<compile_context>
chip_gen: v5e
topology: v5e:2x2
jax: 0.10.0
libtpu: 0.0.40
codegen_flags: <defaults>
</compile_context>

<pallas_src>
import jax
import jax.numpy as jnp
from jax import lax
from jax.experimental import pallas as pl
from jax.experimental.pallas import tpu as pltpu


_NEG_SLOPE = 0.2     # F.leaky_relu(x, 0.2)
_BN_EPS = 1e-5       # nn.BatchNorm2d default eps


def _vmem_spec():
    return pl.BlockSpec(memory_space=pltpu.MemorySpace.VMEM)


def _compiler_params():
    # Everything (space-to-depth input, weights, output) stays VMEM-resident.
    return pltpu.CompilerParams(vmem_limit_bytes=32 * 1024 * 1024)


# ----------------------------------------------------------------------------
# Kernel 1: fused [4x4 stride-2 pad-1 conv] + [folded BN affine] + LeakyReLU.
#
#   z_ref     : (N, Ho+1, Wo+1, 4*Cin)  space-to-depth of the zero-padded input
#   w_ref     : (2, 2, 4*Cin, Cout)     restacked conv weights (see _prep_w_s2)
#   scale_ref : (1, Cout)               folded BN scale  (ones when no BN)
#   bias_ref  : (1, Cout)               folded BN bias   (zeros when no BN)
#   out_ref   : (N*Ho*Wo, Cout)         flattened NHWC output, row = (n, h, w)
# ----------------------------------------------------------------------------
def conv4x4_s2_bn_lrelu_kernel(z_ref, w_ref, scale_ref, bias_ref, out_ref):
    n, hp, wp, k = z_ref.shape
    ho, wo = hp - 1, wp - 1
    p = n * ho * wo

    # 2x2 stride-1 conv over the space-to-depth input == original 4x4 stride-2
    # conv. Static Python loop -> 4 accumulating MXU matmuls, f32 accumulation
    # held in a value (the compiler keeps it in vregs / spills as needed);
    # out_ref is written exactly once.
    acc = jnp.zeros(out_ref.shape, jnp.float32)
    for dh in range(2):
        for dw in range(2):
            patch = z_ref[:, pl.ds(dh, ho), pl.ds(dw, wo), :]      # (N,Ho,Wo,4Cin)
            patch = patch.reshape(p, k)                            # (P, 4*Cin)
            acc = acc + jnp.dot(patch, w_ref[dh, dw],
                                preferred_element_type=jnp.float32)

    # Fused epilogue: BatchNorm (eval, folded) + LeakyReLU(0.2).
    # With slope < 1, leaky_relu(y) == max(y, slope*y): one VPU max.
    y = acc * scale_ref[...] + bias_ref[...]
    out_ref[...] = jnp.maximum(y, jnp.float32(_NEG_SLOPE) * y)


# ----------------------------------------------------------------------------
# Kernel 2: fused [4x4 valid conv -> 1x1 output] + sigmoid (discriminator head).
#   x_ref   : (N, 16*C)   flattened 4x4xC input, column = (kh, kw, c)
#   w_ref   : (16*C, 1)   matching flattened weights
#   out_ref : (N, 1)
# ----------------------------------------------------------------------------
def conv4x4_valid_sigmoid_kernel(x_ref, w_ref, out_ref):
    acc = jnp.dot(x_ref[...], w_ref[...], preferred_element_type=jnp.float32)
    out_ref[...] = jax.nn.sigmoid(acc)


# ----------------------------------------------------------------------------
# Wrapper-side layout plumbing (pure reshape / transpose / pad).
# ----------------------------------------------------------------------------
def _space_to_depth_pad1(x):
    """(N, H, W, C) -> (N, H//2+1, W//2+1, 4*C): zero-pad by 1, fold each 2x2
    spatial block into channels (packed index = (2*a + b)*C + c)."""
    n, h, w, c = x.shape
    ho, wo = h // 2, w // 2
    xp = jnp.pad(x, ((0, 0), (1, 1), (1, 1), (0, 0)))
    xp = xp.reshape(n, ho + 1, 2, wo + 1, 2, c)             # (n, u, a, v, b, c)
    z = jnp.transpose(xp, (0, 1, 3, 2, 4, 5))               # (n, u, v, a, b, c)
    return z.reshape(n, ho + 1, wo + 1, 4 * c)


def _prep_w_s2(w_pt):
    """PyTorch (Cout, Cin, 4, 4) -> (2, 2, 4*Cin, Cout) matching the
    space-to-depth packing: [dh, dw, (2*a+b)*Cin + c, co] = w[co, c, 2dh+a, 2dw+b]."""
    cout, cin = w_pt.shape[0], w_pt.shape[1]
    w = jnp.transpose(w_pt, (2, 3, 1, 0))                   # (kh, kw, Cin, Cout)
    w = w.reshape(2, 2, 2, 2, cin, cout)                    # (dh, a, dw, b, c, co)
    w = jnp.transpose(w, (0, 2, 1, 3, 4, 5))                # (dh, dw, a, b, c, co)
    return w.reshape(2, 2, 4 * cin, cout)


def _prep_w_head(w_pt):
    """PyTorch (1, Cin, 4, 4) -> (16*Cin, 1), row = (kh*4 + kw)*Cin + c."""
    cout, cin = w_pt.shape[0], w_pt.shape[1]
    w = jnp.transpose(w_pt, (2, 3, 1, 0))                   # (4, 4, Cin, 1)
    return w.reshape(16 * cin, cout)


def _fold_bn(bn):
    """Eval-mode BatchNorm folded to per-channel scale/bias."""
    scale = bn['gamma'] * lax.rsqrt(bn['running_var'] + _BN_EPS)
    bias = bn['beta'] - bn['running_mean'] * scale
    return scale.astype(jnp.float32), bias.astype(jnp.float32)


# ----------------------------------------------------------------------------
# Per-layer pallas_call wrappers.
# ----------------------------------------------------------------------------
def conv_s2_bn_lrelu(x, w_pt, scale, bias):
    """One fused block: Conv2d(Cin,Cout,4,2,1,bias=False) -> BN affine -> LeakyReLU."""
    n, h, w_sp, _ = x.shape
    ho, wo = h // 2, w_sp // 2
    cout = w_pt.shape[0]
    z = _space_to_depth_pad1(x)
    w4 = _prep_w_s2(w_pt)
    out = pl.pallas_call(
        conv4x4_s2_bn_lrelu_kernel,
        out_shape=jax.ShapeDtypeStruct((n * ho * wo, cout), jnp.float32),
        in_specs=[_vmem_spec()] * 4,
        out_specs=_vmem_spec(),
        compiler_params=_compiler_params(),
    )(z, w4, scale.reshape(1, cout), bias.reshape(1, cout))
    return out.reshape(n, ho, wo, cout)


def conv_head_sigmoid(x, w_pt):
    """Conv2d(8*ndf, 1, 4, 1, 0, bias=False) on a 4x4 input -> sigmoid."""
    n, _, _, c = x.shape
    xf = x.reshape(n, 16 * c)                                # contiguous NHWC flatten
    wh = _prep_w_head(w_pt)
    return pl.pallas_call(
        conv4x4_valid_sigmoid_kernel,
        out_shape=jax.ShapeDtypeStruct((n, 1), jnp.float32),
        in_specs=[_vmem_spec()] * 2,
        out_specs=_vmem_spec(),
        compiler_params=_compiler_params(),
    )(xf, wh)


def discriminator_forward(params, x_nchw):
    """x_nchw: (N, nc, 64, 64) float -> (N, 1, 1, 1), matching the PyTorch
    Discriminator (eval-mode BatchNorm)."""
    n = x_nchw.shape[0]
    x = jnp.transpose(x_nchw, (0, 2, 3, 1)).astype(jnp.float32)     # NHWC

    ndf = params['conv1'].shape[0]
    ones = jnp.ones((ndf,), jnp.float32)
    zeros = jnp.zeros((ndf,), jnp.float32)
    x = conv_s2_bn_lrelu(x, params['conv1'], ones, zeros)           # no BN, layer 1

    for conv_name, bn_name in (('conv2', 'bn2'), ('conv3', 'bn3'),
                               ('conv4', 'bn4')):
        scale, bias = _fold_bn(params[bn_name])
        x = conv_s2_bn_lrelu(x, params[conv_name], scale, bias)

    out = conv_head_sigmoid(x, params['conv5'])                     # (N, 1)
    return out.reshape(n, 1, 1, 1)


# ----------------------------------------------------------------------------
# Pure-XLA reference of the same math (correctness cross-check).
# ----------------------------------------------------------------------------
def _reference_forward(params, x_nchw):
    x = jnp.transpose(x_nchw, (0, 2, 3, 1)).astype(jnp.float32)
    dn = ('NHWC', 'HWIO', 'NHWC')

    def conv(v, w_pt, stride, pad):
        w = jnp.transpose(w_pt, (2, 3, 1, 0))                       # HWIO
        return lax.conv_general_dilated(
            v, w, (stride, stride), ((pad, pad), (pad, pad)),
            dimension_numbers=dn)

    def lrelu(y):
        return jnp.where(y >= 0.0, y, _NEG_SLOPE * y)

    y = lrelu(conv(x, params['conv1'], 2, 1))
    for c, b in (('conv2', 'bn2'), ('conv3', 'bn3'), ('conv4', 'bn4')):
        s, t = _fold_bn(params[b])
        y = lrelu(conv(y, params[c], 2, 1) * s + t)
    y = jax.nn.sigmoid(conv(y, params['conv5'], 1, 0))              # (N,1,1,1) NHWC
    return jnp.transpose(y, (0, 3, 1, 2))                           # NCHW


# ----------------------------------------------------------------------------
# Deterministic parameter init (shapes implied by the module __init__).
# ----------------------------------------------------------------------------
def init_params(key, nc, ndf):
    ks = jax.random.split(key, 8)

    def conv_w(k, cout, cin):
        return 0.05 * jax.random.normal(k, (cout, cin, 4, 4), jnp.float32)

    def bn(k, c):
        k1, k2, k3, k4 = jax.random.split(k, 4)
        return {
            'gamma': 1.0 + 0.1 * jax.random.normal(k1, (c,), jnp.float32),
            'beta': 0.1 * jax.random.normal(k2, (c,), jnp.float32),
            'running_mean': 0.1 * jax.random.normal(k3, (c,), jnp.float32),
            'running_var': 1.0 + 0.1 * jax.random.uniform(k4, (c,), jnp.float32),
        }

    return {
        'conv1': conv_w(ks[0], ndf, nc),
        'conv2': conv_w(ks[1], ndf * 2, ndf),
        'bn2': bn(ks[2], ndf * 2),
        'conv3': conv_w(ks[3], ndf * 4, ndf * 2),
        'bn3': bn(ks[4], ndf * 4),
        'conv4': conv_w(ks[5], ndf * 8, ndf * 4),
        'bn4': bn(ks[6], ndf * 8),
        'conv5': conv_w(ks[7], 1, ndf * 8),
    }


if __name__ == "__main__":
    key = jax.random.PRNGKey(0)
    k_x, k_p = jax.random.split(key)

    config = {'nc': 4, 'ndf': 8}
    N, H, W = 2, 64, 64        # spatial path: 64 -> 32 -> 16 -> 8 -> 4 -> 1

    x = jax.random.normal(k_x, (N, config['nc'], H, W), jnp.float32)
    params = init_params(k_p, config['nc'], config['ndf'])

    fwd = jax.jit(discriminator_forward)
    out = jax.block_until_ready(fwd(params, x))

    assert out.shape == (N, 1, 1, 1), out.shape
    assert out.dtype == jnp.float32
    assert bool(jnp.all((out >= 0.0) & (out <= 1.0)))

    ref = jax.block_until_ready(jax.jit(_reference_forward)(params, x))
    assert bool(jnp.allclose(out, ref, atol=5e-3, rtol=5e-3)), (
        float(jnp.max(jnp.abs(out - ref))))

    print("KERNEL_OK")
</pallas_src>

<mosaic_0001>
module attributes {stable_mosaic.version = 11 : i64} {
  func.func @conv4x4_s2_bn_lrelu_kernel(%arg0: memref<2x33x33x16xf32, #tpu.memory_space<vmem>>, %arg1: memref<2x2x16x8xf32, #tpu.memory_space<vmem>>, %arg2: memref<1x8xf32, #tpu.memory_space<vmem>>, %arg3: memref<1x8xf32, #tpu.memory_space<vmem>>, %arg4: memref<2048x8xf32, #tpu.memory_space<vmem>>) attributes {dimension_semantics = [], scalar_prefetch = 0 : i64, scratch_operands = 0 : i64, tpu.core_type = #tpu.core_type<tc>} {
    %cst = arith.constant 0.000000e+00 : f32
    %0 = vector.broadcast %cst : f32 to vector<2048x8xf32>
    %c0 = arith.constant 0 : index
    %c0_0 = arith.constant 0 : index
    %c0_1 = arith.constant 0 : index
    %c0_2 = arith.constant 0 : index
    %1 = vector.load %arg0[%c0, %c0_0, %c0_1, %c0_2] : memref<2x33x33x16xf32, #tpu.memory_space<vmem>>, vector<2x32x32x16xf32>
    %2 = vector.shape_cast %1 : vector<2x32x32x16xf32> to vector<2048x16xf32>
    %c0_3 = arith.constant 0 : index
    %c0_4 = arith.constant 0 : index
    %c0_5 = arith.constant 0 : index
    %c0_6 = arith.constant 0 : index
    %3 = vector.load %arg1[%c0_3, %c0_4, %c0_5, %c0_6] : memref<2x2x16x8xf32, #tpu.memory_space<vmem>>, vector<1x1x16x8xf32>
    %4 = vector.shape_cast %3 : vector<1x1x16x8xf32> to vector<16x8xf32>
    %cst_7 = arith.constant dense<0.000000e+00> : vector<2048x8xf32>
    %5 = tpu.matmul %2, %4, %cst_7 {dimension_numbers = #tpu.dot_dimension_numbers<[1], [0], [0], [1], [0, 0, 1, 1], [], []>} : vector<2048x16xf32>, vector<16x8xf32>, vector<2048x8xf32> -> vector<2048x8xf32>
    %6 = arith.addf %0, %5 : vector<2048x8xf32>
    %c0_8 = arith.constant 0 : index
    %c0_9 = arith.constant 0 : index
    %c1 = arith.constant 1 : index
    %c0_10 = arith.constant 0 : index
    %7 = vector.load %arg0[%c0_8, %c0_9, %c1, %c0_10] : memref<2x33x33x16xf32, #tpu.memory_space<vmem>>, vector<2x32x32x16xf32>
    %8 = vector.shape_cast %7 : vector<2x32x32x16xf32> to vector<2048x16xf32>
    %c0_11 = arith.constant 0 : index
    %c1_12 = arith.constant 1 : index
    %c0_13 = arith.constant 0 : index
    %c0_14 = arith.constant 0 : index
    %9 = vector.load %arg1[%c0_11, %c1_12, %c0_13, %c0_14] : memref<2x2x16x8xf32, #tpu.memory_space<vmem>>, vector<1x1x16x8xf32>
    %10 = vector.shape_cast %9 : vector<1x1x16x8xf32> to vector<16x8xf32>
    %cst_15 = arith.constant dense<0.000000e+00> : vector<2048x8xf32>
    %11 = tpu.matmul %8, %10, %cst_15 {dimension_numbers = #tpu.dot_dimension_numbers<[1], [0], [0], [1], [0, 0, 1, 1], [], []>} : vector<2048x16xf32>, vector<16x8xf32>, vector<2048x8xf32> -> vector<2048x8xf32>
    %12 = arith.addf %6, %11 : vector<2048x8xf32>
    %c0_16 = arith.constant 0 : index
    %c1_17 = arith.constant 1 : index
    %c0_18 = arith.constant 0 : index
    %c0_19 = arith.constant 0 : index
    %13 = vector.load %arg0[%c0_16, %c1_17, %c0_18, %c0_19] : memref<2x33x33x16xf32, #tpu.memory_space<vmem>>, vector<2x32x32x16xf32>
    %14 = vector.shape_cast %13 : vector<2x32x32x16xf32> to vector<2048x16xf32>
    %c1_20 = arith.constant 1 : index
    %c0_21 = arith.constant 0 : index
    %c0_22 = arith.constant 0 : index
    %c0_23 = arith.constant 0 : index
    %15 = vector.load %arg1[%c1_20, %c0_21, %c0_22, %c0_23] : memref<2x2x16x8xf32, #tpu.memory_space<vmem>>, vector<1x1x16x8xf32>
    %16 = vector.shape_cast %15 : vector<1x1x16x8xf32> to vector<16x8xf32>
    %cst_24 = arith.constant dense<0.000000e+00> : vector<2048x8xf32>
    %17 = tpu.matmul %14, %16, %cst_24 {dimension_numbers = #tpu.dot_dimension_numbers<[1], [0], [0], [1], [0, 0, 1, 1], [], []>} : vector<2048x16xf32>, vector<16x8xf32>, vector<2048x8xf32> -> vector<2048x8xf32>
    %18 = arith.addf %12, %17 : vector<2048x8xf32>
    %c0_25 = arith.constant 0 : index
    %c1_26 = arith.constant 1 : index
    %c1_27 = arith.constant 1 : index
    %c0_28 = arith.constant 0 : index
    %19 = vector.load %arg0[%c0_25, %c1_26, %c1_27, %c0_28] : memref<2x33x33x16xf32, #tpu.memory_space<vmem>>, vector<2x32x32x16xf32>
    %20 = vector.shape_cast %19 : vector<2x32x32x16xf32> to vector<2048x16xf32>
    %c1_29 = arith.constant 1 : index
    %c1_30 = arith.constant 1 : index
    %c0_31 = arith.constant 0 : index
    %c0_32 = arith.constant 0 : index
    %21 = vector.load %arg1[%c1_29, %c1_30, %c0_31, %c0_32] : memref<2x2x16x8xf32, #tpu.memory_space<vmem>>, vector<1x1x16x8xf32>
    %22 = vector.shape_cast %21 : vector<1x1x16x8xf32> to vector<16x8xf32>
    %cst_33 = arith.constant dense<0.000000e+00> : vector<2048x8xf32>
    %23 = tpu.matmul %20, %22, %cst_33 {dimension_numbers = #tpu.dot_dimension_numbers<[1], [0], [0], [1], [0, 0, 1, 1], [], []>} : vector<2048x16xf32>, vector<16x8xf32>, vector<2048x8xf32> -> vector<2048x8xf32>
    %24 = arith.addf %18, %23 : vector<2048x8xf32>
    %c0_34 = arith.constant 0 : index
    %c0_35 = arith.constant 0 : index
    %25 = vector.load %arg2[%c0_34, %c0_35] : memref<1x8xf32, #tpu.memory_space<vmem>>, vector<1x8xf32>
    %26 = vector.broadcast %25 : vector<1x8xf32> to vector<2048x8xf32>
    %27 = arith.mulf %24, %26 : vector<2048x8xf32>
    %c0_36 = arith.constant 0 : index
    %c0_37 = arith.constant 0 : index
    %28 = vector.load %arg3[%c0_36, %c0_37] : memref<1x8xf32, #tpu.memory_space<vmem>>, vector<1x8xf32>
    %29 = vector.broadcast %28 : vector<1x8xf32> to vector<2048x8xf32>
    %30 = arith.addf %27, %29 : vector<2048x8xf32>
    %cst_38 = arith.constant 2.000000e-01 : f32
    %31 = vector.broadcast %cst_38 : f32 to vector<2048x8xf32>
    %32 = arith.mulf %31, %30 : vector<2048x8xf32>
    %33 = arith.maximumf %30, %32 : vector<2048x8xf32>
    %c0_39 = arith.constant 0 : index
    %c0_40 = arith.constant 0 : index
    %34 = vector.load %arg4[%c0_39, %c0_40] : memref<2048x8xf32, #tpu.memory_space<vmem>>, vector<2048x8xf32>
    tpu.vector_store %arg4[%c0_39, %c0_40], %33 {strides = array<i32>} : memref<2048x8xf32, #tpu.memory_space<vmem>>, vector<2048x8xf32>,
    return
  }
}

module attributes {stable_mosaic.version = 11 : i64} {
  func.func @conv4x4_s2_bn_lrelu_kernel(%arg0: memref<2x17x17x32xf32, #tpu.memory_space<vmem>>, %arg1: memref<2x2x32x16xf32, #tpu.memory_space<vmem>>, %arg2: memref<1x16xf32, #tpu.memory_space<vmem>>, %arg3: memref<1x16xf32, #tpu.memory_space<vmem>>, %arg4: memref<512x16xf32, #tpu.memory_space<vmem>>) attributes {dimension_semantics = [], scalar_prefetch = 0 : i64, scratch_operands = 0 : i64, tpu.core_type = #tpu.core_type<tc>} {
    %cst = arith.constant 0.000000e+00 : f32
    %0 = vector.broadcast %cst : f32 to vector<512x16xf32>
    %c0 = arith.constant 0 : index
    %c0_0 = arith.constant 0 : index
    %c0_1 = arith.constant 0 : index
    %c0_2 = arith.constant 0 : index
    %1 = vector.load %arg0[%c0, %c0_0, %c0_1, %c0_2] : memref<2x17x17x32xf32, #tpu.memory_space<vmem>>, vector<2x16x16x32xf32>
    %2 = vector.shape_cast %1 : vector<2x16x16x32xf32> to vector<512x32xf32>
    %c0_3 = arith.constant 0 : index
    %c0_4 = arith.constant 0 : index
    %c0_5 = arith.constant 0 : index
    %c0_6 = arith.constant 0 : index
    %3 = vector.load %arg1[%c0_3, %c0_4, %c0_5, %c0_6] : memref<2x2x32x16xf32, #tpu.memory_space<vmem>>, vector<1x1x32x16xf32>
    %4 = vector.shape_cast %3 : vector<1x1x32x16xf32> to vector<32x16xf32>
    %cst_7 = arith.constant dense<0.000000e+00> : vector<512x16xf32>
    %5 = tpu.matmul %2, %4, %cst_7 {dimension_numbers = #tpu.dot_dimension_numbers<[1], [0], [0], [1], [0, 0, 1, 1], [], []>} : vector<512x32xf32>, vector<32x16xf32>, vector<512x16xf32> -> vector<512x16xf32>
    %6 = arith.addf %0, %5 : vector<512x16xf32>
    %c0_8 = arith.constant 0 : index
    %c0_9 = arith.constant 0 : index
    %c1 = arith.constant 1 : index
    %c0_10 = arith.constant 0 : index
    %7 = vector.load %arg0[%c0_8, %c0_9, %c1, %c0_10] : memref<2x17x17x32xf32, #tpu.memory_space<vmem>>, vector<2x16x16x32xf32>
    %8 = vector.shape_cast %7 : vector<2x16x16x32xf32> to vector<512x32xf32>
    %c0_11 = arith.constant 0 : index
    %c1_12 = arith.constant 1 : index
    %c0_13 = arith.constant 0 : index
    %c0_14 = arith.constant 0 : index
    %9 = vector.load %arg1[%c0_11, %c1_12, %c0_13, %c0_14] : memref<2x2x32x16xf32, #tpu.memory_space<vmem>>, vector<1x1x32x16xf32>
    %10 = vector.shape_cast %9 : vector<1x1x32x16xf32> to vector<32x16xf32>
    %cst_15 = arith.constant dense<0.000000e+00> : vector<512x16xf32>
    %11 = tpu.matmul %8, %10, %cst_15 {dimension_numbers = #tpu.dot_dimension_numbers<[1], [0], [0], [1], [0, 0, 1, 1], [], []>} : vector<512x32xf32>, vector<32x16xf32>, vector<512x16xf32> -> vector<512x16xf32>
    %12 = arith.addf %6, %11 : vector<512x16xf32>
    %c0_16 = arith.constant 0 : index
    %c1_17 = arith.constant 1 : index
    %c0_18 = arith.constant 0 : index
    %c0_19 = arith.constant 0 : index
    %13 = vector.load %arg0[%c0_16, %c1_17, %c0_18, %c0_19] : memref<2x17x17x32xf32, #tpu.memory_space<vmem>>, vector<2x16x16x32xf32>
    %14 = vector.shape_cast %13 : vector<2x16x16x32xf32> to vector<512x32xf32>
    %c1_20 = arith.constant 1 : index
    %c0_21 = arith.constant 0 : index
    %c0_22 = arith.constant 0 : index
    %c0_23 = arith.constant 0 : index
    %15 = vector.load %arg1[%c1_20, %c0_21, %c0_22, %c0_23] : memref<2x2x32x16xf32, #tpu.memory_space<vmem>>, vector<1x1x32x16xf32>
    %16 = vector.shape_cast %15 : vector<1x1x32x16xf32> to vector<32x16xf32>
    %cst_24 = arith.constant dense<0.000000e+00> : vector<512x16xf32>
    %17 = tpu.matmul %14, %16, %cst_24 {dimension_numbers = #tpu.dot_dimension_numbers<[1], [0], [0], [1], [0, 0, 1, 1], [], []>} : vector<512x32xf32>, vector<32x16xf32>, vector<512x16xf32> -> vector<512x16xf32>
    %18 = arith.addf %12, %17 : vector<512x16xf32>
    %c0_25 = arith.constant 0 : index
    %c1_26 = arith.constant 1 : index
    %c1_27 = arith.constant 1 : index
    %c0_28 = arith.constant 0 : index
    %19 = vector.load %arg0[%c0_25, %c1_26, %c1_27, %c0_28] : memref<2x17x17x32xf32, #tpu.memory_space<vmem>>, vector<2x16x16x32xf32>
    %20 = vector.shape_cast %19 : vector<2x16x16x32xf32> to vector<512x32xf32>
    %c1_29 = arith.constant 1 : index
    %c1_30 = arith.constant 1 : index
    %c0_31 = arith.constant 0 : index
    %c0_32 = arith.constant 0 : index
    %21 = vector.load %arg1[%c1_29, %c1_30, %c0_31, %c0_32] : memref<2x2x32x16xf32, #tpu.memory_space<vmem>>, vector<1x1x32x16xf32>
    %22 = vector.shape_cast %21 : vector<1x1x32x16xf32> to vector<32x16xf32>
    %cst_33 = arith.constant dense<0.000000e+00> : vector<512x16xf32>
    %23 = tpu.matmul %20, %22, %cst_33 {dimension_numbers = #tpu.dot_dimension_numbers<[1], [0], [0], [1], [0, 0, 1, 1], [], []>} : vector<512x32xf32>, vector<32x16xf32>, vector<512x16xf32> -> vector<512x16xf32>
    %24 = arith.addf %18, %23 : vector<512x16xf32>
    %c0_34 = arith.constant 0 : index
    %c0_35 = arith.constant 0 : index
    %25 = vector.load %arg2[%c0_34, %c0_35] : memref<1x16xf32, #tpu.memory_space<vmem>>, vector<1x16xf32>
    %26 = vector.broadcast %25 : vector<1x16xf32> to vector<512x16xf32>
    %27 = arith.mulf %24, %26 : vector<512x16xf32>
    %c0_36 = arith.constant 0 : index
    %c0_37 = arith.constant 0 : index
    %28 = vector.load %arg3[%c0_36, %c0_37] : memref<1x16xf32, #tpu.memory_space<vmem>>, vector<1x16xf32>
    %29 = vector.broadcast %28 : vector<1x16xf32> to vector<512x16xf32>
    %30 = arith.addf %27, %29 : vector<512x16xf32>
    %cst_38 = arith.constant 2.000000e-01 : f32
    %31 = vector.broadcast %cst_38 : f32 to vector<512x16xf32>
    %32 = arith.mulf %31, %30 : vector<512x16xf32>
    %33 = arith.maximumf %30, %32 : vector<512x16xf32>
    %c0_39 = arith.constant 0 : index
    %c0_40 = arith.constant 0 : index
    %34 = vector.load %arg4[%c0_39, %c0_40] : memref<512x16xf32, #tpu.memory_space<vmem>>, vector<512x16xf32>
    tpu.vector_store %arg4[%c0_39, %c0_40], %33 {strides = array<i32>} : memref<512x16xf32, #tpu.memory_space<vmem>>, vector<512x16xf32>,
    return
  }
}

module attributes {stable_mosaic.version = 11 : i64} {
  func.func @conv4x4_s2_bn_lrelu_kernel(%arg0: memref<2x9x9x64xf32, #tpu.memory_space<vmem>>, %arg1: memref<2x2x64x32xf32, #tpu.memory_space<vmem>>, %arg2: memref<1x32xf32, #tpu.memory_space<vmem>>, %arg3: memref<1x32xf32, #tpu.memory_space<vmem>>, %arg4: memref<128x32xf32, #tpu.memory_space<vmem>>) attributes {dimension_semantics = [], scalar_prefetch = 0 : i64, scratch_operands = 0 : i64, tpu.core_type = #tpu.core_type<tc>} {
    %cst = arith.constant 0.000000e+00 : f32
    %0 = vector.broadcast %cst : f32 to vector<128x32xf32>
    %c0 = arith.constant 0 : index
    %c0_0 = arith.constant 0 : index
    %c0_1 = arith.constant 0 : index
    %c0_2 = arith.constant 0 : index
    %1 = vector.load %arg0[%c0, %c0_0, %c0_1, %c0_2] : memref<2x9x9x64xf32, #tpu.memory_space<vmem>>, vector<2x8x8x64xf32>
    %2 = vector.shape_cast %1 : vector<2x8x8x64xf32> to vector<128x64xf32>
    %c0_3 = arith.constant 0 : index
    %c0_4 = arith.constant 0 : index
    %c0_5 = arith.constant 0 : index
    %c0_6 = arith.constant 0 : index
    %3 = vector.load %arg1[%c0_3, %c0_4, %c0_5, %c0_6] : memref<2x2x64x32xf32, #tpu.memory_space<vmem>>, vector<1x1x64x32xf32>
    %4 = vector.shape_cast %3 : vector<1x1x64x32xf32> to vector<64x32xf32>
    %cst_7 = arith.constant dense<0.000000e+00> : vector<128x32xf32>
    %5 = tpu.matmul %2, %4, %cst_7 {dimension_numbers = #tpu.dot_dimension_numbers<[1], [0], [0], [1], [0, 0, 1, 1], [], []>} : vector<128x64xf32>, vector<64x32xf32>, vector<128x32xf32> -> vector<128x32xf32>
    %6 = arith.addf %0, %5 : vector<128x32xf32>
    %c0_8 = arith.constant 0 : index
    %c0_9 = arith.constant 0 : index
    %c1 = arith.constant 1 : index
    %c0_10 = arith.constant 0 : index
    %7 = vector.load %arg0[%c0_8, %c0_9, %c1, %c0_10] : memref<2x9x9x64xf32, #tpu.memory_space<vmem>>, vector<2x8x8x64xf32>
    %8 = vector.shape_cast %7 : vector<2x8x8x64xf32> to vector<128x64xf32>
    %c0_11 = arith.constant 0 : index
    %c1_12 = arith.constant 1 : index
    %c0_13 = arith.constant 0 : index
    %c0_14 = arith.constant 0 : index
    %9 = vector.load %arg1[%c0_11, %c1_12, %c0_13, %c0_14] : memref<2x2x64x32xf32, #tpu.memory_space<vmem>>, vector<1x1x64x32xf32>
    %10 = vector.shape_cast %9 : vector<1x1x64x32xf32> to vector<64x32xf32>
    %cst_15 = arith.constant dense<0.000000e+00> : vector<128x32xf32>
    %11 = tpu.matmul %8, %10, %cst_15 {dimension_numbers = #tpu.dot_dimension_numbers<[1], [0], [0], [1], [0, 0, 1, 1], [], []>} : vector<128x64xf32>, vector<64x32xf32>, vector<128x32xf32> -> vector<128x32xf32>
    %12 = arith.addf %6, %11 : vector<128x32xf32>
    %c0_16 = arith.constant 0 : index
    %c1_17 = arith.constant 1 : index
    %c0_18 = arith.constant 0 : index
    %c0_19 = arith.constant 0 : index
    %13 = vector.load %arg0[%c0_16, %c1_17, %c0_18, %c0_19] : memref<2x9x9x64xf32, #tpu.memory_space<vmem>>, vector<2x8x8x64xf32>
    %14 = vector.shape_cast %13 : vector<2x8x8x64xf32> to vector<128x64xf32>
    %c1_20 = arith.constant 1 : index
    %c0_21 = arith.constant 0 : index
    %c0_22 = arith.constant 0 : index
    %c0_23 = arith.constant 0 : index
    %15 = vector.load %arg1[%c1_20, %c0_21, %c0_22, %c0_23] : memref<2x2x64x32xf32, #tpu.memory_space<vmem>>, vector<1x1x64x32xf32>
    %16 = vector.shape_cast %15 : vector<1x1x64x32xf32> to vector<64x32xf32>
    %cst_24 = arith.constant dense<0.000000e+00> : vector<128x32xf32>
    %17 = tpu.matmul %14, %16, %cst_24 {dimension_numbers = #tpu.dot_dimension_numbers<[1], [0], [0], [1], [0, 0, 1, 1], [], []>} : vector<128x64xf32>, vector<64x32xf32>, vector<128x32xf32> -> vector<128x32xf32>
    %18 = arith.addf %12, %17 : vector<128x32xf32>
    %c0_25 = arith.constant 0 : index
    %c1_26 = arith.constant 1 : index
    %c1_27 = arith.constant 1 : index
    %c0_28 = arith.constant 0 : index
    %19 = vector.load %arg0[%c0_25, %c1_26, %c1_27, %c0_28] : memref<2x9x9x64xf32, #tpu.memory_space<vmem>>, vector<2x8x8x64xf32>
    %20 = vector.shape_cast %19 : vector<2x8x8x64xf32> to vector<128x64xf32>
    %c1_29 = arith.constant 1 : index
    %c1_30 = arith.constant 1 : index
    %c0_31 = arith.constant 0 : index
    %c0_32 = arith.constant 0 : index
    %21 = vector.load %arg1[%c1_29, %c1_30, %c0_31, %c0_32] : memref<2x2x64x32xf32, #tpu.memory_space<vmem>>, vector<1x1x64x32xf32>
    %22 = vector.shape_cast %21 : vector<1x1x64x32xf32> to vector<64x32xf32>
    %cst_33 = arith.constant dense<0.000000e+00> : vector<128x32xf32>
    %23 = tpu.matmul %20, %22, %cst_33 {dimension_numbers = #tpu.dot_dimension_numbers<[1], [0], [0], [1], [0, 0, 1, 1], [], []>} : vector<128x64xf32>, vector<64x32xf32>, vector<128x32xf32> -> vector<128x32xf32>
    %24 = arith.addf %18, %23 : vector<128x32xf32>
    %c0_34 = arith.constant 0 : index
    %c0_35 = arith.constant 0 : index
    %25 = vector.load %arg2[%c0_34, %c0_35] : memref<1x32xf32, #tpu.memory_space<vmem>>, vector<1x32xf32>
    %26 = vector.broadcast %25 : vector<1x32xf32> to vector<128x32xf32>
    %27 = arith.mulf %24, %26 : vector<128x32xf32>
    %c0_36 = arith.constant 0 : index
    %c0_37 = arith.constant 0 : index
    %28 = vector.load %arg3[%c0_36, %c0_37] : memref<1x32xf32, #tpu.memory_space<vmem>>, vector<1x32xf32>
    %29 = vector.broadcast %28 : vector<1x32xf32> to vector<128x32xf32>
    %30 = arith.addf %27, %29 : vector<128x32xf32>
    %cst_38 = arith.constant 2.000000e-01 : f32
    %31 = vector.broadcast %cst_38 : f32 to vector<128x32xf32>
    %32 = arith.mulf %31, %30 : vector<128x32xf32>
    %33 = arith.maximumf %30, %32 : vector<128x32xf32>
    %c0_39 = arith.constant 0 : index
    %c0_40 = arith.constant 0 : index
    %34 = vector.load %arg4[%c0_39, %c0_40] : memref<128x32xf32, #tpu.memory_space<vmem>>, vector<128x32xf32>
    tpu.vector_store %arg4[%c0_39, %c0_40], %33 {strides = array<i32>} : memref<128x32xf32, #tpu.memory_space<vmem>>, vector<128x32xf32>,
    return
  }
}

module attributes {stable_mosaic.version = 11 : i64} {
  func.func @conv4x4_s2_bn_lrelu_kernel(%arg0: memref<2x5x5x128xf32, #tpu.memory_space<vmem>>, %arg1: memref<2x2x128x64xf32, #tpu.memory_space<vmem>>, %arg2: memref<1x64xf32, #tpu.memory_space<vmem>>, %arg3: memref<1x64xf32, #tpu.memory_space<vmem>>, %arg4: memref<32x64xf32, #tpu.memory_space<vmem>>) attributes {dimension_semantics = [], scalar_prefetch = 0 : i64, scratch_operands = 0 : i64, tpu.core_type = #tpu.core_type<tc>} {
    %cst = arith.constant 0.000000e+00 : f32
    %0 = vector.broadcast %cst : f32 to vector<32x64xf32>
    %c0 = arith.constant 0 : index
    %c0_0 = arith.constant 0 : index
    %c0_1 = arith.constant 0 : index
    %c0_2 = arith.constant 0 : index
    %1 = vector.load %arg0[%c0, %c0_0, %c0_1, %c0_2] : memref<2x5x5x128xf32, #tpu.memory_space<vmem>>, vector<2x4x4x128xf32>
    %2 = vector.shape_cast %1 : vector<2x4x4x128xf32> to vector<32x128xf32>
    %c0_3 = arith.constant 0 : index
    %c0_4 = arith.constant 0 : index
    %c0_5 = arith.constant 0 : index
    %c0_6 = arith.constant 0 : index
    %3 = vector.load %arg1[%c0_3, %c0_4, %c0_5, %c0_6] : memref<2x2x128x64xf32, #tpu.memory_space<vmem>>, vector<1x1x128x64xf32>
    %4 = vector.shape_cast %3 : vector<1x1x128x64xf32> to vector<128x64xf32>
    %cst_7 = arith.constant dense<0.000000e+00> : vector<32x64xf32>
    %5 = tpu.matmul %2, %4, %cst_7 {dimension_numbers = #tpu.dot_dimension_numbers<[1], [0], [0], [1], [0, 0, 1, 1], [], []>} : vector<32x128xf32>, vector<128x64xf32>, vector<32x64xf32> -> vector<32x64xf32>
    %6 = arith.addf %0, %5 : vector<32x64xf32>
    %c0_8 = arith.constant 0 : index
    %c0_9 = arith.constant 0 : index
    %c1 = arith.constant 1 : index
    %c0_10 = arith.constant 0 : index
    %7 = vector.load %arg0[%c0_8, %c0_9, %c1, %c0_10] : memref<2x5x5x128xf32, #tpu.memory_space<vmem>>, vector<2x4x4x128xf32>
    %8 = vector.shape_cast %7 : vector<2x4x4x128xf32> to vector<32x128xf32>
    %c0_11 = arith.constant 0 : index
    %c1_12 = arith.constant 1 : index
    %c0_13 = arith.constant 0 : index
    %c0_14 = arith.constant 0 : index
    %9 = vector.load %arg1[%c0_11, %c1_12, %c0_13, %c0_14] : memref<2x2x128x64xf32, #tpu.memory_space<vmem>>, vector<1x1x128x64xf32>
    %10 = vector.shape_cast %9 : vector<1x1x128x64xf32> to vector<128x64xf32>
    %cst_15 = arith.constant dense<0.000000e+00> : vector<32x64xf32>
    %11 = tpu.matmul %8, %10, %cst_15 {dimension_numbers = #tpu.dot_dimension_numbers<[1], [0], [0], [1], [0, 0, 1, 1], [], []>} : vector<32x128xf32>, vector<128x64xf32>, vector<32x64xf32> -> vector<32x64xf32>
    %12 = arith.addf %6, %11 : vector<32x64xf32>
    %c0_16 = arith.constant 0 : index
    %c1_17 = arith.constant 1 : index
    %c0_18 = arith.constant 0 : index
    %c0_19 = arith.constant 0 : index
    %13 = vector.load %arg0[%c0_16, %c1_17, %c0_18, %c0_19] : memref<2x5x5x128xf32, #tpu.memory_space<vmem>>, vector<2x4x4x128xf32>
    %14 = vector.shape_cast %13 : vector<2x4x4x128xf32> to vector<32x128xf32>
    %c1_20 = arith.constant 1 : index
    %c0_21 = arith.constant 0 : index
    %c0_22 = arith.constant 0 : index
    %c0_23 = arith.constant 0 : index
    %15 = vector.load %arg1[%c1_20, %c0_21, %c0_22, %c0_23] : memref<2x2x128x64xf32, #tpu.memory_space<vmem>>, vector<1x1x128x64xf32>
    %16 = vector.shape_cast %15 : vector<1x1x128x64xf32> to vector<128x64xf32>
    %cst_24 = arith.constant dense<0.000000e+00> : vector<32x64xf32>
    %17 = tpu.matmul %14, %16, %cst_24 {dimension_numbers = #tpu.dot_dimension_numbers<[1], [0], [0], [1], [0, 0, 1, 1], [], []>} : vector<32x128xf32>, vector<128x64xf32>, vector<32x64xf32> -> vector<32x64xf32>
    %18 = arith.addf %12, %17 : vector<32x64xf32>
    %c0_25 = arith.constant 0 : index
    %c1_26 = arith.constant 1 : index
    %c1_27 = arith.constant 1 : index
    %c0_28 = arith.constant 0 : index
    %19 = vector.load %arg0[%c0_25, %c1_26, %c1_27, %c0_28] : memref<2x5x5x128xf32, #tpu.memory_space<vmem>>, vector<2x4x4x128xf32>
    %20 = vector.shape_cast %19 : vector<2x4x4x128xf32> to vector<32x128xf32>
    %c1_29 = arith.constant 1 : index
    %c1_30 = arith.constant 1 : index
    %c0_31 = arith.constant 0 : index
    %c0_32 = arith.constant 0 : index
    %21 = vector.load %arg1[%c1_29, %c1_30, %c0_31, %c0_32] : memref<2x2x128x64xf32, #tpu.memory_space<vmem>>, vector<1x1x128x64xf32>
    %22 = vector.shape_cast %21 : vector<1x1x128x64xf32> to vector<128x64xf32>
    %cst_33 = arith.constant dense<0.000000e+00> : vector<32x64xf32>
    %23 = tpu.matmul %20, %22, %cst_33 {dimension_numbers = #tpu.dot_dimension_numbers<[1], [0], [0], [1], [0, 0, 1, 1], [], []>} : vector<32x128xf32>, vector<128x64xf32>, vector<32x64xf32> -> vector<32x64xf32>
    %24 = arith.addf %18, %23 : vector<32x64xf32>
    %c0_34 = arith.constant 0 : index
    %c0_35 = arith.constant 0 : index
    %25 = vector.load %arg2[%c0_34, %c0_35] : memref<1x64xf32, #tpu.memory_space<vmem>>, vector<1x64xf32>
    %26 = vector.broadcast %25 : vector<1x64xf32> to vector<32x64xf32>
    %27 = arith.mulf %24, %26 : vector<32x64xf32>
    %c0_36 = arith.constant 0 : index
    %c0_37 = arith.constant 0 : index
    %28 = vector.load %arg3[%c0_36, %c0_37] : memref<1x64xf32, #tpu.memory_space<vmem>>, vector<1x64xf32>
    %29 = vector.broadcast %28 : vector<1x64xf32> to vector<32x64xf32>
    %30 = arith.addf %27, %29 : vector<32x64xf32>
    %cst_38 = arith.constant 2.000000e-01 : f32
    %31 = vector.broadcast %cst_38 : f32 to vector<32x64xf32>
    %32 = arith.mulf %31, %30 : vector<32x64xf32>
    %33 = arith.maximumf %30, %32 : vector<32x64xf32>
    %c0_39 = arith.constant 0 : index
    %c0_40 = arith.constant 0 : index
    %34 = vector.load %arg4[%c0_39, %c0_40] : memref<32x64xf32, #tpu.memory_space<vmem>>, vector<32x64xf32>
    tpu.vector_store %arg4[%c0_39, %c0_40], %33 {strides = array<i32>} : memref<32x64xf32, #tpu.memory_space<vmem>>, vector<32x64xf32>,
    return
  }
}

module attributes {stable_mosaic.version = 11 : i64} {
  func.func @conv4x4_valid_sigmoid_kernel(%arg0: memref<2x1024xf32, #tpu.memory_space<vmem>>, %arg1: memref<1024x1xf32, #tpu.memory_space<vmem>>, %arg2: memref<2x1xf32, #tpu.memory_space<vmem>>) attributes {dimension_semantics = [], scalar_prefetch = 0 : i64, scratch_operands = 0 : i64, tpu.core_type = #tpu.core_type<tc>} {
    %c0 = arith.constant 0 : index
    %c0_0 = arith.constant 0 : index
    %0 = vector.load %arg0[%c0, %c0_0] : memref<2x1024xf32, #tpu.memory_space<vmem>>, vector<2x1024xf32>
    %c0_1 = arith.constant 0 : index
    %c0_2 = arith.constant 0 : index
    %1 = vector.load %arg1[%c0_1, %c0_2] : memref<1024x1xf32, #tpu.memory_space<vmem>>, vector<1024x1xf32>
    %cst = arith.constant dense<0.000000e+00> : vector<2x1xf32>
    %2 = tpu.matmul %0, %1, %cst {dimension_numbers = #tpu.dot_dimension_numbers<[1], [0], [0], [1], [0, 0, 1, 1], [], []>} : vector<2x1024xf32>, vector<1024x1xf32>, vector<2x1xf32> -> vector<2x1xf32>
    %3 = arith.negf %2 : vector<2x1xf32>
    %4 = math.exp %3 : vector<2x1xf32>
    %cst_3 = arith.constant 1.000000e+00 : f32
    %5 = vector.broadcast %cst_3 : f32 to vector<2x1xf32>
    %6 = arith.addf %5, %4 : vector<2x1xf32>
    %7 = arith.divf %5, %6 : vector<2x1xf32>
    %c0_4 = arith.constant 0 : index
    %c0_5 = arith.constant 0 : index
    %8 = vector.load %arg2[%c0_4, %c0_5] : memref<2x1xf32, #tpu.memory_space<vmem>>, vector<2x1xf32>
    tpu.vector_store %arg2[%c0_4, %c0_5], %7 {strides = array<i32>} : memref<2x1xf32, #tpu.memory_space<vmem>>, vector<2x1xf32>,
    return
  }
}

</mosaic_0001>

<llo_original>
// kernel: discriminator_forward.6
$region0: #{discriminator_forward.6}
  #allocation0 [shape = 'u32[]', space=smem, size = 0x4, offset = 0x4, fixed_abs, tag = 'smem constant byte address 0x4 - core index']
  #allocation1 [shape = 'u32[72,128]{1,0:T(1,128)}', space=vmem, size = 0x9000, scoped, tag = 'internal scratch']
  %s0 = inlined_call_operand.vmem [shape: f32[2,17,17,32], index: 0, kind: input, shape index: {}]
  %s1 = inlined_call_operand.vmem [shape: f32[2,2,32,16], index: 1, kind: input, shape index: {}]
  %s2 = inlined_call_operand.vmem [shape: f32[1,16], index: 2, kind: input, shape index: {}]
  %s3 = inlined_call_operand.vmem [shape: f32[1,16], index: 3, kind: input, shape index: {}]
  %s4 = inlined_call_operand.vmem [shape: f32[512,16], index: 4, kind: output, shape index: {}]
  %s5 = sld [smem:[#allocation0]]
  $region26: #{discriminator_forward.6} parent=0
    _
  %s7 = ssub.s32 1, %s5
  %s8 = scalar_select 0, %s7, %s5
  // Predicated region
  $region2: #{discriminator_forward.6} parent=0 // pred_check
    _
  $region3: #{discriminator_forward.6} parent=0 // pred_check_branch
    %10 = sbr.rel (0) target = $region5
  $region4: #{discriminator_forward.6} parent=0 // pred_region
    _
  $region5: #{discriminator_forward.6} parent=0 // pred_fallthru
    _
  // Predicated region
  $region6: #{discriminator_forward.6} parent=0 // pred_check
    _
  $region7: #{discriminator_forward.6} parent=0 // pred_check_branch
    %12 = sbr.rel (0) target = $region9
  $region8: #{discriminator_forward.6} parent=0 // pred_region
    _
  $region9: #{discriminator_forward.6} parent=0 // pred_fallthru
    _
  // Predicated region
  $region10: #{discriminator_forward.6} parent=0 // pred_check
    _
  $region11: #{discriminator_forward.6} parent=0 // pred_check_branch
    %14 = sbr.rel (0) target = $region13
  $region12: #{discriminator_forward.6} parent=0 // pred_region
    _
  $region13: #{discriminator_forward.6} parent=0 // pred_fallthru
    _
  // Predicated region
  $region14: #{discriminator_forward.6} parent=0 // pred_check
    _
  $region15: #{discriminator_forward.6} parent=0 // pred_check_branch
    %16 = sbr.rel (0) target = $region17
  $region16: #{discriminator_forward.6} parent=0 // pred_region
    _
  $region17: #{discriminator_forward.6} parent=0 // pred_fallthru
    _
  %v17 = vld [vmem:[%s0] sm:$0xff]
  %v18 = vld [vmem:[%s0 + $0x8] sm:$0xff]
  %v19 = vld [vmem:[%s0 + $0x18] sm:$0xff]
  %v20 = vld [vmem:[%s0 + $0x20] sm:$0xff]
  %v21 = vld [vmem:[%s0 + $0x30] sm:$0xff]
  %v22 = vld [vmem:[%s0 + $0x38] sm:$0xff]
  %v23 = vld [vmem:[%s0 + $0x48] sm:$0xff]
  %v24 = vld [vmem:[%s0 + $0x50] sm:$0xff]
  %v25 = vld [vmem:[%s0 + $0x60] sm:$0xff]
  %v26 = vld [vmem:[%s0 + $0x68] sm:$0xff]
  %v27 = vld [vmem:[%s0 + $0x78] sm:$0xff]
  %v28 = vld [vmem:[%s0 + $0x80] sm:$0xff]
  %v29 = vld [vmem:[%s0 + $0x90] sm:$0xff]
  %v30 = vld [vmem:[%s0 + $0x98] sm:$0xff]
  %v31 = vld [vmem:[%s0 + $0xa8] sm:$0xff]
  %v32 = vld [vmem:[%s0 + $0xb0] sm:$0xff]
  %v33 = vld [vmem:[%s0 + $0xc0] sm:$0xff]
  %v34 = vld [vmem:[%s0 + $0xc8] sm:$0xff]
  %v35 = vld [vmem:[%s0 + $0xd8] sm:$0xff]
  %v36 = vld [vmem:[%s0 + $0xe0] sm:$0xff]
  %v37 = vld [vmem:[%s0 + $0xf0] sm:$0xff]
  %v38 = vld [vmem:[%s0 + $0xf8] sm:$0xff]
  %v39 = vld [vmem:[%s0 + $0x108] sm:$0xff]
  %v40 = vld [vmem:[%s0 + $0x110] sm:$0xff]
  %v41 = vld [vmem:[%s0 + $0x120] sm:$0xff]
  %v42 = vld [vmem:[%s0 + $0x128] sm:$0xff]
  %v43 = vld [vmem:[%s0 + $0x138] sm:$0xff]
  %v44 = vld [vmem:[%s0 + $0x140] sm:$0xff]
  %v45 = vld [vmem:[%s0 + $0x150] sm:$0xff]
  %v46 = vld [vmem:[%s0 + $0x158] sm:$0xff]
  %v47 = vld [vmem:[%s0 + $0x168] sm:$0xff]
  %v48 = vld [vmem:[%s0 + $0x170] sm:$0xff]
  %v49 = vld [vmem:[%s0 + $0x198] sm:$0xff]
  %v50 = vld [vmem:[%s0 + $0x1a0] sm:$0xff]
  %v51 = vld [vmem:[%s0 + $0x1b0] sm:$0xff]
  %v52 = vld [vmem:[%s0 + $0x1b8] sm:$0xff]
  %v53 = vld [vmem:[%s0 + $0x1c8] sm:$0xff]
  %v54 = vld [vmem:[%s0 + $0x1d0] sm:$0xff]
  %v55 = vld [vmem:[%s0 + $0x1e0] sm:$0xff]
  %v56 = vld [vmem:[%s0 + $0x1e8] sm:$0xff]
  %v57 = vld [vmem:[%s0 + $0x1f8] sm:$0xff]
  %v58 = vld [vmem:[%s0 + $0x200] sm:$0xff]
  %v59 = vld [vmem:[%s0 + $0x210] sm:$0xff]
  %v60 = vld [vmem:[%s0 + $0x218] sm:$0xff]
  %v61 = vld [vmem:[%s0 + $0x228] sm:$0xff]
  %v62 = vld [vmem:[%s0 + $0x230] sm:$0xff]
  %v63 = vld [vmem:[%s0 + $0x240] sm:$0xff]
  %v64 = vld [vmem:[%s0 + $0x248] sm:$0xff]
  %v65 = vld [vmem:[%s0 + $0x258] sm:$0xff]
  %v66 = vld [vmem:[%s0 + $0x260] sm:$0xff]
  %v67 = vld [vmem:[%s0 + $0x270] sm:$0xff]
  %v68 = vld [vmem:[%s0 + $0x278] sm:$0xff]
  %v69 = vld [vmem:[%s0 + $0x288] sm:$0xff]
  %v70 = vld [vmem:[%s0 + $0x290] sm:$0xff]
  %v71 = vld [vmem:[%s0 + $0x2a0] sm:$0xff]
  %v72 = vld [vmem:[%s0 + $0x2a8] sm:$0xff]
  %v73 = vld [vmem:[%s0 + $0x2b8] sm:$0xff]
  %v74 = vld [vmem:[%s0 + $0x2c0] sm:$0xff]
  %v75 = vld [vmem:[%s0 + $0x2d0] sm:$0xff]
  %v76 = vld [vmem:[%s0 + $0x2d8] sm:$0xff]
  %v77 = vld [vmem:[%s0 + $0x2e8] sm:$0xff]
  %v78 = vld [vmem:[%s0 + $0x2f0] sm:$0xff]
  %v79 = vld [vmem:[%s0 + $0x300] sm:$0xff]
  %v80 = vld [vmem:[%s0 + $0x308] sm:$0xff]
  %v81 = vld [vmem:[%s1] sm:$0xff]
  %v82 = vld [vmem:[%s1 + $0x8] sm:$0xff]
  %v83 = vld [vmem:[%s1 + $0x10] sm:$0xff]
  %v84 = vld [vmem:[%s1 + $0x18] sm:$0xff]
  %v85 = vld [vmem:[%s0 + $0x1] sm:$0xff]
  %v86 = vld [vmem:[%s0 + $0x9] sm:$0xff]
  %v87 = vld [vmem:[%s0 + $0x19] sm:$0xff]
  %v88 = vld [vmem:[%s0 + $0x21] sm:$0xff]
  %v89 = vld [vmem:[%s0 + $0x31] sm:$0xff]
  %v90 = vld [vmem:[%s0 + $0x39] sm:$0xff]
  %v91 = vld [vmem:[%s0 + $0x49] sm:$0xff]
  %v92 = vld [vmem:[%s0 + $0x51] sm:$0xff]
  %v93 = vld [vmem:[%s0 + $0x61] sm:$0xff]
  %v94 = vld [vmem:[%s0 + $0x69] sm:$0xff]
  %v95 = vld [vmem:[%s0 + $0x79] sm:$0xff]
  %v96 = vld [vmem:[%s0 + $0x81] sm:$0xff]
  %v97 = vld [vmem:[%s0 + $0x91] sm:$0xff]
  %v98 = vld [vmem:[%s0 + $0x99] sm:$0xff]
  %v99 = vld [vmem:[%s0 + $0xa9] sm:$0xff]
  %v100 = vld [vmem:[%s0 + $0xb1] sm:$0xff]
  %v101 = vld [vmem:[%s0 + $0xc1] sm:$0xff]
  %v102 = vld [vmem:[%s0 + $0xc9] sm:$0xff]
  %v103 = vld [vmem:[%s0 + $0xd9] sm:$0xff]
  %v104 = vld [vmem:[%s0 + $0xe1] sm:$0xff]
  %v105 = vld [vmem:[%s0 + $0xf1] sm:$0xff]
  %v106 = vld [vmem:[%s0 + $0xf9] sm:$0xff]
  %v107 = vld [vmem:[%s0 + $0x109] sm:$0xff]
  %v108 = vld [vmem:[%s0 + $0x111] sm:$0xff]
  %v109 = vld [vmem:[%s0 + $0x121] sm:$0xff]
  %v110 = vld [vmem:[%s0 + $0x129] sm:$0xff]
  %v111 = vld [vmem:[%s0 + $0x139] sm:$0xff]
  %v112 = vld [vmem:[%s0 + $0x141] sm:$0xff]
  %v113 = vld [vmem:[%s0 + $0x151] sm:$0xff]
  %v114 = vld [vmem:[%s0 + $0x159] sm:$0xff]
  %v115 = vld [vmem:[%s0 + $0x169] sm:$0xff]
  %v116 = vld [vmem:[%s0 + $0x171] sm:$0xff]
  %v117 = vld [vmem:[%s0 + $0x199] sm:$0xff]
  %v118 = vld [vmem:[%s0 + $0x1a1] sm:$0xff]
  %v119 = vld [vmem:[%s0 + $0x1b1] sm:$0xff]
  %v120 = vld [vmem:[%s0 + $0x1b9] sm:$0xff]
  %v121 = vld [vmem:[%s0 + $0x1c9] sm:$0xff]
  %v122 = vld [vmem:[%s0 + $0x1d1] sm:$0xff]
  %v123 = vld [vmem:[%s0 + $0x1e1] sm:$0xff]
  %v124 = vld [vmem:[%s0 + $0x1e9] sm:$0xff]
  %v125 = vld [vmem:[%s0 + $0x1f9] sm:$0xff]
  %v126 = vld [vmem:[%s0 + $0x201] sm:$0xff]
  %v127 = vld [vmem:[%s0 + $0x211] sm:$0xff]
  %v128 = vld [vmem:[%s0 + $0x219] sm:$0xff]
  %v129 = vld [vmem:[%s0 + $0x229] sm:$0xff]
  %v130 = vld [vmem:[%s0 + $0x231] sm:$0xff]
  %v131 = vld [vmem:[%s0 + $0x241] sm:$0xff]
  %v132 = vld [vmem:[%s0 + $0x249] sm:$0xff]
  %v133 = vld [vmem:[%s0 + $0x259] sm:$0xff]
  %v134 = vld [vmem:[%s0 + $0x261] sm:$0xff]
  %v135 = vld [vmem:[%s0 + $0x271] sm:$0xff]
  %v136 = vld [vmem:[%s0 + $0x279] sm:$0xff]
  %v137 = vld [vmem:[%s0 + $0x289] sm:$0xff]
  %v138 = vld [vmem:[%s0 + $0x291] sm:$0xff]
  %v139 = vld [vmem:[%s0 + $0x2a1] sm:$0xff]
  %v140 = vld [vmem:[%s0 + $0x2a9] sm:$0xff]
  %v141 = vld [vmem:[%s0 + $0x2b9] sm:$0xff]
  %v142 = vld [vmem:[%s0 + $0x2c1] sm:$0xff]
  %v143 = vld [vmem:[%s0 + $0x2d1] sm:$0xff]
  %v144 = vld [vmem:[%s0 + $0x2d9] sm:$0xff]
  %v145 = vld [vmem:[%s0 + $0x2e9] sm:$0xff]
  %v146 = vld [vmem:[%s0 + $0x2f1] sm:$0xff]
  %v147 = vld [vmem:[%s0 + $0x301] sm:$0xff]
  %v148 = vld [vmem:[%s0 + $0x309] sm:$0xff]
  %s149 = scalar_lea.vmem %s1, 32
  %v150 = vld [vmem:[%s149] sm:$0xff]
  %v151 = vld [vmem:[%s149 + $0x8] sm:$0xff]
  %v152 = vld [vmem:[%s149 + $0x10] sm:$0xff]
  %v153 = vld [vmem:[%s149 + $0x18] sm:$0xff]
  %vm154 = vcmask 261120
  %v156 = vsel %vm154, %v85, 0
  %v159 = vsel %vm154, %v86, 0
  %v162 = vsel %vm154, %v87, 0
  %v165 = vsel %vm154, %v88, 0
  %v168 = vsel %vm154, %v89, 0
  %v171 = vsel %vm154, %v90, 0
  %v174 = vsel %vm154, %v91, 0
  %v177 = vsel %vm154, %v92, 0
  %v180 = vsel %vm154, %v93, 0
  %v183 = vsel %vm154, %v94, 0
  %v186 = vsel %vm154, %v95, 0
  %v189 = vsel %vm154, %v96, 0
  %v192 = vsel %vm154, %v97, 0
  %v195 = vsel %vm154, %v98, 0
  %v198 = vsel %vm154, %v99, 0
  %v201 = vsel %vm154, %v100, 0
  %v204 = vsel %vm154, %v101, 0
  %v207 = vsel %vm154, %v102, 0
  %v210 = vsel %vm154, %v103, 0
  %v213 = vsel %vm154, %v104, 0
  %v216 = vsel %vm154, %v105, 0
  %v219 = vsel %vm154, %v106, 0
  %v222 = vsel %vm154, %v107, 0
  %v225 = vsel %vm154, %v108, 0
  %v228 = vsel %vm154, %v109, 0
  %v231 = vsel %vm154, %v110, 0
  %v234 = vsel %vm154, %v111, 0
  %v237 = vsel %vm154, %v112, 0
  %v240 = vsel %vm154, %v113, 0
  %v243 = vsel %vm154, %v114, 0
  %v246 = vsel %vm154, %v115, 0
  %v249 = vsel %vm154, %v116, 0
  %v252 = vsel %vm154, %v117, 0
  %v255 = vsel %vm154, %v118, 0
  %v258 = vsel %vm154, %v119, 0
  %v261 = vsel %vm154, %v120, 0
  %v264 = vsel %vm154, %v121, 0
  %v267 = vsel %vm154, %v122, 0
  %v270 = vsel %vm154, %v123, 0
  %v273 = vsel %vm154, %v124, 0
  %v276 = vsel %vm154, %v125, 0
  %v279 = vsel %vm154, %v126, 0
  %v282 = vsel %vm154, %v127, 0
  %v285 = vsel %vm154, %v128, 0
  %v288 = vsel %vm154, %v129, 0
  %v291 = vsel %vm154, %v130, 0
  %v294 = vsel %vm154, %v131, 0
  %v297 = vsel %vm154, %v132, 0
  %v300 = vsel %vm154, %v133, 0
  %v303 = vsel %vm154, %v134, 0
  %v306 = vsel %vm154, %v135, 0
  %v309 = vsel %vm154, %v136, 0
  %v312 = vsel %vm154, %v137, 0
  %v315 = vsel %vm154, %v138, 0
  %v318 = vsel %vm154, %v139, 0
  %v321 = vsel %vm154, %v140, 0
  %v324 = vsel %vm154, %v141, 0
  %v327 = vsel %vm154, %v142, 0
  %v330 = vsel %vm154, %v143, 0
  %v333 = vsel %vm154, %v144, 0
  %v336 = vsel %vm154, %v145, 0
  %v339 = vsel %vm154, %v146, 0
  %v342 = vsel %vm154, %v147, 0
  %v345 = vsel %vm154, %v148, 0
  %347 = vmatpush.msra.mxu0 0.0
  %348 = vmatpush.msra.mxu0 0.0
  %349 = vmatpush.msra.mxu0 0.0
  %350 = vmatpush.msra.mxu0 0.0
  %351 = vmatpush.msra.mxu0 0.0
  %352 = vmatpush.msra.mxu0 0.0
  %353 = vmatpush.msra.mxu0 0.0
  %354 = vmatpush.msra.mxu0 0.0
  %355 = vmatpush.msra.mxu0 0.0
  %356 = vmatpush.msra.mxu0 0.0
  %357 = vmatpush.msra.mxu0 0.0
  %358 = vmatpush.msra.mxu0 0.0
  %359 = vmatpush.msra.mxu0 %v153
  %360 = vmatpush.msra.mxu0 %v152
  %361 = vmatpush.msra.mxu0 %v151
  %362 = vmatpush.msra.mxu0 %v150
  %363 = vmatmul.f32.gmra.mxu0 %v156
  %v364 = vpop.f32.mrf.mxu0
  %v365 = vadd.f32 0.0, %v364
  %366 = vmatmul.f32.gmra.mxu0 %v159
  %v367 = vpop.f32.mrf.mxu0
  %v368 = vadd.f32 0.0, %v367
  %369 = vmatmul.f32.gmra.mxu0 %v162
  %v370 = vpop.f32.mrf.mxu0
  %v371 = vadd.f32 0.0, %v370
  %372 = vmatmul.f32.gmra.mxu0 %v165
  %v373 = vpop.f32.mrf.mxu0
  %v374 = vadd.f32 0.0, %v373
  %375 = vmatmul.f32.gmra.mxu0 %v168
  %v376 = vpop.f32.mrf.mxu0
  %v377 = vadd.f32 0.0, %v376
  %378 = vmatmul.f32.gmra.mxu0 %v171
  %v379 = vpop.f32.mrf.mxu0
  %v380 = vadd.f32 0.0, %v379
  %381 = vmatmul.f32.gmra.mxu0 %v174
  %v382 = vpop.f32.mrf.mxu0
  %v383 = vadd.f32 0.0, %v382
  %384 = vmatmul.f32.gmra.mxu0 %v177
  %v385 = vpop.f32.mrf.mxu0
  %v386 = vadd.f32 0.0, %v385
  %387 = vmatmul.f32.gmra.mxu0 %v180
  %v388 = vpop.f32.mrf.mxu0
  %v389 = vadd.f32 0.0, %v388
  %390 = vmatmul.f32.gmra.mxu0 %v183
  %v391 = vpop.f32.mrf.mxu0
  %v392 = vadd.f32 0.0, %v391
  %393 = vmatmul.f32.gmra.mxu0 %v186
  %v394 = vpop.f32.mrf.mxu0
  %v395 = vadd.f32 0.0, %v394
  %396 = vmatmul.f32.gmra.mxu0 %v189
  %v397 = vpop.f32.mrf.mxu0
  %v398 = vadd.f32 0.0, %v397
  %399 = vmatmul.f32.gmra.mxu0 %v192
  %v400 = vpop.f32.mrf.mxu0
  %v401 = vadd.f32 0.0, %v400
  %402 = vmatmul.f32.gmra.mxu0 %v195
  %v403 = vpop.f32.mrf.mxu0
  %v404 = vadd.f32 0.0, %v403
  %405 = vmatmul.f32.gmra.mxu0 %v198
  %v406 = vpop.f32.mrf.mxu0
  %v407 = vadd.f32 0.0, %v406
  %408 = vmatmul.f32.gmra.mxu0 %v201
  %v409 = vpop.f32.mrf.mxu0
  %v410 = vadd.f32 0.0, %v409
  %411 = vmatmul.f32.gmra.mxu0 %v204
  %v412 = vpop.f32.mrf.mxu0
  %v413 = vadd.f32 0.0, %v412
  %414 = vmatmul.f32.gmra.mxu0 %v207
  %v415 = vpop.f32.mrf.mxu0
  %v416 = vadd.f32 0.0, %v415
  %417 = vmatmul.f32.gmra.mxu0 %v210
  %v418 = vpop.f32.mrf.mxu0
  %v419 = vadd.f32 0.0, %v418
  %420 = vmatmul.f32.gmra.mxu0 %v213
  %v421 = vpop.f32.mrf.mxu0
  %v422 = vadd.f32 0.0, %v421
  %423 = vmatmul.f32.gmra.mxu0 %v216
  %v424 = vpop.f32.mrf.mxu0
  %v425 = vadd.f32 0.0, %v424
  %426 = vmatmul.f32.gmra.mxu0 %v219
  %v427 = vpop.f32.mrf.mxu0
  %v428 = vadd.f32 0.0, %v427
  %429 = vmatmul.f32.gmra.mxu0 %v222
  %v430 = vpop.f32.mrf.mxu0
  %v431 = vadd.f32 0.0, %v430
  %432 = vmatmul.f32.gmra.mxu0 %v225
  %v433 = vpop.f32.mrf.mxu0
  %v434 = vadd.f32 0.0, %v433
  %435 = vmatmul.f32.gmra.mxu0 %v228
  %v436 = vpop.f32.mrf.mxu0
  %v437 = vadd.f32 0.0, %v436
  %438 = vmatmul.f32.gmra.mxu0 %v231
  %v439 = vpop.f32.mrf.mxu0
  %v440 = vadd.f32 0.0, %v439
  %441 = vmatmul.f32.gmra.mxu0 %v234
  %v442 = vpop.f32.mrf.mxu0
  %v443 = vadd.f32 0.0, %v442
  %444 = vmatmul.f32.gmra.mxu0 %v237
  %v445 = vpop.f32.mrf.mxu0
  %v446 = vadd.f32 0.0, %v445
  %447 = vmatmul.f32.gmra.mxu0 %v240
  %v448 = vpop.f32.mrf.mxu0
  %v449 = vadd.f32 0.0, %v448
  %450 = vmatmul.f32.gmra.mxu0 %v243
  %v451 = vpop.f32.mrf.mxu0
  %v452 = vadd.f32 0.0, %v451
  %453 = vmatmul.f32.gmra.mxu0 %v246
  %v454 = vpop.f32.mrf.mxu0
  %v455 = vadd.f32 0.0, %v454
  %456 = vmatmul.f32.gmra.mxu0 %v249
  %v457 = vpop.f32.mrf.mxu0
  %v458 = vadd.f32 0.0, %v457
  %459 = vmatmul.f32.gmra.mxu0 %v252
  %v460 = vpop.f32.mrf.mxu0
  %v461 = vadd.f32 0.0, %v460
  %462 = vmatmul.f32.gmra.mxu0 %v255
  %v463 = vpop.f32.mrf.mxu0
  %v464 = vadd.f32 0.0, %v463
  %465 = vmatmul.f32.gmra.mxu0 %v258
  %v466 = vpop.f32.mrf.mxu0
  %v467 = vadd.f32 0.0, %v466
  %468 = vmatmul.f32.gmra.mxu0 %v261
  %v469 = vpop.f32.mrf.mxu0
  %v470 = vadd.f32 0.0, %v469
  %471 = vmatmul.f32.gmra.mxu0 %v264
  %v472 = vpop.f32.mrf.mxu0
  %v473 = vadd.f32 0.0, %v472
  %474 = vmatmul.f32.gmra.mxu0 %v267
  %v475 = vpop.f32.mrf.mxu0
  %v476 = vadd.f32 0.0, %v475
  %477 = vmatmul.f32.gmra.mxu0 %v270
  %v478 = vpop.f32.mrf.mxu0
  %v479 = vadd.f32 0.0, %v478
  %480 = vmatmul.f32.gmra.mxu0 %v273
  %v481 = vpop.f32.mrf.mxu0
  %v482 = vadd.f32 0.0, %v481
  %483 = vmatmul.f32.gmra.mxu0 %v276
  %v484 = vpop.f32.mrf.mxu0
  %v485 = vadd.f32 0.0, %v484
  %486 = vmatmul.f32.gmra.mxu0 %v279
  %v487 = vpop.f32.mrf.mxu0
  %v488 = vadd.f32 0.0, %v487
  %489 = vmatmul.f32.gmra.mxu0 %v282
  %v490 = vpop.f32.mrf.mxu0
  %v491 = vadd.f32 0.0, %v490
  %492 = vmatmul.f32.gmra.mxu0 %v285
  %v493 = vpop.f32.mrf.mxu0
  %v494 = vadd.f32 0.0, %v493
  %495 = vmatmul.f32.gmra.mxu0 %v288
  %v496 = vpop.f32.mrf.mxu0
  %v497 = vadd.f32 0.0, %v496
  %498 = vmatmul.f32.gmra.mxu0 %v291
  %v499 = vpop.f32.mrf.mxu0
  %v500 = vadd.f32 0.0, %v499
  %501 = vmatmul.f32.gmra.mxu0 %v294
  %v502 = vpop.f32.mrf.mxu0
  %v503 = vadd.f32 0.0, %v502
  %504 = vmatmul.f32.gmra.mxu0 %v297
  %v505 = vpop.f32.mrf.mxu0
  %v506 = vadd.f32 0.0, %v505
  %507 = vmatmul.f32.gmra.mxu0 %v300
  %v508 = vpop.f32.mrf.mxu0
  %v509 = vadd.f32 0.0, %v508
  %510 = vmatmul.f32.gmra.mxu0 %v303
  %v511 = vpop.f32.mrf.mxu0
  %v512 = vadd.f32 0.0, %v511
  %513 = vmatmul.f32.gmra.mxu0 %v306
  %v514 = vpop.f32.mrf.mxu0
  %v515 = vadd.f32 0.0, %v514
  %516 = vmatmul.f32.gmra.mxu0 %v309
  %v517 = vpop.f32.mrf.mxu0
  %v518 = vadd.f32 0.0, %v517
  %519 = vmatmul.f32.gmra.mxu0 %v312
  %v520 = vpop.f32.mrf.mxu0
  %v521 = vadd.f32 0.0, %v520
  %522 = vmatmul.f32.gmra.mxu0 %v315
  %v523 = vpop.f32.mrf.mxu0
  %v524 = vadd.f32 0.0, %v523
  %525 = vmatmul.f32.gmra.mxu0 %v318
  %v526 = vpop.f32.mrf.mxu0
  %v527 = vadd.f32 0.0, %v526
  %528 = vmatmul.f32.gmra.mxu0 %v321
  %v529 = vpop.f32.mrf.mxu0
  %v530 = vadd.f32 0.0, %v529
  %531 = vmatmul.f32.gmra.mxu0 %v324
  %v532 = vpop.f32.mrf.mxu0
  %v533 = vadd.f32 0.0, %v532
  %534 = vmatmul.f32.gmra.mxu0 %v327
  %v535 = vpop.f32.mrf.mxu0
  %v536 = vadd.f32 0.0, %v535
  %537 = vmatmul.f32.gmra.mxu0 %v330
  %v538 = vpop.f32.mrf.mxu0
  %v539 = vadd.f32 0.0, %v538
  %540 = vmatmul.f32.gmra.mxu0 %v333
  %v541 = vpop.f32.mrf.mxu0
  %v542 = vadd.f32 0.0, %v541
  %543 = vmatmul.f32.gmra.mxu0 %v336
  %v544 = vpop.f32.mrf.mxu0
  %v545 = vadd.f32 0.0, %v544
  %546 = vmatmul.f32.gmra.mxu0 %v339
  %v547 = vpop.f32.mrf.mxu0
  %v548 = vadd.f32 0.0, %v547
  %549 = vmatmul.f32.gmra.mxu0 %v342
  %v550 = vpop.f32.mrf.mxu0
  %v551 = vadd.f32 0.0, %v550
  %552 = vmatmul.f32.gmra.mxu0 %v345
  %v553 = vpop.f32.mrf.mxu0
  %v554 = vadd.f32 0.0, %v553
  %555 = vdwg.mxu0
  %v557 = vsel %vm154, %v17, 0
  %v560 = vsel %vm154, %v18, 0
  %v563 = vsel %vm154, %v19, 0
  %v566 = vsel %vm154, %v20, 0
  %v569 = vsel %vm154, %v21, 0
  %v572 = vsel %vm154, %v22, 0
  %v575 = vsel %vm154, %v23, 0
  %v578 = vsel %vm154, %v24, 0
  %v581 = vsel %vm154, %v25, 0
  %v584 = vsel %vm154, %v26, 0
  %v587 = vsel %vm154, %v27, 0
  %v590 = vsel %vm154, %v28, 0
  %v593 = vsel %vm154, %v29, 0
  %v596 = vsel %vm154, %v30, 0
  %v599 = vsel %vm154, %v31, 0
  %v602 = vsel %vm154, %v32, 0
  %v605 = vsel %vm154, %v33, 0
  %v608 = vsel %vm154, %v34, 0
  %v611 = vsel %vm154, %v35, 0
  %v614 = vsel %vm154, %v36, 0
  %v617 = vsel %vm154, %v37, 0
  %v620 = vsel %vm154, %v38, 0
  %v623 = vsel %vm154, %v39, 0
  %v626 = vsel %vm154, %v40, 0
  %v629 = vsel %vm154, %v41, 0
  %v632 = vsel %vm154, %v42, 0
  %v635 = vsel %vm154, %v43, 0
  %v638 = vsel %vm154, %v44, 0
  %v641 = vsel %vm154, %v45, 0
  %v644 = vsel %vm154, %v46, 0
  %v647 = vsel %vm154, %v47, 0
  %v650 = vsel %vm154, %v48, 0
  %v653 = vsel %vm154, %v49, 0
  %v656 = vsel %vm154, %v50, 0
  %v659 = vsel %vm154, %v51, 0
  %v662 = vsel %vm154, %v52, 0
  %v665 = vsel %vm154, %v53, 0
  %v668 = vsel %vm154, %v54, 0
  %v671 = vsel %vm154, %v55, 0
  %v674 = vsel %vm154, %v56, 0
  %v677 = vsel %vm154, %v57, 0
  %v680 = vsel %vm154, %v58, 0
  %v683 = vsel %vm154, %v59, 0
  %v686 = vsel %vm154, %v60, 0
  %v689 = vsel %vm154, %v61, 0
  %v692 = vsel %vm154, %v62, 0
  %v695 = vsel %vm154, %v63, 0
  %v698 = vsel %vm154, %v64, 0
  %v701 = vsel %vm154, %v65, 0
  %v704 = vsel %vm154, %v66, 0
  %v707 = vsel %vm154, %v67, 0
  %v710 = vsel %vm154, %v68, 0
  %v713 = vsel %vm154, %v69, 0
  %v716 = vsel %vm154, %v70, 0
  %v719 = vsel %vm154, %v71, 0
  %v722 = vsel %vm154, %v72, 0
  %v725 = vsel %vm154, %v73, 0
  %v728 = vsel %vm154, %v74, 0
  %v731 = vsel %vm154, %v75, 0
  %v734 = vsel %vm154, %v76, 0
  %v737 = vsel %vm154, %v77, 0
  %v740 = vsel %vm154, %v78, 0
  %v743 = vsel %vm154, %v79, 0
  %v746 = vsel %vm154, %v80, 0
  %748 = vmatpush.msra.mxu0 0.0
  %749 = vmatpush.msra.mxu0 0.0
  %750 = vmatpush.msra.mxu0 0.0
  %751 = vmatpush.msra.mxu0 0.0
  %752 = vmatpush.msra.mxu0 0.0
  %753 = vmatpush.msra.mxu0 0.0
  %754 = vmatpush.msra.mxu0 0.0
  %755 = vmatpush.msra.mxu0 0.0
  %756 = vmatpush.msra.mxu0 0.0
  %757 = vmatpush.msra.mxu0 0.0
  %758 = vmatpush.msra.mxu0 0.0
  %759 = vmatpush.msra.mxu0 0.0
  %760 = vmatpush.msra.mxu0 %v84
  %761 = vmatpush.msra.mxu0 %v83
  %762 = vmatpush.msra.mxu0 %v82
  %763 = vmatpush.msra.mxu0 %v81
  %764 = vmatmul.f32.gmra.mxu0 %v557
  %v765 = vpop.f32.mrf.mxu0
  %v766 = vadd.f32 %v365, %v765
  %767 = vmatmul.f32.gmra.mxu0 %v560
  %v768 = vpop.f32.mrf.mxu0
  %v769 = vadd.f32 %v368, %v768
  %770 = vmatmul.f32.gmra.mxu0 %v563
  %v771 = vpop.f32.mrf.mxu0
  %v772 = vadd.f32 %v371, %v771
  %773 = vmatmul.f32.gmra.mxu0 %v566
  %v774 = vpop.f32.mrf.mxu0
  %v775 = vadd.f32 %v374, %v774
  %776 = vmatmul.f32.gmra.mxu0 %v569
  %v777 = vpop.f32.mrf.mxu0
  %v778 = vadd.f32 %v377, %v777
  %779 = vmatmul.f32.gmra.mxu0 %v572
  %v780 = vpop.f32.mrf.mxu0
  %v781 = vadd.f32 %v380, %v780
  %782 = vmatmul.f32.gmra.mxu0 %v575
  %v783 = vpop.f32.mrf.mxu0
  %v784 = vadd.f32 %v383, %v783
  %785 = vmatmul.f32.gmra.mxu0 %v578
  %v786 = vpop.f32.mrf.mxu0
  %v787 = vadd.f32 %v386, %v786
  %788 = vmatmul.f32.gmra.mxu0 %v581
  %v789 = vpop.f32.mrf.mxu0
  %v790 = vadd.f32 %v389, %v789
  %791 = vmatmul.f32.gmra.mxu0 %v584
  %v792 = vpop.f32.mrf.mxu0
  %v793 = vadd.f32 %v392, %v792
  %794 = vmatmul.f32.gmra.mxu0 %v587
  %v795 = vpop.f32.mrf.mxu0
  %v796 = vadd.f32 %v395, %v795
  %797 = vmatmul.f32.gmra.mxu0 %v590
  %v798 = vpop.f32.mrf.mxu0
  %v799 = vadd.f32 %v398, %v798
  %800 = vmatmul.f32.gmra.mxu0 %v593
  %v801 = vpop.f32.mrf.mxu0
  %v802 = vadd.f32 %v401, %v801
  %803 = vmatmul.f32.gmra.mxu0 %v596
  %v804 = vpop.f32.mrf.mxu0
  %v805 = vadd.f32 %v404, %v804
  %806 = vmatmul.f32.gmra.mxu0 %v599
  %v807 = vpop.f32.mrf.mxu0
  %v808 = vadd.f32 %v407, %v807
  %809 = vmatmul.f32.gmra.mxu0 %v602
  %v810 = vpop.f32.mrf.mxu0
  %v811 = vadd.f32 %v410, %v810
  %812 = vmatmul.f32.gmra.mxu0 %v605
  %v813 = vpop.f32.mrf.mxu0
  %v814 = vadd.f32 %v413, %v813
  %815 = vmatmul.f32.gmra.mxu0 %v608
  %v816 = vpop.f32.mrf.mxu0
  %v817 = vadd.f32 %v416, %v816
  %818 = vmatmul.f32.gmra.mxu0 %v611
  %v819 = vpop.f32.mrf.mxu0
  %v820 = vadd.f32 %v419, %v819
  %821 = vmatmul.f32.gmra.mxu0 %v614
  %v822 = vpop.f32.mrf.mxu0
  %v823 = vadd.f32 %v422, %v822
  %824 = vmatmul.f32.gmra.mxu0 %v617
  %v825 = vpop.f32.mrf.mxu0
  %v826 = vadd.f32 %v425, %v825
  %827 = vmatmul.f32.gmra.mxu0 %v620
  %v828 = vpop.f32.mrf.mxu0
  %v829 = vadd.f32 %v428, %v828
  %830 = vmatmul.f32.gmra.mxu0 %v623
  %v831 = vpop.f32.mrf.mxu0
  %v832 = vadd.f32 %v431, %v831
  %833 = vmatmul.f32.gmra.mxu0 %v626
  %v834 = vpop.f32.mrf.mxu0
  %v835 = vadd.f32 %v434, %v834
  %836 = vmatmul.f32.gmra.mxu0 %v629
  %v837 = vpop.f32.mrf.mxu0
  %v838 = vadd.f32 %v437, %v837
  %839 = vmatmul.f32.gmra.mxu0 %v632
  %v840 = vpop.f32.mrf.mxu0
  %v841 = vadd.f32 %v440, %v840
  %842 = vmatmul.f32.gmra.mxu0 %v635
  %v843 = vpop.f32.mrf.mxu0
  %v844 = vadd.f32 %v443, %v843
  %845 = vmatmul.f32.gmra.mxu0 %v638
  %v846 = vpop.f32.mrf.mxu0
  %v847 = vadd.f32 %v446, %v846
  %848 = vmatmul.f32.gmra.mxu0 %v641
  %v849 = vpop.f32.mrf.mxu0
  %v850 = vadd.f32 %v449, %v849
  %851 = vmatmul.f32.gmra.mxu0 %v644
  %v852 = vpop.f32.mrf.mxu0
  %v853 = vadd.f32 %v452, %v852
  %854 = vmatmul.f32.gmra.mxu0 %v647
  %v855 = vpop.f32.mrf.mxu0
  %v856 = vadd.f32 %v455, %v855
  %857 = vmatmul.f32.gmra.mxu0 %v650
  %v858 = vpop.f32.mrf.mxu0
  %v859 = vadd.f32 %v458, %v858
  %860 = vmatmul.f32.gmra.mxu0 %v653
  %v861 = vpop.f32.mrf.mxu0
  %v862 = vadd.f32 %v461, %v861
  %863 = vmatmul.f32.gmra.mxu0 %v656
  %v864 = vpop.f32.mrf.mxu0
  %v865 = vadd.f32 %v464, %v864
  %866 = vmatmul.f32.gmra.mxu0 %v659
  %v867 = vpop.f32.mrf.mxu0
  %v868 = vadd.f32 %v467, %v867
  %869 = vmatmul.f32.gmra.mxu0 %v662
  %v870 = vpop.f32.mrf.mxu0
  %v871 = vadd.f32 %v470, %v870
  %872 = vmatmul.f32.gmra.mxu0 %v665
  %v873 = vpop.f32.mrf.mxu0
  %v874 = vadd.f32 %v473, %v873
  %875 = vmatmul.f32.gmra.mxu0 %v668
  %v876 = vpop.f32.mrf.mxu0
  %v877 = vadd.f32 %v476, %v876
  %878 = vmatmul.f32.gmra.mxu0 %v671
  %v879 = vpop.f32.mrf.mxu0
  %v880 = vadd.f32 %v479, %v879
  %881 = vmatmul.f32.gmra.mxu0 %v674
  %v882 = vpop.f32.mrf.mxu0
  %v883 = vadd.f32 %v482, %v882
  %884 = vmatmul.f32.gmra.mxu0 %v677
  %v885 = vpop.f32.mrf.mxu0
  %v886 = vadd.f32 %v485, %v885
  %887 = vmatmul.f32.gmra.mxu0 %v680
  %v888 = vpop.f32.mrf.mxu0
  %v889 = vadd.f32 %v488, %v888
  %890 = vmatmul.f32.gmra.mxu0 %v683
  %v891 = vpop.f32.mrf.mxu0
  %v892 = vadd.f32 %v491, %v891
  %893 = vmatmul.f32.gmra.mxu0 %v686
  %v894 = vpop.f32.mrf.mxu0
  %v895 = vadd.f32 %v494, %v894
  %896 = vmatmul.f32.gmra.mxu0 %v689
  %v897 = vpop.f32.mrf.mxu0
  %v898 = vadd.f32 %v497, %v897
  %899 = vmatmul.f32.gmra.mxu0 %v692
  %v900 = vpop.f32.mrf.mxu0
  %v901 = vadd.f32 %v500, %v900
  %902 = vmatmul.f32.gmra.mxu0 %v695
  %v903 = vpop.f32.mrf.mxu0
  %v904 = vadd.f32 %v503, %v903
  %905 = vmatmul.f32.gmra.mxu0 %v698
  %v906 = vpop.f32.mrf.mxu0
  %v907 = vadd.f32 %v506, %v906
  %908 = vmatmul.f32.gmra.mxu0 %v701
  %v909 = vpop.f32.mrf.mxu0
  %v910 = vadd.f32 %v509, %v909
  %911 = vmatmul.f32.gmra.mxu0 %v704
  %v912 = vpop.f32.mrf.mxu0
  %v913 = vadd.f32 %v512, %v912
  %914 = vmatmul.f32.gmra.mxu0 %v707
  %v915 = vpop.f32.mrf.mxu0
  %v916 = vadd.f32 %v515, %v915
  %917 = vmatmul.f32.gmra.mxu0 %v710
  %v918 = vpop.f32.mrf.mxu0
  %v919 = vadd.f32 %v518, %v918
  %920 = vmatmul.f32.gmra.mxu0 %v713
  %v921 = vpop.f32.mrf.mxu0
  %v922 = vadd.f32 %v521, %v921
  %923 = vmatmul.f32.gmra.mxu0 %v716
  %v924 = vpop.f32.mrf.mxu0
  %v925 = vadd.f32 %v524, %v924
  %926 = vmatmul.f32.gmra.mxu0 %v719
  %v927 = vpop.f32.mrf.mxu0
  %v928 = vadd.f32 %v527, %v927
  %929 = vmatmul.f32.gmra.mxu0 %v722
  %v930 = vpop.f32.mrf.mxu0
  %v931 = vadd.f32 %v530, %v930
  %932 = vmatmul.f32.gmra.mxu0 %v725
  %v933 = vpop.f32.mrf.mxu0
  %v934 = vadd.f32 %v533, %v933
  %935 = vmatmul.f32.gmra.mxu0 %v728
  %v936 = vpop.f32.mrf.mxu0
  %v937 = vadd.f32 %v536, %v936
  %938 = vmatmul.f32.gmra.mxu0 %v731
  %v939 = vpop.f32.mrf.mxu0
  %v940 = vadd.f32 %v539, %v939
  %941 = vmatmul.f32.gmra.mxu0 %v734
  %v942 = vpop.f32.mrf.mxu0
  %v943 = vadd.f32 %v542, %v942
  %944 = vmatmul.f32.gmra.mxu0 %v737
  %v945 = vpop.f32.mrf.mxu0
  %v946 = vadd.f32 %v545, %v945
  %947 = vmatmul.f32.gmra.mxu0 %v740
  %v948 = vpop.f32.mrf.mxu0
  %v949 = vadd.f32 %v548, %v948
  %950 = vmatmul.f32.gmra.mxu0 %v743
  %v951 = vpop.f32.mrf.mxu0
  %v952 = vadd.f32 %v551, %v951
  %953 = vmatmul.f32.gmra.mxu0 %v746
  %v954 = vpop.f32.mrf.mxu0
  %v955 = vadd.f32 %v554, %v954
  %956 = vdwg.mxu0
  %s957 = scalar_lea.vmem %s0, 24
  %v958 = vld [vmem:[%s957] sm:$0xff]
  %v959 = vld [vmem:[%s957 + $0x8] sm:$0xff]
  %v960 = vld [vmem:[%s957 + $0x18] sm:$0xff]
  %v961 = vld [vmem:[%s957 + $0x20] sm:$0xff]
  %v962 = vld [vmem:[%s957 + $0x30] sm:$0xff]
  %v963 = vld [vmem:[%s957 + $0x38] sm:$0xff]
  %v964 = vld [vmem:[%s957 + $0x48] sm:$0xff]
  %v965 = vld [vmem:[%s957 + $0x50] sm:$0xff]
  %v966 = vld [vmem:[%s957 + $0x60] sm:$0xff]
  %v967 = vld [vmem:[%s957 + $0x68] sm:$0xff]
  %v968 = vld [vmem:[%s957 + $0x78] sm:$0xff]
  %v969 = vld [vmem:[%s957 + $0x80] sm:$0xff]
  %v970 = vld [vmem:[%s957 + $0x90] sm:$0xff]
  %v971 = vld [vmem:[%s957 + $0x98] sm:$0xff]
  %v972 = vld [vmem:[%s957 + $0xa8] sm:$0xff]
  %v973 = vld [vmem:[%s957 + $0xb0] sm:$0xff]
  %v974 = vld [vmem:[%s957 + $0xc0] sm:$0xff]
  %v975 = vld [vmem:[%s957 + $0xc8] sm:$0xff]
  %v976 = vld [vmem:[%s957 + $0xd8] sm:$0xff]
  %v977 = vld [vmem:[%s957 + $0xe0] sm:$0xff]
  %v978 = vld [vmem:[%s957 + $0xf0] sm:$0xff]
  %v979 = vld [vmem:[%s957 + $0xf8] sm:$0xff]
  %v980 = vld [vmem:[%s957 + $0x108] sm:$0xff]
  %v981 = vld [vmem:[%s957 + $0x110] sm:$0xff]
  %v982 = vld [vmem:[%s957 + $0x120] sm:$0xff]
  %v983 = vld [vmem:[%s957 + $0x128] sm:$0xff]
  %v984 = vld [vmem:[%s957 + $0x138] sm:$0xff]
  %v985 = vld [vmem:[%s957 + $0x140] sm:$0xff]
  %v986 = vld [vmem:[%s957 + $0x150] sm:$0xff]
  %v987 = vld [vmem:[%s957 + $0x158] sm:$0xff]
  %v988 = vld [vmem:[%s957 + $0x168] sm:$0xff]
  %v989 = vld [vmem:[%s957 + $0x170] sm:$0xff]
  %v990 = vld [vmem:[%s957 + $0x198] sm:$0xff]
  %v991 = vld [vmem:[%s957 + $0x1a0] sm:$0xff]
  %v992 = vld [vmem:[%s957 + $0x1b0] sm:$0xff]
  %v993 = vld [vmem:[%s957 + $0x1b8] sm:$0xff]
  %v994 = vld [vmem:[%s957 + $0x1c8] sm:$0xff]
  %v995 = vld [vmem:[%s957 + $0x1d0] sm:$0xff]
  %v996 = vld [vmem:[%s957 + $0x1e0] sm:$0xff]
  %v997 = vld [vmem:[%s957 + $0x1e8] sm:$0xff]
  %v998 = vld [vmem:[%s957 + $0x1f8] sm:$0xff]
  %v999 = vld [vmem:[%s957 + $0x200] sm:$0xff]
  %v1000 = vld [vmem:[%s957 + $0x210] sm:$0xff]
  %v1001 = vld [vmem:[%s957 + $0x218] sm:$0xff]
  %v1002 = vld [vmem:[%s957 + $0x228] sm:$0xff]
  %v1003 = vld [vmem:[%s957 + $0x230] sm:$0xff]
  %v1004 = vld [vmem:[%s957 + $0x240] sm:$0xff]
  %v1005 = vld [vmem:[%s957 + $0x248] sm:$0xff]
  %v1006 = vld [vmem:[%s957 + $0x258] sm:$0xff]
  %v1007 = vld [vmem:[%s957 + $0x260] sm:$0xff]
  %v1008 = vld [vmem:[%s957 + $0x270] sm:$0xff]
  %v1009 = vld [vmem:[%s957 + $0x278] sm:$0xff]
  %v1010 = vld [vmem:[%s957 + $0x288] sm:$0xff]
  %v1011 = vld [vmem:[%s957 + $0x290] sm:$0xff]
  %v1012 = vld [vmem:[%s957 + $0x2a0] sm:$0xff]
  %v1013 = vld [vmem:[%s957 + $0x2a8] sm:$0xff]
  %v1014 = vld [vmem:[%s957 + $0x2b8] sm:$0xff]
  %v1015 = vld [vmem:[%s957 + $0x2c0] sm:$0xff]
  %v1016 = vld [vmem:[%s957 + $0x2d0] sm:$0xff]
  %v1017 = vld [vmem:[%s957 + $0x2d8] sm:$0xff]
  %v1018 = vld [vmem:[%s957 + $0x2e8] sm:$0xff]
  %v1019 = vld [vmem:[%s957 + $0x2f0] sm:$0xff]
  %v1020 = vld [vmem:[%s957 + $0x300] sm:$0xff]
  %v1021 = vld [vmem:[%s957 + $0x308] sm:$0xff]
  %s1022 = scalar_lea.vmem %s1, 64
  %v1023 = vld [vmem:[%s1022] sm:$0xff]
  %v1024 = vld [vmem:[%s1022 + $0x8] sm:$0xff]
  %v1025 = vld [vmem:[%s1022 + $0x10] sm:$0xff]
  %v1026 = vld [vmem:[%s1022 + $0x18] sm:$0xff]
  %v1028 = vsel %vm154, %v958, 0
  %v1031 = vsel %vm154, %v959, 0
  %v1034 = vsel %vm154, %v960, 0
  %v1037 = vsel %vm154, %v961, 0
  %v1040 = vsel %vm154, %v962, 0
  %v1043 = vsel %vm154, %v963, 0
  %v1046 = vsel %vm154, %v964, 0
  %v1049 = vsel %vm154, %v965, 0
  %v1052 = vsel %vm154, %v966, 0
  %v1055 = vsel %vm154, %v967, 0
  %v1058 = vsel %vm154, %v968, 0
  %v1061 = vsel %vm154, %v969, 0
  %v1064 = vsel %vm154, %v970, 0
  %v1067 = vsel %vm154, %v971, 0
  %v1070 = vsel %vm154, %v972, 0
  %v1073 = vsel %vm154, %v973, 0
  %v1076 = vsel %vm154, %v974, 0
  %v1079 = vsel %vm154, %v975, 0
  %v1082 = vsel %vm154, %v976, 0
  %v1085 = vsel %vm154, %v977, 0
  %v1088 = vsel %vm154, %v978, 0
  %v1091 = vsel %vm154, %v979, 0
  %v1094 = vsel %vm154, %v980, 0
  %v1097 = vsel %vm154, %v981, 0
  %v1100 = vsel %vm154, %v982, 0
  %v1103 = vsel %vm154, %v983, 0
  %v1106 = vsel %vm154, %v984, 0
  %v1109 = vsel %vm154, %v985, 0
  %v1112 = vsel %vm154, %v986, 0
  %v1115 = vsel %vm154, %v987, 0
  %v1118 = vsel %vm154, %v988, 0
  %v1121 = vsel %vm154, %v989, 0
  %v1124 = vsel %vm154, %v990, 0
  %v1127 = vsel %vm154, %v991, 0
  %v1130 = vsel %vm154, %v992, 0
  %v1133 = vsel %vm154, %v993, 0
  %v1136 = vsel %vm154, %v994, 0
  %v1139 = vsel %vm154, %v995, 0
  %v1142 = vsel %vm154, %v996, 0
  %v1145 = vsel %vm154, %v997, 0
  %v1148 = vsel %vm154, %v998, 0
  %v1151 = vsel %vm154, %v999, 0
  %v1154 = vsel %vm154, %v1000, 0
  %v1157 = vsel %vm154, %v1001, 0
  %v1160 = vsel %vm154, %v1002, 0
  %v1163 = vsel %vm154, %v1003, 0
  %v1166 = vsel %vm154, %v1004, 0
  %v1169 = vsel %vm154, %v1005, 0
  %v1172 = vsel %vm154, %v1006, 0
  %v1175 = vsel %vm154, %v1007, 0
  %v1178 = vsel %vm154, %v1008, 0
  %v1181 = vsel %vm154, %v1009, 0
  %v1184 = vsel %vm154, %v1010, 0
  %v1187 = vsel %vm154, %v1011, 0
  %v1190 = vsel %vm154, %v1012, 0
  %v1193 = vsel %vm154, %v1013, 0
  %v1196 = vsel %vm154, %v1014, 0
  %v1199 = vsel %vm154, %v1015, 0
  %v1202 = vsel %vm154, %v1016, 0
  %v1205 = vsel %vm154, %v1017, 0
  %v1208 = vsel %vm154, %v1018, 0
  %v1211 = vsel %vm154, %v1019, 0
  %v1214 = vsel %vm154, %v1020, 0
  %v1217 = vsel %vm154, %v1021, 0
  %1219 = vmatpush.msra.mxu0 0.0
  %1220 = vmatpush.msra.mxu0 0.0
  %1221 = vmatpush.msra.mxu0 0.0
  %1222 = vmatpush.msra.mxu0 0.0
  %1223 = vmatpush.msra.mxu0 0.0
  %1224 = vmatpush.msra.mxu0 0.0
  %1225 = vmatpush.msra.mxu0 0.0
  %1226 = vmatpush.msra.mxu0 0.0
  %1227 = vmatpush.msra.mxu0 0.0
  %1228 = vmatpush.msra.mxu0 0.0
  %1229 = vmatpush.msra.mxu0 0.0
  %1230 = vmatpush.msra.mxu0 0.0
  %1231 = vmatpush.msra.mxu0 %v1026
  %1232 = vmatpush.msra.mxu0 %v1025
  %1233 = vmatpush.msra.mxu0 %v1024
  %1234 = vmatpush.msra.mxu0 %v1023
  %1235 = vmatmul.f32.gmra.mxu0 %v1028
  %v1236 = vpop.f32.mrf.mxu0
  %v1237 = vadd.f32 0.0, %v1236
  %1238 = vmatmul.f32.gmra.mxu0 %v1031
  %v1239 = vpop.f32.mrf.mxu0
  %v1240 = vadd.f32 0.0, %v1239
  %1241 = vmatmul.f32.gmra.mxu0 %v1034
  %v1242 = vpop.f32.mrf.mxu0
  %v1243 = vadd.f32 0.0, %v1242
  %1244 = vmatmul.f32.gmra.mxu0 %v1037
  %v1245 = vpop.f32.mrf.mxu0
  %v1246 = vadd.f32 0.0, %v1245
  %1247 = vmatmul.f32.gmra.mxu0 %v1040
  %v1248 = vpop.f32.mrf.mxu0
  %v1249 = vadd.f32 0.0, %v1248
  %1250 = vmatmul.f32.gmra.mxu0 %v1043
  %v1251 = vpop.f32.mrf.mxu0
  %v1252 = vadd.f32 0.0, %v1251
  %1253 = vmatmul.f32.gmra.mxu0 %v1046
  %v1254 = vpop.f32.mrf.mxu0
  %v1255 = vadd.f32 0.0, %v1254
  %1256 = vmatmul.f32.gmra.mxu0 %v1049
  %v1257 = vpop.f32.mrf.mxu0
  %v1258 = vadd.f32 0.0, %v1257
  %1259 = vmatmul.f32.gmra.mxu0 %v1052
  %v1260 = vpop.f32.mrf.mxu0
  %v1261 = vadd.f32 0.0, %v1260
  %1262 = vmatmul.f32.gmra.mxu0 %v1055
  %v1263 = vpop.f32.mrf.mxu0
  %v1264 = vadd.f32 0.0, %v1263
  %1265 = vmatmul.f32.gmra.mxu0 %v1058
  %v1266 = vpop.f32.mrf.mxu0
  %v1267 = vadd.f32 0.0, %v1266
  %1268 = vmatmul.f32.gmra.mxu0 %v1061
  %v1269 = vpop.f32.mrf.mxu0
  %v1270 = vadd.f32 0.0, %v1269
  %1271 = vmatmul.f32.gmra.mxu0 %v1064
  %v1272 = vpop.f32.mrf.mxu0
  %v1273 = vadd.f32 0.0, %v1272
  %1274 = vmatmul.f32.gmra.mxu0 %v1067
  %v1275 = vpop.f32.mrf.mxu0
  %v1276 = vadd.f32 0.0, %v1275
  %1277 = vmatmul.f32.gmra.mxu0 %v1070
  %v1278 = vpop.f32.mrf.mxu0
  %v1279 = vadd.f32 0.0, %v1278
  %1280 = vmatmul.f32.gmra.mxu0 %v1073
  %v1281 = vpop.f32.mrf.mxu0
  %v1282 = vadd.f32 0.0, %v1281
  %1283 = vmatmul.f32.gmra.mxu0 %v1076
  %v1284 = vpop.f32.mrf.mxu0
  %v1285 = vadd.f32 0.0, %v1284
  %1286 = vmatmul.f32.gmra.mxu0 %v1079
  %v1287 = vpop.f32.mrf.mxu0
  %v1288 = vadd.f32 0.0, %v1287
  %1289 = vmatmul.f32.gmra.mxu0 %v1082
  %v1290 = vpop.f32.mrf.mxu0
  %v1291 = vadd.f32 0.0, %v1290
  %1292 = vmatmul.f32.gmra.mxu0 %v1085
  %v1293 = vpop.f32.mrf.mxu0
  %v1294 = vadd.f32 0.0, %v1293
  %1295 = vmatmul.f32.gmra.mxu0 %v1088
  %v1296 = vpop.f32.mrf.mxu0
  %v1297 = vadd.f32 0.0, %v1296
  %1298 = vmatmul.f32.gmra.mxu0 %v1091
  %v1299 = vpop.f32.mrf.mxu0
  %v1300 = vadd.f32 0.0, %v1299
  %1301 = vmatmul.f32.gmra.mxu0 %v1094
  %v1302 = vpop.f32.mrf.mxu0
  %v1303 = vadd.f32 0.0, %v1302
  %1304 = vmatmul.f32.gmra.mxu0 %v1097
  %v1305 = vpop.f32.mrf.mxu0
  %v1306 = vadd.f32 0.0, %v1305
  %1307 = vmatmul.f32.gmra.mxu0 %v1100
  %v1308 = vpop.f32.mrf.mxu0
  %v1309 = vadd.f32 0.0, %v1308
  %1310 = vmatmul.f32.gmra.mxu0 %v1103
  %v1311 = vpop.f32.mrf.mxu0
  %v1312 = vadd.f32 0.0, %v1311
  %1313 = vmatmul.f32.gmra.mxu0 %v1106
  %v1314 = vpop.f32.mrf.mxu0
  %v1315 = vadd.f32 0.0, %v1314
  %1316 = vmatmul.f32.gmra.mxu0 %v1109
  %v1317 = vpop.f32.mrf.mxu0
  %v1318 = vadd.f32 0.0, %v1317
  %1319 = vmatmul.f32.gmra.mxu0 %v1112
  %v1320 = vpop.f32.mrf.mxu0
  %v1321 = vadd.f32 0.0, %v1320
  %1322 = vmatmul.f32.gmra.mxu0 %v1115
  %v1323 = vpop.f32.mrf.mxu0
  %v1324 = vadd.f32 0.0, %v1323
  %1325 = vmatmul.f32.gmra.mxu0 %v1118
  %v1326 = vpop.f32.mrf.mxu0
  %v1327 = vadd.f32 0.0, %v1326
  %1328 = vmatmul.f32.gmra.mxu0 %v1121
  %v1329 = vpop.f32.mrf.mxu0
  %v1330 = vadd.f32 0.0, %v1329
  %1331 = vmatmul.f32.gmra.mxu0 %v1124
  %v1332 = vpop.f32.mrf.mxu0
  %v1333 = vadd.f32 0.0, %v1332
  %1334 = vmatmul.f32.gmra.mxu0 %v1127
  %v1335 = vpop.f32.mrf.mxu0
  %v1336 = vadd.f32 0.0, %v1335
  %1337 = vmatmul.f32.gmra.mxu0 %v1130
  %v1338 = vpop.f32.mrf.mxu0
  %v1339 = vadd.f32 0.0, %v1338
  %1340 = vmatmul.f32.gmra.mxu0 %v1133
  %v1341 = vpop.f32.mrf.mxu0
  %v1342 = vadd.f32 0.0, %v1341
  %1343 = vmatmul.f32.gmra.mxu0 %v1136
  %v1344 = vpop.f32.mrf.mxu0
  %v1345 = vadd.f32 0.0, %v1344
  %1346 = vmatmul.f32.gmra.mxu0 %v1139
  %v1347 = vpop.f32.mrf.mxu0
  %v1348 = vadd.f32 0.0, %v1347
  %1349 = vmatmul.f32.gmra.mxu0 %v1142
  %v1350 = vpop.f32.mrf.mxu0
  %v1351 = vadd.f32 0.0, %v1350
  %1352 = vmatmul.f32.gmra.mxu0 %v1145
  %v1353 = vpop.f32.mrf.mxu0
  %v1354 = vadd.f32 0.0, %v1353
  %1355 = vmatmul.f32.gmra.mxu0 %v1148
  %v1356 = vpop.f32.mrf.mxu0
  %v1357 = vadd.f32 0.0, %v1356
  %1358 = vmatmul.f32.gmra.mxu0 %v1151
  %v1359 = vpop.f32.mrf.mxu0
  %v1360 = vadd.f32 0.0, %v1359
  %1361 = vmatmul.f32.gmra.mxu0 %v1154
  %v1362 = vpop.f32.mrf.mxu0
  %v1363 = vadd.f32 0.0, %v1362
  %1364 = vmatmul.f32.gmra.mxu0 %v1157
  %v1365 = vpop.f32.mrf.mxu0
  %v1366 = vadd.f32 0.0, %v1365
  %1367 = vmatmul.f32.gmra.mxu0 %v1160
  %v1368 = vpop.f32.mrf.mxu0
  %v1369 = vadd.f32 0.0, %v1368
  %1370 = vmatmul.f32.gmra.mxu0 %v1163
  %v1371 = vpop.f32.mrf.mxu0
  %v1372 = vadd.f32 0.0, %v1371
  %1373 = vmatmul.f32.gmra.mxu0 %v1166
  %v1374 = vpop.f32.mrf.mxu0
  %v1375 = vadd.f32 0.0, %v1374
  %1376 = vmatmul.f32.gmra.mxu0 %v1169
  %v1377 = vpop.f32.mrf.mxu0
  %v1378 = vadd.f32 0.0, %v1377
  %1379 = vmatmul.f32.gmra.mxu0 %v1172
  %v1380 = vpop.f32.mrf.mxu0
  %v1381 = vadd.f32 0.0, %v1380
  %1382 = vmatmul.f32.gmra.mxu0 %v1175
  %v1383 = vpop.f32.mrf.mxu0
  %v1384 = vadd.f32 0.0, %v1383
  %1385 = vmatmul.f32.gmra.mxu0 %v1178
  %v1386 = vpop.f32.mrf.mxu0
  %v1387 = vadd.f32 0.0, %v1386
  %1388 = vmatmul.f32.gmra.mxu0 %v1181
  %v1389 = vpop.f32.mrf.mxu0
  %v1390 = vadd.f32 0.0, %v1389
  %1391 = vmatmul.f32.gmra.mxu0 %v1184
  %v1392 = vpop.f32.mrf.mxu0
  %v1393 = vadd.f32 0.0, %v1392
  %1394 = vmatmul.f32.gmra.mxu0 %v1187
  %v1395 = vpop.f32.mrf.mxu0
  %v1396 = vadd.f32 0.0, %v1395
  %1397 = vmatmul.f32.gmra.mxu0 %v1190
  %v1398 = vpop.f32.mrf.mxu0
  %v1399 = vadd.f32 0.0, %v1398
  %1400 = vmatmul.f32.gmra.mxu0 %v1193
  %v1401 = vpop.f32.mrf.mxu0
  %v1402 = vadd.f32 0.0, %v1401
  %1403 = vmatmul.f32.gmra.mxu0 %v1196
  %v1404 = vpop.f32.mrf.mxu0
  %v1405 = vadd.f32 0.0, %v1404
  %1406 = vmatmul.f32.gmra.mxu0 %v1199
  %v1407 = vpop.f32.mrf.mxu0
  %v1408 = vadd.f32 0.0, %v1407
  %1409 = vmatmul.f32.gmra.mxu0 %v1202
  %v1410 = vpop.f32.mrf.mxu0
  %v1411 = vadd.f32 0.0, %v1410
  %1412 = vmatmul.f32.gmra.mxu0 %v1205
  %v1413 = vpop.f32.mrf.mxu0
  %v1414 = vadd.f32 0.0, %v1413
  %1415 = vmatmul.f32.gmra.mxu0 %v1208
  %v1416 = vpop.f32.mrf.mxu0
  %v1417 = vadd.f32 0.0, %v1416
  %1418 = vmatmul.f32.gmra.mxu0 %v1211
  %v1419 = vpop.f32.mrf.mxu0
  %v1420 = vadd.f32 0.0, %v1419
  %1421 = vmatmul.f32.gmra.mxu0 %v1214
  %v1422 = vpop.f32.mrf.mxu0
  %v1423 = vadd.f32 0.0, %v1422
  %1424 = vmatmul.f32.gmra.mxu0 %v1217
  %v1425 = vpop.f32.mrf.mxu0
  %v1426 = vadd.f32 0.0, %v1425
  %1427 = vdwg.mxu0
  %v1428 = vadd.f32 %v766, %v1237
  %v1429 = vadd.f32 %v769, %v1240
  %v1430 = vadd.f32 %v772, %v1243
  %v1431 = vadd.f32 %v775, %v1246
  %v1432 = vadd.f32 %v778, %v1249
  %v1433 = vadd.f32 %v781, %v1252
  %v1434 = vadd.f32 %v784, %v1255
  %v1435 = vadd.f32 %v787, %v1258
  %v1436 = vadd.f32 %v790, %v1261
  %v1437 = vadd.f32 %v793, %v1264
  %v1438 = vadd.f32 %v796, %v1267
  %v1439 = vadd.f32 %v799, %v1270
  %v1440 = vadd.f32 %v802, %v1273
  %v1441 = vadd.f32 %v805, %v1276
  %v1442 = vadd.f32 %v808, %v1279
  %v1443 = vadd.f32 %v811, %v1282
  %v1444 = vadd.f32 %v814, %v1285
  %v1445 = vadd.f32 %v817, %v1288
  %v1446 = vadd.f32 %v820, %v1291
  %v1447 = vadd.f32 %v823, %v1294
  %v1448 = vadd.f32 %v826, %v1297
  %v1449 = vadd.f32 %v829, %v1300
  %v1450 = vadd.f32 %v832, %v1303
  %v1451 = vadd.f32 %v835, %v1306
  %v1452 = vadd.f32 %v838, %v1309
  %v1453 = vadd.f32 %v841, %v1312
  %v1454 = vadd.f32 %v844, %v1315
  %v1455 = vadd.f32 %v847, %v1318
  %v1456 = vadd.f32 %v850, %v1321
  %v1457 = vadd.f32 %v853, %v1324
  %v1458 = vadd.f32 %v856, %v1327
  %v1459 = vadd.f32 %v859, %v1330
  %v1460 = vadd.f32 %v862, %v1333
  %v1461 = vadd.f32 %v865, %v1336
  %v1462 = vadd.f32 %v868, %v1339
  %v1463 = vadd.f32 %v871, %v1342
  %v1464 = vadd.f32 %v874, %v1345
  %v1465 = vadd.f32 %v877, %v1348
  %v1466 = vadd.f32 %v880, %v1351
  %v1467 = vadd.f32 %v883, %v1354
  %v1468 = vadd.f32 %v886, %v1357
  %v1469 = vadd.f32 %v889, %v1360
  %v1470 = vadd.f32 %v892, %v1363
  %v1471 = vadd.f32 %v895, %v1366
  %v1472 = vadd.f32 %v898, %v1369
  %v1473 = vadd.f32 %v901, %v1372
  %v1474 = vadd.f32 %v904, %v1375
  %v1475 = vadd.f32 %v907, %v1378
  %v1476 = vadd.f32 %v910, %v1381
  %v1477 = vadd.f32 %v913, %v1384
  %v1478 = vadd.f32 %v916, %v1387
  %v1479 = vadd.f32 %v919, %v1390
  %v1480 = vadd.f32 %v922, %v1393
  %v1481 = vadd.f32 %v925, %v1396
  %v1482 = vadd.f32 %v928, %v1399
  %v1483 = vadd.f32 %v931, %v1402
  %v1484 = vadd.f32 %v934, %v1405
  %v1485 = vadd.f32 %v937, %v1408
  %v1486 = vadd.f32 %v940, %v1411
  %v1487 = vadd.f32 %v943, %v1414
  %v1488 = vadd.f32 %v946, %v1417
  %v1489 = vadd.f32 %v949, %v1420
  %v1490 = vadd.f32 %v952, %v1423
  %v1491 = vadd.f32 %v955, %v1426
  %v1492 = vld [vmem:[%s957 + $0x1] sm:$0xff]
  %v1493 = vld [vmem:[%s957 + $0x9] sm:$0xff]
  %v1494 = vld [vmem:[%s957 + $0x19] sm:$0xff]
  %v1495 = vld [vmem:[%s957 + $0x21] sm:$0xff]
  %v1496 = vld [vmem:[%s957 + $0x31] sm:$0xff]
  %v1497 = vld [vmem:[%s957 + $0x39] sm:$0xff]
  %v1498 = vld [vmem:[%s957 + $0x49] sm:$0xff]
  %v1499 = vld [vmem:[%s957 + $0x51] sm:$0xff]
  %v1500 = vld [vmem:[%s957 + $0x61] sm:$0xff]
  %v1501 = vld [vmem:[%s957 + $0x69] sm:$0xff]
  %v1502 = vld [vmem:[%s957 + $0x79] sm:$0xff]
  %v1503 = vld [vmem:[%s957 + $0x81] sm:$0xff]
  %v1504 = vld [vmem:[%s957 + $0x91] sm:$0xff]
  %v1505 = vld [vmem:[%s957 + $0x99] sm:$0xff]
  %v1506 = vld [vmem:[%s957 + $0xa9] sm:$0xff]
  %v1507 = vld [vmem:[%s957 + $0xb1] sm:$0xff]
  %v1508 = vld [vmem:[%s957 + $0xc1] sm:$0xff]
  %v1509 = vld [vmem:[%s957 + $0xc9] sm:$0xff]
  %v1510 = vld [vmem:[%s957 + $0xd9] sm:$0xff]
  %v1511 = vld [vmem:[%s957 + $0xe1] sm:$0xff]
  %v1512 = vld [vmem:[%s957 + $0xf1] sm:$0xff]
  %v1513 = vld [vmem:[%s957 + $0xf9] sm:$0xff]
  %v1514 = vld [vmem:[%s957 + $0x109] sm:$0xff]
  %v1515 = vld [vmem:[%s957 + $0x111] sm:$0xff]
  %v1516 = vld [vmem:[%s957 + $0x121] sm:$0xff]
  %v1517 = vld [vmem:[%s957 + $0x129] sm:$0xff]
  %v1518 = vld [vmem:[%s957 + $0x139] sm:$0xff]
  %v1519 = vld [vmem:[%s957 + $0x141] sm:$0xff]
  %v1520 = vld [vmem:[%s957 + $0x151] sm:$0xff]
  %v1521 = vld [vmem:[%s957 + $0x159] sm:$0xff]
  %v1522 = vld [vmem:[%s957 + $0x169] sm:$0xff]
  %v1523 = vld [vmem:[%s957 + $0x171] sm:$0xff]
  %v1524 = vld [vmem:[%s957 + $0x199] sm:$0xff]
  %v1525 = vld [vmem:[%s957 + $0x1a1] sm:$0xff]
  %v1526 = vld [vmem:[%s957 + $0x1b1] sm:$0xff]
  %v1527 = vld [vmem:[%s957 + $0x1b9] sm:$0xff]
  %v1528 = vld [vmem:[%s957 + $0x1c9] sm:$0xff]
  %v1529 = vld [vmem:[%s957 + $0x1d1] sm:$0xff]
  %v1530 = vld [vmem:[%s957 + $0x1e1] sm:$0xff]
  %v1531 = vld [vmem:[%s957 + $0x1e9] sm:$0xff]
  %v1532 = vld [vmem:[%s957 + $0x1f9] sm:$0xff]
  %v1533 = vld [vmem:[%s957 + $0x201] sm:$0xff]
  %v1534 = vld [vmem:[%s957 + $0x211] sm:$0xff]
  %v1535 = vld [vmem:[%s957 + $0x219] sm:$0xff]
  %v1536 = vld [vmem:[%s957 + $0x229] sm:$0xff]
  %v1537 = vld [vmem:[%s957 + $0x231] sm:$0xff]
  %v1538 = vld [vmem:[%s957 + $0x241] sm:$0xff]
  %v1539 = vld [vmem:[%s957 + $0x249] sm:$0xff]
  %v1540 = vld [vmem:[%s957 + $0x259] sm:$0xff]
  %v1541 = vld [vmem:[%s957 + $0x261] sm:$0xff]
  %v1542 = vld [vmem:[%s957 + $0x271] sm:$0xff]
  %v1543 = vld [vmem:[%s957 + $0x279] sm:$0xff]
  %v1544 = vld [vmem:[%s957 + $0x289] sm:$0xff]
  %v1545 = vld [vmem:[%s957 + $0x291] sm:$0xff]
  %v1546 = vld [vmem:[%s957 + $0x2a1] sm:$0xff]
  %v1547 = vld [vmem:[%s957 + $0x2a9] sm:$0xff]
  %v1548 = vld [vmem:[%s957 + $0x2b9] sm:$0xff]
  %v1549 = vld [vmem:[%s957 + $0x2c1] sm:$0xff]
  %v1550 = vld [vmem:[%s957 + $0x2d1] sm:$0xff]
  %v1551 = vld [vmem:[%s957 + $0x2d9] sm:$0xff]
  %v1552 = vld [vmem:[%s957 + $0x2e9] sm:$0xff]
  %v1553 = vld [vmem:[%s957 + $0x2f1] sm:$0xff]
  %v1554 = vld [vmem:[%s957 + $0x301] sm:$0xff]
  %v1555 = vld [vmem:[%s957 + $0x309] sm:$0xff]
  %s1556 = scalar_lea.vmem %s1, 96
  %v1557 = vld [vmem:[%s1556] sm:$0xff]
  %v1558 = vld [vmem:[%s1556 + $0x8] sm:$0xff]
  %v1559 = vld [vmem:[%s1556 + $0x10] sm:$0xff]
  %v1560 = vld [vmem:[%s1556 + $0x18] sm:$0xff]
  %v1562 = vsel %vm154, %v1492, 0
  %v1565 = vsel %vm154, %v1493, 0
  %v1568 = vsel %vm154, %v1494, 0
  %v1571 = vsel %vm154, %v1495, 0
  %v1574 = vsel %vm154, %v1496, 0
  %v1577 = vsel %vm154, %v1497, 0
  %v1580 = vsel %vm154, %v1498, 0
  %v1583 = vsel %vm154, %v1499, 0
  %v1586 = vsel %vm154, %v1500, 0
  %v1589 = vsel %vm154, %v1501, 0
  %v1592 = vsel %vm154, %v1502, 0
  %v1595 = vsel %vm154, %v1503, 0
  %v1598 = vsel %vm154, %v1504, 0
  %v1601 = vsel %vm154, %v1505, 0
  %v1604 = vsel %vm154, %v1506, 0
  %v1607 = vsel %vm154, %v1507, 0
  %v1610 = vsel %vm154, %v1508, 0
  %v1613 = vsel %vm154, %v1509, 0
  %v1616 = vsel %vm154, %v1510, 0
  %v1619 = vsel %vm154, %v1511, 0
  %v1622 = vsel %vm154, %v1512, 0
  %v1625 = vsel %vm154, %v1513, 0
  %v1628 = vsel %vm154, %v1514, 0
  %v1631 = vsel %vm154, %v1515, 0
  %v1634 = vsel %vm154, %v1516, 0
  %v1637 = vsel %vm154, %v1517, 0
  %v1640 = vsel %vm154, %v1518, 0
  %v1643 = vsel %vm154, %v1519, 0
  %v1646 = vsel %vm154, %v1520, 0
  %v1649 = vsel %vm154, %v1521, 0
  %v1652 = vsel %vm154, %v1522, 0
  %v1655 = vsel %vm154, %v1523, 0
  %v1658 = vsel %vm154, %v1524, 0
  %v1661 = vsel %vm154, %v1525, 0
  %v1664 = vsel %vm154, %v1526, 0
  %v1667 = vsel %vm154, %v1527, 0
  %v1670 = vsel %vm154, %v1528, 0
  %v1673 = vsel %vm154, %v1529, 0
  %v1676 = vsel %vm154, %v1530, 0
  %v1679 = vsel %vm154, %v1531, 0
  %v1682 = vsel %vm154, %v1532, 0
  %v1685 = vsel %vm154, %v1533, 0
  %v1688 = vsel %vm154, %v1534, 0
  %v1691 = vsel %vm154, %v1535, 0
  %v1694 = vsel %vm154, %v1536, 0
  %v1697 = vsel %vm154, %v1537, 0
  %v1700 = vsel %vm154, %v1538, 0
  %v1703 = vsel %vm154, %v1539, 0
  %v1706 = vsel %vm154, %v1540, 0
  %v1709 = vsel %vm154, %v1541, 0
  %v1712 = vsel %vm154, %v1542, 0
  %v1715 = vsel %vm154, %v1543, 0
  %v1718 = vsel %vm154, %v1544, 0
  %v1721 = vsel %vm154, %v1545, 0
  %v1724 = vsel %vm154, %v1546, 0
  %v1727 = vsel %vm154, %v1547, 0
  %v1730 = vsel %vm154, %v1548, 0
  %v1733 = vsel %vm154, %v1549, 0
  %v1736 = vsel %vm154, %v1550, 0
  %v1739 = vsel %vm154, %v1551, 0
  %v1742 = vsel %vm154, %v1552, 0
  %v1745 = vsel %vm154, %v1553, 0
  %v1748 = vsel %vm154, %v1554, 0
  %v1751 = vsel %vm154, %v1555, 0
  %1753 = vmatpush.msra.mxu0 0.0
  %1754 = vmatpush.msra.mxu0 0.0
  %1755 = vmatpush.msra.mxu0 0.0
  %1756 = vmatpush.msra.mxu0 0.0
  %1757 = vmatpush.msra.mxu0 0.0
  %1758 = vmatpush.msra.mxu0 0.0
  %1759 = vmatpush.msra.mxu0 0.0
  %1760 = vmatpush.msra.mxu0 0.0
  %1761 = vmatpush.msra.mxu0 0.0
  %1762 = vmatpush.msra.mxu0 0.0
  %1763 = vmatpush.msra.mxu0 0.0
  %1764 = vmatpush.msra.mxu0 0.0
  %1765 = vmatpush.msra.mxu0 %v1560
  %1766 = vmatpush.msra.mxu0 %v1559
  %1767 = vmatpush.msra.mxu0 %v1558
  %1768 = vmatpush.msra.mxu0 %v1557
  %1769 = vmatmul.f32.gmra.mxu0 %v1562
  %v1770 = vpop.f32.mrf.mxu0
  %v1771 = vadd.f32 0.0, %v1770
  %1772 = vmatmul.f32.gmra.mxu0 %v1565
  %v1773 = vpop.f32.mrf.mxu0
  %v1774 = vadd.f32 0.0, %v1773
  %1775 = vmatmul.f32.gmra.mxu0 %v1568
  %v1776 = vpop.f32.mrf.mxu0
  %v1777 = vadd.f32 0.0, %v1776
  %1778 = vmatmul.f32.gmra.mxu0 %v1571
  %v1779 = vpop.f32.mrf.mxu0
  %v1780 = vadd.f32 0.0, %v1779
  %1781 = vmatmul.f32.gmra.mxu0 %v1574
  %v1782 = vpop.f32.mrf.mxu0
  %v1783 = vadd.f32 0.0, %v1782
  %1784 = vmatmul.f32.gmra.mxu0 %v1577
  %v1785 = vpop.f32.mrf.mxu0
  %v1786 = vadd.f32 0.0, %v1785
  %1787 = vmatmul.f32.gmra.mxu0 %v1580
  %v1788 = vpop.f32.mrf.mxu0
  %v1789 = vadd.f32 0.0, %v1788
  %1790 = vmatmul.f32.gmra.mxu0 %v1583
  %v1791 = vpop.f32.mrf.mxu0
  %v1792 = vadd.f32 0.0, %v1791
  %1793 = vmatmul.f32.gmra.mxu0 %v1586
  %v1794 = vpop.f32.mrf.mxu0
  %v1795 = vadd.f32 0.0, %v1794
  %1796 = vmatmul.f32.gmra.mxu0 %v1589
  %v1797 = vpop.f32.mrf.mxu0
  %v1798 = vadd.f32 0.0, %v1797
  %1799 = vmatmul.f32.gmra.mxu0 %v1592
  %v1800 = vpop.f32.mrf.mxu0
  %v1801 = vadd.f32 0.0, %v1800
  %1802 = vmatmul.f32.gmra.mxu0 %v1595
  %v1803 = vpop.f32.mrf.mxu0
  %v1804 = vadd.f32 0.0, %v1803
  %1805 = vmatmul.f32.gmra.mxu0 %v1598
  %v1806 = vpop.f32.mrf.mxu0
  %v1807 = vadd.f32 0.0, %v1806
  %1808 = vmatmul.f32.gmra.mxu0 %v1601
  %v1809 = vpop.f32.mrf.mxu0
  %v1810 = vadd.f32 0.0, %v1809
  %1811 = vmatmul.f32.gmra.mxu0 %v1604
  %v1812 = vpop.f32.mrf.mxu0
  %v1813 = vadd.f32 0.0, %v1812
  %1814 = vmatmul.f32.gmra.mxu0 %v1607
  %v1815 = vpop.f32.mrf.mxu0
  %v1816 = vadd.f32 0.0, %v1815
  %1817 = vmatmul.f32.gmra.mxu0 %v1610
  %v1818 = vpop.f32.mrf.mxu0
  %v1819 = vadd.f32 0.0, %v1818
  %1820 = vmatmul.f32.gmra.mxu0 %v1613
  %v1821 = vpop.f32.mrf.mxu0
  %v1822 = vadd.f32 0.0, %v1821
  %1823 = vmatmul.f32.gmra.mxu0 %v1616
  %v1824 = vpop.f32.mrf.mxu0
  %v1825 = vadd.f32 0.0, %v1824
  %1826 = vmatmul.f32.gmra.mxu0 %v1619
  %v1827 = vpop.f32.mrf.mxu0
  %v1828 = vadd.f32 0.0, %v1827
  %1829 = vmatmul.f32.gmra.mxu0 %v1622
  %v1830 = vpop.f32.mrf.mxu0
  %v1831 = vadd.f32 0.0, %v1830
  %1832 = vmatmul.f32.gmra.mxu0 %v1625
  %v1833 = vpop.f32.mrf.mxu0
  %v1834 = vadd.f32 0.0, %v1833
  %1835 = vmatmul.f32.gmra.mxu0 %v1628
  %v1836 = vpop.f32.mrf.mxu0
  %v1837 = vadd.f32 0.0, %v1836
  %1838 = vmatmul.f32.gmra.mxu0 %v1631
  %v1839 = vpop.f32.mrf.mxu0
  %v1840 = vadd.f32 0.0, %v1839
  %1841 = vmatmul.f32.gmra.mxu0 %v1634
  %v1842 = vpop.f32.mrf.mxu0
  %v1843 = vadd.f32 0.0, %v1842
  %1844 = vmatmul.f32.gmra.mxu0 %v1637
  %v1845 = vpop.f32.mrf.mxu0
  %v1846 = vadd.f32 0.0, %v1845
  %1847 = vmatmul.f32.gmra.mxu0 %v1640
  %v1848 = vpop.f32.mrf.mxu0
  %v1849 = vadd.f32 0.0, %v1848
  %1850 = vmatmul.f32.gmra.mxu0 %v1643
  %v1851 = vpop.f32.mrf.mxu0
  %v1852 = vadd.f32 0.0, %v1851
  %1853 = vmatmul.f32.gmra.mxu0 %v1646
  %v1854 = vpop.f32.mrf.mxu0
  %v1855 = vadd.f32 0.0, %v1854
  %1856 = vmatmul.f32.gmra.mxu0 %v1649
  %v1857 = vpop.f32.mrf.mxu0
  %v1858 = vadd.f32 0.0, %v1857
  %1859 = vmatmul.f32.gmra.mxu0 %v1652
  %v1860 = vpop.f32.mrf.mxu0
  %v1861 = vadd.f32 0.0, %v1860
  %1862 = vmatmul.f32.gmra.mxu0 %v1655
  %v1863 = vpop.f32.mrf.mxu0
  %v1864 = vadd.f32 0.0, %v1863
  %1865 = vmatmul.f32.gmra.mxu0 %v1658
  %v1866 = vpop.f32.mrf.mxu0
  %v1867 = vadd.f32 0.0, %v1866
  %1868 = vmatmul.f32.gmra.mxu0 %v1661
  %v1869 = vpop.f32.mrf.mxu0
  %v1870 = vadd.f32 0.0, %v1869
  %1871 = vmatmul.f32.gmra.mxu0 %v1664
  %v1872 = vpop.f32.mrf.mxu0
  %v1873 = vadd.f32 0.0, %v1872
  %1874 = vmatmul.f32.gmra.mxu0 %v1667
  %v1875 = vpop.f32.mrf.mxu0
  %v1876 = vadd.f32 0.0, %v1875
  %1877 = vmatmul.f32.gmra.mxu0 %v1670
  %v1878 = vpop.f32.mrf.mxu0
  %v1879 = vadd.f32 0.0, %v1878
  %1880 = vmatmul.f32.gmra.mxu0 %v1673
  %v1881 = vpop.f32.mrf.mxu0
  %v1882 = vadd.f32 0.0, %v1881
  %1883 = vmatmul.f32.gmra.mxu0 %v1676
  %v1884 = vpop.f32.mrf.mxu0
  %v1885 = vadd.f32 0.0, %v1884
  %1886 = vmatmul.f32.gmra.mxu0 %v1679
  %v1887 = vpop.f32.mrf.mxu0
  %v1888 = vadd.f32 0.0, %v1887
  %1889 = vmatmul.f32.gmra.mxu0 %v1682
  %v1890 = vpop.f32.mrf.mxu0
  %v1891 = vadd.f32 0.0, %v1890
  %1892 = vmatmul.f32.gmra.mxu0 %v1685
  %v1893 = vpop.f32.mrf.mxu0
  %v1894 = vadd.f32 0.0, %v1893
  %1895 = vmatmul.f32.gmra.mxu0 %v1688
  %v1896 = vpop.f32.mrf.mxu0
  %v1897 = vadd.f32 0.0, %v1896
  %1898 = vmatmul.f32.gmra.mxu0 %v1691
  %v1899 = vpop.f32.mrf.mxu0
  %v1900 = vadd.f32 0.0, %v1899
  %1901 = vmatmul.f32.gmra.mxu0 %v1694
  %v1902 = vpop.f32.mrf.mxu0
  %v1903 = vadd.f32 0.0, %v1902
  %1904 = vmatmul.f32.gmra.mxu0 %v1697
  %v1905 = vpop.f32.mrf.mxu0
  %v1906 = vadd.f32 0.0, %v1905
  %1907 = vmatmul.f32.gmra.mxu0 %v1700
  %v1908 = vpop.f32.mrf.mxu0
  %v1909 = vadd.f32 0.0, %v1908
  %1910 = vmatmul.f32.gmra.mxu0 %v1703
  %v1911 = vpop.f32.mrf.mxu0
  %v1912 = vadd.f32 0.0, %v1911
  %1913 = vmatmul.f32.gmra.mxu0 %v1706
  %v1914 = vpop.f32.mrf.mxu0
  %v1915 = vadd.f32 0.0, %v1914
  %1916 = vmatmul.f32.gmra.mxu0 %v1709
  %v1917 = vpop.f32.mrf.mxu0
  %v1918 = vadd.f32 0.0, %v1917
  %1919 = vmatmul.f32.gmra.mxu0 %v1712
  %v1920 = vpop.f32.mrf.mxu0
  %v1921 = vadd.f32 0.0, %v1920
  %1922 = vmatmul.f32.gmra.mxu0 %v1715
  %v1923 = vpop.f32.mrf.mxu0
  %v1924 = vadd.f32 0.0, %v1923
  %1925 = vmatmul.f32.gmra.mxu0 %v1718
  %v1926 = vpop.f32.mrf.mxu0
  %v1927 = vadd.f32 0.0, %v1926
  %1928 = vmatmul.f32.gmra.mxu0 %v1721
  %v1929 = vpop.f32.mrf.mxu0
  %v1930 = vadd.f32 0.0, %v1929
  %1931 = vmatmul.f32.gmra.mxu0 %v1724
  %v1932 = vpop.f32.mrf.mxu0
  %v1933 = vadd.f32 0.0, %v1932
  %1934 = vmatmul.f32.gmra.mxu0 %v1727
  %v1935 = vpop.f32.mrf.mxu0
  %v1936 = vadd.f32 0.0, %v1935
  %1937 = vmatmul.f32.gmra.mxu0 %v1730
  %v1938 = vpop.f32.mrf.mxu0
  %v1939 = vadd.f32 0.0, %v1938
  %1940 = vmatmul.f32.gmra.mxu0 %v1733
  %v1941 = vpop.f32.mrf.mxu0
  %v1942 = vadd.f32 0.0, %v1941
  %1943 = vmatmul.f32.gmra.mxu0 %v1736
  %v1944 = vpop.f32.mrf.mxu0
  %v1945 = vadd.f32 0.0, %v1944
  %1946 = vmatmul.f32.gmra.mxu0 %v1739
  %v1947 = vpop.f32.mrf.mxu0
  %v1948 = vadd.f32 0.0, %v1947
  %1949 = vmatmul.f32.gmra.mxu0 %v1742
  %v1950 = vpop.f32.mrf.mxu0
  %v1951 = vadd.f32 0.0, %v1950
  %1952 = vmatmul.f32.gmra.mxu0 %v1745
  %v1953 = vpop.f32.mrf.mxu0
  %v1954 = vadd.f32 0.0, %v1953
  %1955 = vmatmul.f32.gmra.mxu0 %v1748
  %v1956 = vpop.f32.mrf.mxu0
  %v1957 = vadd.f32 0.0, %v1956
  %1958 = vmatmul.f32.gmra.mxu0 %v1751
  %v1959 = vpop.f32.mrf.mxu0
  %v1960 = vadd.f32 0.0, %v1959
  %1961 = vdwg.mxu0
  %v1962 = vadd.f32 %v1428, %v1771
  %v1963 = vadd.f32 %v1429, %v1774
  %v1964 = vadd.f32 %v1430, %v1777
  %v1965 = vadd.f32 %v1431, %v1780
  %v1966 = vadd.f32 %v1432, %v1783
  %v1967 = vadd.f32 %v1433, %v1786
  %v1968 = vadd.f32 %v1434, %v1789
  %v1969 = vadd.f32 %v1435, %v1792
  %v1970 = vadd.f32 %v1436, %v1795
  %v1971 = vadd.f32 %v1437, %v1798
  %v1972 = vadd.f32 %v1438, %v1801
  %v1973 = vadd.f32 %v1439, %v1804
  %v1974 = vadd.f32 %v1440, %v1807
  %v1975 = vadd.f32 %v1441, %v1810
  %v1976 = vadd.f32 %v1442, %v1813
  %v1977 = vadd.f32 %v1443, %v1816
  %v1978 = vadd.f32 %v1444, %v1819
  %v1979 = vadd.f32 %v1445, %v1822
  %v1980 = vadd.f32 %v1446, %v1825
  %v1981 = vadd.f32 %v1447, %v1828
  %v1982 = vadd.f32 %v1448, %v1831
  %v1983 = vadd.f32 %v1449, %v1834
  %v1984 = vadd.f32 %v1450, %v1837
  %v1985 = vadd.f32 %v1451, %v1840
  %v1986 = vadd.f32 %v1452, %v1843
  %v1987 = vadd.f32 %v1453, %v1846
  %v1988 = vadd.f32 %v1454, %v1849
  %v1989 = vadd.f32 %v1455, %v1852
  %v1990 = vadd.f32 %v1456, %v1855
  %v1991 = vadd.f32 %v1457, %v1858
  %v1992 = vadd.f32 %v1458, %v1861
  %v1993 = vadd.f32 %v1459, %v1864
  %v1994 = vadd.f32 %v1460, %v1867
  %v1995 = vadd.f32 %v1461, %v1870
  %v1996 = vadd.f32 %v1462, %v1873
  %v1997 = vadd.f32 %v1463, %v1876
  %v1998 = vadd.f32 %v1464, %v1879
  %v1999 = vadd.f32 %v1465, %v1882
  %v2000 = vadd.f32 %v1466, %v1885
  %v2001 = vadd.f32 %v1467, %v1888
  %v2002 = vadd.f32 %v1468, %v1891
  %v2003 = vadd.f32 %v1469, %v1894
  %v2004 = vadd.f32 %v1470, %v1897
  %v2005 = vadd.f32 %v1471, %v1900
  %v2006 = vadd.f32 %v1472, %v1903
  %v2007 = vadd.f32 %v1473, %v1906
  %v2008 = vadd.f32 %v1474, %v1909
  %v2009 = vadd.f32 %v1475, %v1912
  %v2010 = vadd.f32 %v1476, %v1915
  %v2011 = vadd.f32 %v1477, %v1918
  %v2012 = vadd.f32 %v1478, %v1921
  %v2013 = vadd.f32 %v1479, %v1924
  %v2014 = vadd.f32 %v1480, %v1927
  %v2015 = vadd.f32 %v1481, %v1930
  %v2016 = vadd.f32 %v1482, %v1933
  %v2017 = vadd.f32 %v1483, %v1936
  %v2018 = vadd.f32 %v1484, %v1939
  %v2019 = vadd.f32 %v1485, %v1942
  %v2020 = vadd.f32 %v1486, %v1945
  %v2021 = vadd.f32 %v1487, %v1948
  %v2022 = vadd.f32 %v1488, %v1951
  %v2023 = vadd.f32 %v1489, %v1954
  %v2024 = vadd.f32 %v1490, %v1957
  %v2025 = vadd.f32 %v1491, %v1960
  %v2026 = vld [vmem:[%s2] sm:$0x1]
  %v2028 = vperm.slane %v2026, 0
  %v2030 = vmul.f32 %v1962, %v2028
  %v2031 = vmul.f32 %v1963, %v2028
  %v2032 = vmul.f32 %v1964, %v2028
  %v2033 = vmul.f32 %v1965, %v2028
  %v2034 = vmul.f32 %v1966, %v2028
  %v2035 = vmul.f32 %v1967, %v2028
  %v2036 = vmul.f32 %v1968, %v2028
  %v2037 = vmul.f32 %v1969, %v2028
  %v2038 = vmul.f32 %v1970, %v2028
  %v2039 = vmul.f32 %v1971, %v2028
  %v2040 = vmul.f32 %v1972, %v2028
  %v2041 = vmul.f32 %v1973, %v2028
  %v2042 = vmul.f32 %v1974, %v2028
  %v2043 = vmul.f32 %v1975, %v2028
  %v2044 = vmul.f32 %v1976, %v2028
  %v2045 = vmul.f32 %v1977, %v2028
  %v2046 = vmul.f32 %v1978, %v2028
  %v2047 = vmul.f32 %v1979, %v2028
  %v2048 = vmul.f32 %v1980, %v2028
  %v2049 = vmul.f32 %v1981, %v2028
  %v2050 = vmul.f32 %v1982, %v2028
  %v2051 = vmul.f32 %v1983, %v2028
  %v2052 = vmul.f32 %v1984, %v2028
  %v2053 = vmul.f32 %v1985, %v2028
  %v2054 = vmul.f32 %v1986, %v2028
  %v2055 = vmul.f32 %v1987, %v2028
  %v2056 = vmul.f32 %v1988, %v2028
  %v2057 = vmul.f32 %v1989, %v2028
  %v2058 = vmul.f32 %v1990, %v2028
  %v2059 = vmul.f32 %v1991, %v2028
  %v2060 = vmul.f32 %v1992, %v2028
  %v2061 = vmul.f32 %v1993, %v2028
  %v2062 = vmul.f32 %v1994, %v2028
  %v2063 = vmul.f32 %v1995, %v2028
  %v2064 = vmul.f32 %v1996, %v2028
  %v2065 = vmul.f32 %v1997, %v2028
  %v2066 = vmul.f32 %v1998, %v2028
  %v2067 = vmul.f32 %v1999, %v2028
  %v2068 = vmul.f32 %v2000, %v2028
  %v2069 = vmul.f32 %v2001, %v2028
  %v2070 = vmul.f32 %v2002, %v2028
  %v2071 = vmul.f32 %v2003, %v2028
  %v2072 = vmul.f32 %v2004, %v2028
  %v2073 = vmul.f32 %v2005, %v2028
  %v2074 = vmul.f32 %v2006, %v2028
  %v2075 = vmul.f32 %v2007, %v2028
  %v2076 = vmul.f32 %v2008, %v2028
  %v2077 = vmul.f32 %v2009, %v2028
  %v2078 = vmul.f32 %v2010, %v2028
  %v2079 = vmul.f32 %v2011, %v2028
  %v2080 = vmul.f32 %v2012, %v2028
  %v2081 = vmul.f32 %v2013, %v2028
  %v2082 = vmul.f32 %v2014, %v2028
  %v2083 = vmul.f32 %v2015, %v2028
  %v2084 = vmul.f32 %v2016, %v2028
  %v2085 = vmul.f32 %v2017, %v2028
  %v2086 = vmul.f32 %v2018, %v2028
  %v2087 = vmul.f32 %v2019, %v2028
  %v2088 = vmul.f32 %v2020, %v2028
  %v2089 = vmul.f32 %v2021, %v2028
  %v2090 = vmul.f32 %v2022, %v2028
  %v2091 = vmul.f32 %v2023, %v2028
  %v2092 = vmul.f32 %v2024, %v2028
  %v2093 = vmul.f32 %v2025, %v2028
  %v2094 = vld [vmem:[%s3] sm:$0x1]
  %v2096 = vperm.slane %v2094, 0
  %v2098 = vadd.f32 %v2030, %v2096
  %v2099 = vadd.f32 %v2031, %v2096
  %v2100 = vadd.f32 %v2032, %v2096
  %v2101 = vadd.f32 %v2033, %v2096
  %v2102 = vadd.f32 %v2034, %v2096
  %v2103 = vadd.f32 %v2035, %v2096
  %v2104 = vadd.f32 %v2036, %v2096
  %v2105 = vadd.f32 %v2037, %v2096
  %v2106 = vadd.f32 %v2038, %v2096
  %v2107 = vadd.f32 %v2039, %v2096
  %v2108 = vadd.f32 %v2040, %v2096
  %v2109 = vadd.f32 %v2041, %v2096
  %v2110 = vadd.f32 %v2042, %v2096
  %v2111 = vadd.f32 %v2043, %v2096
  %v2112 = vadd.f32 %v2044, %v2096
  %v2113 = vadd.f32 %v2045, %v2096
  %v2114 = vadd.f32 %v2046, %v2096
  %v2115 = vadd.f32 %v2047, %v2096
  %v2116 = vadd.f32 %v2048, %v2096
  %v2117 = vadd.f32 %v2049, %v2096
  %v2118 = vadd.f32 %v2050, %v2096
  %v2119 = vadd.f32 %v2051, %v2096
  %v2120 = vadd.f32 %v2052, %v2096
  %v2121 = vadd.f32 %v2053, %v2096
  %v2122 = vadd.f32 %v2054, %v2096
  %v2123 = vadd.f32 %v2055, %v2096
  %v2124 = vadd.f32 %v2056, %v2096
  %v2125 = vadd.f32 %v2057, %v2096
  %v2126 = vadd.f32 %v2058, %v2096
  %v2127 = vadd.f32 %v2059, %v2096
  %v2128 = vadd.f32 %v2060, %v2096
  %v2129 = vadd.f32 %v2061, %v2096
  %v2130 = vadd.f32 %v2062, %v2096
  %v2131 = vadd.f32 %v2063, %v2096
  %v2132 = vadd.f32 %v2064, %v2096
  %v2133 = vadd.f32 %v2065, %v2096
  %v2134 = vadd.f32 %v2066, %v2096
  %v2135 = vadd.f32 %v2067, %v2096
  %v2136 = vadd.f32 %v2068, %v2096
  %v2137 = vadd.f32 %v2069, %v2096
  %v2138 = vadd.f32 %v2070, %v2096
  %v2139 = vadd.f32 %v2071, %v2096
  %v2140 = vadd.f32 %v2072, %v2096
  %v2141 = vadd.f32 %v2073, %v2096
  %v2142 = vadd.f32 %v2074, %v2096
  %v2143 = vadd.f32 %v2075, %v2096
  %v2144 = vadd.f32 %v2076, %v2096
  %v2145 = vadd.f32 %v2077, %v2096
  %v2146 = vadd.f32 %v2078, %v2096
  %v2147 = vadd.f32 %v2079, %v2096
  %v2148 = vadd.f32 %v2080, %v2096
  %v2149 = vadd.f32 %v2081, %v2096
  %v2150 = vadd.f32 %v2082, %v2096
  %v2151 = vadd.f32 %v2083, %v2096
  %v2152 = vadd.f32 %v2084, %v2096
  %v2153 = vadd.f32 %v2085, %v2096
  %v2154 = vadd.f32 %v2086, %v2096
  %v2155 = vadd.f32 %v2087, %v2096
  %v2156 = vadd.f32 %v2088, %v2096
  %v2157 = vadd.f32 %v2089, %v2096
  %v2158 = vadd.f32 %v2090, %v2096
  %v2159 = vadd.f32 %v2091, %v2096
  %v2160 = vadd.f32 %v2092, %v2096
  %v2161 = vadd.f32 %v2093, %v2096
  %v2162 = vmul.f32 %v2098, 0.2
  %v2163 = vmul.f32 %v2099, 0.2
  %v2164 = vmul.f32 %v2100, 0.2
  %v2165 = vmul.f32 %v2101, 0.2
  %v2166 = vmul.f32 %v2102, 0.2
  %v2167 = vmul.f32 %v2103, 0.2
  %v2168 = vmul.f32 %v2104, 0.2
  %v2169 = vmul.f32 %v2105, 0.2
  %v2170 = vmul.f32 %v2106, 0.2
  %v2171 = vmul.f32 %v2107, 0.2
  %v2172 = vmul.f32 %v2108, 0.2
  %v2173 = vmul.f32 %v2109, 0.2
  %v2174 = vmul.f32 %v2110, 0.2
  %v2175 = vmul.f32 %v2111, 0.2
  %v2176 = vmul.f32 %v2112, 0.2
  %v2177 = vmul.f32 %v2113, 0.2
  %v2178 = vmul.f32 %v2114, 0.2
  %v2179 = vmul.f32 %v2115, 0.2
  %v2180 = vmul.f32 %v2116, 0.2
  %v2181 = vmul.f32 %v2117, 0.2
  %v2182 = vmul.f32 %v2118, 0.2
  %v2183 = vmul.f32 %v2119, 0.2
  %v2184 = vmul.f32 %v2120, 0.2
  %v2185 = vmul.f32 %v2121, 0.2
  %v2186 = vmul.f32 %v2122, 0.2
  %v2187 = vmul.f32 %v2123, 0.2
  %v2188 = vmul.f32 %v2124, 0.2
  %v2189 = vmul.f32 %v2125, 0.2
  %v2190 = vmul.f32 %v2126, 0.2
  %v2191 = vmul.f32 %v2127, 0.2
  %v2192 = vmul.f32 %v2128, 0.2
  %v2193 = vmul.f32 %v2129, 0.2
  %v2194 = vmul.f32 %v2130, 0.2
  %v2195 = vmul.f32 %v2131, 0.2
  %v2196 = vmul.f32 %v2132, 0.2
  %v2197 = vmul.f32 %v2133, 0.2
  %v2198 = vmul.f32 %v2134, 0.2
  %v2199 = vmul.f32 %v2135, 0.2
  %v2200 = vmul.f32 %v2136, 0.2
  %v2201 = vmul.f32 %v2137, 0.2
  %v2202 = vmul.f32 %v2138, 0.2
  %v2203 = vmul.f32 %v2139, 0.2
  %v2204 = vmul.f32 %v2140, 0.2
  %v2205 = vmul.f32 %v2141, 0.2
  %v2206 = vmul.f32 %v2142, 0.2
  %v2207 = vmul.f32 %v2143, 0.2
  %v2208 = vmul.f32 %v2144, 0.2
  %v2209 = vmul.f32 %v2145, 0.2
  %v2210 = vmul.f32 %v2146, 0.2
  %v2211 = vmul.f32 %v2147, 0.2
  %v2212 = vmul.f32 %v2148, 0.2
  %v2213 = vmul.f32 %v2149, 0.2
  %v2214 = vmul.f32 %v2150, 0.2
  %v2215 = vmul.f32 %v2151, 0.2
  %v2216 = vmul.f32 %v2152, 0.2
  %v2217 = vmul.f32 %v2153, 0.2
  %v2218 = vmul.f32 %v2154, 0.2
  %v2219 = vmul.f32 %v2155, 0.2
  %v2220 = vmul.f32 %v2156, 0.2
  %v2221 = vmul.f32 %v2157, 0.2
  %v2222 = vmul.f32 %v2158, 0.2
  %v2223 = vmul.f32 %v2159, 0.2
  %v2224 = vmul.f32 %v2160, 0.2
  %v2225 = vmul.f32 %v2161, 0.2
  %v2226 = vmax.f32 %v2098, %v2162
  %v2227 = vmax.f32 %v2099, %v2163
  %v2228 = vmax.f32 %v2100, %v2164
  %v2229 = vmax.f32 %v2101, %v2165
  %v2230 = vmax.f32 %v2102, %v2166
  %v2231 = vmax.f32 %v2103, %v2167
  %v2232 = vmax.f32 %v2104, %v2168
  %v2233 = vmax.f32 %v2105, %v2169
  %v2234 = vmax.f32 %v2106, %v2170
  %v2235 = vmax.f32 %v2107, %v2171
  %v2236 = vmax.f32 %v2108, %v2172
  %v2237 = vmax.f32 %v2109, %v2173
  %v2238 = vmax.f32 %v2110, %v2174
  %v2239 = vmax.f32 %v2111, %v2175
  %v2240 = vmax.f32 %v2112, %v2176
  %v2241 = vmax.f32 %v2113, %v2177
  %v2242 = vmax.f32 %v2114, %v2178
  %v2243 = vmax.f32 %v2115, %v2179
  %v2244 = vmax.f32 %v2116, %v2180
  %v2245 = vmax.f32 %v2117, %v2181
  %v2246 = vmax.f32 %v2118, %v2182
  %v2247 = vmax.f32 %v2119, %v2183
  %v2248 = vmax.f32 %v2120, %v2184
  %v2249 = vmax.f32 %v2121, %v2185
  %v2250 = vmax.f32 %v2122, %v2186
  %v2251 = vmax.f32 %v2123, %v2187
  %v2252 = vmax.f32 %v2124, %v2188
  %v2253 = vmax.f32 %v2125, %v2189
  %v2254 = vmax.f32 %v2126, %v2190
  %v2255 = vmax.f32 %v2127, %v2191
  %v2256 = vmax.f32 %v2128, %v2192
  %v2257 = vmax.f32 %v2129, %v2193
  %v2258 = vmax.f32 %v2130, %v2194
  %v2259 = vmax.f32 %v2131, %v2195
  %v2260 = vmax.f32 %v2132, %v2196
  %v2261 = vmax.f32 %v2133, %v2197
  %v2262 = vmax.f32 %v2134, %v2198
  %v2263 = vmax.f32 %v2135, %v2199
  %v2264 = vmax.f32 %v2136, %v2200
  %v2265 = vmax.f32 %v2137, %v2201
  %v2266 = vmax.f32 %v2138, %v2202
  %v2267 = vmax.f32 %v2139, %v2203
  %v2268 = vmax.f32 %v2140, %v2204
  %v2269 = vmax.f32 %v2141, %v2205
  %v2270 = vmax.f32 %v2142, %v2206
  %v2271 = vmax.f32 %v2143, %v2207
  %v2272 = vmax.f32 %v2144, %v2208
  %v2273 = vmax.f32 %v2145, %v2209
  %v2274 = vmax.f32 %v2146, %v2210
  %v2275 = vmax.f32 %v2147, %v2211
  %v2276 = vmax.f32 %v2148, %v2212
  %v2277 = vmax.f32 %v2149, %v2213
  %v2278 = vmax.f32 %v2150, %v2214
  %v2279 = vmax.f32 %v2151, %v2215
  %v2280 = vmax.f32 %v2152, %v2216
  %v2281 = vmax.f32 %v2153, %v2217
  %v2282 = vmax.f32 %v2154, %v2218
  %v2283 = vmax.f32 %v2155, %v2219
  %v2284 = vmax.f32 %v2156, %v2220
  %v2285 = vmax.f32 %v2157, %v2221
  %v2286 = vmax.f32 %v2158, %v2222
  %v2287 = vmax.f32 %v2159, %v2223
  %v2288 = vmax.f32 %v2160, %v2224
  %v2289 = vmax.f32 %v2161, %v2225
  %vm2290 = vcmask 130048
  %2291 = vst.msk [vmem:[%s4] sm:$0xff] %vm2290, %v2226
  %2292 = vst.msk [vmem:[%s4 + $0x8] sm:$0xff] %vm2290, %v2227
  %2293 = vst.msk [vmem:[%s4 + $0x10] sm:$0xff] %vm2290, %v2228
  %2294 = vst.msk [vmem:[%s4 + $0x18] sm:$0xff] %vm2290, %v2229
  %2295 = vst.msk [vmem:[%s4 + $0x20] sm:$0xff] %vm2290, %v2230
  %2296 = vst.msk [vmem:[%s4 + $0x28] sm:$0xff] %vm2290, %v2231
  %2297 = vst.msk [vmem:[%s4 + $0x30] sm:$0xff] %vm2290, %v2232
  %2298 = vst.msk [vmem:[%s4 + $0x38] sm:$0xff] %vm2290, %v2233
  %2299 = vst.msk [vmem:[%s4 + $0x40] sm:$0xff] %vm2290, %v2234
  %2300 = vst.msk [vmem:[%s4 + $0x48] sm:$0xff] %vm2290, %v2235
  %2301 = vst.msk [vmem:[%s4 + $0x50] sm:$0xff] %vm2290, %v2236
  %2302 = vst.msk [vmem:[%s4 + $0x58] sm:$0xff] %vm2290, %v2237
  %2303 = vst.msk [vmem:[%s4 + $0x60] sm:$0xff] %vm2290, %v2238
  %2304 = vst.msk [vmem:[%s4 + $0x68] sm:$0xff] %vm2290, %v2239
  %2305 = vst.msk [vmem:[%s4 + $0x70] sm:$0xff] %vm2290, %v2240
  %2306 = vst.msk [vmem:[%s4 + $0x78] sm:$0xff] %vm2290, %v2241
  %2307 = vst.msk [vmem:[%s4 + $0x80] sm:$0xff] %vm2290, %v2242
  %2308 = vst.msk [vmem:[%s4 + $0x88] sm:$0xff] %vm2290, %v2243
  %2309 = vst.msk [vmem:[%s4 + $0x90] sm:$0xff] %vm2290, %v2244
  %2310 = vst.msk [vmem:[%s4 + $0x98] sm:$0xff] %vm2290, %v2245
  %2311 = vst.msk [vmem:[%s4 + $0xa0] sm:$0xff] %vm2290, %v2246
  %2312 = vst.msk [vmem:[%s4 + $0xa8] sm:$0xff] %vm2290, %v2247
  %2313 = vst.msk [vmem:[%s4 + $0xb0] sm:$0xff] %vm2290, %v2248
  %2314 = vst.msk [vmem:[%s4 + $0xb8] sm:$0xff] %vm2290, %v2249
  %2315 = vst.msk [vmem:[%s4 + $0xc0] sm:$0xff] %vm2290, %v2250
  %2316 = vst.msk [vmem:[%s4 + $0xc8] sm:$0xff] %vm2290, %v2251
  %2317 = vst.msk [vmem:[%s4 + $0xd0] sm:$0xff] %vm2290, %v2252
  %2318 = vst.msk [vmem:[%s4 + $0xd8] sm:$0xff] %vm2290, %v2253
  %2319 = vst.msk [vmem:[%s4 + $0xe0] sm:$0xff] %vm2290, %v2254
  %2320 = vst.msk [vmem:[%s4 + $0xe8] sm:$0xff] %vm2290, %v2255
  %2321 = vst.msk [vmem:[%s4 + $0xf0] sm:$0xff] %vm2290, %v2256
  %2322 = vst.msk [vmem:[%s4 + $0xf8] sm:$0xff] %vm2290, %v2257
  %2323 = vst.msk [vmem:[%s4 + $0x100] sm:$0xff] %vm2290, %v2258
  %2324 = vst.msk [vmem:[%s4 + $0x108] sm:$0xff] %vm2290, %v2259
  %2325 = vst.msk [vmem:[%s4 + $0x110] sm:$0xff] %vm2290, %v2260
  %2326 = vst.msk [vmem:[%s4 + $0x118] sm:$0xff] %vm2290, %v2261
  %2327 = vst.msk [vmem:[%s4 + $0x120] sm:$0xff] %vm2290, %v2262
  %2328 = vst.msk [vmem:[%s4 + $0x128] sm:$0xff] %vm2290, %v2263
  %2329 = vst.msk [vmem:[%s4 + $0x130] sm:$0xff] %vm2290, %v2264
  %2330 = vst.msk [vmem:[%s4 + $0x138] sm:$0xff] %vm2290, %v2265
  %2331 = vst.msk [vmem:[%s4 + $0x140] sm:$0xff] %vm2290, %v2266
  %2332 = vst.msk [vmem:[%s4 + $0x148] sm:$0xff] %vm2290, %v2267
  %2333 = vst.msk [vmem:[%s4 + $0x150] sm:$0xff] %vm2290, %v2268
  %2334 = vst.msk [vmem:[%s4 + $0x158] sm:$0xff] %vm2290, %v2269
  %2335 = vst.msk [vmem:[%s4 + $0x160] sm:$0xff] %vm2290, %v2270
  %2336 = vst.msk [vmem:[%s4 + $0x168] sm:$0xff] %vm2290, %v2271
  %2337 = vst.msk [vmem:[%s4 + $0x170] sm:$0xff] %vm2290, %v2272
  %2338 = vst.msk [vmem:[%s4 + $0x178] sm:$0xff] %vm2290, %v2273
  %2339 = vst.msk [vmem:[%s4 + $0x180] sm:$0xff] %vm2290, %v2274
  %2340 = vst.msk [vmem:[%s4 + $0x188] sm:$0xff] %vm2290, %v2275
  %2341 = vst.msk [vmem:[%s4 + $0x190] sm:$0xff] %vm2290, %v2276
  %2342 = vst.msk [vmem:[%s4 + $0x198] sm:$0xff] %vm2290, %v2277
  %2343 = vst.msk [vmem:[%s4 + $0x1a0] sm:$0xff] %vm2290, %v2278
  %2344 = vst.msk [vmem:[%s4 + $0x1a8] sm:$0xff] %vm2290, %v2279
  %2345 = vst.msk [vmem:[%s4 + $0x1b0] sm:$0xff] %vm2290, %v2280
  %2346 = vst.msk [vmem:[%s4 + $0x1b8] sm:$0xff] %vm2290, %v2281
  %2347 = vst.msk [vmem:[%s4 + $0x1c0] sm:$0xff] %vm2290, %v2282
  %2348 = vst.msk [vmem:[%s4 + $0x1c8] sm:$0xff] %vm2290, %v2283
  %2349 = vst.msk [vmem:[%s4 + $0x1d0] sm:$0xff] %vm2290, %v2284
  %2350 = vst.msk [vmem:[%s4 + $0x1d8] sm:$0xff] %vm2290, %v2285
  %2351 = vst.msk [vmem:[%s4 + $0x1e0] sm:$0xff] %vm2290, %v2286
  %2352 = vst.msk [vmem:[%s4 + $0x1e8] sm:$0xff] %vm2290, %v2287
  %2353 = vst.msk [vmem:[%s4 + $0x1f0] sm:$0xff] %vm2290, %v2288
  %2354 = vst.msk [vmem:[%s4 + $0x1f8] sm:$0xff] %vm2290, %v2289
  // Predicated region
  $region18: #{discriminator_forward.6} parent=0 // pred_check
    _
  $region19: #{discriminator_forward.6} parent=0 // pred_check_branch
    %2356 = sbr.rel (0) target = $region21
  $region20: #{discriminator_forward.6} parent=0 // pred_region
    _
  $region21: #{discriminator_forward.6} parent=0 // pred_fallthru
    _
  // Predicated region
  $region22: #{discriminator_forward.6} parent=0 // pred_check
    _
  $region23: #{discriminator_forward.6} parent=0 // pred_check_branch
    %2358 = sbr.rel (0) target = $region25
  $region24: #{discriminator_forward.6} parent=0 // pred_region
    _
  $region25: #{discriminator_forward.6} parent=0 // pred_fallthru
    _

// kernel: discriminator_forward.5
$region0: #{discriminator_forward.5}
  #allocation0 [shape = 'u32[]', space=smem, size = 0x4, offset = 0x4, fixed_abs, tag = 'smem constant byte address 0x4 - core index']
  #allocation1 [shape = 'u32[72,128]{1,0:T(1,128)}', space=vmem, size = 0x9000, scoped, tag = 'internal scratch']
  %s0 = inlined_call_operand.vmem [shape: f32[2,33,33,16], index: 0, kind: input, shape index: {}]
  %s1 = inlined_call_operand.vmem [shape: f32[2,2,16,8], index: 1, kind: input, shape index: {}]
  %s2 = inlined_call_operand.vmem [shape: f32[1,8], index: 2, kind: input, shape index: {}]
  %s3 = inlined_call_operand.vmem [shape: f32[1,8], index: 3, kind: input, shape index: {}]
  %s4 = inlined_call_operand.vmem [shape: f32[2048,8], index: 4, kind: output, shape index: {}]
  %s5 = sld [smem:[#allocation0]]
  $region26: #{discriminator_forward.5} parent=0
    _
  %s7 = ssub.s32 1, %s5
  %s8 = scalar_select 0, %s7, %s5
  // Predicated region
  $region2: #{discriminator_forward.5} parent=0 // pred_check
    _
  $region3: #{discriminator_forward.5} parent=0 // pred_check_branch
    %10 = sbr.rel (0) target = $region5
  $region4: #{discriminator_forward.5} parent=0 // pred_region
    _
  $region5: #{discriminator_forward.5} parent=0 // pred_fallthru
    _
  // Predicated region
  $region6: #{discriminator_forward.5} parent=0 // pred_check
    _
  $region7: #{discriminator_forward.5} parent=0 // pred_check_branch
    %12 = sbr.rel (0) target = $region9
  $region8: #{discriminator_forward.5} parent=0 // pred_region
    _
  $region9: #{discriminator_forward.5} parent=0 // pred_fallthru
    _
  // Predicated region
  $region10: #{discriminator_forward.5} parent=0 // pred_check
    _
  $region11: #{discriminator_forward.5} parent=0 // pred_check_branch
    %14 = sbr.rel (0) target = $region13
  $region12: #{discriminator_forward.5} parent=0 // pred_region
    _
  $region13: #{discriminator_forward.5} parent=0 // pred_fallthru
    _
  // Predicated region
  $region14: #{discriminator_forward.5} parent=0 // pred_check
    _
  $region15: #{discriminator_forward.5} parent=0 // pred_check_branch
    %16 = sbr.rel (0) target = $region17
  $region16: #{discriminator_forward.5} parent=0 // pred_region
    _
  $region17: #{discriminator_forward.5} parent=0 // pred_fallthru
    _
  %v17 = vld [vmem:[%s0] sm:$0xff]
  %v18 = vld [vmem:[%s0 + $0x8] sm:$0xff]
  %v19 = vld [vmem:[%s0 + $0x10] sm:$0xff]
  %v20 = vld [vmem:[%s0 + $0x18] sm:$0xff]
  %v21 = vld [vmem:[%s0 + $0x28] sm:$0xff]
  %v22 = vld [vmem:[%s0 + $0x30] sm:$0xff]
  %v23 = vld [vmem:[%s0 + $0x38] sm:$0xff]
  %v24 = vld [vmem:[%s0 + $0x40] sm:$0xff]
  %v25 = vld [vmem:[%s0 + $0x50] sm:$0xff]
  %v26 = vld [vmem:[%s0 + $0x58] sm:$0xff]
  %v27 = vld [vmem:[%s0 + $0x60] sm:$0xff]
  %v28 = vld [vmem:[%s0 + $0x68] sm:$0xff]
  %v29 = vld [vmem:[%s0 + $0x78] sm:$0xff]
  %v30 = vld [vmem:[%s0 + $0x80] sm:$0xff]
  %v31 = vld [vmem:[%s0 + $0x88] sm:$0xff]
  %v32 = vld [vmem:[%s0 + $0x90] sm:$0xff]
  %v33 = vld [vmem:[%s0 + $0xa0] sm:$0xff]
  %v34 = vld [vmem:[%s0 + $0xa8] sm:$0xff]
  %v35 = vld [vmem:[%s0 + $0xb0] sm:$0xff]
  %v36 = vld [vmem:[%s0 + $0xb8] sm:$0xff]
  %v37 = vld [vmem:[%s0 + $0xc8] sm:$0xff]
  %v38 = vld [vmem:[%s0 + $0xd0] sm:$0xff]
  %v39 = vld [vmem:[%s0 + $0xd8] sm:$0xff]
  %v40 = vld [vmem:[%s0 + $0xe0] sm:$0xff]
  %v41 = vld [vmem:[%s0 + $0xf0] sm:$0xff]
  %v42 = vld [vmem:[%s0 + $0xf8] sm:$0xff]
  %v43 = vld [vmem:[%s0 + $0x100] sm:$0xff]
  %v44 = vld [vmem:[%s0 + $0x108] sm:$0xff]
  %v45 = vld [vmem:[%s0 + $0x118] sm:$0xff]
  %v46 = vld [vmem:[%s0 + $0x120] sm:$0xff]
  %v47 = vld [vmem:[%s0 + $0x128] sm:$0xff]
  %v48 = vld [vmem:[%s0 + $0x130] sm:$0xff]
  %v49 = vld [vmem:[%s0 + $0x140] sm:$0xff]
  %v50 = vld [vmem:[%s0 + $0x148] sm:$0xff]
  %v51 = vld [vmem:[%s0 + $0x150] sm:$0xff]
  %v52 = vld [vmem:[%s0 + $0x158] sm:$0xff]
  %v53 = vld [vmem:[%s0 + $0x168] sm:$0xff]
  %v54 = vld [vmem:[%s0 + $0x170] sm:$0xff]
  %v55 = vld [vmem:[%s0 + $0x178] sm:$0xff]
  %v56 = vld [vmem:[%s0 + $0x180] sm:$0xff]
  %v57 = vld [vmem:[%s0 + $0x190] sm:$0xff]
  %v58 = vld [vmem:[%s0 + $0x198] sm:$0xff]
  %v59 = vld [vmem:[%s0 + $0x1a0] sm:$0xff]
  %v60 = vld [vmem:[%s0 + $0x1a8] sm:$0xff]
  %v61 = vld [vmem:[%s0 + $0x1b8] sm:$0xff]
  %v62 = vld [vmem:[%s0 + $0x1c0] sm:$0xff]
  %v63 = vld [vmem:[%s0 + $0x1c8] sm:$0xff]
  %v64 = vld [vmem:[%s0 + $0x1d0] sm:$0xff]
  %v65 = vld [vmem:[%s0 + $0x1e0] sm:$0xff]
  %v66 = vld [vmem:[%s0 + $0x1e8] sm:$0xff]
  %v67 = vld [vmem:[%s0 + $0x1f0] sm:$0xff]
  %v68 = vld [vmem:[%s0 + $0x1f8] sm:$0xff]
  %v69 = vld [vmem:[%s0 + $0x208] sm:$0xff]
  %v70 = vld [vmem:[%s0 + $0x210] sm:$0xff]
  %v71 = vld [vmem:[%s0 + $0x218] sm:$0xff]
  %v72 = vld [vmem:[%s0 + $0x220] sm:$0xff]
  %v73 = vld [vmem:[%s0 + $0x230] sm:$0xff]
  %v74 = vld [vmem:[%s0 + $0x238] sm:$0xff]
  %v75 = vld [vmem:[%s0 + $0x240] sm:$0xff]
  %v76 = vld [vmem:[%s0 + $0x248] sm:$0xff]
  %v77 = vld [vmem:[%s0 + $0x258] sm:$0xff]
  %v78 = vld [vmem:[%s0 + $0x260] sm:$0xff]
  %v79 = vld [vmem:[%s0 + $0x268] sm:$0xff]
  %v80 = vld [vmem:[%s0 + $0x270] sm:$0xff]
  %v81 = vld [vmem:[%s0 + $0x280] sm:$0xff]
  %v82 = vld [vmem:[%s0 + $0x288] sm:$0xff]
  %v83 = vld [vmem:[%s0 + $0x290] sm:$0xff]
  %v84 = vld [vmem:[%s0 + $0x298] sm:$0xff]
  %v85 = vld [vmem:[%s0 + $0x2a8] sm:$0xff]
  %v86 = vld [vmem:[%s0 + $0x2b0] sm:$0xff]
  %v87 = vld [vmem:[%s0 + $0x2b8] sm:$0xff]
  %v88 = vld [vmem:[%s0 + $0x2c0] sm:$0xff]
  %v89 = vld [vmem:[%s0 + $0x2d0] sm:$0xff]
  %v90 = vld [vmem:[%s0 + $0x2d8] sm:$0xff]
  %v91 = vld [vmem:[%s0 + $0x2e0] sm:$0xff]
  %v92 = vld [vmem:[%s0 + $0x2e8] sm:$0xff]
  %v93 = vld [vmem:[%s0 + $0x2f8] sm:$0xff]
  %v94 = vld [vmem:[%s0 + $0x300] sm:$0xff]
  %v95 = vld [vmem:[%s0 + $0x308] sm:$0xff]
  %v96 = vld [vmem:[%s0 + $0x310] sm:$0xff]
  %v97 = vld [vmem:[%s0 + $0x320] sm:$0xff]
  %v98 = vld [vmem:[%s0 + $0x328] sm:$0xff]
  %v99 = vld [vmem:[%s0 + $0x330] sm:$0xff]
  %v100 = vld [vmem:[%s0 + $0x338] sm:$0xff]
  %v101 = vld [vmem:[%s0 + $0x348] sm:$0xff]
  %v102 = vld [vmem:[%s0 + $0x350] sm:$0xff]
  %v103 = vld [vmem:[%s0 + $0x358] sm:$0xff]
  %v104 = vld [vmem:[%s0 + $0x360] sm:$0xff]
  %v105 = vld [vmem:[%s0 + $0x370] sm:$0xff]
  %v106 = vld [vmem:[%s0 + $0x378] sm:$0xff]
  %v107 = vld [vmem:[%s0 + $0x380] sm:$0xff]
  %v108 = vld [vmem:[%s0 + $0x388] sm:$0xff]
  %v109 = vld [vmem:[%s0 + $0x398] sm:$0xff]
  %v110 = vld [vmem:[%s0 + $0x3a0] sm:$0xff]
  %v111 = vld [vmem:[%s0 + $0x3a8] sm:$0xff]
  %v112 = vld [vmem:[%s0 + $0x3b0] sm:$0xff]
  %v113 = vld [vmem:[%s0 + $0x3c0] sm:$0xff]
  %v114 = vld [vmem:[%s0 + $0x3c8] sm:$0xff]
  %v115 = vld [vmem:[%s0 + $0x3d0] sm:$0xff]
  %v116 = vld [vmem:[%s0 + $0x3d8] sm:$0xff]
  %v117 = vld [vmem:[%s0 + $0x3e8] sm:$0xff]
  %v118 = vld [vmem:[%s0 + $0x3f0] sm:$0xff]
  %v119 = vld [vmem:[%s0 + $0x3f8] sm:$0xff]
  %v120 = vld [vmem:[%s0 + $0x400] sm:$0xff]
  %v121 = vld [vmem:[%s0 + $0x410] sm:$0xff]
  %v122 = vld [vmem:[%s0 + $0x418] sm:$0xff]
  %v123 = vld [vmem:[%s0 + $0x420] sm:$0xff]
  %v124 = vld [vmem:[%s0 + $0x428] sm:$0xff]
  %v125 = vld [vmem:[%s0 + $0x438] sm:$0xff]
  %v126 = vld [vmem:[%s0 + $0x440] sm:$0xff]
  %v127 = vld [vmem:[%s0 + $0x448] sm:$0xff]
  %v128 = vld [vmem:[%s0 + $0x450] sm:$0xff]
  %v129 = vld [vmem:[%s0 + $0x460] sm:$0xff]
  %v130 = vld [vmem:[%s0 + $0x468] sm:$0xff]
  %v131 = vld [vmem:[%s0 + $0x470] sm:$0xff]
  %v132 = vld [vmem:[%s0 + $0x478] sm:$0xff]
  %v133 = vld [vmem:[%s0 + $0x488] sm:$0xff]
  %v134 = vld [vmem:[%s0 + $0x490] sm:$0xff]
  %v135 = vld [vmem:[%s0 + $0x498] sm:$0xff]
  %v136 = vld [vmem:[%s0 + $0x4a0] sm:$0xff]
  %v137 = vld [vmem:[%s0 + $0x4b0] sm:$0xff]
  %v138 = vld [vmem:[%s0 + $0x4b8] sm:$0xff]
  %v139 = vld [vmem:[%s0 + $0x4c0] sm:$0xff]
  %v140 = vld [vmem:[%s0 + $0x4c8] sm:$0xff]
  %v141 = vld [vmem:[%s0 + $0x4d8] sm:$0xff]
  %v142 = vld [vmem:[%s0 + $0x4e0] sm:$0xff]
  %v143 = vld [vmem:[%s0 + $0x4e8] sm:$0xff]
  %v144 = vld [vmem:[%s0 + $0x4f0] sm:$0xff]
  %v145 = vld [vmem:[%s0 + $0x528] sm:$0xff]
  %v146 = vld [vmem:[%s0 + $0x530] sm:$0xff]
  %v147 = vld [vmem:[%s0 + $0x538] sm:$0xff]
  %v148 = vld [vmem:[%s0 + $0x540] sm:$0xff]
  %v149 = vld [vmem:[%s0 + $0x550] sm:$0xff]
  %v150 = vld [vmem:[%s0 + $0x558] sm:$0xff]
  %v151 = vld [vmem:[%s0 + $0x560] sm:$0xff]
  %v152 = vld [vmem:[%s0 + $0x568] sm:$0xff]
  %v153 = vld [vmem:[%s0 + $0x578] sm:$0xff]
  %v154 = vld [vmem:[%s0 + $0x580] sm:$0xff]
  %v155 = vld [vmem:[%s0 + $0x588] sm:$0xff]
  %v156 = vld [vmem:[%s0 + $0x590] sm:$0xff]
  %v157 = vld [vmem:[%s0 + $0x5a0] sm:$0xff]
  %v158 = vld [vmem:[%s0 + $0x5a8] sm:$0xff]
  %v159 = vld [vmem:[%s0 + $0x5b0] sm:$0xff]
  %v160 = vld [vmem:[%s0 + $0x5b8] sm:$0xff]
  %v161 = vld [vmem:[%s0 + $0x5c8] sm:$0xff]
  %v162 = vld [vmem:[%s0 + $0x5d0] sm:$0xff]
  %v163 = vld [vmem:[%s0 + $0x5d8] sm:$0xff]
  %v164 = vld [vmem:[%s0 + $0x5e0] sm:$0xff]
  %v165 = vld [vmem:[%s0 + $0x5f0] sm:$0xff]
  %v166 = vld [vmem:[%s0 + $0x5f8] sm:$0xff]
  %v167 = vld [vmem:[%s0 + $0x600] sm:$0xff]
  %v168 = vld [vmem:[%s0 + $0x608] sm:$0xff]
  %v169 = vld [vmem:[%s0 + $0x618] sm:$0xff]
  %v170 = vld [vmem:[%s0 + $0x620] sm:$0xff]
  %v171 = vld [vmem:[%s0 + $0x628] sm:$0xff]
  %v172 = vld [vmem:[%s0 + $0x630] sm:$0xff]
  %v173 = vld [vmem:[%s0 + $0x640] sm:$0xff]
  %v174 = vld [vmem:[%s0 + $0x648] sm:$0xff]
  %v175 = vld [vmem:[%s0 + $0x650] sm:$0xff]
  %v176 = vld [vmem:[%s0 + $0x658] sm:$0xff]
  %v177 = vld [vmem:[%s0 + $0x668] sm:$0xff]
  %v178 = vld [vmem:[%s0 + $0x670] sm:$0xff]
  %v179 = vld [vmem:[%s0 + $0x678] sm:$0xff]
  %v180 = vld [vmem:[%s0 + $0x680] sm:$0xff]
  %v181 = vld [vmem:[%s0 + $0x690] sm:$0xff]
  %v182 = vld [vmem:[%s0 + $0x698] sm:$0xff]
  %v183 = vld [vmem:[%s0 + $0x6a0] sm:$0xff]
  %v184 = vld [vmem:[%s0 + $0x6a8] sm:$0xff]
  %v185 = vld [vmem:[%s0 + $0x6b8] sm:$0xff]
  %v186 = vld [vmem:[%s0 + $0x6c0] sm:$0xff]
  %v187 = vld [vmem:[%s0 + $0x6c8] sm:$0xff]
  %v188 = vld [vmem:[%s0 + $0x6d0] sm:$0xff]
  %v189 = vld [vmem:[%s0 + $0x6e0] sm:$0xff]
  %v190 = vld [vmem:[%s0 + $0x6e8] sm:$0xff]
  %v191 = vld [vmem:[%s0 + $0x6f0] sm:$0xff]
  %v192 = vld [vmem:[%s0 + $0x6f8] sm:$0xff]
  %v193 = vld [vmem:[%s0 + $0x708] sm:$0xff]
  %v194 = vld [vmem:[%s0 + $0x710] sm:$0xff]
  %v195 = vld [vmem:[%s0 + $0x718] sm:$0xff]
  %v196 = vld [vmem:[%s0 + $0x720] sm:$0xff]
  %v197 = vld [vmem:[%s0 + $0x730] sm:$0xff]
  %v198 = vld [vmem:[%s0 + $0x738] sm:$0xff]
  %v199 = vld [vmem:[%s0 + $0x740] sm:$0xff]
  %v200 = vld [vmem:[%s0 + $0x748] sm:$0xff]
  %v201 = vld [vmem:[%s0 + $0x758] sm:$0xff]
  %v202 = vld [vmem:[%s0 + $0x760] sm:$0xff]
  %v203 = vld [vmem:[%s0 + $0x768] sm:$0xff]
  %v204 = vld [vmem:[%s0 + $0x770] sm:$0xff]
  %v205 = vld [vmem:[%s0 + $0x780] sm:$0xff]
  %v206 = vld [vmem:[%s0 + $0x788] sm:$0xff]
  %v207 = vld [vmem:[%s0 + $0x790] sm:$0xff]
  %v208 = vld [vmem:[%s0 + $0x798] sm:$0xff]
  %v209 = vld [vmem:[%s0 + $0x7a8] sm:$0xff]
  %v210 = vld [vmem:[%s0 + $0x7b0] sm:$0xff]
  %v211 = vld [vmem:[%s0 + $0x7b8] sm:$0xff]
  %v212 = vld [vmem:[%s0 + $0x7c0] sm:$0xff]
  %v213 = vld [vmem:[%s0 + $0x7d0] sm:$0xff]
  %v214 = vld [vmem:[%s0 + $0x7d8] sm:$0xff]
  %v215 = vld [vmem:[%s0 + $0x7e0] sm:$0xff]
  %v216 = vld [vmem:[%s0 + $0x7e8] sm:$0xff]
  %v217 = vld [vmem:[%s0 + $0x7f8] sm:$0xff]
  %v218 = vld [vmem:[%s0 + $0x800] sm:$0xff]
  %v219 = vld [vmem:[%s0 + $0x808] sm:$0xff]
  %v220 = vld [vmem:[%s0 + $0x810] sm:$0xff]
  %v221 = vld [vmem:[%s0 + $0x820] sm:$0xff]
  %v222 = vld [vmem:[%s0 + $0x828] sm:$0xff]
  %v223 = vld [vmem:[%s0 + $0x830] sm:$0xff]
  %v224 = vld [vmem:[%s0 + $0x838] sm:$0xff]
  %v225 = vld [vmem:[%s0 + $0x848] sm:$0xff]
  %v226 = vld [vmem:[%s0 + $0x850] sm:$0xff]
  %v227 = vld [vmem:[%s0 + $0x858] sm:$0xff]
  %v228 = vld [vmem:[%s0 + $0x860] sm:$0xff]
  %v229 = vld [vmem:[%s0 + $0x870] sm:$0xff]
  %v230 = vld [vmem:[%s0 + $0x878] sm:$0xff]
  %v231 = vld [vmem:[%s0 + $0x880] sm:$0xff]
  %v232 = vld [vmem:[%s0 + $0x888] sm:$0xff]
  %v233 = vld [vmem:[%s0 + $0x898] sm:$0xff]
  %v234 = vld [vmem:[%s0 + $0x8a0] sm:$0xff]
  %v235 = vld [vmem:[%s0 + $0x8a8] sm:$0xff]
  %v236 = vld [vmem:[%s0 + $0x8b0] sm:$0xff]
  %v237 = vld [vmem:[%s0 + $0x8c0] sm:$0xff]
  %v238 = vld [vmem:[%s0 + $0x8c8] sm:$0xff]
  %v239 = vld [vmem:[%s0 + $0x8d0] sm:$0xff]
  %v240 = vld [vmem:[%s0 + $0x8d8] sm:$0xff]
  %v241 = vld [vmem:[%s0 + $0x8e8] sm:$0xff]
  %v242 = vld [vmem:[%s0 + $0x8f0] sm:$0xff]
  %v243 = vld [vmem:[%s0 + $0x8f8] sm:$0xff]
  %v244 = vld [vmem:[%s0 + $0x900] sm:$0xff]
  %v245 = vld [vmem:[%s0 + $0x910] sm:$0xff]
  %v246 = vld [vmem:[%s0 + $0x918] sm:$0xff]
  %v247 = vld [vmem:[%s0 + $0x920] sm:$0xff]
  %v248 = vld [vmem:[%s0 + $0x928] sm:$0xff]
  %v249 = vld [vmem:[%s0 + $0x938] sm:$0xff]
  %v250 = vld [vmem:[%s0 + $0x940] sm:$0xff]
  %v251 = vld [vmem:[%s0 + $0x948] sm:$0xff]
  %v252 = vld [vmem:[%s0 + $0x950] sm:$0xff]
  %v253 = vld [vmem:[%s0 + $0x960] sm:$0xff]
  %v254 = vld [vmem:[%s0 + $0x968] sm:$0xff]
  %v255 = vld [vmem:[%s0 + $0x970] sm:$0xff]
  %v256 = vld [vmem:[%s0 + $0x978] sm:$0xff]
  %v257 = vld [vmem:[%s0 + $0x988] sm:$0xff]
  %v258 = vld [vmem:[%s0 + $0x990] sm:$0xff]
  %v259 = vld [vmem:[%s0 + $0x998] sm:$0xff]
  %v260 = vld [vmem:[%s0 + $0x9a0] sm:$0xff]
  %v261 = vld [vmem:[%s0 + $0x9b0] sm:$0xff]
  %v262 = vld [vmem:[%s0 + $0x9b8] sm:$0xff]
  %v263 = vld [vmem:[%s0 + $0x9c0] sm:$0xff]
  %v264 = vld [vmem:[%s0 + $0x9c8] sm:$0xff]
  %v265 = vld [vmem:[%s0 + $0x9d8] sm:$0xff]
  %v266 = vld [vmem:[%s0 + $0x9e0] sm:$0xff]
  %v267 = vld [vmem:[%s0 + $0x9e8] sm:$0xff]
  %v268 = vld [vmem:[%s0 + $0x9f0] sm:$0xff]
  %v269 = vld [vmem:[%s0 + $0xa00] sm:$0xff]
  %v270 = vld [vmem:[%s0 + $0xa08] sm:$0xff]
  %v271 = vld [vmem:[%s0 + $0xa10] sm:$0xff]
  %v272 = vld [vmem:[%s0 + $0xa18] sm:$0xff]
  %v273 = vld [vmem:[%s1] sm:$0xff]
  %v274 = vld [vmem:[%s1 + $0x8] sm:$0xff]
  %v275 = vld [vmem:[%s0 + $0x1] sm:$0xff]
  %v276 = vld [vmem:[%s0 + $0x9] sm:$0xff]
  %v277 = vld [vmem:[%s0 + $0x11] sm:$0xff]
  %v278 = vld [vmem:[%s0 + $0x19] sm:$0xff]
  %v279 = vld [vmem:[%s0 + $0x29] sm:$0xff]
  %v280 = vld [vmem:[%s0 + $0x31] sm:$0xff]
  %v281 = vld [vmem:[%s0 + $0x39] sm:$0xff]
  %v282 = vld [vmem:[%s0 + $0x41] sm:$0xff]
  %v283 = vld [vmem:[%s0 + $0x51] sm:$0xff]
  %v284 = vld [vmem:[%s0 + $0x59] sm:$0xff]
  %v285 = vld [vmem:[%s0 + $0x61] sm:$0xff]
  %v286 = vld [vmem:[%s0 + $0x69] sm:$0xff]
  %v287 = vld [vmem:[%s0 + $0x79] sm:$0xff]
  %v288 = vld [vmem:[%s0 + $0x81] sm:$0xff]
  %v289 = vld [vmem:[%s0 + $0x89] sm:$0xff]
  %v290 = vld [vmem:[%s0 + $0x91] sm:$0xff]
  %v291 = vld [vmem:[%s0 + $0xa1] sm:$0xff]
  %v292 = vld [vmem:[%s0 + $0xa9] sm:$0xff]
  %v293 = vld [vmem:[%s0 + $0xb1] sm:$0xff]
  %v294 = vld [vmem:[%s0 + $0xb9] sm:$0xff]
  %v295 = vld [vmem:[%s0 + $0xc9] sm:$0xff]
  %v296 = vld [vmem:[%s0 + $0xd1] sm:$0xff]
  %v297 = vld [vmem:[%s0 + $0xd9] sm:$0xff]
  %v298 = vld [vmem:[%s0 + $0xe1] sm:$0xff]
  %v299 = vld [vmem:[%s0 + $0xf1] sm:$0xff]
  %v300 = vld [vmem:[%s0 + $0xf9] sm:$0xff]
  %v301 = vld [vmem:[%s0 + $0x101] sm:$0xff]
  %v302 = vld [vmem:[%s0 + $0x109] sm:$0xff]
  %v303 = vld [vmem:[%s0 + $0x119] sm:$0xff]
  %v304 = vld [vmem:[%s0 + $0x121] sm:$0xff]
  %v305 = vld [vmem:[%s0 + $0x129] sm:$0xff]
  %v306 = vld [vmem:[%s0 + $0x131] sm:$0xff]
  %v307 = vld [vmem:[%s0 + $0x141] sm:$0xff]
  %v308 = vld [vmem:[%s0 + $0x149] sm:$0xff]
  %v309 = vld [vmem:[%s0 + $0x151] sm:$0xff]
  %v310 = vld [vmem:[%s0 + $0x159] sm:$0xff]
  %v311 = vld [vmem:[%s0 + $0x169] sm:$0xff]
  %v312 = vld [vmem:[%s0 + $0x171] sm:$0xff]
  %v313 = vld [vmem:[%s0 + $0x179] sm:$0xff]
  %v314 = vld [vmem:[%s0 + $0x181] sm:$0xff]
  %v315 = vld [vmem:[%s0 + $0x191] sm:$0xff]
  %v316 = vld [vmem:[%s0 + $0x199] sm:$0xff]
  %v317 = vld [vmem:[%s0 + $0x1a1] sm:$0xff]
  %v318 = vld [vmem:[%s0 + $0x1a9] sm:$0xff]
  %v319 = vld [vmem:[%s0 + $0x1b9] sm:$0xff]
  %v320 = vld [vmem:[%s0 + $0x1c1] sm:$0xff]
  %v321 = vld [vmem:[%s0 + $0x1c9] sm:$0xff]
  %v322 = vld [vmem:[%s0 + $0x1d1] sm:$0xff]
  %v323 = vld [vmem:[%s0 + $0x1e1] sm:$0xff]
  %v324 = vld [vmem:[%s0 + $0x1e9] sm:$0xff]
  %v325 = vld [vmem:[%s0 + $0x1f1] sm:$0xff]
  %v326 = vld [vmem:[%s0 + $0x1f9] sm:$0xff]
  %v327 = vld [vmem:[%s0 + $0x209] sm:$0xff]
  %v328 = vld [vmem:[%s0 + $0x211] sm:$0xff]
  %v329 = vld [vmem:[%s0 + $0x219] sm:$0xff]
  %v330 = vld [vmem:[%s0 + $0x221] sm:$0xff]
  %v331 = vld [vmem:[%s0 + $0x231] sm:$0xff]
  %v332 = vld [vmem:[%s0 + $0x239] sm:$0xff]
  %v333 = vld [vmem:[%s0 + $0x241] sm:$0xff]
  %v334 = vld [vmem:[%s0 + $0x249] sm:$0xff]
  %v335 = vld [vmem:[%s0 + $0x259] sm:$0xff]
  %v336 = vld [vmem:[%s0 + $0x261] sm:$0xff]
  %v337 = vld [vmem:[%s0 + $0x269] sm:$0xff]
  %v338 = vld [vmem:[%s0 + $0x271] sm:$0xff]
  %v339 = vld [vmem:[%s0 + $0x281] sm:$0xff]
  %v340 = vld [vmem:[%s0 + $0x289] sm:$0xff]
  %v341 = vld [vmem:[%s0 + $0x291] sm:$0xff]
  %v342 = vld [vmem:[%s0 + $0x299] sm:$0xff]
  %v343 = vld [vmem:[%s0 + $0x2a9] sm:$0xff]
  %v344 = vld [vmem:[%s0 + $0x2b1] sm:$0xff]
  %v345 = vld [vmem:[%s0 + $0x2b9] sm:$0xff]
  %v346 = vld [vmem:[%s0 + $0x2c1] sm:$0xff]
  %v347 = vld [vmem:[%s0 + $0x2d1] sm:$0xff]
  %v348 = vld [vmem:[%s0 + $0x2d9] sm:$0xff]
  %v349 = vld [vmem:[%s0 + $0x2e1] sm:$0xff]
  %v350 = vld [vmem:[%s0 + $0x2e9] sm:$0xff]
  %v351 = vld [vmem:[%s0 + $0x2f9] sm:$0xff]
  %v352 = vld [vmem:[%s0 + $0x301] sm:$0xff]
  %v353 = vld [vmem:[%s0 + $0x309] sm:$0xff]
  %v354 = vld [vmem:[%s0 + $0x311] sm:$0xff]
  %v355 = vld [vmem:[%s0 + $0x321] sm:$0xff]
  %v356 = vld [vmem:[%s0 + $0x329] sm:$0xff]
  %v357 = vld [vmem:[%s0 + $0x331] sm:$0xff]
  %v358 = vld [vmem:[%s0 + $0x339] sm:$0xff]
  %v359 = vld [vmem:[%s0 + $0x349] sm:$0xff]
  %v360 = vld [vmem:[%s0 + $0x351] sm:$0xff]
  %v361 = vld [vmem:[%s0 + $0x359] sm:$0xff]
  %v362 = vld [vmem:[%s0 + $0x361] sm:$0xff]
  %v363 = vld [vmem:[%s0 + $0x371] sm:$0xff]
  %v364 = vld [vmem:[%s0 + $0x379] sm:$0xff]
  %v365 = vld [vmem:[%s0 + $0x381] sm:$0xff]
  %v366 = vld [vmem:[%s0 + $0x389] sm:$0xff]
  %v367 = vld [vmem:[%s0 + $0x399] sm:$0xff]
  %v368 = vld [vmem:[%s0 + $0x3a1] sm:$0xff]
  %v369 = vld [vmem:[%s0 + $0x3a9] sm:$0xff]
  %v370 = vld [vmem:[%s0 + $0x3b1] sm:$0xff]
  %v371 = vld [vmem:[%s0 + $0x3c1] sm:$0xff]
  %v372 = vld [vmem:[%s0 + $0x3c9] sm:$0xff]
  %v373 = vld [vmem:[%s0 + $0x3d1] sm:$0xff]
  %v374 = vld [vmem:[%s0 + $0x3d9] sm:$0xff]
  %v375 = vld [vmem:[%s0 + $0x3e9] sm:$0xff]
  %v376 = vld [vmem:[%s0 + $0x3f1] sm:$0xff]
  %v377 = vld [vmem:[%s0 + $0x3f9] sm:$0xff]
  %v378 = vld [vmem:[%s0 + $0x401] sm:$0xff]
  %v379 = vld [vmem:[%s0 + $0x411] sm:$0xff]
  %v380 = vld [vmem:[%s0 + $0x419] sm:$0xff]
  %v381 = vld [vmem:[%s0 + $0x421] sm:$0xff]
  %v382 = vld [vmem:[%s0 + $0x429] sm:$0xff]
  %v383 = vld [vmem:[%s0 + $0x439] sm:$0xff]
  %v384 = vld [vmem:[%s0 + $0x441] sm:$0xff]
  %v385 = vld [vmem:[%s0 + $0x449] sm:$0xff]
  %v386 = vld [vmem:[%s0 + $0x451] sm:$0xff]
  %v387 = vld [vmem:[%s0 + $0x461] sm:$0xff]
  %v388 = vld [vmem:[%s0 + $0x469] sm:$0xff]
  %v389 = vld [vmem:[%s0 + $0x471] sm:$0xff]
  %v390 = vld [vmem:[%s0 + $0x479] sm:$0xff]
  %v391 = vld [vmem:[%s0 + $0x489] sm:$0xff]
  %v392 = vld [vmem:[%s0 + $0x491] sm:$0xff]
  %v393 = vld [vmem:[%s0 + $0x499] sm:$0xff]
  %v394 = vld [vmem:[%s0 + $0x4a1] sm:$0xff]
  %v395 = vld [vmem:[%s0 + $0x4b1] sm:$0xff]
  %v396 = vld [vmem:[%s0 + $0x4b9] sm:$0xff]
  %v397 = vld [vmem:[%s0 + $0x4c1] sm:$0xff]
  %v398 = vld [vmem:[%s0 + $0x4c9] sm:$0xff]
  %v399 = vld [vmem:[%s0 + $0x4d9] sm:$0xff]
  %v400 = vld [vmem:[%s0 + $0x4e1] sm:$0xff]
  %v401 = vld [vmem:[%s0 + $0x4e9] sm:$0xff]
  %v402 = vld [vmem:[%s0 + $0x4f1] sm:$0xff]
  %v403 = vld [vmem:[%s0 + $0x529] sm:$0xff]
  %v404 = vld [vmem:[%s0 + $0x531] sm:$0xff]
  %v405 = vld [vmem:[%s0 + $0x539] sm:$0xff]
  %v406 = vld [vmem:[%s0 + $0x541] sm:$0xff]
  %v407 = vld [vmem:[%s0 + $0x551] sm:$0xff]
  %v408 = vld [vmem:[%s0 + $0x559] sm:$0xff]
  %v409 = vld [vmem:[%s0 + $0x561] sm:$0xff]
  %v410 = vld [vmem:[%s0 + $0x569] sm:$0xff]
  %v411 = vld [vmem:[%s0 + $0x579] sm:$0xff]
  %v412 = vld [vmem:[%s0 + $0x581] sm:$0xff]
  %v413 = vld [vmem:[%s0 + $0x589] sm:$0xff]
  %v414 = vld [vmem:[%s0 + $0x591] sm:$0xff]
  %v415 = vld [vmem:[%s0 + $0x5a1] sm:$0xff]
  %v416 = vld [vmem:[%s0 + $0x5a9] sm:$0xff]
  %v417 = vld [vmem:[%s0 + $0x5b1] sm:$0xff]
  %v418 = vld [vmem:[%s0 + $0x5b9] sm:$0xff]
  %v419 = vld [vmem:[%s0 + $0x5c9] sm:$0xff]
  %v420 = vld [vmem:[%s0 + $0x5d1] sm:$0xff]
  %v421 = vld [vmem:[%s0 + $0x5d9] sm:$0xff]
  %v422 = vld [vmem:[%s0 + $0x5e1] sm:$0xff]
  %v423 = vld [vmem:[%s0 + $0x5f1] sm:$0xff]
  %v424 = vld [vmem:[%s0 + $0x5f9] sm:$0xff]
  %v425 = vld [vmem:[%s0 + $0x601] sm:$0xff]
  %v426 = vld [vmem:[%s0 + $0x609] sm:$0xff]
  %v427 = vld [vmem:[%s0 + $0x619] sm:$0xff]
  %v428 = vld [vmem:[%s0 + $0x621] sm:$0xff]
  %v429 = vld [vmem:[%s0 + $0x629] sm:$0xff]
  %v430 = vld [vmem:[%s0 + $0x631] sm:$0xff]
  %v431 = vld [vmem:[%s0 + $0x641] sm:$0xff]
  %v432 = vld [vmem:[%s0 + $0x649] sm:$0xff]
  %v433 = vld [vmem:[%s0 + $0x651] sm:$0xff]
  %v434 = vld [vmem:[%s0 + $0x659] sm:$0xff]
  %v435 = vld [vmem:[%s0 + $0x669] sm:$0xff]
  %v436 = vld [vmem:[%s0 + $0x671] sm:$0xff]
  %v437 = vld [vmem:[%s0 + $0x679] sm:$0xff]
  %v438 = vld [vmem:[%s0 + $0x681] sm:$0xff]
  %v439 = vld [vmem:[%s0 + $0x691] sm:$0xff]
  %v440 = vld [vmem:[%s0 + $0x699] sm:$0xff]
  %v441 = vld [vmem:[%s0 + $0x6a1] sm:$0xff]
  %v442 = vld [vmem:[%s0 + $0x6a9] sm:$0xff]
  %v443 = vld [vmem:[%s0 + $0x6b9] sm:$0xff]
  %v444 = vld [vmem:[%s0 + $0x6c1] sm:$0xff]
  %v445 = vld [vmem:[%s0 + $0x6c9] sm:$0xff]
  %v446 = vld [vmem:[%s0 + $0x6d1] sm:$0xff]
  %v447 = vld [vmem:[%s0 + $0x6e1] sm:$0xff]
  %v448 = vld [vmem:[%s0 + $0x6e9] sm:$0xff]
  %v449 = vld [vmem:[%s0 + $0x6f1] sm:$0xff]
  %v450 = vld [vmem:[%s0 + $0x6f9] sm:$0xff]
  %v451 = vld [vmem:[%s0 + $0x709] sm:$0xff]
  %v452 = vld [vmem:[%s0 + $0x711] sm:$0xff]
  %v453 = vld [vmem:[%s0 + $0x719] sm:$0xff]
  %v454 = vld [vmem:[%s0 + $0x721] sm:$0xff]
  %v455 = vld [vmem:[%s0 + $0x731] sm:$0xff]
  %v456 = vld [vmem:[%s0 + $0x739] sm:$0xff]
  %v457 = vld [vmem:[%s0 + $0x741] sm:$0xff]
  %v458 = vld [vmem:[%s0 + $0x749] sm:$0xff]
  %v459 = vld [vmem:[%s0 + $0x759] sm:$0xff]
  %v460 = vld [vmem:[%s0 + $0x761] sm:$0xff]
  %v461 = vld [vmem:[%s0 + $0x769] sm:$0xff]
  %v462 = vld [vmem:[%s0 + $0x771] sm:$0xff]
  %v463 = vld [vmem:[%s0 + $0x781] sm:$0xff]
  %v464 = vld [vmem:[%s0 + $0x789] sm:$0xff]
  %v465 = vld [vmem:[%s0 + $0x791] sm:$0xff]
  %v466 = vld [vmem:[%s0 + $0x799] sm:$0xff]
  %v467 = vld [vmem:[%s0 + $0x7a9] sm:$0xff]
  %v468 = vld [vmem:[%s0 + $0x7b1] sm:$0xff]
  %v469 = vld [vmem:[%s0 + $0x7b9] sm:$0xff]
  %v470 = vld [vmem:[%s0 + $0x7c1] sm:$0xff]
  %v471 = vld [vmem:[%s0 + $0x7d1] sm:$0xff]
  %v472 = vld [vmem:[%s0 + $0x7d9] sm:$0xff]
  %v473 = vld [vmem:[%s0 + $0x7e1] sm:$0xff]
  %v474 = vld [vmem:[%s0 + $0x7e9] sm:$0xff]
  %v475 = vld [vmem:[%s0 + $0x7f9] sm:$0xff]
  %v476 = vld [vmem:[%s0 + $0x801] sm:$0xff]
  %v477 = vld [vmem:[%s0 + $0x809] sm:$0xff]
  %v478 = vld [vmem:[%s0 + $0x811] sm:$0xff]
  %v479 = vld [vmem:[%s0 + $0x821] sm:$0xff]
  %v480 = vld [vmem:[%s0 + $0x829] sm:$0xff]
  %v481 = vld [vmem:[%s0 + $0x831] sm:$0xff]
  %v482 = vld [vmem:[%s0 + $0x839] sm:$0xff]
  %v483 = vld [vmem:[%s0 + $0x849] sm:$0xff]
  %v484 = vld [vmem:[%s0 + $0x851] sm:$0xff]
  %v485 = vld [vmem:[%s0 + $0x859] sm:$0xff]
  %v486 = vld [vmem:[%s0 + $0x861] sm:$0xff]
  %v487 = vld [vmem:[%s0 + $0x871] sm:$0xff]
  %v488 = vld [vmem:[%s0 + $0x879] sm:$0xff]
  %v489 = vld [vmem:[%s0 + $0x881] sm:$0xff]
  %v490 = vld [vmem:[%s0 + $0x889] sm:$0xff]
  %v491 = vld [vmem:[%s0 + $0x899] sm:$0xff]
  %v492 = vld [vmem:[%s0 + $0x8a1] sm:$0xff]
  %v493 = vld [vmem:[%s0 + $0x8a9] sm:$0xff]
  %v494 = vld [vmem:[%s0 + $0x8b1] sm:$0xff]
  %v495 = vld [vmem:[%s0 + $0x8c1] sm:$0xff]
  %v496 = vld [vmem:[%s0 + $0x8c9] sm:$0xff]
  %v497 = vld [vmem:[%s0 + $0x8d1] sm:$0xff]
  %v498 = vld [vmem:[%s0 + $0x8d9] sm:$0xff]
  %v499 = vld [vmem:[%s0 + $0x8e9] sm:$0xff]
  %v500 = vld [vmem:[%s0 + $0x8f1] sm:$0xff]
  %v501 = vld [vmem:[%s0 + $0x8f9] sm:$0xff]
  %v502 = vld [vmem:[%s0 + $0x901] sm:$0xff]
  %v503 = vld [vmem:[%s0 + $0x911] sm:$0xff]
  %v504 = vld [vmem:[%s0 + $0x919] sm:$0xff]
  %v505 = vld [vmem:[%s0 + $0x921] sm:$0xff]
  %v506 = vld [vmem:[%s0 + $0x929] sm:$0xff]
  %v507 = vld [vmem:[%s0 + $0x939] sm:$0xff]
  %v508 = vld [vmem:[%s0 + $0x941] sm:$0xff]
  %v509 = vld [vmem:[%s0 + $0x949] sm:$0xff]
  %v510 = vld [vmem:[%s0 + $0x951] sm:$0xff]
  %v511 = vld [vmem:[%s0 + $0x961] sm:$0xff]
  %v512 = vld [vmem:[%s0 + $0x969] sm:$0xff]
  %v513 = vld [vmem:[%s0 + $0x971] sm:$0xff]
  %v514 = vld [vmem:[%s0 + $0x979] sm:$0xff]
  %v515 = vld [vmem:[%s0 + $0x989] sm:$0xff]
  %v516 = vld [vmem:[%s0 + $0x991] sm:$0xff]
  %v517 = vld [vmem:[%s0 + $0x999] sm:$0xff]
  %v518 = vld [vmem:[%s0 + $0x9a1] sm:$0xff]
  %v519 = vld [vmem:[%s0 + $0x9b1] sm:$0xff]
  %v520 = vld [vmem:[%s0 + $0x9b9] sm:$0xff]
  %v521 = vld [vmem:[%s0 + $0x9c1] sm:$0xff]
  %v522 = vld [vmem:[%s0 + $0x9c9] sm:$0xff]
  %v523 = vld [vmem:[%s0 + $0x9d9] sm:$0xff]
  %v524 = vld [vmem:[%s0 + $0x9e1] sm:$0xff]
  %v525 = vld [vmem:[%s0 + $0x9e9] sm:$0xff]
  %v526 = vld [vmem:[%s0 + $0x9f1] sm:$0xff]
  %v527 = vld [vmem:[%s0 + $0xa01] sm:$0xff]
  %v528 = vld [vmem:[%s0 + $0xa09] sm:$0xff]
  %v529 = vld [vmem:[%s0 + $0xa11] sm:$0xff]
  %v530 = vld [vmem:[%s0 + $0xa19] sm:$0xff]
  %s531 = scalar_lea.vmem %s1, 16
  %v532 = vld [vmem:[%s531] sm:$0xff]
  %v533 = vld [vmem:[%s531 + $0x8] sm:$0xff]
  %vm534 = vcmask 130048
  %v536 = vsel %vm534, %v275, 0
  %v539 = vsel %vm534, %v276, 0
  %v542 = vsel %vm534, %v277, 0
  %v545 = vsel %vm534, %v278, 0
  %v548 = vsel %vm534, %v279, 0
  %v551 = vsel %vm534, %v280, 0
  %v554 = vsel %vm534, %v281, 0
  %v557 = vsel %vm534, %v282, 0
  %v560 = vsel %vm534, %v283, 0
  %v563 = vsel %vm534, %v284, 0
  %v566 = vsel %vm534, %v285, 0
  %v569 = vsel %vm534, %v286, 0
  %v572 = vsel %vm534, %v287, 0
  %v575 = vsel %vm534, %v288, 0
  %v578 = vsel %vm534, %v289, 0
  %v581 = vsel %vm534, %v290, 0
  %v584 = vsel %vm534, %v291, 0
  %v587 = vsel %vm534, %v292, 0
  %v590 = vsel %vm534, %v293, 0
  %v593 = vsel %vm534, %v294, 0
  %v596 = vsel %vm534, %v295, 0
  %v599 = vsel %vm534, %v296, 0
  %v602 = vsel %vm534, %v297, 0
  %v605 = vsel %vm534, %v298, 0
  %v608 = vsel %vm534, %v299, 0
  %v611 = vsel %vm534, %v300, 0
  %v614 = vsel %vm534, %v301, 0
  %v617 = vsel %vm534, %v302, 0
  %v620 = vsel %vm534, %v303, 0
  %v623 = vsel %vm534, %v304, 0
  %v626 = vsel %vm534, %v305, 0
  %v629 = vsel %vm534, %v306, 0
  %v632 = vsel %vm534, %v307, 0
  %v635 = vsel %vm534, %v308, 0
  %v638 = vsel %vm534, %v309, 0
  %v641 = vsel %vm534, %v310, 0
  %v644 = vsel %vm534, %v311, 0
  %v647 = vsel %vm534, %v312, 0
  %v650 = vsel %vm534, %v313, 0
  %v653 = vsel %vm534, %v314, 0
  %v656 = vsel %vm534, %v315, 0
  %v659 = vsel %vm534, %v316, 0
  %v662 = vsel %vm534, %v317, 0
  %v665 = vsel %vm534, %v318, 0
  %v668 = vsel %vm534, %v319, 0
  %v671 = vsel %vm534, %v320, 0
  %v674 = vsel %vm534, %v321, 0
  %v677 = vsel %vm534, %v322, 0
  %v680 = vsel %vm534, %v323, 0
  %v683 = vsel %vm534, %v324, 0
  %v686 = vsel %vm534, %v325, 0
  %v689 = vsel %vm534, %v326, 0
  %v692 = vsel %vm534, %v327, 0
  %v695 = vsel %vm534, %v328, 0
  %v698 = vsel %vm534, %v329, 0
  %v701 = vsel %vm534, %v330, 0
  %v704 = vsel %vm534, %v331, 0
  %v707 = vsel %vm534, %v332, 0
  %v710 = vsel %vm534, %v333, 0
  %v713 = vsel %vm534, %v334, 0
  %v716 = vsel %vm534, %v335, 0
  %v719 = vsel %vm534, %v336, 0
  %v722 = vsel %vm534, %v337, 0
  %v725 = vsel %vm534, %v338, 0
  %v728 = vsel %vm534, %v339, 0
  %v731 = vsel %vm534, %v340, 0
  %v734 = vsel %vm534, %v341, 0
  %v737 = vsel %vm534, %v342, 0
  %v740 = vsel %vm534, %v343, 0
  %v743 = vsel %vm534, %v344, 0
  %v746 = vsel %vm534, %v345, 0
  %v749 = vsel %vm534, %v346, 0
  %v752 = vsel %vm534, %v347, 0
  %v755 = vsel %vm534, %v348, 0
  %v758 = vsel %vm534, %v349, 0
  %v761 = vsel %vm534, %v350, 0
  %v764 = vsel %vm534, %v351, 0
  %v767 = vsel %vm534, %v352, 0
  %v770 = vsel %vm534, %v353, 0
  %v773 = vsel %vm534, %v354, 0
  %v776 = vsel %vm534, %v355, 0
  %v779 = vsel %vm534, %v356, 0
  %v782 = vsel %vm534, %v357, 0
  %v785 = vsel %vm534, %v358, 0
  %v788 = vsel %vm534, %v359, 0
  %v791 = vsel %vm534, %v360, 0
  %v794 = vsel %vm534, %v361, 0
  %v797 = vsel %vm534, %v362, 0
  %v800 = vsel %vm534, %v363, 0
  %v803 = vsel %vm534, %v364, 0
  %v806 = vsel %vm534, %v365, 0
  %v809 = vsel %vm534, %v366, 0
  %v812 = vsel %vm534, %v367, 0
  %v815 = vsel %vm534, %v368, 0
  %v818 = vsel %vm534, %v369, 0
  %v821 = vsel %vm534, %v370, 0
  %v824 = vsel %vm534, %v371, 0
  %v827 = vsel %vm534, %v372, 0
  %v830 = vsel %vm534, %v373, 0
  %v833 = vsel %vm534, %v374, 0
  %v836 = vsel %vm534, %v375, 0
  %v839 = vsel %vm534, %v376, 0
  %v842 = vsel %vm534, %v377, 0
  %v845 = vsel %vm534, %v378, 0
  %v848 = vsel %vm534, %v379, 0
  %v851 = vsel %vm534, %v380, 0
  %v854 = vsel %vm534, %v381, 0
  %v857 = vsel %vm534, %v382, 0
  %v860 = vsel %vm534, %v383, 0
  %v863 = vsel %vm534, %v384, 0
  %v866 = vsel %vm534, %v385, 0
  %v869 = vsel %vm534, %v386, 0
  %v872 = vsel %vm534, %v387, 0
  %v875 = vsel %vm534, %v388, 0
  %v878 = vsel %vm534, %v389, 0
  %v881 = vsel %vm534, %v390, 0
  %v884 = vsel %vm534, %v391, 0
  %v887 = vsel %vm534, %v392, 0
  %v890 = vsel %vm534, %v393, 0
  %v893 = vsel %vm534, %v394, 0
  %v896 = vsel %vm534, %v395, 0
  %v899 = vsel %vm534, %v396, 0
  %v902 = vsel %vm534, %v397, 0
  %v905 = vsel %vm534, %v398, 0
  %v908 = vsel %vm534, %v399, 0
  %v911 = vsel %vm534, %v400, 0
  %v914 = vsel %vm534, %v401, 0
  %v917 = vsel %vm534, %v402, 0
  %v920 = vsel %vm534, %v403, 0
  %v923 = vsel %vm534, %v404, 0
  %v926 = vsel %vm534, %v405, 0
  %v929 = vsel %vm534, %v406, 0
  %v932 = vsel %vm534, %v407, 0
  %v935 = vsel %vm534, %v408, 0
  %v938 = vsel %vm534, %v409, 0
  %v941 = vsel %vm534, %v410, 0
  %v944 = vsel %vm534, %v411, 0
  %v947 = vsel %vm534, %v412, 0
  %v950 = vsel %vm534, %v413, 0
  %v953 = vsel %vm534, %v414, 0
  %v956 = vsel %vm534, %v415, 0
  %v959 = vsel %vm534, %v416, 0
  %v962 = vsel %vm534, %v417, 0
  %v965 = vsel %vm534, %v418, 0
  %v968 = vsel %vm534, %v419, 0
  %v971 = vsel %vm534, %v420, 0
  %v974 = vsel %vm534, %v421, 0
  %v977 = vsel %vm534, %v422, 0
  %v980 = vsel %vm534, %v423, 0
  %v983 = vsel %vm534, %v424, 0
  %v986 = vsel %vm534, %v425, 0
  %v989 = vsel %vm534, %v426, 0
  %v992 = vsel %vm534, %v427, 0
  %v995 = vsel %vm534, %v428, 0
  %v998 = vsel %vm534, %v429, 0
  %v1001 = vsel %vm534, %v430, 0
  %v1004 = vsel %vm534, %v431, 0
  %v1007 = vsel %vm534, %v432, 0
  %v1010 = vsel %vm534, %v433, 0
  %v1013 = vsel %vm534, %v434, 0
  %v1016 = vsel %vm534, %v435, 0
  %v1019 = vsel %vm534, %v436, 0
  %v1022 = vsel %vm534, %v437, 0
  %v1025 = vsel %vm534, %v438, 0
  %v1028 = vsel %vm534, %v439, 0
  %v1031 = vsel %vm534, %v440, 0
  %v1034 = vsel %vm534, %v441, 0
  %v1037 = vsel %vm534, %v442, 0
  %v1040 = vsel %vm534, %v443, 0
  %v1043 = vsel %vm534, %v444, 0
  %v1046 = vsel %vm534, %v445, 0
  %v1049 = vsel %vm534, %v446, 0
  %v1052 = vsel %vm534, %v447, 0
  %v1055 = vsel %vm534, %v448, 0
  %v1058 = vsel %vm534, %v449, 0
  %v1061 = vsel %vm534, %v450, 0
  %v1064 = vsel %vm534, %v451, 0
  %v1067 = vsel %vm534, %v452, 0
  %v1070 = vsel %vm534, %v453, 0
  %v1073 = vsel %vm534, %v454, 0
  %v1076 = vsel %vm534, %v455, 0
  %v1079 = vsel %vm534, %v456, 0
  %v1082 = vsel %vm534, %v457, 0
  %v1085 = vsel %vm534, %v458, 0
  %v1088 = vsel %vm534, %v459, 0
  %v1091 = vsel %vm534, %v460, 0
  %v1094 = vsel %vm534, %v461, 0
  %v1097 = vsel %vm534, %v462, 0
  %v1100 = vsel %vm534, %v463, 0
  %v1103 = vsel %vm534, %v464, 0
  %v1106 = vsel %vm534, %v465, 0
  %v1109 = vsel %vm534, %v466, 0
  %v1112 = vsel %vm534, %v467, 0
  %v1115 = vsel %vm534, %v468, 0
  %v1118 = vsel %vm534, %v469, 0
  %v1121 = vsel %vm534, %v470, 0
  %v1124 = vsel %vm534, %v471, 0
  %v1127 = vsel %vm534, %v472, 0
  %v1130 = vsel %vm534, %v473, 0
  %v1133 = vsel %vm534, %v474, 0
  %v1136 = vsel %vm534, %v475, 0
  %v1139 = vsel %vm534, %v476, 0
  %v1142 = vsel %vm534, %v477, 0
  %v1145 = vsel %vm534, %v478, 0
  %v1148 = vsel %vm534, %v479, 0
  %v1151 = vsel %vm534, %v480, 0
  %v1154 = vsel %vm534, %v481, 0
  %v1157 = vsel %vm534, %v482, 0
  %v1160 = vsel %vm534, %v483, 0
  %v1163 = vsel %vm534, %v484, 0
  %v1166 = vsel %vm534, %v485, 0
  %v1169 = vsel %vm534, %v486, 0
  %v1172 = vsel %vm534, %v487, 0
  %v1175 = vsel %vm534, %v488, 0
  %v1178 = vsel %vm534, %v489, 0
  %v1181 = vsel %vm534, %v490, 0
  %v1184 = vsel %vm534, %v491, 0
  %v1187 = vsel %vm534, %v492, 0
  %v1190 = vsel %vm534, %v493, 0
  %v1193 = vsel %vm534, %v494, 0
  %v1196 = vsel %vm534, %v495, 0
  %v1199 = vsel %vm534, %v496, 0
  %v1202 = vsel %vm534, %v497, 0
  %v1205 = vsel %vm534, %v498, 0
  %v1208 = vsel %vm534, %v499, 0
  %v1211 = vsel %vm534, %v500, 0
  %v1214 = vsel %vm534, %v501, 0
  %v1217 = vsel %vm534, %v502, 0
  %v1220 = vsel %vm534, %v503, 0
  %v1223 = vsel %vm534, %v504, 0
  %v1226 = vsel %vm534, %v505, 0
  %v1229 = vsel %vm534, %v506, 0
  %v1232 = vsel %vm534, %v507, 0
  %v1235 = vsel %vm534, %v508, 0
  %v1238 = vsel %vm534, %v509, 0
  %v1241 = vsel %vm534, %v510, 0
  %v1244 = vsel %vm534, %v511, 0
  %v1247 = vsel %vm534, %v512, 0
  %v1250 = vsel %vm534, %v513, 0
  %v1253 = vsel %vm534, %v514, 0
  %v1256 = vsel %vm534, %v515, 0
  %v1259 = vsel %vm534, %v516, 0
  %v1262 = vsel %vm534, %v517, 0
  %v1265 = vsel %vm534, %v518, 0
  %v1268 = vsel %vm534, %v519, 0
  %v1271 = vsel %vm534, %v520, 0
  %v1274 = vsel %vm534, %v521, 0
  %v1277 = vsel %vm534, %v522, 0
  %v1280 = vsel %vm534, %v523, 0
  %v1283 = vsel %vm534, %v524, 0
  %v1286 = vsel %vm534, %v525, 0
  %v1289 = vsel %vm534, %v526, 0
  %v1292 = vsel %vm534, %v527, 0
  %v1295 = vsel %vm534, %v528, 0
  %v1298 = vsel %vm534, %v529, 0
  %v1301 = vsel %vm534, %v530, 0
  %1303 = vmatpush.msra.mxu0 0.0
  %1304 = vmatpush.msra.mxu0 0.0
  %1305 = vmatpush.msra.mxu0 0.0
  %1306 = vmatpush.msra.mxu0 0.0
  %1307 = vmatpush.msra.mxu0 0.0
  %1308 = vmatpush.msra.mxu0 0.0
  %1309 = vmatpush.msra.mxu0 0.0
  %1310 = vmatpush.msra.mxu0 0.0
  %1311 = vmatpush.msra.mxu0 0.0
  %1312 = vmatpush.msra.mxu0 0.0
  %1313 = vmatpush.msra.mxu0 0.0
  %1314 = vmatpush.msra.mxu0 0.0
  %1315 = vmatpush.msra.mxu0 0.0
  %1316 = vmatpush.msra.mxu0 0.0
  %1317 = vmatpush.msra.mxu0 %v533
  %1318 = vmatpush.msra.mxu0 %v532
  %1319 = vmatmul.f32.gmra.mxu0 %v536
  %v1320 = vpop.f32.mrf.mxu0
  %v1321 = vadd.f32 0.0, %v1320
  %1322 = vmatmul.f32.gmra.mxu0 %v539
  %v1323 = vpop.f32.mrf.mxu0
  %v1324 = vadd.f32 0.0, %v1323
  %1325 = vmatmul.f32.gmra.mxu0 %v542
  %v1326 = vpop.f32.mrf.mxu0
  %v1327 = vadd.f32 0.0, %v1326
  %1328 = vmatmul.f32.gmra.mxu0 %v545
  %v1329 = vpop.f32.mrf.mxu0
  %v1330 = vadd.f32 0.0, %v1329
  %1331 = vmatmul.f32.gmra.mxu0 %v548
  %v1332 = vpop.f32.mrf.mxu0
  %v1333 = vadd.f32 0.0, %v1332
  %1334 = vmatmul.f32.gmra.mxu0 %v551
  %v1335 = vpop.f32.mrf.mxu0
  %v1336 = vadd.f32 0.0, %v1335
  %1337 = vmatmul.f32.gmra.mxu0 %v554
  %v1338 = vpop.f32.mrf.mxu0
  %v1339 = vadd.f32 0.0, %v1338
  %1340 = vmatmul.f32.gmra.mxu0 %v557
  %v1341 = vpop.f32.mrf.mxu0
  %v1342 = vadd.f32 0.0, %v1341
  %1343 = vmatmul.f32.gmra.mxu0 %v560
  %v1344 = vpop.f32.mrf.mxu0
  %v1345 = vadd.f32 0.0, %v1344
  %1346 = vmatmul.f32.gmra.mxu0 %v563
  %v1347 = vpop.f32.mrf.mxu0
  %v1348 = vadd.f32 0.0, %v1347
  %1349 = vmatmul.f32.gmra.mxu0 %v566
  %v1350 = vpop.f32.mrf.mxu0
  %v1351 = vadd.f32 0.0, %v1350
  %1352 = vmatmul.f32.gmra.mxu0 %v569
  %v1353 = vpop.f32.mrf.mxu0
  %v1354 = vadd.f32 0.0, %v1353
  %1355 = vmatmul.f32.gmra.mxu0 %v572
  %v1356 = vpop.f32.mrf.mxu0
  %v1357 = vadd.f32 0.0, %v1356
  %1358 = vmatmul.f32.gmra.mxu0 %v575
  %v1359 = vpop.f32.mrf.mxu0
  %v1360 = vadd.f32 0.0, %v1359
  %1361 = vmatmul.f32.gmra.mxu0 %v578
  %v1362 = vpop.f32.mrf.mxu0
  %v1363 = vadd.f32 0.0, %v1362
  %1364 = vmatmul.f32.gmra.mxu0 %v581
  %v1365 = vpop.f32.mrf.mxu0
  %v1366 = vadd.f32 0.0, %v1365
  %1367 = vmatmul.f32.gmra.mxu0 %v584
  %v1368 = vpop.f32.mrf.mxu0
  %v1369 = vadd.f32 0.0, %v1368
  %1370 = vmatmul.f32.gmra.mxu0 %v587
  %v1371 = vpop.f32.mrf.mxu0
  %v1372 = vadd.f32 0.0, %v1371
  %1373 = vmatmul.f32.gmra.mxu0 %v590
  %v1374 = vpop.f32.mrf.mxu0
  %v1375 = vadd.f32 0.0, %v1374
  %1376 = vmatmul.f32.gmra.mxu0 %v593
  %v1377 = vpop.f32.mrf.mxu0
  %v1378 = vadd.f32 0.0, %v1377
  %1379 = vmatmul.f32.gmra.mxu0 %v596
  %v1380 = vpop.f32.mrf.mxu0
  %v1381 = vadd.f32 0.0, %v1380
  %1382 = vmatmul.f32.gmra.mxu0 %v599
  %v1383 = vpop.f32.mrf.mxu0
  %v1384 = vadd.f32 0.0, %v1383
  %1385 = vmatmul.f32.gmra.mxu0 %v602
  %v1386 = vpop.f32.mrf.mxu0
  %v1387 = vadd.f32 0.0, %v1386
  %1388 = vmatmul.f32.gmra.mxu0 %v605
  %v1389 = vpop.f32.mrf.mxu0
  %v1390 = vadd.f32 0.0, %v1389
  %1391 = vmatmul.f32.gmra.mxu0 %v608
  %v1392 = vpop.f32.mrf.mxu0
  %v1393 = vadd.f32 0.0, %v1392
  %1394 = vmatmul.f32.gmra.mxu0 %v611
  %v1395 = vpop.f32.mrf.mxu0
  %v1396 = vadd.f32 0.0, %v1395
  %1397 = vmatmul.f32.gmra.mxu0 %v614
  %v1398 = vpop.f32.mrf.mxu0
  %v1399 = vadd.f32 0.0, %v1398
  %1400 = vmatmul.f32.gmra.mxu0 %v617
  %v1401 = vpop.f32.mrf.mxu0
  %v1402 = vadd.f32 0.0, %v1401
  %1403 = vmatmul.f32.gmra.mxu0 %v620
  %v1404 = vpop.f32.mrf.mxu0
  %v1405 = vadd.f32 0.0, %v1404
  %1406 = vmatmul.f32.gmra.mxu0 %v623
  %v1407 = vpop.f32.mrf.mxu0
  %v1408 = vadd.f32 0.0, %v1407
  %1409 = vmatmul.f32.gmra.mxu0 %v626
  %v1410 = vpop.f32.mrf.mxu0
  %v1411 = vadd.f32 0.0, %v1410
  %1412 = vmatmul.f32.gmra.mxu0 %v629
  %v1413 = vpop.f32.mrf.mxu0
  %v1414 = vadd.f32 0.0, %v1413
  %1415 = vmatmul.f32.gmra.mxu0 %v632
  %v1416 = vpop.f32.mrf.mxu0
  %v1417 = vadd.f32 0.0, %v1416
  %1418 = vmatmul.f32.gmra.mxu0 %v635
  %v1419 = vpop.f32.mrf.mxu0
  %v1420 = vadd.f32 0.0, %v1419
  %1421 = vmatmul.f32.gmra.mxu0 %v638
  %v1422 = vpop.f32.mrf.mxu0
  %v1423 = vadd.f32 0.0, %v1422
  %1424 = vmatmul.f32.gmra.mxu0 %v641
  %v1425 = vpop.f32.mrf.mxu0
  %v1426 = vadd.f32 0.0, %v1425
  %1427 = vmatmul.f32.gmra.mxu0 %v644
  %v1428 = vpop.f32.mrf.mxu0
  %v1429 = vadd.f32 0.0, %v1428
  %1430 = vmatmul.f32.gmra.mxu0 %v647
  %v1431 = vpop.f32.mrf.mxu0
  %v1432 = vadd.f32 0.0, %v1431
  %1433 = vmatmul.f32.gmra.mxu0 %v650
  %v1434 = vpop.f32.mrf.mxu0
  %v1435 = vadd.f32 0.0, %v1434
  %1436 = vmatmul.f32.gmra.mxu0 %v653
  %v1437 = vpop.f32.mrf.mxu0
  %v1438 = vadd.f32 0.0, %v1437
  %1439 = vmatmul.f32.gmra.mxu0 %v656
  %v1440 = vpop.f32.mrf.mxu0
  %v1441 = vadd.f32 0.0, %v1440
  %1442 = vmatmul.f32.gmra.mxu0 %v659
  %v1443 = vpop.f32.mrf.mxu0
  %v1444 = vadd.f32 0.0, %v1443
  %1445 = vmatmul.f32.gmra.mxu0 %v662
  %v1446 = vpop.f32.mrf.mxu0
  %v1447 = vadd.f32 0.0, %v1446
  %1448 = vmatmul.f32.gmra.mxu0 %v665
  %v1449 = vpop.f32.mrf.mxu0
  %v1450 = vadd.f32 0.0, %v1449
  %1451 = vmatmul.f32.gmra.mxu0 %v668
  %v1452 = vpop.f32.mrf.mxu0
  %v1453 = vadd.f32 0.0, %v1452
  %1454 = vmatmul.f32.gmra.mxu0 %v671
  %v1455 = vpop.f32.mrf.mxu0
  %v1456 = vadd.f32 0.0, %v1455
  %1457 = vmatmul.f32.gmra.mxu0 %v674
  %v1458 = vpop.f32.mrf.mxu0
  %v1459 = vadd.f32 0.0, %v1458
  %1460 = vmatmul.f32.gmra.mxu0 %v677
  %v1461 = vpop.f32.mrf.mxu0
  %v1462 = vadd.f32 0.0, %v1461
  %1463 = vmatmul.f32.gmra.mxu0 %v680
  %v1464 = vpop.f32.mrf.mxu0
  %v1465 = vadd.f32 0.0, %v1464
  %1466 = vmatmul.f32.gmra.mxu0 %v683
  %v1467 = vpop.f32.mrf.mxu0
  %v1468 = vadd.f32 0.0, %v1467
  %1469 = vmatmul.f32.gmra.mxu0 %v686
  %v1470 = vpop.f32.mrf.mxu0
  %v1471 = vadd.f32 0.0, %v1470
  %1472 = vmatmul.f32.gmra.mxu0 %v689
  %v1473 = vpop.f32.mrf.mxu0
  %v1474 = vadd.f32 0.0, %v1473
  %1475 = vmatmul.f32.gmra.mxu0 %v692
  %v1476 = vpop.f32.mrf.mxu0
  %v1477 = vadd.f32 0.0, %v1476
  %1478 = vmatmul.f32.gmra.mxu0 %v695
  %v1479 = vpop.f32.mrf.mxu0
  %v1480 = vadd.f32 0.0, %v1479
  %1481 = vmatmul.f32.gmra.mxu0 %v698
  %v1482 = vpop.f32.mrf.mxu0
  %v1483 = vadd.f32 0.0, %v1482
  %1484 = vmatmul.f32.gmra.mxu0 %v701
  %v1485 = vpop.f32.mrf.mxu0
  %v1486 = vadd.f32 0.0, %v1485
  %1487 = vmatmul.f32.gmra.mxu0 %v704
  %v1488 = vpop.f32.mrf.mxu0
  %v1489 = vadd.f32 0.0, %v1488
  %1490 = vmatmul.f32.gmra.mxu0 %v707
  %v1491 = vpop.f32.mrf.mxu0
  %v1492 = vadd.f32 0.0, %v1491
  %1493 = vmatmul.f32.gmra.mxu0 %v710
  %v1494 = vpop.f32.mrf.mxu0
  %v1495 = vadd.f32 0.0, %v1494
  %1496 = vmatmul.f32.gmra.mxu0 %v713
  %v1497 = vpop.f32.mrf.mxu0
  %v1498 = vadd.f32 0.0, %v1497
  %1499 = vmatmul.f32.gmra.mxu0 %v716
  %v1500 = vpop.f32.mrf.mxu0
  %v1501 = vadd.f32 0.0, %v1500
  %1502 = vmatmul.f32.gmra.mxu0 %v719
  %v1503 = vpop.f32.mrf.mxu0
  %v1504 = vadd.f32 0.0, %v1503
  %1505 = vmatmul.f32.gmra.mxu0 %v722
  %v1506 = vpop.f32.mrf.mxu0
  %v1507 = vadd.f32 0.0, %v1506
  %1508 = vmatmul.f32.gmra.mxu0 %v725
  %v1509 = vpop.f32.mrf.mxu0
  %v1510 = vadd.f32 0.0, %v1509
  %1511 = vmatmul.f32.gmra.mxu0 %v728
  %v1512 = vpop.f32.mrf.mxu0
  %v1513 = vadd.f32 0.0, %v1512
  %1514 = vmatmul.f32.gmra.mxu0 %v731
  %v1515 = vpop.f32.mrf.mxu0
  %v1516 = vadd.f32 0.0, %v1515
  %1517 = vmatmul.f32.gmra.mxu0 %v734
  %v1518 = vpop.f32.mrf.mxu0
  %v1519 = vadd.f32 0.0, %v1518
  %1520 = vmatmul.f32.gmra.mxu0 %v737
  %v1521 = vpop.f32.mrf.mxu0
  %v1522 = vadd.f32 0.0, %v1521
  %1523 = vmatmul.f32.gmra.mxu0 %v740
  %v1524 = vpop.f32.mrf.mxu0
  %v1525 = vadd.f32 0.0, %v1524
  %1526 = vmatmul.f32.gmra.mxu0 %v743
  %v1527 = vpop.f32.mrf.mxu0
  %v1528 = vadd.f32 0.0, %v1527
  %1529 = vmatmul.f32.gmra.mxu0 %v746
  %v1530 = vpop.f32.mrf.mxu0
  %v1531 = vadd.f32 0.0, %v1530
  %1532 = vmatmul.f32.gmra.mxu0 %v749
  %v1533 = vpop.f32.mrf.mxu0
  %v1534 = vadd.f32 0.0, %v1533
  %1535 = vmatmul.f32.gmra.mxu0 %v752
  %v1536 = vpop.f32.mrf.mxu0
  %v1537 = vadd.f32 0.0, %v1536
  %1538 = vmatmul.f32.gmra.mxu0 %v755
  %v1539 = vpop.f32.mrf.mxu0
  %v1540 = vadd.f32 0.0, %v1539
  %1541 = vmatmul.f32.gmra.mxu0 %v758
  %v1542 = vpop.f32.mrf.mxu0
  %v1543 = vadd.f32 0.0, %v1542
  %1544 = vmatmul.f32.gmra.mxu0 %v761
  %v1545 = vpop.f32.mrf.mxu0
  %v1546 = vadd.f32 0.0, %v1545
  %1547 = vmatmul.f32.gmra.mxu0 %v764
  %v1548 = vpop.f32.mrf.mxu0
  %v1549 = vadd.f32 0.0, %v1548
  %1550 = vmatmul.f32.gmra.mxu0 %v767
  %v1551 = vpop.f32.mrf.mxu0
  %v1552 = vadd.f32 0.0, %v1551
  %1553 = vmatmul.f32.gmra.mxu0 %v770
  %v1554 = vpop.f32.mrf.mxu0
  %v1555 = vadd.f32 0.0, %v1554
  %1556 = vmatmul.f32.gmra.mxu0 %v773
  %v1557 = vpop.f32.mrf.mxu0
  %v1558 = vadd.f32 0.0, %v1557
  %1559 = vmatmul.f32.gmra.mxu0 %v776
  %v1560 = vpop.f32.mrf.mxu0
  %v1561 = vadd.f32 0.0, %v1560
  %1562 = vmatmul.f32.gmra.mxu0 %v779
  %v1563 = vpop.f32.mrf.mxu0
  %v1564 = vadd.f32 0.0, %v1563
  %1565 = vmatmul.f32.gmra.mxu0 %v782
  %v1566 = vpop.f32.mrf.mxu0
  %v1567 = vadd.f32 0.0, %v1566
  %1568 = vmatmul.f32.gmra.mxu0 %v785
  %v1569 = vpop.f32.mrf.mxu0
  %v1570 = vadd.f32 0.0, %v1569
  %1571 = vmatmul.f32.gmra.mxu0 %v788
  %v1572 = vpop.f32.mrf.mxu0
  %v1573 = vadd.f32 0.0, %v1572
  %1574 = vmatmul.f32.gmra.mxu0 %v791
  %v1575 = vpop.f32.mrf.mxu0
  %v1576 = vadd.f32 0.0, %v1575
  %1577 = vmatmul.f32.gmra.mxu0 %v794
  %v1578 = vpop.f32.mrf.mxu0
  %v1579 = vadd.f32 0.0, %v1578
  %1580 = vmatmul.f32.gmra.mxu0 %v797
  %v1581 = vpop.f32.mrf.mxu0
  %v1582 = vadd.f32 0.0, %v1581
  %1583 = vmatmul.f32.gmra.mxu0 %v800
  %v1584 = vpop.f32.mrf.mxu0
  %v1585 = vadd.f32 0.0, %v1584
  %1586 = vmatmul.f32.gmra.mxu0 %v803
  %v1587 = vpop.f32.mrf.mxu0
  %v1588 = vadd.f32 0.0, %v1587
  %1589 = vmatmul.f32.gmra.mxu0 %v806
  %v1590 = vpop.f32.mrf.mxu0
  %v1591 = vadd.f32 0.0, %v1590
  %1592 = vmatmul.f32.gmra.mxu0 %v809
  %v1593 = vpop.f32.mrf.mxu0
  %v1594 = vadd.f32 0.0, %v1593
  %1595 = vmatmul.f32.gmra.mxu0 %v812
  %v1596 = vpop.f32.mrf.mxu0
  %v1597 = vadd.f32 0.0, %v1596
  %1598 = vmatmul.f32.gmra.mxu0 %v815
  %v1599 = vpop.f32.mrf.mxu0
  %v1600 = vadd.f32 0.0, %v1599
  %1601 = vmatmul.f32.gmra.mxu0 %v818
  %v1602 = vpop.f32.mrf.mxu0
  %v1603 = vadd.f32 0.0, %v1602
  %1604 = vmatmul.f32.gmra.mxu0 %v821
  %v1605 = vpop.f32.mrf.mxu0
  %v1606 = vadd.f32 0.0, %v1605
  %1607 = vmatmul.f32.gmra.mxu0 %v824
  %v1608 = vpop.f32.mrf.mxu0
  %v1609 = vadd.f32 0.0, %v1608
  %1610 = vmatmul.f32.gmra.mxu0 %v827
  %v1611 = vpop.f32.mrf.mxu0
  %v1612 = vadd.f32 0.0, %v1611
  %1613 = vmatmul.f32.gmra.mxu0 %v830
  %v1614 = vpop.f32.mrf.mxu0
  %v1615 = vadd.f32 0.0, %v1614
  %1616 = vmatmul.f32.gmra.mxu0 %v833
  %v1617 = vpop.f32.mrf.mxu0
  %v1618 = vadd.f32 0.0, %v1617
  %1619 = vmatmul.f32.gmra.mxu0 %v836
  %v1620 = vpop.f32.mrf.mxu0
  %v1621 = vadd.f32 0.0, %v1620
  %1622 = vmatmul.f32.gmra.mxu0 %v839
  %v1623 = vpop.f32.mrf.mxu0
  %v1624 = vadd.f32 0.0, %v1623
  %1625 = vmatmul.f32.gmra.mxu0 %v842
  %v1626 = vpop.f32.mrf.mxu0
  %v1627 = vadd.f32 0.0, %v1626
  %1628 = vmatmul.f32.gmra.mxu0 %v845
  %v1629 = vpop.f32.mrf.mxu0
  %v1630 = vadd.f32 0.0, %v1629
  %1631 = vmatmul.f32.gmra.mxu0 %v848
  %v1632 = vpop.f32.mrf.mxu0
  %v1633 = vadd.f32 0.0, %v1632
  %1634 = vmatmul.f32.gmra.mxu0 %v851
  %v1635 = vpop.f32.mrf.mxu0
  %v1636 = vadd.f32 0.0, %v1635
  %1637 = vmatmul.f32.gmra.mxu0 %v854
  %v1638 = vpop.f32.mrf.mxu0
  %v1639 = vadd.f32 0.0, %v1638
  %1640 = vmatmul.f32.gmra.mxu0 %v857
  %v1641 = vpop.f32.mrf.mxu0
  %v1642 = vadd.f32 0.0, %v1641
  %1643 = vmatmul.f32.gmra.mxu0 %v860
  %v1644 = vpop.f32.mrf.mxu0
  %v1645 = vadd.f32 0.0, %v1644
  %1646 = vmatmul.f32.gmra.mxu0 %v863
  %v1647 = vpop.f32.mrf.mxu0
  %v1648 = vadd.f32 0.0, %v1647
  %1649 = vmatmul.f32.gmra.mxu0 %v866
  %v1650 = vpop.f32.mrf.mxu0
  %v1651 = vadd.f32 0.0, %v1650
  %1652 = vmatmul.f32.gmra.mxu0 %v869
  %v1653 = vpop.f32.mrf.mxu0
  %v1654 = vadd.f32 0.0, %v1653
  %1655 = vmatmul.f32.gmra.mxu0 %v872
  %v1656 = vpop.f32.mrf.mxu0
  %v1657 = vadd.f32 0.0, %v1656
  %1658 = vmatmul.f32.gmra.mxu0 %v875
  %v1659 = vpop.f32.mrf.mxu0
  %v1660 = vadd.f32 0.0, %v1659
  %1661 = vmatmul.f32.gmra.mxu0 %v878
  %v1662 = vpop.f32.mrf.mxu0
  %v1663 = vadd.f32 0.0, %v1662
  %1664 = vmatmul.f32.gmra.mxu0 %v881
  %v1665 = vpop.f32.mrf.mxu0
  %v1666 = vadd.f32 0.0, %v1665
  %1667 = vmatmul.f32.gmra.mxu0 %v884
  %v1668 = vpop.f32.mrf.mxu0
  %v1669 = vadd.f32 0.0, %v1668
  %1670 = vmatmul.f32.gmra.mxu0 %v887
  %v1671 = vpop.f32.mrf.mxu0
  %v1672 = vadd.f32 0.0, %v1671
  %1673 = vmatmul.f32.gmra.mxu0 %v890
  %v1674 = vpop.f32.mrf.mxu0
  %v1675 = vadd.f32 0.0, %v1674
  %1676 = vmatmul.f32.gmra.mxu0 %v893
  %v1677 = vpop.f32.mrf.mxu0
  %v1678 = vadd.f32 0.0, %v1677
  %1679 = vmatmul.f32.gmra.mxu0 %v896
  %v1680 = vpop.f32.mrf.mxu0
  %v1681 = vadd.f32 0.0, %v1680
  %1682 = vmatmul.f32.gmra.mxu0 %v899
  %v1683 = vpop.f32.mrf.mxu0
  %v1684 = vadd.f32 0.0, %v1683
  %1685 = vmatmul.f32.gmra.mxu0 %v902
  %v1686 = vpop.f32.mrf.mxu0
  %v1687 = vadd.f32 0.0, %v1686
  %1688 = vmatmul.f32.gmra.mxu0 %v905
  %v1689 = vpop.f32.mrf.mxu0
  %v1690 = vadd.f32 0.0, %v1689
  %1691 = vmatmul.f32.gmra.mxu0 %v908
  %v1692 = vpop.f32.mrf.mxu0
  %v1693 = vadd.f32 0.0, %v1692
  %1694 = vmatmul.f32.gmra.mxu0 %v911
  %v1695 = vpop.f32.mrf.mxu0
  %v1696 = vadd.f32 0.0, %v1695
  %1697 = vmatmul.f32.gmra.mxu0 %v914
  %v1698 = vpop.f32.mrf.mxu0
  %v1699 = vadd.f32 0.0, %v1698
  %1700 = vmatmul.f32.gmra.mxu0 %v917
  %v1701 = vpop.f32.mrf.mxu0
  %v1702 = vadd.f32 0.0, %v1701
  %1703 = vmatmul.f32.gmra.mxu0 %v920
  %v1704 = vpop.f32.mrf.mxu0
  %v1705 = vadd.f32 0.0, %v1704
  %1706 = vmatmul.f32.gmra.mxu0 %v923
  %v1707 = vpop.f32.mrf.mxu0
  %v1708 = vadd.f32 0.0, %v1707
  %1709 = vmatmul.f32.gmra.mxu0 %v926
  %v1710 = vpop.f32.mrf.mxu0
  %v1711 = vadd.f32 0.0, %v1710
  %1712 = vmatmul.f32.gmra.mxu0 %v929
  %v1713 = vpop.f32.mrf.mxu0
  %v1714 = vadd.f32 0.0, %v1713
  %1715 = vmatmul.f32.gmra.mxu0 %v932
  %v1716 = vpop.f32.mrf.mxu0
  %v1717 = vadd.f32 0.0, %v1716
  %1718 = vmatmul.f32.gmra.mxu0 %v935
  %v1719 = vpop.f32.mrf.mxu0
  %v1720 = vadd.f32 0.0, %v1719
  %1721 = vmatmul.f32.gmra.mxu0 %v938
  %v1722 = vpop.f32.mrf.mxu0
  %v1723 = vadd.f32 0.0, %v1722
  %1724 = vmatmul.f32.gmra.mxu0 %v941
  %v1725 = vpop.f32.mrf.mxu0
  %v1726 = vadd.f32 0.0, %v1725
  %1727 = vmatmul.f32.gmra.mxu0 %v944
  %v1728 = vpop.f32.mrf.mxu0
  %v1729 = vadd.f32 0.0, %v1728
  %1730 = vmatmul.f32.gmra.mxu0 %v947
  %v1731 = vpop.f32.mrf.mxu0
  %v1732 = vadd.f32 0.0, %v1731
  %1733 = vmatmul.f32.gmra.mxu0 %v950
  %v1734 = vpop.f32.mrf.mxu0
  %v1735 = vadd.f32 0.0, %v1734
  %1736 = vmatmul.f32.gmra.mxu0 %v953
  %v1737 = vpop.f32.mrf.mxu0
  %v1738 = vadd.f32 0.0, %v1737
  %1739 = vmatmul.f32.gmra.mxu0 %v956
  %v1740 = vpop.f32.mrf.mxu0
  %v1741 = vadd.f32 0.0, %v1740
  %1742 = vmatmul.f32.gmra.mxu0 %v959
  %v1743 = vpop.f32.mrf.mxu0
  %v1744 = vadd.f32 0.0, %v1743
  %1745 = vmatmul.f32.gmra.mxu0 %v962
  %v1746 = vpop.f32.mrf.mxu0
  %v1747 = vadd.f32 0.0, %v1746
  %1748 = vmatmul.f32.gmra.mxu0 %v965
  %v1749 = vpop.f32.mrf.mxu0
  %v1750 = vadd.f32 0.0, %v1749
  %1751 = vmatmul.f32.gmra.mxu0 %v968
  %v1752 = vpop.f32.mrf.mxu0
  %v1753 = vadd.f32 0.0, %v1752
  %1754 = vmatmul.f32.gmra.mxu0 %v971
  %v1755 = vpop.f32.mrf.mxu0
  %v1756 = vadd.f32 0.0, %v1755
  %1757 = vmatmul.f32.gmra.mxu0 %v974
  %v1758 = vpop.f32.mrf.mxu0
  %v1759 = vadd.f32 0.0, %v1758
  %1760 = vmatmul.f32.gmra.mxu0 %v977
  %v1761 = vpop.f32.mrf.mxu0
  %v1762 = vadd.f32 0.0, %v1761
  %1763 = vmatmul.f32.gmra.mxu0 %v980
  %v1764 = vpop.f32.mrf.mxu0
  %v1765 = vadd.f32 0.0, %v1764
  %1766 = vmatmul.f32.gmra.mxu0 %v983
  %v1767 = vpop.f32.mrf.mxu0
  %v1768 = vadd.f32 0.0, %v1767
  %1769 = vmatmul.f32.gmra.mxu0 %v986
  %v1770 = vpop.f32.mrf.mxu0
  %v1771 = vadd.f32 0.0, %v1770
  %1772 = vmatmul.f32.gmra.mxu0 %v989
  %v1773 = vpop.f32.mrf.mxu0
  %v1774 = vadd.f32 0.0, %v1773
  %1775 = vmatmul.f32.gmra.mxu0 %v992
  %v1776 = vpop.f32.mrf.mxu0
  %v1777 = vadd.f32 0.0, %v1776
  %1778 = vmatmul.f32.gmra.mxu0 %v995
  %v1779 = vpop.f32.mrf.mxu0
  %v1780 = vadd.f32 0.0, %v1779
  %1781 = vmatmul.f32.gmra.mxu0 %v998
  %v1782 = vpop.f32.mrf.mxu0
  %v1783 = vadd.f32 0.0, %v1782
  %1784 = vmatmul.f32.gmra.mxu0 %v1001
  %v1785 = vpop.f32.mrf.mxu0
  %v1786 = vadd.f32 0.0, %v1785
  %1787 = vmatmul.f32.gmra.mxu0 %v1004
  %v1788 = vpop.f32.mrf.mxu0
  %v1789 = vadd.f32 0.0, %v1788
  %1790 = vmatmul.f32.gmra.mxu0 %v1007
  %v1791 = vpop.f32.mrf.mxu0
  %v1792 = vadd.f32 0.0, %v1791
  %1793 = vmatmul.f32.gmra.mxu0 %v1010
  %v1794 = vpop.f32.mrf.mxu0
  %v1795 = vadd.f32 0.0, %v1794
  %1796 = vmatmul.f32.gmra.mxu0 %v1013
  %v1797 = vpop.f32.mrf.mxu0
  %v1798 = vadd.f32 0.0, %v1797
  %1799 = vmatmul.f32.gmra.mxu0 %v1016
  %v1800 = vpop.f32.mrf.mxu0
  %v1801 = vadd.f32 0.0, %v1800
  %1802 = vmatmul.f32.gmra.mxu0 %v1019
  %v1803 = vpop.f32.mrf.mxu0
  %v1804 = vadd.f32 0.0, %v1803
  %1805 = vmatmul.f32.gmra.mxu0 %v1022
  %v1806 = vpop.f32.mrf.mxu0
  %v1807 = vadd.f32 0.0, %v1806
  %1808 = vmatmul.f32.gmra.mxu0 %v1025
  %v1809 = vpop.f32.mrf.mxu0
  %v1810 = vadd.f32 0.0, %v1809
  %1811 = vmatmul.f32.gmra.mxu0 %v1028
  %v1812 = vpop.f32.mrf.mxu0
  %v1813 = vadd.f32 0.0, %v1812
  %1814 = vmatmul.f32.gmra.mxu0 %v1031
  %v1815 = vpop.f32.mrf.mxu0
  %v1816 = vadd.f32 0.0, %v1815
  %1817 = vmatmul.f32.gmra.mxu0 %v1034
  %v1818 = vpop.f32.mrf.mxu0
  %v1819 = vadd.f32 0.0, %v1818
  %1820 = vmatmul.f32.gmra.mxu0 %v1037
  %v1821 = vpop.f32.mrf.mxu0
  %v1822 = vadd.f32 0.0, %v1821
  %1823 = vmatmul.f32.gmra.mxu0 %v1040
  %v1824 = vpop.f32.mrf.mxu0
  %v1825 = vadd.f32 0.0, %v1824
  %1826 = vmatmul.f32.gmra.mxu0 %v1043
  %v1827 = vpop.f32.mrf.mxu0
  %v1828 = vadd.f32 0.0, %v1827
  %1829 = vmatmul.f32.gmra.mxu0 %v1046
  %v1830 = vpop.f32.mrf.mxu0
  %v1831 = vadd.f32 0.0, %v1830
  %1832 = vmatmul.f32.gmra.mxu0 %v1049
  %v1833 = vpop.f32.mrf.mxu0
  %v1834 = vadd.f32 0.0, %v1833
  %1835 = vmatmul.f32.gmra.mxu0 %v1052
  %v1836 = vpop.f32.mrf.mxu0
  %v1837 = vadd.f32 0.0, %v1836
  %1838 = vmatmul.f32.gmra.mxu0 %v1055
  %v1839 = vpop.f32.mrf.mxu0
  %v1840 = vadd.f32 0.0, %v1839
  %1841 = vmatmul.f32.gmra.mxu0 %v1058
  %v1842 = vpop.f32.mrf.mxu0
  %v1843 = vadd.f32 0.0, %v1842
  %1844 = vmatmul.f32.gmra.mxu0 %v1061
  %v1845 = vpop.f32.mrf.mxu0
  %v1846 = vadd.f32 0.0, %v1845
  %1847 = vmatmul.f32.gmra.mxu0 %v1064
  %v1848 = vpop.f32.mrf.mxu0
  %v1849 = vadd.f32 0.0, %v1848
  %1850 = vmatmul.f32.gmra.mxu0 %v1067
  %v1851 = vpop.f32.mrf.mxu0
  %v1852 = vadd.f32 0.0, %v1851
  %1853 = vmatmul.f32.gmra.mxu0 %v1070
  %v1854 = vpop.f32.mrf.mxu0
  %v1855 = vadd.f32 0.0, %v1854
  %1856 = vmatmul.f32.gmra.mxu0 %v1073
  %v1857 = vpop.f32.mrf.mxu0
  %v1858 = vadd.f32 0.0, %v1857
  %1859 = vmatmul.f32.gmra.mxu0 %v1076
  %v1860 = vpop.f32.mrf.mxu0
  %v1861 = vadd.f32 0.0, %v1860
  %1862 = vmatmul.f32.gmra.mxu0 %v1079
  %v1863 = vpop.f32.mrf.mxu0
  %v1864 = vadd.f32 0.0, %v1863
  %1865 = vmatmul.f32.gmra.mxu0 %v1082
  %v1866 = vpop.f32.mrf.mxu0
  %v1867 = vadd.f32 0.0, %v1866
  %1868 = vmatmul.f32.gmra.mxu0 %v1085
  %v1869 = vpop.f32.mrf.mxu0
  %v1870 = vadd.f32 0.0, %v1869
  %1871 = vmatmul.f32.gmra.mxu0 %v1088
  %v1872 = vpop.f32.mrf.mxu0
  %v1873 = vadd.f32 0.0, %v1872
  %1874 = vmatmul.f32.gmra.mxu0 %v1091
  %v1875 = vpop.f32.mrf.mxu0
  %v1876 = vadd.f32 0.0, %v1875
  %1877 = vmatmul.f32.gmra.mxu0 %v1094
  %v1878 = vpop.f32.mrf.mxu0
  %v1879 = vadd.f32 0.0, %v1878
  %1880 = vmatmul.f32.gmra.mxu0 %v1097
  %v1881 = vpop.f32.mrf.mxu0
  %v1882 = vadd.f32 0.0, %v1881
  %1883 = vmatmul.f32.gmra.mxu0 %v1100
  %v1884 = vpop.f32.mrf.mxu0
  %v1885 = vadd.f32 0.0, %v1884
  %1886 = vmatmul.f32.gmra.mxu0 %v1103
  %v1887 = vpop.f32.mrf.mxu0
  %v1888 = vadd.f32 0.0, %v1887
  %1889 = vmatmul.f32.gmra.mxu0 %v1106
  %v1890 = vpop.f32.mrf.mxu0
  %v1891 = vadd.f32 0.0, %v1890
  %1892 = vmatmul.f32.gmra.mxu0 %v1109
  %v1893 = vpop.f32.mrf.mxu0
  %v1894 = vadd.f32 0.0, %v1893
  %1895 = vmatmul.f32.gmra.mxu0 %v1112
  %v1896 = vpop.f32.mrf.mxu0
  %v1897 = vadd.f32 0.0, %v1896
  %1898 = vmatmul.f32.gmra.mxu0 %v1115
  %v1899 = vpop.f32.mrf.mxu0
  %v1900 = vadd.f32 0.0, %v1899
  %1901 = vmatmul.f32.gmra.mxu0 %v1118
  %v1902 = vpop.f32.mrf.mxu0
  %v1903 = vadd.f32 0.0, %v1902
  %1904 = vmatmul.f32.gmra.mxu0 %v1121
  %v1905 = vpop.f32.mrf.mxu0
  %v1906 = vadd.f32 0.0, %v1905
  %1907 = vmatmul.f32.gmra.mxu0 %v1124
  %v1908 = vpop.f32.mrf.mxu0
  %v1909 = vadd.f32 0.0, %v1908
  %1910 = vmatmul.f32.gmra.mxu0 %v1127
  %v1911 = vpop.f32.mrf.mxu0
  %v1912 = vadd.f32 0.0, %v1911
  %1913 = vmatmul.f32.gmra.mxu0 %v1130
  %v1914 = vpop.f32.mrf.mxu0
  %v1915 = vadd.f32 0.0, %v1914
  %1916 = vmatmul.f32.gmra.mxu0 %v1133
  %v1917 = vpop.f32.mrf.mxu0
  %v1918 = vadd.f32 0.0, %v1917
  %1919 = vmatmul.f32.gmra.mxu0 %v1136
  %v1920 = vpop.f32.mrf.mxu0
  %v1921 = vadd.f32 0.0, %v1920
  %1922 = vmatmul.f32.gmra.mxu0 %v1139
  %v1923 = vpop.f32.mrf.mxu0
  %v1924 = vadd.f32 0.0, %v1923
  %1925 = vmatmul.f32.gmra.mxu0 %v1142
  %v1926 = vpop.f32.mrf.mxu0
  %v1927 = vadd.f32 0.0, %v1926
  %1928 = vmatmul.f32.gmra.mxu0 %v1145
  %v1929 = vpop.f32.mrf.mxu0
  %v1930 = vadd.f32 0.0, %v1929
  %1931 = vmatmul.f32.gmra.mxu0 %v1148
  %v1932 = vpop.f32.mrf.mxu0
  %v1933 = vadd.f32 0.0, %v1932
  %1934 = vmatmul.f32.gmra.mxu0 %v1151
  %v1935 = vpop.f32.mrf.mxu0
  %v1936 = vadd.f32 0.0, %v1935
  %1937 = vmatmul.f32.gmra.mxu0 %v1154
  %v1938 = vpop.f32.mrf.mxu0
  %v1939 = vadd.f32 0.0, %v1938
  %1940 = vmatmul.f32.gmra.mxu0 %v1157
  %v1941 = vpop.f32.mrf.mxu0
  %v1942 = vadd.f32 0.0, %v1941
  %1943 = vmatmul.f32.gmra.mxu0 %v1160
  %v1944 = vpop.f32.mrf.mxu0
  %v1945 = vadd.f32 0.0, %v1944
  %1946 = vmatmul.f32.gmra.mxu0 %v1163
  %v1947 = vpop.f32.mrf.mxu0
  %v1948 = vadd.f32 0.0, %v1947
  %1949 = vmatmul.f32.gmra.mxu0 %v1166
  %v1950 = vpop.f32.mrf.mxu0
  %v1951 = vadd.f32 0.0, %v1950
  %1952 = vmatmul.f32.gmra.mxu0 %v1169
  %v1953 = vpop.f32.mrf.mxu0
  %v1954 = vadd.f32 0.0, %v1953
  %1955 = vmatmul.f32.gmra.mxu0 %v1172
  %v1956 = vpop.f32.mrf.mxu0
  %v1957 = vadd.f32 0.0, %v1956
  %1958 = vmatmul.f32.gmra.mxu0 %v1175
  %v1959 = vpop.f32.mrf.mxu0
  %v1960 = vadd.f32 0.0, %v1959
  %1961 = vmatmul.f32.gmra.mxu0 %v1178
  %v1962 = vpop.f32.mrf.mxu0
  %v1963 = vadd.f32 0.0, %v1962
  %1964 = vmatmul.f32.gmra.mxu0 %v1181
  %v1965 = vpop.f32.mrf.mxu0
  %v1966 = vadd.f32 0.0, %v1965
  %1967 = vmatmul.f32.gmra.mxu0 %v1184
  %v1968 = vpop.f32.mrf.mxu0
  %v1969 = vadd.f32 0.0, %v1968
  %1970 = vmatmul.f32.gmra.mxu0 %v1187
  %v1971 = vpop.f32.mrf.mxu0
  %v1972 = vadd.f32 0.0, %v1971
  %1973 = vmatmul.f32.gmra.mxu0 %v1190
  %v1974 = vpop.f32.mrf.mxu0
  %v1975 = vadd.f32 0.0, %v1974
  %1976 = vmatmul.f32.gmra.mxu0 %v1193
  %v1977 = vpop.f32.mrf.mxu0
  %v1978 = vadd.f32 0.0, %v1977
  %1979 = vmatmul.f32.gmra.mxu0 %v1196
  %v1980 = vpop.f32.mrf.mxu0
  %v1981 = vadd.f32 0.0, %v1980
  %1982 = vmatmul.f32.gmra.mxu0 %v1199
  %v1983 = vpop.f32.mrf.mxu0
  %v1984 = vadd.f32 0.0, %v1983
  %1985 = vmatmul.f32.gmra.mxu0 %v1202
  %v1986 = vpop.f32.mrf.mxu0
  %v1987 = vadd.f32 0.0, %v1986
  %1988 = vmatmul.f32.gmra.mxu0 %v1205
  %v1989 = vpop.f32.mrf.mxu0
  %v1990 = vadd.f32 0.0, %v1989
  %1991 = vmatmul.f32.gmra.mxu0 %v1208
  %v1992 = vpop.f32.mrf.mxu0
  %v1993 = vadd.f32 0.0, %v1992
  %1994 = vmatmul.f32.gmra.mxu0 %v1211
  %v1995 = vpop.f32.mrf.mxu0
  %v1996 = vadd.f32 0.0, %v1995
  %1997 = vmatmul.f32.gmra.mxu0 %v1214
  %v1998 = vpop.f32.mrf.mxu0
  %v1999 = vadd.f32 0.0, %v1998
  %2000 = vmatmul.f32.gmra.mxu0 %v1217
  %v2001 = vpop.f32.mrf.mxu0
  %v2002 = vadd.f32 0.0, %v2001
  %2003 = vmatmul.f32.gmra.mxu0 %v1220
  %v2004 = vpop.f32.mrf.mxu0
  %v2005 = vadd.f32 0.0, %v2004
  %2006 = vmatmul.f32.gmra.mxu0 %v1223
  %v2007 = vpop.f32.mrf.mxu0
  %v2008 = vadd.f32 0.0, %v2007
  %2009 = vmatmul.f32.gmra.mxu0 %v1226
  %v2010 = vpop.f32.mrf.mxu0
  %v2011 = vadd.f32 0.0, %v2010
  %2012 = vmatmul.f32.gmra.mxu0 %v1229
  %v2013 = vpop.f32.mrf.mxu0
  %v2014 = vadd.f32 0.0, %v2013
  %2015 = vmatmul.f32.gmra.mxu0 %v1232
  %v2016 = vpop.f32.mrf.mxu0
  %v2017 = vadd.f32 0.0, %v2016
  %2018 = vmatmul.f32.gmra.mxu0 %v1235
  %v2019 = vpop.f32.mrf.mxu0
  %v2020 = vadd.f32 0.0, %v2019
  %2021 = vmatmul.f32.gmra.mxu0 %v1238
  %v2022 = vpop.f32.mrf.mxu0
  %v2023 = vadd.f32 0.0, %v2022
  %2024 = vmatmul.f32.gmra.mxu0 %v1241
  %v2025 = vpop.f32.mrf.mxu0
  %v2026 = vadd.f32 0.0, %v2025
  %2027 = vmatmul.f32.gmra.mxu0 %v1244
  %v2028 = vpop.f32.mrf.mxu0
  %v2029 = vadd.f32 0.0, %v2028
  %2030 = vmatmul.f32.gmra.mxu0 %v1247
  %v2031 = vpop.f32.mrf.mxu0
  %v2032 = vadd.f32 0.0, %v2031
  %2033 = vmatmul.f32.gmra.mxu0 %v1250
  %v2034 = vpop.f32.mrf.mxu0
  %v2035 = vadd.f32 0.0, %v2034
  %2036 = vmatmul.f32.gmra.mxu0 %v1253
  %v2037 = vpop.f32.mrf.mxu0
  %v2038 = vadd.f32 0.0, %v2037
  %2039 = vmatmul.f32.gmra.mxu0 %v1256
  %v2040 = vpop.f32.mrf.mxu0
  %v2041 = vadd.f32 0.0, %v2040
  %2042 = vmatmul.f32.gmra.mxu0 %v1259
  %v2043 = vpop.f32.mrf.mxu0
  %v2044 = vadd.f32 0.0, %v2043
  %2045 = vmatmul.f32.gmra.mxu0 %v1262
  %v2046 = vpop.f32.mrf.mxu0
  %v2047 = vadd.f32 0.0, %v2046
  %2048 = vmatmul.f32.gmra.mxu0 %v1265
  %v2049 = vpop.f32.mrf.mxu0
  %v2050 = vadd.f32 0.0, %v2049
  %2051 = vmatmul.f32.gmra.mxu0 %v1268
  %v2052 = vpop.f32.mrf.mxu0
  %v2053 = vadd.f32 0.0, %v2052
  %2054 = vmatmul.f32.gmra.mxu0 %v1271
  %v2055 = vpop.f32.mrf.mxu0
  %v2056 = vadd.f32 0.0, %v2055
  %2057 = vmatmul.f32.gmra.mxu0 %v1274
  %v2058 = vpop.f32.mrf.mxu0
  %v2059 = vadd.f32 0.0, %v2058
  %2060 = vmatmul.f32.gmra.mxu0 %v1277
  %v2061 = vpop.f32.mrf.mxu0
  %v2062 = vadd.f32 0.0, %v2061
  %2063 = vmatmul.f32.gmra.mxu0 %v1280
  %v2064 = vpop.f32.mrf.mxu0
  %v2065 = vadd.f32 0.0, %v2064
  %2066 = vmatmul.f32.gmra.mxu0 %v1283
  %v2067 = vpop.f32.mrf.mxu0
  %v2068 = vadd.f32 0.0, %v2067
  %2069 = vmatmul.f32.gmra.mxu0 %v1286
  %v2070 = vpop.f32.mrf.mxu0
  %v2071 = vadd.f32 0.0, %v2070
  %2072 = vmatmul.f32.gmra.mxu0 %v1289
  %v2073 = vpop.f32.mrf.mxu0
  %v2074 = vadd.f32 0.0, %v2073
  %2075 = vmatmul.f32.gmra.mxu0 %v1292
  %v2076 = vpop.f32.mrf.mxu0
  %v2077 = vadd.f32 0.0, %v2076
  %2078 = vmatmul.f32.gmra.mxu0 %v1295
  %v2079 = vpop.f32.mrf.mxu0
  %v2080 = vadd.f32 0.0, %v2079
  %2081 = vmatmul.f32.gmra.mxu0 %v1298
  %v2082 = vpop.f32.mrf.mxu0
  %v2083 = vadd.f32 0.0, %v2082
  %2084 = vmatmul.f32.gmra.mxu0 %v1301
  %v2085 = vpop.f32.mrf.mxu0
  %v2086 = vadd.f32 0.0, %v2085
  %2087 = vdwg.mxu0
  %v2089 = vsel %vm534, %v17, 0
  %v2092 = vsel %vm534, %v18, 0
  %v2095 = vsel %vm534, %v19, 0
  %v2098 = vsel %vm534, %v20, 0
  %v2101 = vsel %vm534, %v21, 0
  %v2104 = vsel %vm534, %v22, 0
  %v2107 = vsel %vm534, %v23, 0
  %v2110 = vsel %vm534, %v24, 0
  %v2113 = vsel %vm534, %v25, 0
  %v2116 = vsel %vm534, %v26, 0
  %v2119 = vsel %vm534, %v27, 0
  %v2122 = vsel %vm534, %v28, 0
  %v2125 = vsel %vm534, %v29, 0
  %v2128 = vsel %vm534, %v30, 0
  %v2131 = vsel %vm534, %v31, 0
  %v2134 = vsel %vm534, %v32, 0
  %v2137 = vsel %vm534, %v33, 0
  %v2140 = vsel %vm534, %v34, 0
  %v2143 = vsel %vm534, %v35, 0
  %v2146 = vsel %vm534, %v36, 0
  %v2149 = vsel %vm534, %v37, 0
  %v2152 = vsel %vm534, %v38, 0
  %v2155 = vsel %vm534, %v39, 0
  %v2158 = vsel %vm534, %v40, 0
  %v2161 = vsel %vm534, %v41, 0
  %v2164 = vsel %vm534, %v42, 0
  %v2167 = vsel %vm534, %v43, 0
  %v2170 = vsel %vm534, %v44, 0
  %v2173 = vsel %vm534, %v45, 0
  %v2176 = vsel %vm534, %v46, 0
  %v2179 = vsel %vm534, %v47, 0
  %v2182 = vsel %vm534, %v48, 0
  %v2185 = vsel %vm534, %v49, 0
  %v2188 = vsel %vm534, %v50, 0
  %v2191 = vsel %vm534, %v51, 0
  %v2194 = vsel %vm534, %v52, 0
  %v2197 = vsel %vm534, %v53, 0
  %v2200 = vsel %vm534, %v54, 0
  %v2203 = vsel %vm534, %v55, 0
  %v2206 = vsel %vm534, %v56, 0
  %v2209 = vsel %vm534, %v57, 0
  %v2212 = vsel %vm534, %v58, 0
  %v2215 = vsel %vm534, %v59, 0
  %v2218 = vsel %vm534, %v60, 0
  %v2221 = vsel %vm534, %v61, 0
  %v2224 = vsel %vm534, %v62, 0
  %v2227 = vsel %vm534, %v63, 0
  %v2230 = vsel %vm534, %v64, 0
  %v2233 = vsel %vm534, %v65, 0
  %v2236 = vsel %vm534, %v66, 0
  %v2239 = vsel %vm534, %v67, 0
  %v2242 = vsel %vm534, %v68, 0
  %v2245 = vsel %vm534, %v69, 0
  %v2248 = vsel %vm534, %v70, 0
  %v2251 = vsel %vm534, %v71, 0
  %v2254 = vsel %vm534, %v72, 0
  %v2257 = vsel %vm534, %v73, 0
  %v2260 = vsel %vm534, %v74, 0
  %v2263 = vsel %vm534, %v75, 0
  %v2266 = vsel %vm534, %v76, 0
  %v2269 = vsel %vm534, %v77, 0
  %v2272 = vsel %vm534, %v78, 0
  %v2275 = vsel %vm534, %v79, 0
  %v2278 = vsel %vm534, %v80, 0
  %v2281 = vsel %vm534, %v81, 0
  %v2284 = vsel %vm534, %v82, 0
  %v2287 = vsel %vm534, %v83, 0
  %v2290 = vsel %vm534, %v84, 0
  %v2293 = vsel %vm534, %v85, 0
  %v2296 = vsel %vm534, %v86, 0
  %v2299 = vsel %vm534, %v87, 0
  %v2302 = vsel %vm534, %v88, 0
  %v2305 = vsel %vm534, %v89, 0
  %v2308 = vsel %vm534, %v90, 0
  %v2311 = vsel %vm534, %v91, 0
  %v2314 = vsel %vm534, %v92, 0
  %v2317 = vsel %vm534, %v93, 0
  %v2320 = vsel %vm534, %v94, 0
  %v2323 = vsel %vm534, %v95, 0
  %v2326 = vsel %vm534, %v96, 0
  %v2329 = vsel %vm534, %v97, 0
  %v2332 = vsel %vm534, %v98, 0
  %v2335 = vsel %vm534, %v99, 0
  %v2338 = vsel %vm534, %v100, 0
  %v2341 = vsel %vm534, %v101, 0
  %v2344 = vsel %vm534, %v102, 0
  %v2347 = vsel %vm534, %v103, 0
  %v2350 = vsel %vm534, %v104, 0
  %v2353 = vsel %vm534, %v105, 0
  %v2356 = vsel %vm534, %v106, 0
  %v2359 = vsel %vm534, %v107, 0
  %v2362 = vsel %vm534, %v108, 0
  %v2365 = vsel %vm534, %v109, 0
  %v2368 = vsel %vm534, %v110, 0
  %v2371 = vsel %vm534, %v111, 0
  %v2374 = vsel %vm534, %v112, 0
  %v2377 = vsel %vm534, %v113, 0
  %v2380 = vsel %vm534, %v114, 0
  %v2383 = vsel %vm534, %v115, 0
  %v2386 = vsel %vm534, %v116, 0
  %v2389 = vsel %vm534, %v117, 0
  %v2392 = vsel %vm534, %v118, 0
  %v2395 = vsel %vm534, %v119, 0
  %v2398 = vsel %vm534, %v120, 0
  %v2401 = vsel %vm534, %v121, 0
  %v2404 = vsel %vm534, %v122, 0
  %v2407 = vsel %vm534, %v123, 0
  %v2410 = vsel %vm534, %v124, 0
  %v2413 = vsel %vm534, %v125, 0
  %v2416 = vsel %vm534, %v126, 0
  %v2419 = vsel %vm534, %v127, 0
  %v2422 = vsel %vm534, %v128, 0
  %v2425 = vsel %vm534, %v129, 0
  %v2428 = vsel %vm534, %v130, 0
  %v2431 = vsel %vm534, %v131, 0
  %v2434 = vsel %vm534, %v132, 0
  %v2437 = vsel %vm534, %v133, 0
  %v2440 = vsel %vm534, %v134, 0
  %v2443 = vsel %vm534, %v135, 0
  %v2446 = vsel %vm534, %v136, 0
  %v2449 = vsel %vm534, %v137, 0
  %v2452 = vsel %vm534, %v138, 0
  %v2455 = vsel %vm534, %v139, 0
  %v2458 = vsel %vm534, %v140, 0
  %v2461 = vsel %vm534, %v141, 0
  %v2464 = vsel %vm534, %v142, 0
  %v2467 = vsel %vm534, %v143, 0
  %v2470 = vsel %vm534, %v144, 0
  %v2473 = vsel %vm534, %v145, 0
  %v2476 = vsel %vm534, %v146, 0
  %v2479 = vsel %vm534, %v147, 0
  %v2482 = vsel %vm534, %v148, 0
  %v2485 = vsel %vm534, %v149, 0
  %v2488 = vsel %vm534, %v150, 0
  %v2491 = vsel %vm534, %v151, 0
  %v2494 = vsel %vm534, %v152, 0
  %v2497 = vsel %vm534, %v153, 0
  %v2500 = vsel %vm534, %v154, 0
  %v2503 = vsel %vm534, %v155, 0
  %v2506 = vsel %vm534, %v156, 0
  %v2509 = vsel %vm534, %v157, 0
  %v2512 = vsel %vm534, %v158, 0
  %v2515 = vsel %vm534, %v159, 0
  %v2518 = vsel %vm534, %v160, 0
  %v2521 = vsel %vm534, %v161, 0
  %v2524 = vsel %vm534, %v162, 0
  %v2527 = vsel %vm534, %v163, 0
  %v2530 = vsel %vm534, %v164, 0
  %v2533 = vsel %vm534, %v165, 0
  %v2536 = vsel %vm534, %v166, 0
  %v2539 = vsel %vm534, %v167, 0
  %v2542 = vsel %vm534, %v168, 0
  %v2545 = vsel %vm534, %v169, 0
  %v2548 = vsel %vm534, %v170, 0
  %v2551 = vsel %vm534, %v171, 0
  %v2554 = vsel %vm534, %v172, 0
  %v2557 = vsel %vm534, %v173, 0
  %v2560 = vsel %vm534, %v174, 0
  %v2563 = vsel %vm534, %v175, 0
  %v2566 = vsel %vm534, %v176, 0
  %v2569 = vsel %vm534, %v177, 0
  %v2572 = vsel %vm534, %v178, 0
  %v2575 = vsel %vm534, %v179, 0
  %v2578 = vsel %vm534, %v180, 0
  %v2581 = vsel %vm534, %v181, 0
  %v2584 = vsel %vm534, %v182, 0
  %v2587 = vsel %vm534, %v183, 0
  %v2590 = vsel %vm534, %v184, 0
  %v2593 = vsel %vm534, %v185, 0
  %v2596 = vsel %vm534, %v186, 0
  %v2599 = vsel %vm534, %v187, 0
  %v2602 = vsel %vm534, %v188, 0
  %v2605 = vsel %vm534, %v189, 0
  %v2608 = vsel %vm534, %v190, 0
  %v2611 = vsel %vm534, %v191, 0
  %v2614 = vsel %vm534, %v192, 0
  %v2617 = vsel %vm534, %v193, 0
  %v2620 = vsel %vm534, %v194, 0
  %v2623 = vsel %vm534, %v195, 0
  %v2626 = vsel %vm534, %v196, 0
  %v2629 = vsel %vm534, %v197, 0
  %v2632 = vsel %vm534, %v198, 0
  %v2635 = vsel %vm534, %v199, 0
  %v2638 = vsel %vm534, %v200, 0
  %v2641 = vsel %vm534, %v201, 0
  %v2644 = vsel %vm534, %v202, 0
  %v2647 = vsel %vm534, %v203, 0
  %v2650 = vsel %vm534, %v204, 0
  %v2653 = vsel %vm534, %v205, 0
  %v2656 = vsel %vm534, %v206, 0
  %v2659 = vsel %vm534, %v207, 0
  %v2662 = vsel %vm534, %v208, 0
  %v2665 = vsel %vm534, %v209, 0
  %v2668 = vsel %vm534, %v210, 0
  %v2671 = vsel %vm534, %v211, 0
  %v2674 = vsel %vm534, %v212, 0
  %v2677 = vsel %vm534, %v213, 0
  %v2680 = vsel %vm534, %v214, 0
  %v2683 = vsel %vm534, %v215, 0
  %v2686 = vsel %vm534, %v216, 0
  %v2689 = vsel %vm534, %v217, 0
  %v2692 = vsel %vm534, %v218, 0
  %v2695 = vsel %vm534, %v219, 0
  %v2698 = vsel %vm534, %v220, 0
  %v2701 = vsel %vm534, %v221, 0
  %v2704 = vsel %vm534, %v222, 0
  %v2707 = vsel %vm534, %v223, 0
  %v2710 = vsel %vm534, %v224, 0
  %v2713 = vsel %vm534, %v225, 0
  %v2716 = vsel %vm534, %v226, 0
  %v2719 = vsel %vm534, %v227, 0
  %v2722 = vsel %vm534, %v228, 0
  %v2725 = vsel %vm534, %v229, 0
  %v2728 = vsel %vm534, %v230, 0
  %v2731 = vsel %vm534, %v231, 0
  %v2734 = vsel %vm534, %v232, 0
  %v2737 = vsel %vm534, %v233, 0
  %v2740 = vsel %vm534, %v234, 0
  %v2743 = vsel %vm534, %v235, 0
  %v2746 = vsel %vm534, %v236, 0
  %v2749 = vsel %vm534, %v237, 0
  %v2752 = vsel %vm534, %v238, 0
  %v2755 = vsel %vm534, %v239, 0
  %v2758 = vsel %vm534, %v240, 0
  %v2761 = vsel %vm534, %v241, 0
  %v2764 = vsel %vm534, %v242, 0
  %v2767 = vsel %vm534, %v243, 0
  %v2770 = vsel %vm534, %v244, 0
  %v2773 = vsel %vm534, %v245, 0
  %v2776 = vsel %vm534, %v246, 0
  %v2779 = vsel %vm534, %v247, 0
  %v2782 = vsel %vm534, %v248, 0
  %v2785 = vsel %vm534, %v249, 0
  %v2788 = vsel %vm534, %v250, 0
  %v2791 = vsel %vm534, %v251, 0
  %v2794 = vsel %vm534, %v252, 0
  %v2797 = vsel %vm534, %v253, 0
  %v2800 = vsel %vm534, %v254, 0
  %v2803 = vsel %vm534, %v255, 0
  %v2806 = vsel %vm534, %v256, 0
  %v2809 = vsel %vm534, %v257, 0
  %v2812 = vsel %vm534, %v258, 0
  %v2815 = vsel %vm534, %v259, 0
  %v2818 = vsel %vm534, %v260, 0
  %v2821 = vsel %vm534, %v261, 0
  %v2824 = vsel %vm534, %v262, 0
  %v2827 = vsel %vm534, %v263, 0
  %v2830 = vsel %vm534, %v264, 0
  %v2833 = vsel %vm534, %v265, 0
  %v2836 = vsel %vm534, %v266, 0
  %v2839 = vsel %vm534, %v267, 0
  %v2842 = vsel %vm534, %v268, 0
  %v2845 = vsel %vm534, %v269, 0
  %v2848 = vsel %vm534, %v270, 0
  %v2851 = vsel %vm534, %v271, 0
  %v2854 = vsel %vm534, %v272, 0
  %2856 = vmatpush.msra.mxu0 0.0
  %2857 = vmatpush.msra.mxu0 0.0
  %2858 = vmatpush.msra.mxu0 0.0
  %2859 = vmatpush.msra.mxu0 0.0
  %2860 = vmatpush.msra.mxu0 0.0
  %2861 = vmatpush.msra.mxu0 0.0
  %2862 = vmatpush.msra.mxu0 0.0
  %2863 = vmatpush.msra.mxu0 0.0
  %2864 = vmatpush.msra.mxu0 0.0
  %2865 = vmatpush.msra.mxu0 0.0
  %2866 = vmatpush.msra.mxu0 0.0
  %2867 = vmatpush.msra.mxu0 0.0
  %2868 = vmatpush.msra.mxu0 0.0
  %2869 = vmatpush.msra.mxu0 0.0
  %2870 = vmatpush.msra.mxu0 %v274
  %2871 = vmatpush.msra.mxu0 %v273
  %2872 = vmatmul.f32.gmra.mxu0 %v2089
  %v2873 = vpop.f32.mrf.mxu0
  %v2874 = vadd.f32 %v1321, %v2873
  %2875 = vmatmul.f32.gmra.mxu0 %v2092
  %v2876 = vpop.f32.mrf.mxu0
  %v2877 = vadd.f32 %v1324, %v2876
  %2878 = vmatmul.f32.gmra.mxu0 %v2095
  %v2879 = vpop.f32.mrf.mxu0
  %v2880 = vadd.f32 %v1327, %v2879
  %2881 = vmatmul.f32.gmra.mxu0 %v2098
  %v2882 = vpop.f32.mrf.mxu0
  %v2883 = vadd.f32 %v1330, %v2882
  %2884 = vmatmul.f32.gmra.mxu0 %v2101
  %v2885 = vpop.f32.mrf.mxu0
  %v2886 = vadd.f32 %v1333, %v2885
  %2887 = vmatmul.f32.gmra.mxu0 %v2104
  %v2888 = vpop.f32.mrf.mxu0
  %v2889 = vadd.f32 %v1336, %v2888
  %2890 = vmatmul.f32.gmra.mxu0 %v2107
  %v2891 = vpop.f32.mrf.mxu0
  %v2892 = vadd.f32 %v1339, %v2891
  %2893 = vmatmul.f32.gmra.mxu0 %v2110
  %v2894 = vpop.f32.mrf.mxu0
  %v2895 = vadd.f32 %v1342, %v2894
  %2896 = vmatmul.f32.gmra.mxu0 %v2113
  %v2897 = vpop.f32.mrf.mxu0
  %v2898 = vadd.f32 %v1345, %v2897
  %2899 = vmatmul.f32.gmra.mxu0 %v2116
  %v2900 = vpop.f32.mrf.mxu0
  %v2901 = vadd.f32 %v1348, %v2900
  %2902 = vmatmul.f32.gmra.mxu0 %v2119
  %v2903 = vpop.f32.mrf.mxu0
  %v2904 = vadd.f32 %v1351, %v2903
  %2905 = vmatmul.f32.gmra.mxu0 %v2122
  %v2906 = vpop.f32.mrf.mxu0
  %v2907 = vadd.f32 %v1354, %v2906
  %2908 = vmatmul.f32.gmra.mxu0 %v2125
  %v2909 = vpop.f32.mrf.mxu0
  %v2910 = vadd.f32 %v1357, %v2909
  %2911 = vmatmul.f32.gmra.mxu0 %v2128
  %v2912 = vpop.f32.mrf.mxu0
  %v2913 = vadd.f32 %v1360, %v2912
  %2914 = vmatmul.f32.gmra.mxu0 %v2131
  %v2915 = vpop.f32.mrf.mxu0
  %v2916 = vadd.f32 %v1363, %v2915
  %2917 = vmatmul.f32.gmra.mxu0 %v2134
  %v2918 = vpop.f32.mrf.mxu0
  %v2919 = vadd.f32 %v1366, %v2918
  %2920 = vmatmul.f32.gmra.mxu0 %v2137
  %v2921 = vpop.f32.mrf.mxu0
  %v2922 = vadd.f32 %v1369, %v2921
  %2923 = vmatmul.f32.gmra.mxu0 %v2140
  %v2924 = vpop.f32.mrf.mxu0
  %v2925 = vadd.f32 %v1372, %v2924
  %2926 = vmatmul.f32.gmra.mxu0 %v2143
  %v2927 = vpop.f32.mrf.mxu0
  %v2928 = vadd.f32 %v1375, %v2927
  %2929 = vmatmul.f32.gmra.mxu0 %v2146
  %v2930 = vpop.f32.mrf.mxu0
  %v2931 = vadd.f32 %v1378, %v2930
  %2932 = vmatmul.f32.gmra.mxu0 %v2149
  %v2933 = vpop.f32.mrf.mxu0
  %v2934 = vadd.f32 %v1381, %v2933
  %2935 = vmatmul.f32.gmra.mxu0 %v2152
  %v2936 = vpop.f32.mrf.mxu0
  %v2937 = vadd.f32 %v1384, %v2936
  %2938 = vmatmul.f32.gmra.mxu0 %v2155
  %v2939 = vpop.f32.mrf.mxu0
  %v2940 = vadd.f32 %v1387, %v2939
  %2941 = vmatmul.f32.gmra.mxu0 %v2158
  %v2942 = vpop.f32.mrf.mxu0
  %v2943 = vadd.f32 %v1390, %v2942
  %2944 = vmatmul.f32.gmra.mxu0 %v2161
  %v2945 = vpop.f32.mrf.mxu0
  %v2946 = vadd.f32 %v1393, %v2945
  %2947 = vmatmul.f32.gmra.mxu0 %v2164
  %v2948 = vpop.f32.mrf.mxu0
  %v2949 = vadd.f32 %v1396, %v2948
  %2950 = vmatmul.f32.gmra.mxu0 %v2167
  %v2951 = vpop.f32.mrf.mxu0
  %v2952 = vadd.f32 %v1399, %v2951
  %2953 = vmatmul.f32.gmra.mxu0 %v2170
  %v2954 = vpop.f32.mrf.mxu0
  %v2955 = vadd.f32 %v1402, %v2954
  %2956 = vmatmul.f32.gmra.mxu0 %v2173
  %v2957 = vpop.f32.mrf.mxu0
  %v2958 = vadd.f32 %v1405, %v2957
  %2959 = vmatmul.f32.gmra.mxu0 %v2176
  %v2960 = vpop.f32.mrf.mxu0
  %v2961 = vadd.f32 %v1408, %v2960
  %2962 = vmatmul.f32.gmra.mxu0 %v2179
  %v2963 = vpop.f32.mrf.mxu0
  %v2964 = vadd.f32 %v1411, %v2963
  %2965 = vmatmul.f32.gmra.mxu0 %v2182
  %v2966 = vpop.f32.mrf.mxu0
  %v2967 = vadd.f32 %v1414, %v2966
  %2968 = vmatmul.f32.gmra.mxu0 %v2185
  %v2969 = vpop.f32.mrf.mxu0
  %v2970 = vadd.f32 %v1417, %v2969
  %2971 = vmatmul.f32.gmra.mxu0 %v2188
  %v2972 = vpop.f32.mrf.mxu0
  %v2973 = vadd.f32 %v1420, %v2972
  %2974 = vmatmul.f32.gmra.mxu0 %v2191
  %v2975 = vpop.f32.mrf.mxu0
  %v2976 = vadd.f32 %v1423, %v2975
  %2977 = vmatmul.f32.gmra.mxu0 %v2194
  %v2978 = vpop.f32.mrf.mxu0
  %v2979 = vadd.f32 %v1426, %v2978
  %2980 = vmatmul.f32.gmra.mxu0 %v2197
  %v2981 = vpop.f32.mrf.mxu0
  %v2982 = vadd.f32 %v1429, %v2981
  %2983 = vmatmul.f32.gmra.mxu0 %v2200
  %v2984 = vpop.f32.mrf.mxu0
  %v2985 = vadd.f32 %v1432, %v2984
  %2986 = vmatmul.f32.gmra.mxu0 %v2203
  %v2987 = vpop.f32.mrf.mxu0
  %v2988 = vadd.f32 %v1435, %v2987
  %2989 = vmatmul.f32.gmra.mxu0 %v2206
  %v2990 = vpop.f32.mrf.mxu0
  %v2991 = vadd.f32 %v1438, %v2990
  %2992 = vmatmul.f32.gmra.mxu0 %v2209
  %v2993 = vpop.f32.mrf.mxu0
  %v2994 = vadd.f32 %v1441, %v2993
  %2995 = vmatmul.f32.gmra.mxu0 %v2212
  %v2996 = vpop.f32.mrf.mxu0
  %v2997 = vadd.f32 %v1444, %v2996
  %2998 = vmatmul.f32.gmra.mxu0 %v2215
  %v2999 = vpop.f32.mrf.mxu0
  %v3000 = vadd.f32 %v1447, %v2999
  %3001 = vmatmul.f32.gmra.mxu0 %v2218
  %v3002 = vpop.f32.mrf.mxu0
  %v3003 = vadd.f32 %v1450, %v3002
  %3004 = vmatmul.f32.gmra.mxu0 %v2221
  %v3005 = vpop.f32.mrf.mxu0
  %v3006 = vadd.f32 %v1453, %v3005
  %3007 = vmatmul.f32.gmra.mxu0 %v2224
  %v3008 = vpop.f32.mrf.mxu0
  %v3009 = vadd.f32 %v1456, %v3008
  %3010 = vmatmul.f32.gmra.mxu0 %v2227
  %v3011 = vpop.f32.mrf.mxu0
  %v3012 = vadd.f32 %v1459, %v3011
  %3013 = vmatmul.f32.gmra.mxu0 %v2230
  %v3014 = vpop.f32.mrf.mxu0
  %v3015 = vadd.f32 %v1462, %v3014
  %3016 = vmatmul.f32.gmra.mxu0 %v2233
  %v3017 = vpop.f32.mrf.mxu0
  %v3018 = vadd.f32 %v1465, %v3017
  %3019 = vmatmul.f32.gmra.mxu0 %v2236
  %v3020 = vpop.f32.mrf.mxu0
  %v3021 = vadd.f32 %v1468, %v3020
  %3022 = vmatmul.f32.gmra.mxu0 %v2239
  %v3023 = vpop.f32.mrf.mxu0
  %v3024 = vadd.f32 %v1471, %v3023
  %3025 = vmatmul.f32.gmra.mxu0 %v2242
  %v3026 = vpop.f32.mrf.mxu0
  %v3027 = vadd.f32 %v1474, %v3026
  %3028 = vmatmul.f32.gmra.mxu0 %v2245
  %v3029 = vpop.f32.mrf.mxu0
  %v3030 = vadd.f32 %v1477, %v3029
  %3031 = vmatmul.f32.gmra.mxu0 %v2248
  %v3032 = vpop.f32.mrf.mxu0
  %v3033 = vadd.f32 %v1480, %v3032
  %3034 = vmatmul.f32.gmra.mxu0 %v2251
  %v3035 = vpop.f32.mrf.mxu0
  %v3036 = vadd.f32 %v1483, %v3035
  %3037 = vmatmul.f32.gmra.mxu0 %v2254
  %v3038 = vpop.f32.mrf.mxu0
  %v3039 = vadd.f32 %v1486, %v3038
  %3040 = vmatmul.f32.gmra.mxu0 %v2257
  %v3041 = vpop.f32.mrf.mxu0
  %v3042 = vadd.f32 %v1489, %v3041
  %3043 = vmatmul.f32.gmra.mxu0 %v2260
  %v3044 = vpop.f32.mrf.mxu0
  %v3045 = vadd.f32 %v1492, %v3044
  %3046 = vmatmul.f32.gmra.mxu0 %v2263
  %v3047 = vpop.f32.mrf.mxu0
  %v3048 = vadd.f32 %v1495, %v3047
  %3049 = vmatmul.f32.gmra.mxu0 %v2266
  %v3050 = vpop.f32.mrf.mxu0
  %v3051 = vadd.f32 %v1498, %v3050
  %3052 = vmatmul.f32.gmra.mxu0 %v2269
  %v3053 = vpop.f32.mrf.mxu0
  %v3054 = vadd.f32 %v1501, %v3053
  %3055 = vmatmul.f32.gmra.mxu0 %v2272
  %v3056 = vpop.f32.mrf.mxu0
  %v3057 = vadd.f32 %v1504, %v3056
  %3058 = vmatmul.f32.gmra.mxu0 %v2275
  %v3059 = vpop.f32.mrf.mxu0
  %v3060 = vadd.f32 %v1507, %v3059
  %3061 = vmatmul.f32.gmra.mxu0 %v2278
  %v3062 = vpop.f32.mrf.mxu0
  %v3063 = vadd.f32 %v1510, %v3062
  %3064 = vmatmul.f32.gmra.mxu0 %v2281
  %v3065 = vpop.f32.mrf.mxu0
  %v3066 = vadd.f32 %v1513, %v3065
  %3067 = vmatmul.f32.gmra.mxu0 %v2284
  %v3068 = vpop.f32.mrf.mxu0
  %v3069 = vadd.f32 %v1516, %v3068
  %3070 = vmatmul.f32.gmra.mxu0 %v2287
  %v3071 = vpop.f32.mrf.mxu0
  %v3072 = vadd.f32 %v1519, %v3071
  %3073 = vmatmul.f32.gmra.mxu0 %v2290
  %v3074 = vpop.f32.mrf.mxu0
  %v3075 = vadd.f32 %v1522, %v3074
  %3076 = vmatmul.f32.gmra.mxu0 %v2293
  %v3077 = vpop.f32.mrf.mxu0
  %v3078 = vadd.f32 %v1525, %v3077
  %3079 = vmatmul.f32.gmra.mxu0 %v2296
  %v3080 = vpop.f32.mrf.mxu0
  %v3081 = vadd.f32 %v1528, %v3080
  %3082 = vmatmul.f32.gmra.mxu0 %v2299
  %v3083 = vpop.f32.mrf.mxu0
  %v3084 = vadd.f32 %v1531, %v3083
  %3085 = vmatmul.f32.gmra.mxu0 %v2302
  %v3086 = vpop.f32.mrf.mxu0
  %v3087 = vadd.f32 %v1534, %v3086
  %3088 = vmatmul.f32.gmra.mxu0 %v2305
  %v3089 = vpop.f32.mrf.mxu0
  %v3090 = vadd.f32 %v1537, %v3089
  %3091 = vmatmul.f32.gmra.mxu0 %v2308
  %v3092 = vpop.f32.mrf.mxu0
  %v3093 = vadd.f32 %v1540, %v3092
  %3094 = vmatmul.f32.gmra.mxu0 %v2311
  %v3095 = vpop.f32.mrf.mxu0
  %v3096 = vadd.f32 %v1543, %v3095
  %3097 = vmatmul.f32.gmra.mxu0 %v2314
  %v3098 = vpop.f32.mrf.mxu0
  %v3099 = vadd.f32 %v1546, %v3098
  %3100 = vmatmul.f32.gmra.mxu0 %v2317
  %v3101 = vpop.f32.mrf.mxu0
  %v3102 = vadd.f32 %v1549, %v3101
  %3103 = vmatmul.f32.gmra.mxu0 %v2320
  %v3104 = vpop.f32.mrf.mxu0
  %v3105 = vadd.f32 %v1552, %v3104
  %3106 = vmatmul.f32.gmra.mxu0 %v2323
  %v3107 = vpop.f32.mrf.mxu0
  %v3108 = vadd.f32 %v1555, %v3107
  %3109 = vmatmul.f32.gmra.mxu0 %v2326
  %v3110 = vpop.f32.mrf.mxu0
  %v3111 = vadd.f32 %v1558, %v3110
  %3112 = vmatmul.f32.gmra.mxu0 %v2329
  %v3113 = vpop.f32.mrf.mxu0
  %v3114 = vadd.f32 %v1561, %v3113
  %3115 = vmatmul.f32.gmra.mxu0 %v2332
  %v3116 = vpop.f32.mrf.mxu0
  %v3117 = vadd.f32 %v1564, %v3116
  %3118 = vmatmul.f32.gmra.mxu0 %v2335
  %v3119 = vpop.f32.mrf.mxu0
  %v3120 = vadd.f32 %v1567, %v3119
  %3121 = vmatmul.f32.gmra.mxu0 %v2338
  %v3122 = vpop.f32.mrf.mxu0
  %v3123 = vadd.f32 %v1570, %v3122
  %3124 = vmatmul.f32.gmra.mxu0 %v2341
  %v3125 = vpop.f32.mrf.mxu0
  %v3126 = vadd.f32 %v1573, %v3125
  %3127 = vmatmul.f32.gmra.mxu0 %v2344
  %v3128 = vpop.f32.mrf.mxu0
  %v3129 = vadd.f32 %v1576, %v3128
  %3130 = vmatmul.f32.gmra.mxu0 %v2347
  %v3131 = vpop.f32.mrf.mxu0
  %v3132 = vadd.f32 %v1579, %v3131
  %3133 = vmatmul.f32.gmra.mxu0 %v2350
  %v3134 = vpop.f32.mrf.mxu0
  %v3135 = vadd.f32 %v1582, %v3134
  %3136 = vmatmul.f32.gmra.mxu0 %v2353
  %v3137 = vpop.f32.mrf.mxu0
  %v3138 = vadd.f32 %v1585, %v3137
  %3139 = vmatmul.f32.gmra.mxu0 %v2356
  %v3140 = vpop.f32.mrf.mxu0
  %v3141 = vadd.f32 %v1588, %v3140
  %3142 = vmatmul.f32.gmra.mxu0 %v2359
  %v3143 = vpop.f32.mrf.mxu0
  %v3144 = vadd.f32 %v1591, %v3143
  %3145 = vmatmul.f32.gmra.mxu0 %v2362
  %v3146 = vpop.f32.mrf.mxu0
  %v3147 = vadd.f32 %v1594, %v3146
  %3148 = vmatmul.f32.gmra.mxu0 %v2365
  %v3149 = vpop.f32.mrf.mxu0
  %v3150 = vadd.f32 %v1597, %v3149
  %3151 = vmatmul.f32.gmra.mxu0 %v2368
  %v3152 = vpop.f32.mrf.mxu0
  %v3153 = vadd.f32 %v1600, %v3152
  %3154 = vmatmul.f32.gmra.mxu0 %v2371
  %v3155 = vpop.f32.mrf.mxu0
  %v3156 = vadd.f32 %v1603, %v3155
  %3157 = vmatmul.f32.gmra.mxu0 %v2374
  %v3158 = vpop.f32.mrf.mxu0
  %v3159 = vadd.f32 %v1606, %v3158
  %3160 = vmatmul.f32.gmra.mxu0 %v2377
  %v3161 = vpop.f32.mrf.mxu0
  %v3162 = vadd.f32 %v1609, %v3161
  %3163 = vmatmul.f32.gmra.mxu0 %v2380
  %v3164 = vpop.f32.mrf.mxu0
  %v3165 = vadd.f32 %v1612, %v3164
  %3166 = vmatmul.f32.gmra.mxu0 %v2383
  %v3167 = vpop.f32.mrf.mxu0
  %v3168 = vadd.f32 %v1615, %v3167
  %3169 = vmatmul.f32.gmra.mxu0 %v2386
  %v3170 = vpop.f32.mrf.mxu0
  %v3171 = vadd.f32 %v1618, %v3170
  %3172 = vmatmul.f32.gmra.mxu0 %v2389
  %v3173 = vpop.f32.mrf.mxu0
  %v3174 = vadd.f32 %v1621, %v3173
  %3175 = vmatmul.f32.gmra.mxu0 %v2392
  %v3176 = vpop.f32.mrf.mxu0
  %v3177 = vadd.f32 %v1624, %v3176
  %3178 = vmatmul.f32.gmra.mxu0 %v2395
  %v3179 = vpop.f32.mrf.mxu0
  %v3180 = vadd.f32 %v1627, %v3179
  %3181 = vmatmul.f32.gmra.mxu0 %v2398
  %v3182 = vpop.f32.mrf.mxu0
  %v3183 = vadd.f32 %v1630, %v3182
  %3184 = vmatmul.f32.gmra.mxu0 %v2401
  %v3185 = vpop.f32.mrf.mxu0
  %v3186 = vadd.f32 %v1633, %v3185
  %3187 = vmatmul.f32.gmra.mxu0 %v2404
  %v3188 = vpop.f32.mrf.mxu0
  %v3189 = vadd.f32 %v1636, %v3188
  %3190 = vmatmul.f32.gmra.mxu0 %v2407
  %v3191 = vpop.f32.mrf.mxu0
  %v3192 = vadd.f32 %v1639, %v3191
  %3193 = vmatmul.f32.gmra.mxu0 %v2410
  %v3194 = vpop.f32.mrf.mxu0
  %v3195 = vadd.f32 %v1642, %v3194
  %3196 = vmatmul.f32.gmra.mxu0 %v2413
  %v3197 = vpop.f32.mrf.mxu0
  %v3198 = vadd.f32 %v1645, %v3197
  %3199 = vmatmul.f32.gmra.mxu0 %v2416
  %v3200 = vpop.f32.mrf.mxu0
  %v3201 = vadd.f32 %v1648, %v3200
  %3202 = vmatmul.f32.gmra.mxu0 %v2419
  %v3203 = vpop.f32.mrf.mxu0
  %v3204 = vadd.f32 %v1651, %v3203
  %3205 = vmatmul.f32.gmra.mxu0 %v2422
  %v3206 = vpop.f32.mrf.mxu0
  %v3207 = vadd.f32 %v1654, %v3206
  %3208 = vmatmul.f32.gmra.mxu0 %v2425
  %v3209 = vpop.f32.mrf.mxu0
  %v3210 = vadd.f32 %v1657, %v3209
  %3211 = vmatmul.f32.gmra.mxu0 %v2428
  %v3212 = vpop.f32.mrf.mxu0
  %v3213 = vadd.f32 %v1660, %v3212
  %3214 = vmatmul.f32.gmra.mxu0 %v2431
  %v3215 = vpop.f32.mrf.mxu0
  %v3216 = vadd.f32 %v1663, %v3215
  %3217 = vmatmul.f32.gmra.mxu0 %v2434
  %v3218 = vpop.f32.mrf.mxu0
  %v3219 = vadd.f32 %v1666, %v3218
  %3220 = vmatmul.f32.gmra.mxu0 %v2437
  %v3221 = vpop.f32.mrf.mxu0
  %v3222 = vadd.f32 %v1669, %v3221
  %3223 = vmatmul.f32.gmra.mxu0 %v2440
  %v3224 = vpop.f32.mrf.mxu0
  %v3225 = vadd.f32 %v1672, %v3224
  %3226 = vmatmul.f32.gmra.mxu0 %v2443
  %v3227 = vpop.f32.mrf.mxu0
  %v3228 = vadd.f32 %v1675, %v3227
  %3229 = vmatmul.f32.gmra.mxu0 %v2446
  %v3230 = vpop.f32.mrf.mxu0
  %v3231 = vadd.f32 %v1678, %v3230
  %3232 = vmatmul.f32.gmra.mxu0 %v2449
  %v3233 = vpop.f32.mrf.mxu0
  %v3234 = vadd.f32 %v1681, %v3233
  %3235 = vmatmul.f32.gmra.mxu0 %v2452
  %v3236 = vpop.f32.mrf.mxu0
  %v3237 = vadd.f32 %v1684, %v3236
  %3238 = vmatmul.f32.gmra.mxu0 %v2455
  %v3239 = vpop.f32.mrf.mxu0
  %v3240 = vadd.f32 %v1687, %v3239
  %3241 = vmatmul.f32.gmra.mxu0 %v2458
  %v3242 = vpop.f32.mrf.mxu0
  %v3243 = vadd.f32 %v1690, %v3242
  %3244 = vmatmul.f32.gmra.mxu0 %v2461
  %v3245 = vpop.f32.mrf.mxu0
  %v3246 = vadd.f32 %v1693, %v3245
  %3247 = vmatmul.f32.gmra.mxu0 %v2464
  %v3248 = vpop.f32.mrf.mxu0
  %v3249 = vadd.f32 %v1696, %v3248
  %3250 = vmatmul.f32.gmra.mxu0 %v2467
  %v3251 = vpop.f32.mrf.mxu0
  %v3252 = vadd.f32 %v1699, %v3251
  %3253 = vmatmul.f32.gmra.mxu0 %v2470
  %v3254 = vpop.f32.mrf.mxu0
  %v3255 = vadd.f32 %v1702, %v3254
  %3256 = vmatmul.f32.gmra.mxu0 %v2473
  %v3257 = vpop.f32.mrf.mxu0
  %v3258 = vadd.f32 %v1705, %v3257
  %3259 = vmatmul.f32.gmra.mxu0 %v2476
  %v3260 = vpop.f32.mrf.mxu0
  %v3261 = vadd.f32 %v1708, %v3260
  %3262 = vmatmul.f32.gmra.mxu0 %v2479
  %v3263 = vpop.f32.mrf.mxu0
  %v3264 = vadd.f32 %v1711, %v3263
  %3265 = vmatmul.f32.gmra.mxu0 %v2482
  %v3266 = vpop.f32.mrf.mxu0
  %v3267 = vadd.f32 %v1714, %v3266
  %3268 = vmatmul.f32.gmra.mxu0 %v2485
  %v3269 = vpop.f32.mrf.mxu0
  %v3270 = vadd.f32 %v1717, %v3269
  %3271 = vmatmul.f32.gmra.mxu0 %v2488
  %v3272 = vpop.f32.mrf.mxu0
  %v3273 = vadd.f32 %v1720, %v3272
  %3274 = vmatmul.f32.gmra.mxu0 %v2491
  %v3275 = vpop.f32.mrf.mxu0
  %v3276 = vadd.f32 %v1723, %v3275
  %3277 = vmatmul.f32.gmra.mxu0 %v2494
  %v3278 = vpop.f32.mrf.mxu0
  %v3279 = vadd.f32 %v1726, %v3278
  %3280 = vmatmul.f32.gmra.mxu0 %v2497
  %v3281 = vpop.f32.mrf.mxu0
  %v3282 = vadd.f32 %v1729, %v3281
  %3283 = vmatmul.f32.gmra.mxu0 %v2500
  %v3284 = vpop.f32.mrf.mxu0
  %v3285 = vadd.f32 %v1732, %v3284
  %3286 = vmatmul.f32.gmra.mxu0 %v2503
  %v3287 = vpop.f32.mrf.mxu0
  %v3288 = vadd.f32 %v1735, %v3287
  %3289 = vmatmul.f32.gmra.mxu0 %v2506
  %v3290 = vpop.f32.mrf.mxu0
  %v3291 = vadd.f32 %v1738, %v3290
  %3292 = vmatmul.f32.gmra.mxu0 %v2509
  %v3293 = vpop.f32.mrf.mxu0
  %v3294 = vadd.f32 %v1741, %v3293
  %3295 = vmatmul.f32.gmra.mxu0 %v2512
  %v3296 = vpop.f32.mrf.mxu0
  %v3297 = vadd.f32 %v1744, %v3296
  %3298 = vmatmul.f32.gmra.mxu0 %v2515
  %v3299 = vpop.f32.mrf.mxu0
  %v3300 = vadd.f32 %v1747, %v3299
  %3301 = vmatmul.f32.gmra.mxu0 %v2518
  %v3302 = vpop.f32.mrf.mxu0
  %v3303 = vadd.f32 %v1750, %v3302
  %3304 = vmatmul.f32.gmra.mxu0 %v2521
  %v3305 = vpop.f32.mrf.mxu0
  %v3306 = vadd.f32 %v1753, %v3305
  %3307 = vmatmul.f32.gmra.mxu0 %v2524
  %v3308 = vpop.f32.mrf.mxu0
  %v3309 = vadd.f32 %v1756, %v3308
  %3310 = vmatmul.f32.gmra.mxu0 %v2527
  %v3311 = vpop.f32.mrf.mxu0
  %v3312 = vadd.f32 %v1759, %v3311
  %3313 = vmatmul.f32.gmra.mxu0 %v2530
  %v3314 = vpop.f32.mrf.mxu0
  %v3315 = vadd.f32 %v1762, %v3314
  %3316 = vmatmul.f32.gmra.mxu0 %v2533
  %v3317 = vpop.f32.mrf.mxu0
  %v3318 = vadd.f32 %v1765, %v3317
  %3319 = vmatmul.f32.gmra.mxu0 %v2536
  %v3320 = vpop.f32.mrf.mxu0
  %v3321 = vadd.f32 %v1768, %v3320
  %3322 = vmatmul.f32.gmra.mxu0 %v2539
  %v3323 = vpop.f32.mrf.mxu0
  %v3324 = vadd.f32 %v1771, %v3323
  %3325 = vmatmul.f32.gmra.mxu0 %v2542
  %v3326 = vpop.f32.mrf.mxu0
  %v3327 = vadd.f32 %v1774, %v3326
  %3328 = vmatmul.f32.gmra.mxu0 %v2545
  %v3329 = vpop.f32.mrf.mxu0
  %v3330 = vadd.f32 %v1777, %v3329
  %3331 = vmatmul.f32.gmra.mxu0 %v2548
  %v3332 = vpop.f32.mrf.mxu0
  %v3333 = vadd.f32 %v1780, %v3332
  %3334 = vmatmul.f32.gmra.mxu0 %v2551
  %v3335 = vpop.f32.mrf.mxu0
  %v3336 = vadd.f32 %v1783, %v3335
  %3337 = vmatmul.f32.gmra.mxu0 %v2554
  %v3338 = vpop.f32.mrf.mxu0
  %v3339 = vadd.f32 %v1786, %v3338
  %3340 = vmatmul.f32.gmra.mxu0 %v2557
  %v3341 = vpop.f32.mrf.mxu0
  %v3342 = vadd.f32 %v1789, %v3341
  %3343 = vmatmul.f32.gmra.mxu0 %v2560
  %v3344 = vpop.f32.mrf.mxu0
  %v3345 = vadd.f32 %v1792, %v3344
  %3346 = vmatmul.f32.gmra.mxu0 %v2563
  %v3347 = vpop.f32.mrf.mxu0
  %v3348 = vadd.f32 %v1795, %v3347
  %3349 = vmatmul.f32.gmra.mxu0 %v2566
  %v3350 = vpop.f32.mrf.mxu0
  %v3351 = vadd.f32 %v1798, %v3350
  %3352 = vmatmul.f32.gmra.mxu0 %v2569
  %v3353 = vpop.f32.mrf.mxu0
  %v3354 = vadd.f32 %v1801, %v3353
  %3355 = vmatmul.f32.gmra.mxu0 %v2572
  %v3356 = vpop.f32.mrf.mxu0
  %v3357 = vadd.f32 %v1804, %v3356
  %3358 = vmatmul.f32.gmra.mxu0 %v2575
  %v3359 = vpop.f32.mrf.mxu0
  %v3360 = vadd.f32 %v1807, %v3359
  %3361 = vmatmul.f32.gmra.mxu0 %v2578
  %v3362 = vpop.f32.mrf.mxu0
  %v3363 = vadd.f32 %v1810, %v3362
  %3364 = vmatmul.f32.gmra.mxu0 %v2581
  %v3365 = vpop.f32.mrf.mxu0
  %v3366 = vadd.f32 %v1813, %v3365
  %3367 = vmatmul.f32.gmra.mxu0 %v2584
  %v3368 = vpop.f32.mrf.mxu0
  %v3369 = vadd.f32 %v1816, %v3368
  %3370 = vmatmul.f32.gmra.mxu0 %v2587
  %v3371 = vpop.f32.mrf.mxu0
  %v3372 = vadd.f32 %v1819, %v3371
  %3373 = vmatmul.f32.gmra.mxu0 %v2590
  %v3374 = vpop.f32.mrf.mxu0
  %v3375 = vadd.f32 %v1822, %v3374
  %3376 = vmatmul.f32.gmra.mxu0 %v2593
  %v3377 = vpop.f32.mrf.mxu0
  %v3378 = vadd.f32 %v1825, %v3377
  %3379 = vmatmul.f32.gmra.mxu0 %v2596
  %v3380 = vpop.f32.mrf.mxu0
  %v3381 = vadd.f32 %v1828, %v3380
  %3382 = vmatmul.f32.gmra.mxu0 %v2599
  %v3383 = vpop.f32.mrf.mxu0
  %v3384 = vadd.f32 %v1831, %v3383
  %3385 = vmatmul.f32.gmra.mxu0 %v2602
  %v3386 = vpop.f32.mrf.mxu0
  %v3387 = vadd.f32 %v1834, %v3386
  %3388 = vmatmul.f32.gmra.mxu0 %v2605
  %v3389 = vpop.f32.mrf.mxu0
  %v3390 = vadd.f32 %v1837, %v3389
  %3391 = vmatmul.f32.gmra.mxu0 %v2608
  %v3392 = vpop.f32.mrf.mxu0
  %v3393 = vadd.f32 %v1840, %v3392
  %3394 = vmatmul.f32.gmra.mxu0 %v2611
  %v3395 = vpop.f32.mrf.mxu0
  %v3396 = vadd.f32 %v1843, %v3395
  %3397 = vmatmul.f32.gmra.mxu0 %v2614
  %v3398 = vpop.f32.mrf.mxu0
  %v3399 = vadd.f32 %v1846, %v3398
  %3400 = vmatmul.f32.gmra.mxu0 %v2617
  %v3401 = vpop.f32.mrf.mxu0
  %v3402 = vadd.f32 %v1849, %v3401
  %3403 = vmatmul.f32.gmra.mxu0 %v2620
  %v3404 = vpop.f32.mrf.mxu0
  %v3405 = vadd.f32 %v1852, %v3404
  %3406 = vmatmul.f32.gmra.mxu0 %v2623
  %v3407 = vpop.f32.mrf.mxu0
  %v3408 = vadd.f32 %v1855, %v3407
  %3409 = vmatmul.f32.gmra.mxu0 %v2626
  %v3410 = vpop.f32.mrf.mxu0
  %v3411 = vadd.f32 %v1858, %v3410
  %3412 = vmatmul.f32.gmra.mxu0 %v2629
  %v3413 = vpop.f32.mrf.mxu0
  %v3414 = vadd.f32 %v1861, %v3413
  %3415 = vmatmul.f32.gmra.mxu0 %v2632
  %v3416 = vpop.f32.mrf.mxu0
  %v3417 = vadd.f32 %v1864, %v3416
  %3418 = vmatmul.f32.gmra.mxu0 %v2635
  %v3419 = vpop.f32.mrf.mxu0
  %v3420 = vadd.f32 %v1867, %v3419
  %3421 = vmatmul.f32.gmra.mxu0 %v2638
  %v3422 = vpop.f32.mrf.mxu0
  %v3423 = vadd.f32 %v1870, %v3422
  %3424 = vmatmul.f32.gmra.mxu0 %v2641
  %v3425 = vpop.f32.mrf.mxu0
  %v3426 = vadd.f32 %v1873, %v3425
  %3427 = vmatmul.f32.gmra.mxu0 %v2644
  %v3428 = vpop.f32.mrf.mxu0
  %v3429 = vadd.f32 %v1876, %v3428
  %3430 = vmatmul.f32.gmra.mxu0 %v2647
  %v3431 = vpop.f32.mrf.mxu0
  %v3432 = vadd.f32 %v1879, %v3431
  %3433 = vmatmul.f32.gmra.mxu0 %v2650
  %v3434 = vpop.f32.mrf.mxu0
  %v3435 = vadd.f32 %v1882, %v3434
  %3436 = vmatmul.f32.gmra.mxu0 %v2653
  %v3437 = vpop.f32.mrf.mxu0
  %v3438 = vadd.f32 %v1885, %v3437
  %3439 = vmatmul.f32.gmra.mxu0 %v2656
  %v3440 = vpop.f32.mrf.mxu0
  %v3441 = vadd.f32 %v1888, %v3440
  %3442 = vmatmul.f32.gmra.mxu0 %v2659
  %v3443 = vpop.f32.mrf.mxu0
  %v3444 = vadd.f32 %v1891, %v3443
  %3445 = vmatmul.f32.gmra.mxu0 %v2662
  %v3446 = vpop.f32.mrf.mxu0
  %v3447 = vadd.f32 %v1894, %v3446
  %3448 = vmatmul.f32.gmra.mxu0 %v2665
  %v3449 = vpop.f32.mrf.mxu0
  %v3450 = vadd.f32 %v1897, %v3449
  %3451 = vmatmul.f32.gmra.mxu0 %v2668
  %v3452 = vpop.f32.mrf.mxu0
  %v3453 = vadd.f32 %v1900, %v3452
  %3454 = vmatmul.f32.gmra.mxu0 %v2671
  %v3455 = vpop.f32.mrf.mxu0
  %v3456 = vadd.f32 %v1903, %v3455
  %3457 = vmatmul.f32.gmra.mxu0 %v2674
  %v3458 = vpop.f32.mrf.mxu0
  %v3459 = vadd.f32 %v1906, %v3458
  %3460 = vmatmul.f32.gmra.mxu0 %v2677
  %v3461 = vpop.f32.mrf.mxu0
  %v3462 = vadd.f32 %v1909, %v3461
  %3463 = vmatmul.f32.gmra.mxu0 %v2680
  %v3464 = vpop.f32.mrf.mxu0
  %v3465 = vadd.f32 %v1912, %v3464
  %3466 = vmatmul.f32.gmra.mxu0 %v2683
  %v3467 = vpop.f32.mrf.mxu0
  %v3468 = vadd.f32 %v1915, %v3467
  %3469 = vmatmul.f32.gmra.mxu0 %v2686
  %v3470 = vpop.f32.mrf.mxu0
  %v3471 = vadd.f32 %v1918, %v3470
  %3472 = vmatmul.f32.gmra.mxu0 %v2689
  %v3473 = vpop.f32.mrf.mxu0
  %v3474 = vadd.f32 %v1921, %v3473
  %3475 = vmatmul.f32.gmra.mxu0 %v2692
  %v3476 = vpop.f32.mrf.mxu0
  %v3477 = vadd.f32 %v1924, %v3476
  %3478 = vmatmul.f32.gmra.mxu0 %v2695
  %v3479 = vpop.f32.mrf.mxu0
  %v3480 = vadd.f32 %v1927, %v3479
  %3481 = vmatmul.f32.gmra.mxu0 %v2698
  %v3482 = vpop.f32.mrf.mxu0
  %v3483 = vadd.f32 %v1930, %v3482
  %3484 = vmatmul.f32.gmra.mxu0 %v2701
  %v3485 = vpop.f32.mrf.mxu0
  %v3486 = vadd.f32 %v1933, %v3485
  %3487 = vmatmul.f32.gmra.mxu0 %v2704
  %v3488 = vpop.f32.mrf.mxu0
  %v3489 = vadd.f32 %v1936, %v3488
  %3490 = vmatmul.f32.gmra.mxu0 %v2707
  %v3491 = vpop.f32.mrf.mxu0
  %v3492 = vadd.f32 %v1939, %v3491
  %3493 = vmatmul.f32.gmra.mxu0 %v2710
  %v3494 = vpop.f32.mrf.mxu0
  %v3495 = vadd.f32 %v1942, %v3494
  %3496 = vmatmul.f32.gmra.mxu0 %v2713
  %v3497 = vpop.f32.mrf.mxu0
  %v3498 = vadd.f32 %v1945, %v3497
  %3499 = vmatmul.f32.gmra.mxu0 %v2716
  %v3500 = vpop.f32.mrf.mxu0
  %v3501 = vadd.f32 %v1948, %v3500
  %3502 = vmatmul.f32.gmra.mxu0 %v2719
  %v3503 = vpop.f32.mrf.mxu0
  %v3504 = vadd.f32 %v1951, %v3503
  %3505 = vmatmul.f32.gmra.mxu0 %v2722
  %v3506 = vpop.f32.mrf.mxu0
  %v3507 = vadd.f32 %v1954, %v3506
  %3508 = vmatmul.f32.gmra.mxu0 %v2725
  %v3509 = vpop.f32.mrf.mxu0
  %v3510 = vadd.f32 %v1957, %v3509
  %3511 = vmatmul.f32.gmra.mxu0 %v2728
  %v3512 = vpop.f32.mrf.mxu0
  %v3513 = vadd.f32 %v1960, %v3512
  %3514 = vmatmul.f32.gmra.mxu0 %v2731
  %v3515 = vpop.f32.mrf.mxu0
  %v3516 = vadd.f32 %v1963, %v3515
  %3517 = vmatmul.f32.gmra.mxu0 %v2734
  %v3518 = vpop.f32.mrf.mxu0
  %v3519 = vadd.f32 %v1966, %v3518
  %3520 = vmatmul.f32.gmra.mxu0 %v2737
  %v3521 = vpop.f32.mrf.mxu0
  %v3522 = vadd.f32 %v1969, %v3521
  %3523 = vmatmul.f32.gmra.mxu0 %v2740
  %v3524 = vpop.f32.mrf.mxu0
  %v3525 = vadd.f32 %v1972, %v3524
  %3526 = vmatmul.f32.gmra.mxu0 %v2743
  %v3527 = vpop.f32.mrf.mxu0
  %v3528 = vadd.f32 %v1975, %v3527
  %3529 = vmatmul.f32.gmra.mxu0 %v2746
  %v3530 = vpop.f32.mrf.mxu0
  %v3531 = vadd.f32 %v1978, %v3530
  %3532 = vmatmul.f32.gmra.mxu0 %v2749
  %v3533 = vpop.f32.mrf.mxu0
  %v3534 = vadd.f32 %v1981, %v3533
  %3535 = vmatmul.f32.gmra.mxu0 %v2752
  %v3536 = vpop.f32.mrf.mxu0
  %v3537 = vadd.f32 %v1984, %v3536
  %3538 = vmatmul.f32.gmra.mxu0 %v2755
  %v3539 = vpop.f32.mrf.mxu0
  %v3540 = vadd.f32 %v1987, %v3539
  %3541 = vmatmul.f32.gmra.mxu0 %v2758
  %v3542 = vpop.f32.mrf.mxu0
  %v3543 = vadd.f32 %v1990, %v3542
  %3544 = vmatmul.f32.gmra.mxu0 %v2761
  %v3545 = vpop.f32.mrf.mxu0
  %v3546 = vadd.f32 %v1993, %v3545
  %3547 = vmatmul.f32.gmra.mxu0 %v2764
  %v3548 = vpop.f32.mrf.mxu0
  %v3549 = vadd.f32 %v1996, %v3548
  %3550 = vmatmul.f32.gmra.mxu0 %v2767
  %v3551 = vpop.f32.mrf.mxu0
  %v3552 = vadd.f32 %v1999, %v3551
  %3553 = vmatmul.f32.gmra.mxu0 %v2770
  %v3554 = vpop.f32.mrf.mxu0
  %v3555 = vadd.f32 %v2002, %v3554
  %3556 = vmatmul.f32.gmra.mxu0 %v2773
  %v3557 = vpop.f32.mrf.mxu0
  %v3558 = vadd.f32 %v2005, %v3557
  %3559 = vmatmul.f32.gmra.mxu0 %v2776
  %v3560 = vpop.f32.mrf.mxu0
  %v3561 = vadd.f32 %v2008, %v3560
  %3562 = vmatmul.f32.gmra.mxu0 %v2779
  %v3563 = vpop.f32.mrf.mxu0
  %v3564 = vadd.f32 %v2011, %v3563
  %3565 = vmatmul.f32.gmra.mxu0 %v2782
  %v3566 = vpop.f32.mrf.mxu0
  %v3567 = vadd.f32 %v2014, %v3566
  %3568 = vmatmul.f32.gmra.mxu0 %v2785
  %v3569 = vpop.f32.mrf.mxu0
  %v3570 = vadd.f32 %v2017, %v3569
  %3571 = vmatmul.f32.gmra.mxu0 %v2788
  %v3572 = vpop.f32.mrf.mxu0
  %v3573 = vadd.f32 %v2020, %v3572
  %3574 = vmatmul.f32.gmra.mxu0 %v2791
  %v3575 = vpop.f32.mrf.mxu0
  %v3576 = vadd.f32 %v2023, %v3575
  %3577 = vmatmul.f32.gmra.mxu0 %v2794
  %v3578 = vpop.f32.mrf.mxu0
  %v3579 = vadd.f32 %v2026, %v3578
  %3580 = vmatmul.f32.gmra.mxu0 %v2797
  %v3581 = vpop.f32.mrf.mxu0
  %v3582 = vadd.f32 %v2029, %v3581
  %3583 = vmatmul.f32.gmra.mxu0 %v2800
  %v3584 = vpop.f32.mrf.mxu0
  %v3585 = vadd.f32 %v2032, %v3584
  %3586 = vmatmul.f32.gmra.mxu0 %v2803
  %v3587 = vpop.f32.mrf.mxu0
  %v3588 = vadd.f32 %v2035, %v3587
  %3589 = vmatmul.f32.gmra.mxu0 %v2806
  %v3590 = vpop.f32.mrf.mxu0
  %v3591 = vadd.f32 %v2038, %v3590
  %3592 = vmatmul.f32.gmra.mxu0 %v2809
  %v3593 = vpop.f32.mrf.mxu0
  %v3594 = vadd.f32 %v2041, %v3593
  %3595 = vmatmul.f32.gmra.mxu0 %v2812
  %v3596 = vpop.f32.mrf.mxu0
  %v3597 = vadd.f32 %v2044, %v3596
  %3598 = vmatmul.f32.gmra.mxu0 %v2815
  %v3599 = vpop.f32.mrf.mxu0
  %v3600 = vadd.f32 %v2047, %v3599
  %3601 = vmatmul.f32.gmra.mxu0 %v2818
  %v3602 = vpop.f32.mrf.mxu0
  %v3603 = vadd.f32 %v2050, %v3602
  %3604 = vmatmul.f32.gmra.mxu0 %v2821
  %v3605 = vpop.f32.mrf.mxu0
  %v3606 = vadd.f32 %v2053, %v3605
  %3607 = vmatmul.f32.gmra.mxu0 %v2824
  %v3608 = vpop.f32.mrf.mxu0
  %v3609 = vadd.f32 %v2056, %v3608
  %3610 = vmatmul.f32.gmra.mxu0 %v2827
  %v3611 = vpop.f32.mrf.mxu0
  %v3612 = vadd.f32 %v2059, %v3611
  %3613 = vmatmul.f32.gmra.mxu0 %v2830
  %v3614 = vpop.f32.mrf.mxu0
  %v3615 = vadd.f32 %v2062, %v3614
  %3616 = vmatmul.f32.gmra.mxu0 %v2833
  %v3617 = vpop.f32.mrf.mxu0
  %v3618 = vadd.f32 %v2065, %v3617
  %3619 = vmatmul.f32.gmra.mxu0 %v2836
  %v3620 = vpop.f32.mrf.mxu0
  %v3621 = vadd.f32 %v2068, %v3620
  %3622 = vmatmul.f32.gmra.mxu0 %v2839
  %v3623 = vpop.f32.mrf.mxu0
  %v3624 = vadd.f32 %v2071, %v3623
  %3625 = vmatmul.f32.gmra.mxu0 %v2842
  %v3626 = vpop.f32.mrf.mxu0
  %v3627 = vadd.f32 %v2074, %v3626
  %3628 = vmatmul.f32.gmra.mxu0 %v2845
  %v3629 = vpop.f32.mrf.mxu0
  %v3630 = vadd.f32 %v2077, %v3629
  %3631 = vmatmul.f32.gmra.mxu0 %v2848
  %v3632 = vpop.f32.mrf.mxu0
  %v3633 = vadd.f32 %v2080, %v3632
  %3634 = vmatmul.f32.gmra.mxu0 %v2851
  %v3635 = vpop.f32.mrf.mxu0
  %v3636 = vadd.f32 %v2083, %v3635
  %3637 = vmatmul.f32.gmra.mxu0 %v2854
  %v3638 = vpop.f32.mrf.mxu0
  %v3639 = vadd.f32 %v2086, %v3638
  %3640 = vdwg.mxu0
  %s3641 = scalar_lea.vmem %s0, 40
  %v3642 = vld [vmem:[%s3641] sm:$0xff]
  %v3643 = vld [vmem:[%s3641 + $0x8] sm:$0xff]
  %v3644 = vld [vmem:[%s3641 + $0x10] sm:$0xff]
  %v3645 = vld [vmem:[%s3641 + $0x18] sm:$0xff]
  %v3646 = vld [vmem:[%s3641 + $0x28] sm:$0xff]
  %v3647 = vld [vmem:[%s3641 + $0x30] sm:$0xff]
  %v3648 = vld [vmem:[%s3641 + $0x38] sm:$0xff]
  %v3649 = vld [vmem:[%s3641 + $0x40] sm:$0xff]
  %v3650 = vld [vmem:[%s3641 + $0x50] sm:$0xff]
  %v3651 = vld [vmem:[%s3641 + $0x58] sm:$0xff]
  %v3652 = vld [vmem:[%s3641 + $0x60] sm:$0xff]
  %v3653 = vld [vmem:[%s3641 + $0x68] sm:$0xff]
  %v3654 = vld [vmem:[%s3641 + $0x78] sm:$0xff]
  %v3655 = vld [vmem:[%s3641 + $0x80] sm:$0xff]
  %v3656 = vld [vmem:[%s3641 + $0x88] sm:$0xff]
  %v3657 = vld [vmem:[%s3641 + $0x90] sm:$0xff]
  %v3658 = vld [vmem:[%s3641 + $0xa0] sm:$0xff]
  %v3659 = vld [vmem:[%s3641 + $0xa8] sm:$0xff]
  %v3660 = vld [vmem:[%s3641 + $0xb0] sm:$0xff]
  %v3661 = vld [vmem:[%s3641 + $0xb8] sm:$0xff]
  %v3662 = vld [vmem:[%s3641 + $0xc8] sm:$0xff]
  %v3663 = vld [vmem:[%s3641 + $0xd0] sm:$0xff]
  %v3664 = vld [vmem:[%s3641 + $0xd8] sm:$0xff]
  %v3665 = vld [vmem:[%s3641 + $0xe0] sm:$0xff]
  %v3666 = vld [vmem:[%s3641 + $0xf0] sm:$0xff]
  %v3667 = vld [vmem:[%s3641 + $0xf8] sm:$0xff]
  %v3668 = vld [vmem:[%s3641 + $0x100] sm:$0xff]
  %v3669 = vld [vmem:[%s3641 + $0x108] sm:$0xff]
  %v3670 = vld [vmem:[%s3641 + $0x118] sm:$0xff]
  %v3671 = vld [vmem:[%s3641 + $0x120] sm:$0xff]
  %v3672 = vld [vmem:[%s3641 + $0x128] sm:$0xff]
  %v3673 = vld [vmem:[%s3641 + $0x130] sm:$0xff]
  %v3674 = vld [vmem:[%s3641 + $0x140] sm:$0xff]
  %v3675 = vld [vmem:[%s3641 + $0x148] sm:$0xff]
  %v3676 = vld [vmem:[%s3641 + $0x150] sm:$0xff]
  %v3677 = vld [vmem:[%s3641 + $0x158] sm:$0xff]
  %v3678 = vld [vmem:[%s3641 + $0x168] sm:$0xff]
  %v3679 = vld [vmem:[%s3641 + $0x170] sm:$0xff]
  %v3680 = vld [vmem:[%s3641 + $0x178] sm:$0xff]
  %v3681 = vld [vmem:[%s3641 + $0x180] sm:$0xff]
  %v3682 = vld [vmem:[%s3641 + $0x190] sm:$0xff]
  %v3683 = vld [vmem:[%s3641 + $0x198] sm:$0xff]
  %v3684 = vld [vmem:[%s3641 + $0x1a0] sm:$0xff]
  %v3685 = vld [vmem:[%s3641 + $0x1a8] sm:$0xff]
  %v3686 = vld [vmem:[%s3641 + $0x1b8] sm:$0xff]
  %v3687 = vld [vmem:[%s3641 + $0x1c0] sm:$0xff]
  %v3688 = vld [vmem:[%s3641 + $0x1c8] sm:$0xff]
  %v3689 = vld [vmem:[%s3641 + $0x1d0] sm:$0xff]
  %v3690 = vld [vmem:[%s3641 + $0x1e0] sm:$0xff]
  %v3691 = vld [vmem:[%s3641 + $0x1e8] sm:$0xff]
  %v3692 = vld [vmem:[%s3641 + $0x1f0] sm:$0xff]
  %v3693 = vld [vmem:[%s3641 + $0x1f8] sm:$0xff]
  %v3694 = vld [vmem:[%s3641 + $0x208] sm:$0xff]
  %v3695 = vld [vmem:[%s3641 + $0x210] sm:$0xff]
  %v3696 = vld [vmem:[%s3641 + $0x218] sm:$0xff]
  %v3697 = vld [vmem:[%s3641 + $0x220] sm:$0xff]
  %v3698 = vld [vmem:[%s3641 + $0x230] sm:$0xff]
  %v3699 = vld [vmem:[%s3641 + $0x238] sm:$0xff]
  %v3700 = vld [vmem:[%s3641 + $0x240] sm:$0xff]
  %v3701 = vld [vmem:[%s3641 + $0x248] sm:$0xff]
  %v3702 = vld [vmem:[%s3641 + $0x258] sm:$0xff]
  %v3703 = vld [vmem:[%s3641 + $0x260] sm:$0xff]
  %v3704 = vld [vmem:[%s3641 + $0x268] sm:$0xff]
  %v3705 = vld [vmem:[%s3641 + $0x270] sm:$0xff]
  %v3706 = vld [vmem:[%s3641 + $0x280] sm:$0xff]
  %v3707 = vld [vmem:[%s3641 + $0x288] sm:$0xff]
  %v3708 = vld [vmem:[%s3641 + $0x290] sm:$0xff]
  %v3709 = vld [vmem:[%s3641 + $0x298] sm:$0xff]
  %v3710 = vld [vmem:[%s3641 + $0x2a8] sm:$0xff]
  %v3711 = vld [vmem:[%s3641 + $0x2b0] sm:$0xff]
  %v3712 = vld [vmem:[%s3641 + $0x2b8] sm:$0xff]
  %v3713 = vld [vmem:[%s3641 + $0x2c0] sm:$0xff]
  %v3714 = vld [vmem:[%s3641 + $0x2d0] sm:$0xff]
  %v3715 = vld [vmem:[%s3641 + $0x2d8] sm:$0xff]
  %v3716 = vld [vmem:[%s3641 + $0x2e0] sm:$0xff]
  %v3717 = vld [vmem:[%s3641 + $0x2e8] sm:$0xff]
  %v3718 = vld [vmem:[%s3641 + $0x2f8] sm:$0xff]
  %v3719 = vld [vmem:[%s3641 + $0x300] sm:$0xff]
  %v3720 = vld [vmem:[%s3641 + $0x308] sm:$0xff]
  %v3721 = vld [vmem:[%s3641 + $0x310] sm:$0xff]
  %v3722 = vld [vmem:[%s3641 + $0x320] sm:$0xff]
  %v3723 = vld [vmem:[%s3641 + $0x328] sm:$0xff]
  %v3724 = vld [vmem:[%s3641 + $0x330] sm:$0xff]
  %v3725 = vld [vmem:[%s3641 + $0x338] sm:$0xff]
  %v3726 = vld [vmem:[%s3641 + $0x348] sm:$0xff]
  %v3727 = vld [vmem:[%s3641 + $0x350] sm:$0xff]
  %v3728 = vld [vmem:[%s3641 + $0x358] sm:$0xff]
  %v3729 = vld [vmem:[%s3641 + $0x360] sm:$0xff]
  %v3730 = vld [vmem:[%s3641 + $0x370] sm:$0xff]
  %v3731 = vld [vmem:[%s3641 + $0x378] sm:$0xff]
  %v3732 = vld [vmem:[%s3641 + $0x380] sm:$0xff]
  %v3733 = vld [vmem:[%s3641 + $0x388] sm:$0xff]
  %v3734 = vld [vmem:[%s3641 + $0x398] sm:$0xff]
  %v3735 = vld [vmem:[%s3641 + $0x3a0] sm:$0xff]
  %v3736 = vld [vmem:[%s3641 + $0x3a8] sm:$0xff]
  %v3737 = vld [vmem:[%s3641 + $0x3b0] sm:$0xff]
  %v3738 = vld [vmem:[%s3641 + $0x3c0] sm:$0xff]
  %v3739 = vld [vmem:[%s3641 + $0x3c8] sm:$0xff]
  %v3740 = vld [vmem:[%s3641 + $0x3d0] sm:$0xff]
  %v3741 = vld [vmem:[%s3641 + $0x3d8] sm:$0xff]
  %v3742 = vld [vmem:[%s3641 + $0x3e8] sm:$0xff]
  %v3743 = vld [vmem:[%s3641 + $0x3f0] sm:$0xff]
  %v3744 = vld [vmem:[%s3641 + $0x3f8] sm:$0xff]
  %v3745 = vld [vmem:[%s3641 + $0x400] sm:$0xff]
  %v3746 = vld [vmem:[%s3641 + $0x410] sm:$0xff]
  %v3747 = vld [vmem:[%s3641 + $0x418] sm:$0xff]
  %v3748 = vld [vmem:[%s3641 + $0x420] sm:$0xff]
  %v3749 = vld [vmem:[%s3641 + $0x428] sm:$0xff]
  %v3750 = vld [vmem:[%s3641 + $0x438] sm:$0xff]
  %v3751 = vld [vmem:[%s3641 + $0x440] sm:$0xff]
  %v3752 = vld [vmem:[%s3641 + $0x448] sm:$0xff]
  %v3753 = vld [vmem:[%s3641 + $0x450] sm:$0xff]
  %v3754 = vld [vmem:[%s3641 + $0x460] sm:$0xff]
  %v3755 = vld [vmem:[%s3641 + $0x468] sm:$0xff]
  %v3756 = vld [vmem:[%s3641 + $0x470] sm:$0xff]
  %v3757 = vld [vmem:[%s3641 + $0x478] sm:$0xff]
  %v3758 = vld [vmem:[%s3641 + $0x488] sm:$0xff]
  %v3759 = vld [vmem:[%s3641 + $0x490] sm:$0xff]
  %v3760 = vld [vmem:[%s3641 + $0x498] sm:$0xff]
  %v3761 = vld [vmem:[%s3641 + $0x4a0] sm:$0xff]
  %v3762 = vld [vmem:[%s3641 + $0x4b0] sm:$0xff]
  %v3763 = vld [vmem:[%s3641 + $0x4b8] sm:$0xff]
  %v3764 = vld [vmem:[%s3641 + $0x4c0] sm:$0xff]
  %v3765 = vld [vmem:[%s3641 + $0x4c8] sm:$0xff]
  %v3766 = vld [vmem:[%s3641 + $0x4d8] sm:$0xff]
  %v3767 = vld [vmem:[%s3641 + $0x4e0] sm:$0xff]
  %v3768 = vld [vmem:[%s3641 + $0x4e8] sm:$0xff]
  %v3769 = vld [vmem:[%s3641 + $0x4f0] sm:$0xff]
  %v3770 = vld [vmem:[%s3641 + $0x528] sm:$0xff]
  %v3771 = vld [vmem:[%s3641 + $0x530] sm:$0xff]
  %v3772 = vld [vmem:[%s3641 + $0x538] sm:$0xff]
  %v3773 = vld [vmem:[%s3641 + $0x540] sm:$0xff]
  %v3774 = vld [vmem:[%s3641 + $0x550] sm:$0xff]
  %v3775 = vld [vmem:[%s3641 + $0x558] sm:$0xff]
  %v3776 = vld [vmem:[%s3641 + $0x560] sm:$0xff]
  %v3777 = vld [vmem:[%s3641 + $0x568] sm:$0xff]
  %v3778 = vld [vmem:[%s3641 + $0x578] sm:$0xff]
  %v3779 = vld [vmem:[%s3641 + $0x580] sm:$0xff]
  %v3780 = vld [vmem:[%s3641 + $0x588] sm:$0xff]
  %v3781 = vld [vmem:[%s3641 + $0x590] sm:$0xff]
  %v3782 = vld [vmem:[%s3641 + $0x5a0] sm:$0xff]
  %v3783 = vld [vmem:[%s3641 + $0x5a8] sm:$0xff]
  %v3784 = vld [vmem:[%s3641 + $0x5b0] sm:$0xff]
  %v3785 = vld [vmem:[%s3641 + $0x5b8] sm:$0xff]
  %v3786 = vld [vmem:[%s3641 + $0x5c8] sm:$0xff]
  %v3787 = vld [vmem:[%s3641 + $0x5d0] sm:$0xff]
  %v3788 = vld [vmem:[%s3641 + $0x5d8] sm:$0xff]
  %v3789 = vld [vmem:[%s3641 + $0x5e0] sm:$0xff]
  %v3790 = vld [vmem:[%s3641 + $0x5f0] sm:$0xff]
  %v3791 = vld [vmem:[%s3641 + $0x5f8] sm:$0xff]
  %v3792 = vld [vmem:[%s3641 + $0x600] sm:$0xff]
  %v3793 = vld [vmem:[%s3641 + $0x608] sm:$0xff]
  %v3794 = vld [vmem:[%s3641 + $0x618] sm:$0xff]
  %v3795 = vld [vmem:[%s3641 + $0x620] sm:$0xff]
  %v3796 = vld [vmem:[%s3641 + $0x628] sm:$0xff]
  %v3797 = vld [vmem:[%s3641 + $0x630] sm:$0xff]
  %v3798 = vld [vmem:[%s3641 + $0x640] sm:$0xff]
  %v3799 = vld [vmem:[%s3641 + $0x648] sm:$0xff]
  %v3800 = vld [vmem:[%s3641 + $0x650] sm:$0xff]
  %v3801 = vld [vmem:[%s3641 + $0x658] sm:$0xff]
  %v3802 = vld [vmem:[%s3641 + $0x668] sm:$0xff]
  %v3803 = vld [vmem:[%s3641 + $0x670] sm:$0xff]
  %v3804 = vld [vmem:[%s3641 + $0x678] sm:$0xff]
  %v3805 = vld [vmem:[%s3641 + $0x680] sm:$0xff]
  %v3806 = vld [vmem:[%s3641 + $0x690] sm:$0xff]
  %v3807 = vld [vmem:[%s3641 + $0x698] sm:$0xff]
  %v3808 = vld [vmem:[%s3641 + $0x6a0] sm:$0xff]
  %v3809 = vld [vmem:[%s3641 + $0x6a8] sm:$0xff]
  %v3810 = vld [vmem:[%s3641 + $0x6b8] sm:$0xff]
  %v3811 = vld [vmem:[%s3641 + $0x6c0] sm:$0xff]
  %v3812 = vld [vmem:[%s3641 + $0x6c8] sm:$0xff]
  %v3813 = vld [vmem:[%s3641 + $0x6d0] sm:$0xff]
  %v3814 = vld [vmem:[%s3641 + $0x6e0] sm:$0xff]
  %v3815 = vld [vmem:[%s3641 + $0x6e8] sm:$0xff]
  %v3816 = vld [vmem:[%s3641 + $0x6f0] sm:$0xff]
  %v3817 = vld [vmem:[%s3641 + $0x6f8] sm:$0xff]
  %v3818 = vld [vmem:[%s3641 + $0x708] sm:$0xff]
  %v3819 = vld [vmem:[%s3641 + $0x710] sm:$0xff]
  %v3820 = vld [vmem:[%s3641 + $0x718] sm:$0xff]
  %v3821 = vld [vmem:[%s3641 + $0x720] sm:$0xff]
  %v3822 = vld [vmem:[%s3641 + $0x730] sm:$0xff]
  %v3823 = vld [vmem:[%s3641 + $0x738] sm:$0xff]
  %v3824 = vld [vmem:[%s3641 + $0x740] sm:$0xff]
  %v3825 = vld [vmem:[%s3641 + $0x748] sm:$0xff]
  %v3826 = vld [vmem:[%s3641 + $0x758] sm:$0xff]
  %v3827 = vld [vmem:[%s3641 + $0x760] sm:$0xff]
  %v3828 = vld [vmem:[%s3641 + $0x768] sm:$0xff]
  %v3829 = vld [vmem:[%s3641 + $0x770] sm:$0xff]
  %v3830 = vld [vmem:[%s3641 + $0x780] sm:$0xff]
  %v3831 = vld [vmem:[%s3641 + $0x788] sm:$0xff]
  %v3832 = vld [vmem:[%s3641 + $0x790] sm:$0xff]
  %v3833 = vld [vmem:[%s3641 + $0x798] sm:$0xff]
  %v3834 = vld [vmem:[%s3641 + $0x7a8] sm:$0xff]
  %v3835 = vld [vmem:[%s3641 + $0x7b0] sm:$0xff]
  %v3836 = vld [vmem:[%s3641 + $0x7b8] sm:$0xff]
  %v3837 = vld [vmem:[%s3641 + $0x7c0] sm:$0xff]
  %v3838 = vld [vmem:[%s3641 + $0x7d0] sm:$0xff]
  %v3839 = vld [vmem:[%s3641 + $0x7d8] sm:$0xff]
  %v3840 = vld [vmem:[%s3641 + $0x7e0] sm:$0xff]
  %v3841 = vld [vmem:[%s3641 + $0x7e8] sm:$0xff]
  %v3842 = vld [vmem:[%s3641 + $0x7f8] sm:$0xff]
  %v3843 = vld [vmem:[%s3641 + $0x800] sm:$0xff]
  %v3844 = vld [vmem:[%s3641 + $0x808] sm:$0xff]
  %v3845 = vld [vmem:[%s3641 + $0x810] sm:$0xff]
  %v3846 = vld [vmem:[%s3641 + $0x820] sm:$0xff]
  %v3847 = vld [vmem:[%s3641 + $0x828] sm:$0xff]
  %v3848 = vld [vmem:[%s3641 + $0x830] sm:$0xff]
  %v3849 = vld [vmem:[%s3641 + $0x838] sm:$0xff]
  %v3850 = vld [vmem:[%s3641 + $0x848] sm:$0xff]
  %v3851 = vld [vmem:[%s3641 + $0x850] sm:$0xff]
  %v3852 = vld [vmem:[%s3641 + $0x858] sm:$0xff]
  %v3853 = vld [vmem:[%s3641 + $0x860] sm:$0xff]
  %v3854 = vld [vmem:[%s3641 + $0x870] sm:$0xff]
  %v3855 = vld [vmem:[%s3641 + $0x878] sm:$0xff]
  %v3856 = vld [vmem:[%s3641 + $0x880] sm:$0xff]
  %v3857 = vld [vmem:[%s3641 + $0x888] sm:$0xff]
  %v3858 = vld [vmem:[%s3641 + $0x898] sm:$0xff]
  %v3859 = vld [vmem:[%s3641 + $0x8a0] sm:$0xff]
  %v3860 = vld [vmem:[%s3641 + $0x8a8] sm:$0xff]
  %v3861 = vld [vmem:[%s3641 + $0x8b0] sm:$0xff]
  %v3862 = vld [vmem:[%s3641 + $0x8c0] sm:$0xff]
  %v3863 = vld [vmem:[%s3641 + $0x8c8] sm:$0xff]
  %v3864 = vld [vmem:[%s3641 + $0x8d0] sm:$0xff]
  %v3865 = vld [vmem:[%s3641 + $0x8d8] sm:$0xff]
  %v3866 = vld [vmem:[%s3641 + $0x8e8] sm:$0xff]
  %v3867 = vld [vmem:[%s3641 + $0x8f0] sm:$0xff]
  %v3868 = vld [vmem:[%s3641 + $0x8f8] sm:$0xff]
  %v3869 = vld [vmem:[%s3641 + $0x900] sm:$0xff]
  %v3870 = vld [vmem:[%s3641 + $0x910] sm:$0xff]
  %v3871 = vld [vmem:[%s3641 + $0x918] sm:$0xff]
  %v3872 = vld [vmem:[%s3641 + $0x920] sm:$0xff]
  %v3873 = vld [vmem:[%s3641 + $0x928] sm:$0xff]
  %v3874 = vld [vmem:[%s3641 + $0x938] sm:$0xff]
  %v3875 = vld [vmem:[%s3641 + $0x940] sm:$0xff]
  %v3876 = vld [vmem:[%s3641 + $0x948] sm:$0xff]
  %v3877 = vld [vmem:[%s3641 + $0x950] sm:$0xff]
  %v3878 = vld [vmem:[%s3641 + $0x960] sm:$0xff]
  %v3879 = vld [vmem:[%s3641 + $0x968] sm:$0xff]
  %v3880 = vld [vmem:[%s3641 + $0x970] sm:$0xff]
  %v3881 = vld [vmem:[%s3641 + $0x978] sm:$0xff]
  %v3882 = vld [vmem:[%s3641 + $0x988] sm:$0xff]
  %v3883 = vld [vmem:[%s3641 + $0x990] sm:$0xff]
  %v3884 = vld [vmem:[%s3641 + $0x998] sm:$0xff]
  %v3885 = vld [vmem:[%s3641 + $0x9a0] sm:$0xff]
  %v3886 = vld [vmem:[%s3641 + $0x9b0] sm:$0xff]
  %v3887 = vld [vmem:[%s3641 + $0x9b8] sm:$0xff]
  %v3888 = vld [vmem:[%s3641 + $0x9c0] sm:$0xff]
  %v3889 = vld [vmem:[%s3641 + $0x9c8] sm:$0xff]
  %v3890 = vld [vmem:[%s3641 + $0x9d8] sm:$0xff]
  %v3891 = vld [vmem:[%s3641 + $0x9e0] sm:$0xff]
  %v3892 = vld [vmem:[%s3641 + $0x9e8] sm:$0xff]
  %v3893 = vld [vmem:[%s3641 + $0x9f0] sm:$0xff]
  %v3894 = vld [vmem:[%s3641 + $0xa00] sm:$0xff]
  %v3895 = vld [vmem:[%s3641 + $0xa08] sm:$0xff]
  %v3896 = vld [vmem:[%s3641 + $0xa10] sm:$0xff]
  %v3897 = vld [vmem:[%s3641 + $0xa18] sm:$0xff]
  %s3898 = scalar_lea.vmem %s1, 32
  %v3899 = vld [vmem:[%s3898] sm:$0xff]
  %v3900 = vld [vmem:[%s3898 + $0x8] sm:$0xff]
  %v3902 = vsel %vm534, %v3642, 0
  %v3905 = vsel %vm534, %v3643, 0
  %v3908 = vsel %vm534, %v3644, 0
  %v3911 = vsel %vm534, %v3645, 0
  %v3914 = vsel %vm534, %v3646, 0
  %v3917 = vsel %vm534, %v3647, 0
  %v3920 = vsel %vm534, %v3648, 0
  %v3923 = vsel %vm534, %v3649, 0
  %v3926 = vsel %vm534, %v3650, 0
  %v3929 = vsel %vm534, %v3651, 0
  %v3932 = vsel %vm534, %v3652, 0
  %v3935 = vsel %vm534, %v3653, 0
  %v3938 = vsel %vm534, %v3654, 0
  %v3941 = vsel %vm534, %v3655, 0
  %v3944 = vsel %vm534, %v3656, 0
  %v3947 = vsel %vm534, %v3657, 0
  %v3950 = vsel %vm534, %v3658, 0
  %v3953 = vsel %vm534, %v3659, 0
  %v3956 = vsel %vm534, %v3660, 0
  %v3959 = vsel %vm534, %v3661, 0
  %v3962 = vsel %vm534, %v3662, 0
  %v3965 = vsel %vm534, %v3663, 0
  %v3968 = vsel %vm534, %v3664, 0
  %v3971 = vsel %vm534, %v3665, 0
  %v3974 = vsel %vm534, %v3666, 0
  %v3977 = vsel %vm534, %v3667, 0
  %v3980 = vsel %vm534, %v3668, 0
  %v3983 = vsel %vm534, %v3669, 0
  %v3986 = vsel %vm534, %v3670, 0
  %v3989 = vsel %vm534, %v3671, 0
  %v3992 = vsel %vm534, %v3672, 0
  %v3995 = vsel %vm534, %v3673, 0
  %v3998 = vsel %vm534, %v3674, 0
  %v4001 = vsel %vm534, %v3675, 0
  %v4004 = vsel %vm534, %v3676, 0
  %v4007 = vsel %vm534, %v3677, 0
  %v4010 = vsel %vm534, %v3678, 0
  %v4013 = vsel %vm534, %v3679, 0
  %v4016 = vsel %vm534, %v3680, 0
  %v4019 = vsel %vm534, %v3681, 0
  %v4022 = vsel %vm534, %v3682, 0
  %v4025 = vsel %vm534, %v3683, 0
  %v4028 = vsel %vm534, %v3684, 0
  %v4031 = vsel %vm534, %v3685, 0
  %v4034 = vsel %vm534, %v3686, 0
  %v4037 = vsel %vm534, %v3687, 0
  %v4040 = vsel %vm534, %v3688, 0
  %v4043 = vsel %vm534, %v3689, 0
  %v4046 = vsel %vm534, %v3690, 0
  %v4049 = vsel %vm534, %v3691, 0
  %v4052 = vsel %vm534, %v3692, 0
  %v4055 = vsel %vm534, %v3693, 0
  %v4058 = vsel %vm534, %v3694, 0
  %v4061 = vsel %vm534, %v3695, 0
  %v4064 = vsel %vm534, %v3696, 0
  %v4067 = vsel %vm534, %v3697, 0
  %v4070 = vsel %vm534, %v3698, 0
  %v4073 = vsel %vm534, %v3699, 0
  %v4076 = vsel %vm534, %v3700, 0
  %v4079 = vsel %vm534, %v3701, 0
  %v4082 = vsel %vm534, %v3702, 0
  %v4085 = vsel %vm534, %v3703, 0
  %v4088 = vsel %vm534, %v3704, 0
  %v4091 = vsel %vm534, %v3705, 0
  %v4094 = vsel %vm534, %v3706, 0
  %v4097 = vsel %vm534, %v3707, 0
  %v4100 = vsel %vm534, %v3708, 0
  %v4103 = vsel %vm534, %v3709, 0
  %v4106 = vsel %vm534, %v3710, 0
  %v4109 = vsel %vm534, %v3711, 0
  %v4112 = vsel %vm534, %v3712, 0
  %v4115 = vsel %vm534, %v3713, 0
  %v4118 = vsel %vm534, %v3714, 0
  %v4121 = vsel %vm534, %v3715, 0
  %v4124 = vsel %vm534, %v3716, 0
  %v4127 = vsel %vm534, %v3717, 0
  %v4130 = vsel %vm534, %v3718, 0
  %v4133 = vsel %vm534, %v3719, 0
  %v4136 = vsel %vm534, %v3720, 0
  %v4139 = vsel %vm534, %v3721, 0
  %v4142 = vsel %vm534, %v3722, 0
  %v4145 = vsel %vm534, %v3723, 0
  %v4148 = vsel %vm534, %v3724, 0
  %v4151 = vsel %vm534, %v3725, 0
  %v4154 = vsel %vm534, %v3726, 0
  %v4157 = vsel %vm534, %v3727, 0
  %v4160 = vsel %vm534, %v3728, 0
  %v4163 = vsel %vm534, %v3729, 0
  %v4166 = vsel %vm534, %v3730, 0
  %v4169 = vsel %vm534, %v3731, 0
  %v4172 = vsel %vm534, %v3732, 0
  %v4175 = vsel %vm534, %v3733, 0
  %v4178 = vsel %vm534, %v3734, 0
  %v4181 = vsel %vm534, %v3735, 0
  %v4184 = vsel %vm534, %v3736, 0
  %v4187 = vsel %vm534, %v3737, 0
  %v4190 = vsel %vm534, %v3738, 0
  %v4193 = vsel %vm534, %v3739, 0
  %v4196 = vsel %vm534, %v3740, 0
  %v4199 = vsel %vm534, %v3741, 0
  %v4202 = vsel %vm534, %v3742, 0
  %v4205 = vsel %vm534, %v3743, 0
  %v4208 = vsel %vm534, %v3744, 0
  %v4211 = vsel %vm534, %v3745, 0
  %v4214 = vsel %vm534, %v3746, 0
  %v4217 = vsel %vm534, %v3747, 0
  %v4220 = vsel %vm534, %v3748, 0
  %v4223 = vsel %vm534, %v3749, 0
  %v4226 = vsel %vm534, %v3750, 0
  %v4229 = vsel %vm534, %v3751, 0
  %v4232 = vsel %vm534, %v3752, 0
  %v4235 = vsel %vm534, %v3753, 0
  %v4238 = vsel %vm534, %v3754, 0
  %v4241 = vsel %vm534, %v3755, 0
  %v4244 = vsel %vm534, %v3756, 0
  %v4247 = vsel %vm534, %v3757, 0
  %v4250 = vsel %vm534, %v3758, 0
  %v4253 = vsel %vm534, %v3759, 0
  %v4256 = vsel %vm534, %v3760, 0
  %v4259 = vsel %vm534, %v3761, 0
  %v4262 = vsel %vm534, %v3762, 0
  %v4265 = vsel %vm534, %v3763, 0
  %v4268 = vsel %vm534, %v3764, 0
  %v4271 = vsel %vm534, %v3765, 0
  %v4274 = vsel %vm534, %v3766, 0
  %v4277 = vsel %vm534, %v3767, 0
  %v4280 = vsel %vm534, %v3768, 0
  %v4283 = vsel %vm534, %v3769, 0
  %v4286 = vsel %vm534, %v3770, 0
  %v4289 = vsel %vm534, %v3771, 0
  %v4292 = vsel %vm534, %v3772, 0
  %v4295 = vsel %vm534, %v3773, 0
  %v4298 = vsel %vm534, %v3774, 0
  %v4301 = vsel %vm534, %v3775, 0
  %v4304 = vsel %vm534, %v3776, 0
  %v4307 = vsel %vm534, %v3777, 0
  %v4310 = vsel %vm534, %v3778, 0
  %v4313 = vsel %vm534, %v3779, 0
  %v4316 = vsel %vm534, %v3780, 0
  %v4319 = vsel %vm534, %v3781, 0
  %v4322 = vsel %vm534, %v3782, 0
  %v4325 = vsel %vm534, %v3783, 0
  %v4328 = vsel %vm534, %v3784, 0
  %v4331 = vsel %vm534, %v3785, 0
  %v4334 = vsel %vm534, %v3786, 0
  %v4337 = vsel %vm534, %v3787, 0
  %v4340 = vsel %vm534, %v3788, 0
  %v4343 = vsel %vm534, %v3789, 0
  %v4346 = vsel %vm534, %v3790, 0
  %v4349 = vsel %vm534, %v3791, 0
  %v4352 = vsel %vm534, %v3792, 0
  %v4355 = vsel %vm534, %v3793, 0
  %v4358 = vsel %vm534, %v3794, 0
  %v4361 = vsel %vm534, %v3795, 0
  %v4364 = vsel %vm534, %v3796, 0
  %v4367 = vsel %vm534, %v3797, 0
  %v4370 = vsel %vm534, %v3798, 0
  %v4373 = vsel %vm534, %v3799, 0
  %v4376 = vsel %vm534, %v3800, 0
  %v4379 = vsel %vm534, %v3801, 0
  %v4382 = vsel %vm534, %v3802, 0
  %v4385 = vsel %vm534, %v3803, 0
  %v4388 = vsel %vm534, %v3804, 0
  %v4391 = vsel %vm534, %v3805, 0
  %v4394 = vsel %vm534, %v3806, 0
  %v4397 = vsel %vm534, %v3807, 0
  %v4400 = vsel %vm534, %v3808, 0
  %v4403 = vsel %vm534, %v3809, 0
  %v4406 = vsel %vm534, %v3810, 0
  %v4409 = vsel %vm534, %v3811, 0
  %v4412 = vsel %vm534, %v3812, 0
  %v4415 = vsel %vm534, %v3813, 0
  %v4418 = vsel %vm534, %v3814, 0
  %v4421 = vsel %vm534, %v3815, 0
  %v4424 = vsel %vm534, %v3816, 0
  %v4427 = vsel %vm534, %v3817, 0
  %v4430 = vsel %vm534, %v3818, 0
  %v4433 = vsel %vm534, %v3819, 0
  %v4436 = vsel %vm534, %v3820, 0
  %v4439 = vsel %vm534, %v3821, 0
  %v4442 = vsel %vm534, %v3822, 0
  %v4445 = vsel %vm534, %v3823, 0
  %v4448 = vsel %vm534, %v3824, 0
  %v4451 = vsel %vm534, %v3825, 0
  %v4454 = vsel %vm534, %v3826, 0
  %v4457 = vsel %vm534, %v3827, 0
  %v4460 = vsel %vm534, %v3828, 0
  %v4463 = vsel %vm534, %v3829, 0
  %v4466 = vsel %vm534, %v3830, 0
  %v4469 = vsel %vm534, %v3831, 0
  %v4472 = vsel %vm534, %v3832, 0
  %v4475 = vsel %vm534, %v3833, 0
  %v4478 = vsel %vm534, %v3834, 0
  %v4481 = vsel %vm534, %v3835, 0
  %v4484 = vsel %vm534, %v3836, 0
  %v4487 = vsel %vm534, %v3837, 0
  %v4490 = vsel %vm534, %v3838, 0
  %v4493 = vsel %vm534, %v3839, 0
  %v4496 = vsel %vm534, %v3840, 0
  %v4499 = vsel %vm534, %v3841, 0
  %v4502 = vsel %vm534, %v3842, 0
  %v4505 = vsel %vm534, %v3843, 0
  %v4508 = vsel %vm534, %v3844, 0
  %v4511 = vsel %vm534, %v3845, 0
  %v4514 = vsel %vm534, %v3846, 0
  %v4517 = vsel %vm534, %v3847, 0
  %v4520 = vsel %vm534, %v3848, 0
  %v4523 = vsel %vm534, %v3849, 0
  %v4526 = vsel %vm534, %v3850, 0
  %v4529 = vsel %vm534, %v3851, 0
  %v4532 = vsel %vm534, %v3852, 0
  %v4535 = vsel %vm534, %v3853, 0
  %v4538 = vsel %vm534, %v3854, 0
  %v4541 = vsel %vm534, %v3855, 0
  %v4544 = vsel %vm534, %v3856, 0
  %v4547 = vsel %vm534, %v3857, 0
  %v4550 = vsel %vm534, %v3858, 0
  %v4553 = vsel %vm534, %v3859, 0
  %v4556 = vsel %vm534, %v3860, 0
  %v4559 = vsel %vm534, %v3861, 0
  %v4562 = vsel %vm534, %v3862, 0
  %v4565 = vsel %vm534, %v3863, 0
  %v4568 = vsel %vm534, %v3864, 0
  %v4571 = vsel %vm534, %v3865, 0
  %v4574 = vsel %vm534, %v3866, 0
  %v4577 = vsel %vm534, %v3867, 0
  %v4580 = vsel %vm534, %v3868, 0
  %v4583 = vsel %vm534, %v3869, 0
  %v4586 = vsel %vm534, %v3870, 0
  %v4589 = vsel %vm534, %v3871, 0
  %v4592 = vsel %vm534, %v3872, 0
  %v4595 = vsel %vm534, %v3873, 0
  %v4598 = vsel %vm534, %v3874, 0
  %v4601 = vsel %vm534, %v3875, 0
  %v4604 = vsel %vm534, %v3876, 0
  %v4607 = vsel %vm534, %v3877, 0
  %v4610 = vsel %vm534, %v3878, 0
  %v4613 = vsel %vm534, %v3879, 0
  %v4616 = vsel %vm534, %v3880, 0
  %v4619 = vsel %vm534, %v3881, 0
  %v4622 = vsel %vm534, %v3882, 0
  %v4625 = vsel %vm534, %v3883, 0
  %v4628 = vsel %vm534, %v3884, 0
  %v4631 = vsel %vm534, %v3885, 0
  %v4634 = vsel %vm534, %v3886, 0
  %v4637 = vsel %vm534, %v3887, 0
  %v4640 = vsel %vm534, %v3888, 0
  %v4643 = vsel %vm534, %v3889, 0
  %v4646 = vsel %vm534, %v3890, 0
  %v4649 = vsel %vm534, %v3891, 0
  %v4652 = vsel %vm534, %v3892, 0
  %v4655 = vsel %vm534, %v3893, 0
  %v4658 = vsel %vm534, %v3894, 0
  %v4661 = vsel %vm534, %v3895, 0
  %v4664 = vsel %vm534, %v3896, 0
  %v4667 = vsel %vm534, %v3897, 0
  %4669 = vmatpush.msra.mxu0 0.0
  %4670 = vmatpush.msra.mxu0 0.0
  %4671 = vmatpush.msra.mxu0 0.0
  %4672 = vmatpush.msra.mxu0 0.0
  %4673 = vmatpush.msra.mxu0 0.0
  %4674 = vmatpush.msra.mxu0 0.0
  %4675 = vmatpush.msra.mxu0 0.0
  %4676 = vmatpush.msra.mxu0 0.0
  %4677 = vmatpush.msra.mxu0 0.0
  %4678 = vmatpush.msra.mxu0 0.0
  %4679 = vmatpush.msra.mxu0 0.0
  %4680 = vmatpush.msra.mxu0 0.0
  %4681 = vmatpush.msra.mxu0 0.0
  %4682 = vmatpush.msra.mxu0 0.0
  %4683 = vmatpush.msra.mxu0 %v3900
  %4684 = vmatpush.msra.mxu0 %v3899
  %4685 = vmatmul.f32.gmra.mxu0 %v3902
  %v4686 = vpop.f32.mrf.mxu0
  %v4687 = vadd.f32 0.0, %v4686
  %4688 = vmatmul.f32.gmra.mxu0 %v3905
  %v4689 = vpop.f32.mrf.mxu0
  %v4690 = vadd.f32 0.0, %v4689
  %4691 = vmatmul.f32.gmra.mxu0 %v3908
  %v4692 = vpop.f32.mrf.mxu0
  %v4693 = vadd.f32 0.0, %v4692
  %4694 = vmatmul.f32.gmra.mxu0 %v3911
  %v4695 = vpop.f32.mrf.mxu0
  %v4696 = vadd.f32 0.0, %v4695
  %4697 = vmatmul.f32.gmra.mxu0 %v3914
  %v4698 = vpop.f32.mrf.mxu0
  %v4699 = vadd.f32 0.0, %v4698
  %4700 = vmatmul.f32.gmra.mxu0 %v3917
  %v4701 = vpop.f32.mrf.mxu0
  %v4702 = vadd.f32 0.0, %v4701
  %4703 = vmatmul.f32.gmra.mxu0 %v3920
  %v4704 = vpop.f32.mrf.mxu0
  %v4705 = vadd.f32 0.0, %v4704
  %4706 = vmatmul.f32.gmra.mxu0 %v3923
  %v4707 = vpop.f32.mrf.mxu0
  %v4708 = vadd.f32 0.0, %v4707
  %4709 = vmatmul.f32.gmra.mxu0 %v3926
  %v4710 = vpop.f32.mrf.mxu0
  %v4711 = vadd.f32 0.0, %v4710
  %4712 = vmatmul.f32.gmra.mxu0 %v3929
  %v4713 = vpop.f32.mrf.mxu0
  %v4714 = vadd.f32 0.0, %v4713
  %4715 = vmatmul.f32.gmra.mxu0 %v3932
  %v4716 = vpop.f32.mrf.mxu0
  %v4717 = vadd.f32 0.0, %v4716
  %4718 = vmatmul.f32.gmra.mxu0 %v3935
  %v4719 = vpop.f32.mrf.mxu0
  %v4720 = vadd.f32 0.0, %v4719
  %4721 = vmatmul.f32.gmra.mxu0 %v3938
  %v4722 = vpop.f32.mrf.mxu0
  %v4723 = vadd.f32 0.0, %v4722
  %4724 = vmatmul.f32.gmra.mxu0 %v3941
  %v4725 = vpop.f32.mrf.mxu0
  %v4726 = vadd.f32 0.0, %v4725
  %4727 = vmatmul.f32.gmra.mxu0 %v3944
  %v4728 = vpop.f32.mrf.mxu0
  %v4729 = vadd.f32 0.0, %v4728
  %4730 = vmatmul.f32.gmra.mxu0 %v3947
  %v4731 = vpop.f32.mrf.mxu0
  %v4732 = vadd.f32 0.0, %v4731
  %4733 = vmatmul.f32.gmra.mxu0 %v3950
  %v4734 = vpop.f32.mrf.mxu0
  %v4735 = vadd.f32 0.0, %v4734
  %4736 = vmatmul.f32.gmra.mxu0 %v3953
  %v4737 = vpop.f32.mrf.mxu0
  %v4738 = vadd.f32 0.0, %v4737
  %4739 = vmatmul.f32.gmra.mxu0 %v3956
  %v4740 = vpop.f32.mrf.mxu0
  %v4741 = vadd.f32 0.0, %v4740
  %4742 = vmatmul.f32.gmra.mxu0 %v3959
  %v4743 = vpop.f32.mrf.mxu0
  %v4744 = vadd.f32 0.0, %v4743
  %4745 = vmatmul.f32.gmra.mxu0 %v3962
  %v4746 = vpop.f32.mrf.mxu0
  %v4747 = vadd.f32 0.0, %v4746
  %4748 = vmatmul.f32.gmra.mxu0 %v3965
  %v4749 = vpop.f32.mrf.mxu0
  %v4750 = vadd.f32 0.0, %v4749
  %4751 = vmatmul.f32.gmra.mxu0 %v3968
  %v4752 = vpop.f32.mrf.mxu0
  %v4753 = vadd.f32 0.0, %v4752
  %4754 = vmatmul.f32.gmra.mxu0 %v3971
  %v4755 = vpop.f32.mrf.mxu0
  %v4756 = vadd.f32 0.0, %v4755
  %4757 = vmatmul.f32.gmra.mxu0 %v3974
  %v4758 = vpop.f32.mrf.mxu0
  %v4759 = vadd.f32 0.0, %v4758
  %4760 = vmatmul.f32.gmra.mxu0 %v3977
  %v4761 = vpop.f32.mrf.mxu0
  %v4762 = vadd.f32 0.0, %v4761
  %4763 = vmatmul.f32.gmra.mxu0 %v3980
  %v4764 = vpop.f32.mrf.mxu0
  %v4765 = vadd.f32 0.0, %v4764
  %4766 = vmatmul.f32.gmra.mxu0 %v3983
  %v4767 = vpop.f32.mrf.mxu0
  %v4768 = vadd.f32 0.0, %v4767
  %4769 = vmatmul.f32.gmra.mxu0 %v3986
  %v4770 = vpop.f32.mrf.mxu0
  %v4771 = vadd.f32 0.0, %v4770
  %4772 = vmatmul.f32.gmra.mxu0 %v3989
  %v4773 = vpop.f32.mrf.mxu0
  %v4774 = vadd.f32 0.0, %v4773
  %4775 = vmatmul.f32.gmra.mxu0 %v3992
  %v4776 = vpop.f32.mrf.mxu0
  %v4777 = vadd.f32 0.0, %v4776
  %4778 = vmatmul.f32.gmra.mxu0 %v3995
  %v4779 = vpop.f32.mrf.mxu0
  %v4780 = vadd.f32 0.0, %v4779
  %4781 = vmatmul.f32.gmra.mxu0 %v3998
  %v4782 = vpop.f32.mrf.mxu0
  %v4783 = vadd.f32 0.0, %v4782
  %4784 = vmatmul.f32.gmra.mxu0 %v4001
  %v4785 = vpop.f32.mrf.mxu0
  %v4786 = vadd.f32 0.0, %v4785
  %4787 = vmatmul.f32.gmra.mxu0 %v4004
  %v4788 = vpop.f32.mrf.mxu0
  %v4789 = vadd.f32 0.0, %v4788
  %4790 = vmatmul.f32.gmra.mxu0 %v4007
  %v4791 = vpop.f32.mrf.mxu0
  %v4792 = vadd.f32 0.0, %v4791
  %4793 = vmatmul.f32.gmra.mxu0 %v4010
  %v4794 = vpop.f32.mrf.mxu0
  %v4795 = vadd.f32 0.0, %v4794
  %4796 = vmatmul.f32.gmra.mxu0 %v4013
  %v4797 = vpop.f32.mrf.mxu0
  %v4798 = vadd.f32 0.0, %v4797
  %4799 = vmatmul.f32.gmra.mxu0 %v4016
  %v4800 = vpop.f32.mrf.mxu0
  %v4801 = vadd.f32 0.0, %v4800
  %4802 = vmatmul.f32.gmra.mxu0 %v4019
  %v4803 = vpop.f32.mrf.mxu0
  %v4804 = vadd.f32 0.0, %v4803
  %4805 = vmatmul.f32.gmra.mxu0 %v4022
  %v4806 = vpop.f32.mrf.mxu0
  %v4807 = vadd.f32 0.0, %v4806
  %4808 = vmatmul.f32.gmra.mxu0 %v4025
  %v4809 = vpop.f32.mrf.mxu0
  %v4810 = vadd.f32 0.0, %v4809
  %4811 = vmatmul.f32.gmra.mxu0 %v4028
  %v4812 = vpop.f32.mrf.mxu0
  %v4813 = vadd.f32 0.0, %v4812
  %4814 = vmatmul.f32.gmra.mxu0 %v4031
  %v4815 = vpop.f32.mrf.mxu0
  %v4816 = vadd.f32 0.0, %v4815
  %4817 = vmatmul.f32.gmra.mxu0 %v4034
  %v4818 = vpop.f32.mrf.mxu0
  %v4819 = vadd.f32 0.0, %v4818
  %4820 = vmatmul.f32.gmra.mxu0 %v4037
  %v4821 = vpop.f32.mrf.mxu0
  %v4822 = vadd.f32 0.0, %v4821
  %4823 = vmatmul.f32.gmra.mxu0 %v4040
  %v4824 = vpop.f32.mrf.mxu0
  %v4825 = vadd.f32 0.0, %v4824
  %4826 = vmatmul.f32.gmra.mxu0 %v4043
  %v4827 = vpop.f32.mrf.mxu0
  %v4828 = vadd.f32 0.0, %v4827
  %4829 = vmatmul.f32.gmra.mxu0 %v4046
  %v4830 = vpop.f32.mrf.mxu0
  %v4831 = vadd.f32 0.0, %v4830
  %4832 = vmatmul.f32.gmra.mxu0 %v4049
  %v4833 = vpop.f32.mrf.mxu0
  %v4834 = vadd.f32 0.0, %v4833
  %4835 = vmatmul.f32.gmra.mxu0 %v4052
  %v4836 = vpop.f32.mrf.mxu0
  %v4837 = vadd.f32 0.0, %v4836
  %4838 = vmatmul.f32.gmra.mxu0 %v4055
  %v4839 = vpop.f32.mrf.mxu0
  %v4840 = vadd.f32 0.0, %v4839
  %4841 = vmatmul.f32.gmra.mxu0 %v4058
  %v4842 = vpop.f32.mrf.mxu0
  %v4843 = vadd.f32 0.0, %v4842
  %4844 = vmatmul.f32.gmra.mxu0 %v4061
  %v4845 = vpop.f32.mrf.mxu0
  %v4846 = vadd.f32 0.0, %v4845
  %4847 = vmatmul.f32.gmra.mxu0 %v4064
  %v4848 = vpop.f32.mrf.mxu0
  %v4849 = vadd.f32 0.0, %v4848
  %4850 = vmatmul.f32.gmra.mxu0 %v4067
  %v4851 = vpop.f32.mrf.mxu0
  %v4852 = vadd.f32 0.0, %v4851
  %4853 = vmatmul.f32.gmra.mxu0 %v4070
  %v4854 = vpop.f32.mrf.mxu0
  %v4855 = vadd.f32 0.0, %v4854
  %4856 = vmatmul.f32.gmra.mxu0 %v4073
  %v4857 = vpop.f32.mrf.mxu0
  %v4858 = vadd.f32 0.0, %v4857
  %4859 = vmatmul.f32.gmra.mxu0 %v4076
  %v4860 = vpop.f32.mrf.mxu0
  %v4861 = vadd.f32 0.0, %v4860
  %4862 = vmatmul.f32.gmra.mxu0 %v4079
  %v4863 = vpop.f32.mrf.mxu0
  %v4864 = vadd.f32 0.0, %v4863
  %4865 = vmatmul.f32.gmra.mxu0 %v4082
  %v4866 = vpop.f32.mrf.mxu0
  %v4867 = vadd.f32 0.0, %v4866
  %4868 = vmatmul.f32.gmra.mxu0 %v4085
  %v4869 = vpop.f32.mrf.mxu0
  %v4870 = vadd.f32 0.0, %v4869
  %4871 = vmatmul.f32.gmra.mxu0 %v4088
  %v4872 = vpop.f32.mrf.mxu0
  %v4873 = vadd.f32 0.0, %v4872
  %4874 = vmatmul.f32.gmra.mxu0 %v4091
  %v4875 = vpop.f32.mrf.mxu0
  %v4876 = vadd.f32 0.0, %v4875
  %4877 = vmatmul.f32.gmra.mxu0 %v4094
  %v4878 = vpop.f32.mrf.mxu0
  %v4879 = vadd.f32 0.0, %v4878
  %4880 = vmatmul.f32.gmra.mxu0 %v4097
  %v4881 = vpop.f32.mrf.mxu0
  %v4882 = vadd.f32 0.0, %v4881
  %4883 = vmatmul.f32.gmra.mxu0 %v4100
  %v4884 = vpop.f32.mrf.mxu0
  %v4885 = vadd.f32 0.0, %v4884
  %4886 = vmatmul.f32.gmra.mxu0 %v4103
  %v4887 = vpop.f32.mrf.mxu0
  %v4888 = vadd.f32 0.0, %v4887
  %4889 = vmatmul.f32.gmra.mxu0 %v4106
  %v4890 = vpop.f32.mrf.mxu0
  %v4891 = vadd.f32 0.0, %v4890
  %4892 = vmatmul.f32.gmra.mxu0 %v4109
  %v4893 = vpop.f32.mrf.mxu0
  %v4894 = vadd.f32 0.0, %v4893
  %4895 = vmatmul.f32.gmra.mxu0 %v4112
  %v4896 = vpop.f32.mrf.mxu0
  %v4897 = vadd.f32 0.0, %v4896
  %4898 = vmatmul.f32.gmra.mxu0 %v4115
  %v4899 = vpop.f32.mrf.mxu0
  %v4900 = vadd.f32 0.0, %v4899
  %4901 = vmatmul.f32.gmra.mxu0 %v4118
  %v4902 = vpop.f32.mrf.mxu0
  %v4903 = vadd.f32 0.0, %v4902
  %4904 = vmatmul.f32.gmra.mxu0 %v4121
  %v4905 = vpop.f32.mrf.mxu0
  %v4906 = vadd.f32 0.0, %v4905
  %4907 = vmatmul.f32.gmra.mxu0 %v4124
  %v4908 = vpop.f32.mrf.mxu0
  %v4909 = vadd.f32 0.0, %v4908
  %4910 = vmatmul.f32.gmra.mxu0 %v4127
  %v4911 = vpop.f32.mrf.mxu0
  %v4912 = vadd.f32 0.0, %v4911
  %4913 = vmatmul.f32.gmra.mxu0 %v4130
  %v4914 = vpop.f32.mrf.mxu0
  %v4915 = vadd.f32 0.0, %v4914
  %4916 = vmatmul.f32.gmra.mxu0 %v4133
  %v4917 = vpop.f32.mrf.mxu0
  %v4918 = vadd.f32 0.0, %v4917
  %4919 = vmatmul.f32.gmra.mxu0 %v4136
  %v4920 = vpop.f32.mrf.mxu0
  %v4921 = vadd.f32 0.0, %v4920
  %4922 = vmatmul.f32.gmra.mxu0 %v4139
  %v4923 = vpop.f32.mrf.mxu0
  %v4924 = vadd.f32 0.0, %v4923
  %4925 = vmatmul.f32.gmra.mxu0 %v4142
  %v4926 = vpop.f32.mrf.mxu0
  %v4927 = vadd.f32 0.0, %v4926
  %4928 = vmatmul.f32.gmra.mxu0 %v4145
  %v4929 = vpop.f32.mrf.mxu0
  %v4930 = vadd.f32 0.0, %v4929
  %4931 = vmatmul.f32.gmra.mxu0 %v4148
  %v4932 = vpop.f32.mrf.mxu0
  %v4933 = vadd.f32 0.0, %v4932
  %4934 = vmatmul.f32.gmra.mxu0 %v4151
  %v4935 = vpop.f32.mrf.mxu0
  %v4936 = vadd.f32 0.0, %v4935
  %4937 = vmatmul.f32.gmra.mxu0 %v4154
  %v4938 = vpop.f32.mrf.mxu0
  %v4939 = vadd.f32 0.0, %v4938
  %4940 = vmatmul.f32.gmra.mxu0 %v4157
  %v4941 = vpop.f32.mrf.mxu0
  %v4942 = vadd.f32 0.0, %v4941
  %4943 = vmatmul.f32.gmra.mxu0 %v4160
  %v4944 = vpop.f32.mrf.mxu0
  %v4945 = vadd.f32 0.0, %v4944
  %4946 = vmatmul.f32.gmra.mxu0 %v4163
  %v4947 = vpop.f32.mrf.mxu0
  %v4948 = vadd.f32 0.0, %v4947
  %4949 = vmatmul.f32.gmra.mxu0 %v4166
  %v4950 = vpop.f32.mrf.mxu0
  %v4951 = vadd.f32 0.0, %v4950
  %4952 = vmatmul.f32.gmra.mxu0 %v4169
  %v4953 = vpop.f32.mrf.mxu0
  %v4954 = vadd.f32 0.0, %v4953
  %4955 = vmatmul.f32.gmra.mxu0 %v4172
  %v4956 = vpop.f32.mrf.mxu0
  %v4957 = vadd.f32 0.0, %v4956
  %4958 = vmatmul.f32.gmra.mxu0 %v4175
  %v4959 = vpop.f32.mrf.mxu0
  %v4960 = vadd.f32 0.0, %v4959
  %4961 = vmatmul.f32.gmra.mxu0 %v4178
  %v4962 = vpop.f32.mrf.mxu0
  %v4963 = vadd.f32 0.0, %v4962
  %4964 = vmatmul.f32.gmra.mxu0 %v4181
  %v4965 = vpop.f32.mrf.mxu0
  %v4966 = vadd.f32 0.0, %v4965
  %4967 = vmatmul.f32.gmra.mxu0 %v4184
  %v4968 = vpop.f32.mrf.mxu0
  %v4969 = vadd.f32 0.0, %v4968
  %4970 = vmatmul.f32.gmra.mxu0 %v4187
  %v4971 = vpop.f32.mrf.mxu0
  %v4972 = vadd.f32 0.0, %v4971
  %4973 = vmatmul.f32.gmra.mxu0 %v4190
  %v4974 = vpop.f32.mrf.mxu0
  %v4975 = vadd.f32 0.0, %v4974
  %4976 = vmatmul.f32.gmra.mxu0 %v4193
  %v4977 = vpop.f32.mrf.mxu0
  %v4978 = vadd.f32 0.0, %v4977
  %4979 = vmatmul.f32.gmra.mxu0 %v4196
  %v4980 = vpop.f32.mrf.mxu0
  %v4981 = vadd.f32 0.0, %v4980
  %4982 = vmatmul.f32.gmra.mxu0 %v4199
  %v4983 = vpop.f32.mrf.mxu0
  %v4984 = vadd.f32 0.0, %v4983
  %4985 = vmatmul.f32.gmra.mxu0 %v4202
  %v4986 = vpop.f32.mrf.mxu0
  %v4987 = vadd.f32 0.0, %v4986
  %4988 = vmatmul.f32.gmra.mxu0 %v4205
  %v4989 = vpop.f32.mrf.mxu0
  %v4990 = vadd.f32 0.0, %v4989
  %4991 = vmatmul.f32.gmra.mxu0 %v4208
  %v4992 = vpop.f32.mrf.mxu0
  %v4993 = vadd.f32 0.0, %v4992
  %4994 = vmatmul.f32.gmra.mxu0 %v4211
  %v4995 = vpop.f32.mrf.mxu0
  %v4996 = vadd.f32 0.0, %v4995
  %4997 = vmatmul.f32.gmra.mxu0 %v4214
  %v4998 = vpop.f32.mrf.mxu0
  %v4999 = vadd.f32 0.0, %v4998
  %5000 = vmatmul.f32.gmra.mxu0 %v4217
  %v5001 = vpop.f32.mrf.mxu0
  %v5002 = vadd.f32 0.0, %v5001
  %5003 = vmatmul.f32.gmra.mxu0 %v4220
  %v5004 = vpop.f32.mrf.mxu0
  %v5005 = vadd.f32 0.0, %v5004
  %5006 = vmatmul.f32.gmra.mxu0 %v4223
  %v5007 = vpop.f32.mrf.mxu0
  %v5008 = vadd.f32 0.0, %v5007
  %5009 = vmatmul.f32.gmra.mxu0 %v4226
  %v5010 = vpop.f32.mrf.mxu0
  %v5011 = vadd.f32 0.0, %v5010
  %5012 = vmatmul.f32.gmra.mxu0 %v4229
  %v5013 = vpop.f32.mrf.mxu0
  %v5014 = vadd.f32 0.0, %v5013
  %5015 = vmatmul.f32.gmra.mxu0 %v4232
  %v5016 = vpop.f32.mrf.mxu0
  %v5017 = vadd.f32 0.0, %v5016
  %5018 = vmatmul.f32.gmra.mxu0 %v4235
  %v5019 = vpop.f32.mrf.mxu0
  %v5020 = vadd.f32 0.0, %v5019
  %5021 = vmatmul.f32.gmra.mxu0 %v4238
  %v5022 = vpop.f32.mrf.mxu0
  %v5023 = vadd.f32 0.0, %v5022
  %5024 = vmatmul.f32.gmra.mxu0 %v4241
  %v5025 = vpop.f32.mrf.mxu0
  %v5026 = vadd.f32 0.0, %v5025
  %5027 = vmatmul.f32.gmra.mxu0 %v4244
  %v5028 = vpop.f32.mrf.mxu0
  %v5029 = vadd.f32 0.0, %v5028
  %5030 = vmatmul.f32.gmra.mxu0 %v4247
  %v5031 = vpop.f32.mrf.mxu0
  %v5032 = vadd.f32 0.0, %v5031
  %5033 = vmatmul.f32.gmra.mxu0 %v4250
  %v5034 = vpop.f32.mrf.mxu0
  %v5035 = vadd.f32 0.0, %v5034
  %5036 = vmatmul.f32.gmra.mxu0 %v4253
  %v5037 = vpop.f32.mrf.mxu0
  %v5038 = vadd.f32 0.0, %v5037
  %5039 = vmatmul.f32.gmra.mxu0 %v4256
  %v5040 = vpop.f32.mrf.mxu0
  %v5041 = vadd.f32 0.0, %v5040
  %5042 = vmatmul.f32.gmra.mxu0 %v4259
  %v5043 = vpop.f32.mrf.mxu0
  %v5044 = vadd.f32 0.0, %v5043
  %5045 = vmatmul.f32.gmra.mxu0 %v4262
  %v5046 = vpop.f32.mrf.mxu0
  %v5047 = vadd.f32 0.0, %v5046
  %5048 = vmatmul.f32.gmra.mxu0 %v4265
  %v5049 = vpop.f32.mrf.mxu0
  %v5050 = vadd.f32 0.0, %v5049
  %5051 = vmatmul.f32.gmra.mxu0 %v4268
  %v5052 = vpop.f32.mrf.mxu0
  %v5053 = vadd.f32 0.0, %v5052
  %5054 = vmatmul.f32.gmra.mxu0 %v4271
  %v5055 = vpop.f32.mrf.mxu0
  %v5056 = vadd.f32 0.0, %v5055
  %5057 = vmatmul.f32.gmra.mxu0 %v4274
  %v5058 = vpop.f32.mrf.mxu0
  %v5059 = vadd.f32 0.0, %v5058
  %5060 = vmatmul.f32.gmra.mxu0 %v4277
  %v5061 = vpop.f32.mrf.mxu0
  %v5062 = vadd.f32 0.0, %v5061
  %5063 = vmatmul.f32.gmra.mxu0 %v4280
  %v5064 = vpop.f32.mrf.mxu0
  %v5065 = vadd.f32 0.0, %v5064
  %5066 = vmatmul.f32.gmra.mxu0 %v4283
  %v5067 = vpop.f32.mrf.mxu0
  %v5068 = vadd.f32 0.0, %v5067
  %5069 = vmatmul.f32.gmra.mxu0 %v4286
  %v5070 = vpop.f32.mrf.mxu0
  %v5071 = vadd.f32 0.0, %v5070
  %5072 = vmatmul.f32.gmra.mxu0 %v4289
  %v5073 = vpop.f32.mrf.mxu0
  %v5074 = vadd.f32 0.0, %v5073
  %5075 = vmatmul.f32.gmra.mxu0 %v4292
  %v5076 = vpop.f32.mrf.mxu0
  %v5077 = vadd.f32 0.0, %v5076
  %5078 = vmatmul.f32.gmra.mxu0 %v4295
  %v5079 = vpop.f32.mrf.mxu0
  %v5080 = vadd.f32 0.0, %v5079
  %5081 = vmatmul.f32.gmra.mxu0 %v4298
  %v5082 = vpop.f32.mrf.mxu0
  %v5083 = vadd.f32 0.0, %v5082
  %5084 = vmatmul.f32.gmra.mxu0 %v4301
  %v5085 = vpop.f32.mrf.mxu0
  %v5086 = vadd.f32 0.0, %v5085
  %5087 = vmatmul.f32.gmra.mxu0 %v4304
  %v5088 = vpop.f32.mrf.mxu0
  %v5089 = vadd.f32 0.0, %v5088
  %5090 = vmatmul.f32.gmra.mxu0 %v4307
  %v5091 = vpop.f32.mrf.mxu0
  %v5092 = vadd.f32 0.0, %v5091
  %5093 = vmatmul.f32.gmra.mxu0 %v4310
  %v5094 = vpop.f32.mrf.mxu0
  %v5095 = vadd.f32 0.0, %v5094
  %5096 = vmatmul.f32.gmra.mxu0 %v4313
  %v5097 = vpop.f32.mrf.mxu0
  %v5098 = vadd.f32 0.0, %v5097
  %5099 = vmatmul.f32.gmra.mxu0 %v4316
  %v5100 = vpop.f32.mrf.mxu0
  %v5101 = vadd.f32 0.0, %v5100
  %5102 = vmatmul.f32.gmra.mxu0 %v4319
  %v5103 = vpop.f32.mrf.mxu0
  %v5104 = vadd.f32 0.0, %v5103
  %5105 = vmatmul.f32.gmra.mxu0 %v4322
  %v5106 = vpop.f32.mrf.mxu0
  %v5107 = vadd.f32 0.0, %v5106
  %5108 = vmatmul.f32.gmra.mxu0 %v4325
  %v5109 = vpop.f32.mrf.mxu0
  %v5110 = vadd.f32 0.0, %v5109
  %5111 = vmatmul.f32.gmra.mxu0 %v4328
  %v5112 = vpop.f32.mrf.mxu0
  %v5113 = vadd.f32 0.0, %v5112
  %5114 = vmatmul.f32.gmra.mxu0 %v4331
  %v5115 = vpop.f32.mrf.mxu0
  %v5116 = vadd.f32 0.0, %v5115
  %5117 = vmatmul.f32.gmra.mxu0 %v4334
  %v5118 = vpop.f32.mrf.mxu0
  %v5119 = vadd.f32 0.0, %v5118
  %5120 = vmatmul.f32.gmra.mxu0 %v4337
  %v5121 = vpop.f32.mrf.mxu0
  %v5122 = vadd.f32 0.0, %v5121
  %5123 = vmatmul.f32.gmra.mxu0 %v4340
  %v5124 = vpop.f32.mrf.mxu0
  %v5125 = vadd.f32 0.0, %v5124
  %5126 = vmatmul.f32.gmra.mxu0 %v4343
  %v5127 = vpop.f32.mrf.mxu0
  %v5128 = vadd.f32 0.0, %v5127
  %5129 = vmatmul.f32.gmra.mxu0 %v4346
  %v5130 = vpop.f32.mrf.mxu0
  %v5131 = vadd.f32 0.0, %v5130
  %5132 = vmatmul.f32.gmra.mxu0 %v4349
  %v5133 = vpop.f32.mrf.mxu0
  %v5134 = vadd.f32 0.0, %v5133
  %5135 = vmatmul.f32.gmra.mxu0 %v4352
  %v5136 = vpop.f32.mrf.mxu0
  %v5137 = vadd.f32 0.0, %v5136
  %5138 = vmatmul.f32.gmra.mxu0 %v4355
  %v5139 = vpop.f32.mrf.mxu0
  %v5140 = vadd.f32 0.0, %v5139
  %5141 = vmatmul.f32.gmra.mxu0 %v4358
  %v5142 = vpop.f32.mrf.mxu0
  %v5143 = vadd.f32 0.0, %v5142
  %5144 = vmatmul.f32.gmra.mxu0 %v4361
  %v5145 = vpop.f32.mrf.mxu0
  %v5146 = vadd.f32 0.0, %v5145
  %5147 = vmatmul.f32.gmra.mxu0 %v4364
  %v5148 = vpop.f32.mrf.mxu0
  %v5149 = vadd.f32 0.0, %v5148
  %5150 = vmatmul.f32.gmra.mxu0 %v4367
  %v5151 = vpop.f32.mrf.mxu0
  %v5152 = vadd.f32 0.0, %v5151
  %5153 = vmatmul.f32.gmra.mxu0 %v4370
  %v5154 = vpop.f32.mrf.mxu0
  %v5155 = vadd.f32 0.0, %v5154
  %5156 = vmatmul.f32.gmra.mxu0 %v4373
  %v5157 = vpop.f32.mrf.mxu0
  %v5158 = vadd.f32 0.0, %v5157
  %5159 = vmatmul.f32.gmra.mxu0 %v4376
  %v5160 = vpop.f32.mrf.mxu0
  %v5161 = vadd.f32 0.0, %v5160
  %5162 = vmatmul.f32.gmra.mxu0 %v4379
  %v5163 = vpop.f32.mrf.mxu0
  %v5164 = vadd.f32 0.0, %v5163
  %5165 = vmatmul.f32.gmra.mxu0 %v4382
  %v5166 = vpop.f32.mrf.mxu0
  %v5167 = vadd.f32 0.0, %v5166
  %5168 = vmatmul.f32.gmra.mxu0 %v4385
  %v5169 = vpop.f32.mrf.mxu0
  %v5170 = vadd.f32 0.0, %v5169
  %5171 = vmatmul.f32.gmra.mxu0 %v4388
  %v5172 = vpop.f32.mrf.mxu0
  %v5173 = vadd.f32 0.0, %v5172
  %5174 = vmatmul.f32.gmra.mxu0 %v4391
  %v5175 = vpop.f32.mrf.mxu0
  %v5176 = vadd.f32 0.0, %v5175
  %5177 = vmatmul.f32.gmra.mxu0 %v4394
  %v5178 = vpop.f32.mrf.mxu0
  %v5179 = vadd.f32 0.0, %v5178
  %5180 = vmatmul.f32.gmra.mxu0 %v4397
  %v5181 = vpop.f32.mrf.mxu0
  %v5182 = vadd.f32 0.0, %v5181
  %5183 = vmatmul.f32.gmra.mxu0 %v4400
  %v5184 = vpop.f32.mrf.mxu0
  %v5185 = vadd.f32 0.0, %v5184
  %5186 = vmatmul.f32.gmra.mxu0 %v4403
  %v5187 = vpop.f32.mrf.mxu0
  %v5188 = vadd.f32 0.0, %v5187
  %5189 = vmatmul.f32.gmra.mxu0 %v4406
  %v5190 = vpop.f32.mrf.mxu0
  %v5191 = vadd.f32 0.0, %v5190
  %5192 = vmatmul.f32.gmra.mxu0 %v4409
  %v5193 = vpop.f32.mrf.mxu0
  %v5194 = vadd.f32 0.0, %v5193
  %5195 = vmatmul.f32.gmra.mxu0 %v4412
  %v5196 = vpop.f32.mrf.mxu0
  %v5197 = vadd.f32 0.0, %v5196
  %5198 = vmatmul.f32.gmra.mxu0 %v4415
  %v5199 = vpop.f32.mrf.mxu0
  %v5200 = vadd.f32 0.0, %v5199
  %5201 = vmatmul.f32.gmra.mxu0 %v4418
  %v5202 = vpop.f32.mrf.mxu0
  %v5203 = vadd.f32 0.0, %v5202
  %5204 = vmatmul.f32.gmra.mxu0 %v4421
  %v5205 = vpop.f32.mrf.mxu0
  %v5206 = vadd.f32 0.0, %v5205
  %5207 = vmatmul.f32.gmra.mxu0 %v4424
  %v5208 = vpop.f32.mrf.mxu0
  %v5209 = vadd.f32 0.0, %v5208
  %5210 = vmatmul.f32.gmra.mxu0 %v4427
  %v5211 = vpop.f32.mrf.mxu0
  %v5212 = vadd.f32 0.0, %v5211
  %5213 = vmatmul.f32.gmra.mxu0 %v4430
  %v5214 = vpop.f32.mrf.mxu0
  %v5215 = vadd.f32 0.0, %v5214
  %5216 = vmatmul.f32.gmra.mxu0 %v4433
  %v5217 = vpop.f32.mrf.mxu0
  %v5218 = vadd.f32 0.0, %v5217
  %5219 = vmatmul.f32.gmra.mxu0 %v4436
  %v5220 = vpop.f32.mrf.mxu0
  %v5221 = vadd.f32 0.0, %v5220
  %5222 = vmatmul.f32.gmra.mxu0 %v4439
  %v5223 = vpop.f32.mrf.mxu0
  %v5224 = vadd.f32 0.0, %v5223
  %5225 = vmatmul.f32.gmra.mxu0 %v4442
  %v5226 = vpop.f32.mrf.mxu0
  %v5227 = vadd.f32 0.0, %v5226
  %5228 = vmatmul.f32.gmra.mxu0 %v4445
  %v5229 = vpop.f32.mrf.mxu0
  %v5230 = vadd.f32 0.0, %v5229
  %5231 = vmatmul.f32.gmra.mxu0 %v4448
  %v5232 = vpop.f32.mrf.mxu0
  %v5233 = vadd.f32 0.0, %v5232
  %5234 = vmatmul.f32.gmra.mxu0 %v4451
  %v5235 = vpop.f32.mrf.mxu0
  %v5236 = vadd.f32 0.0, %v5235
  %5237 = vmatmul.f32.gmra.mxu0 %v4454
  %v5238 = vpop.f32.mrf.mxu0
  %v5239 = vadd.f32 0.0, %v5238
  %5240 = vmatmul.f32.gmra.mxu0 %v4457
  %v5241 = vpop.f32.mrf.mxu0
  %v5242 = vadd.f32 0.0, %v5241
  %5243 = vmatmul.f32.gmra.mxu0 %v4460
  %v5244 = vpop.f32.mrf.mxu0
  %v5245 = vadd.f32 0.0, %v5244
  %5246 = vmatmul.f32.gmra.mxu0 %v4463
  %v5247 = vpop.f32.mrf.mxu0
  %v5248 = vadd.f32 0.0, %v5247
  %5249 = vmatmul.f32.gmra.mxu0 %v4466
  %v5250 = vpop.f32.mrf.mxu0
  %v5251 = vadd.f32 0.0, %v5250
  %5252 = vmatmul.f32.gmra.mxu0 %v4469
  %v5253 = vpop.f32.mrf.mxu0
  %v5254 = vadd.f32 0.0, %v5253
  %5255 = vmatmul.f32.gmra.mxu0 %v4472
  %v5256 = vpop.f32.mrf.mxu0
  %v5257 = vadd.f32 0.0, %v5256
  %5258 = vmatmul.f32.gmra.mxu0 %v4475
  %v5259 = vpop.f32.mrf.mxu0
  %v5260 = vadd.f32 0.0, %v5259
  %5261 = vmatmul.f32.gmra.mxu0 %v4478
  %v5262 = vpop.f32.mrf.mxu0
  %v5263 = vadd.f32 0.0, %v5262
  %5264 = vmatmul.f32.gmra.mxu0 %v4481
  %v5265 = vpop.f32.mrf.mxu0
  %v5266 = vadd.f32 0.0, %v5265
  %5267 = vmatmul.f32.gmra.mxu0 %v4484
  %v5268 = vpop.f32.mrf.mxu0
  %v5269 = vadd.f32 0.0, %v5268
  %5270 = vmatmul.f32.gmra.mxu0 %v4487
  %v5271 = vpop.f32.mrf.mxu0
  %v5272 = vadd.f32 0.0, %v5271
  %5273 = vmatmul.f32.gmra.mxu0 %v4490
  %v5274 = vpop.f32.mrf.mxu0
  %v5275 = vadd.f32 0.0, %v5274
  %5276 = vmatmul.f32.gmra.mxu0 %v4493
  %v5277 = vpop.f32.mrf.mxu0
  %v5278 = vadd.f32 0.0, %v5277
  %5279 = vmatmul.f32.gmra.mxu0 %v4496
  %v5280 = vpop.f32.mrf.mxu0
  %v5281 = vadd.f32 0.0, %v5280
  %5282 = vmatmul.f32.gmra.mxu0 %v4499
  %v5283 = vpop.f32.mrf.mxu0
  %v5284 = vadd.f32 0.0, %v5283
  %5285 = vmatmul.f32.gmra.mxu0 %v4502
  %v5286 = vpop.f32.mrf.mxu0
  %v5287 = vadd.f32 0.0, %v5286
  %5288 = vmatmul.f32.gmra.mxu0 %v4505
  %v5289 = vpop.f32.mrf.mxu0
  %v5290 = vadd.f32 0.0, %v5289
  %5291 = vmatmul.f32.gmra.mxu0 %v4508
  %v5292 = vpop.f32.mrf.mxu0
  %v5293 = vadd.f32 0.0, %v5292
  %5294 = vmatmul.f32.gmra.mxu0 %v4511
  %v5295 = vpop.f32.mrf.mxu0
  %v5296 = vadd.f32 0.0, %v5295
  %5297 = vmatmul.f32.gmra.mxu0 %v4514
  %v5298 = vpop.f32.mrf.mxu0
  %v5299 = vadd.f32 0.0, %v5298
  %5300 = vmatmul.f32.gmra.mxu0 %v4517
  %v5301 = vpop.f32.mrf.mxu0
  %v5302 = vadd.f32 0.0, %v5301
  %5303 = vmatmul.f32.gmra.mxu0 %v4520
  %v5304 = vpop.f32.mrf.mxu0
  %v5305 = vadd.f32 0.0, %v5304
  %5306 = vmatmul.f32.gmra.mxu0 %v4523
  %v5307 = vpop.f32.mrf.mxu0
  %v5308 = vadd.f32 0.0, %v5307
  %5309 = vmatmul.f32.gmra.mxu0 %v4526
  %v5310 = vpop.f32.mrf.mxu0
  %v5311 = vadd.f32 0.0, %v5310
  %5312 = vmatmul.f32.gmra.mxu0 %v4529
  %v5313 = vpop.f32.mrf.mxu0
  %v5314 = vadd.f32 0.0, %v5313
  %5315 = vmatmul.f32.gmra.mxu0 %v4532
  %v5316 = vpop.f32.mrf.mxu0
  %v5317 = vadd.f32 0.0, %v5316
  %5318 = vmatmul.f32.gmra.mxu0 %v4535
  %v5319 = vpop.f32.mrf.mxu0
  %v5320 = vadd.f32 0.0, %v5319
  %5321 = vmatmul.f32.gmra.mxu0 %v4538
  %v5322 = vpop.f32.mrf.mxu0
  %v5323 = vadd.f32 0.0, %v5322
  %5324 = vmatmul.f32.gmra.mxu0 %v4541
  %v5325 = vpop.f32.mrf.mxu0
  %v5326 = vadd.f32 0.0, %v5325
  %5327 = vmatmul.f32.gmra.mxu0 %v4544
  %v5328 = vpop.f32.mrf.mxu0
  %v5329 = vadd.f32 0.0, %v5328
  %5330 = vmatmul.f32.gmra.mxu0 %v4547
  %v5331 = vpop.f32.mrf.mxu0
  %v5332 = vadd.f32 0.0, %v5331
  %5333 = vmatmul.f32.gmra.mxu0 %v4550
  %v5334 = vpop.f32.mrf.mxu0
  %v5335 = vadd.f32 0.0, %v5334
  %5336 = vmatmul.f32.gmra.mxu0 %v4553
  %v5337 = vpop.f32.mrf.mxu0
  %v5338 = vadd.f32 0.0, %v5337
  %5339 = vmatmul.f32.gmra.mxu0 %v4556
  %v5340 = vpop.f32.mrf.mxu0
  %v5341 = vadd.f32 0.0, %v5340
  %5342 = vmatmul.f32.gmra.mxu0 %v4559
  %v5343 = vpop.f32.mrf.mxu0
  %v5344 = vadd.f32 0.0, %v5343
  %5345 = vmatmul.f32.gmra.mxu0 %v4562
  %v5346 = vpop.f32.mrf.mxu0
  %v5347 = vadd.f32 0.0, %v5346
  %5348 = vmatmul.f32.gmra.mxu0 %v4565
  %v5349 = vpop.f32.mrf.mxu0
  %v5350 = vadd.f32 0.0, %v5349
  %5351 = vmatmul.f32.gmra.mxu0 %v4568
  %v5352 = vpop.f32.mrf.mxu0
  %v5353 = vadd.f32 0.0, %v5352
  %5354 = vmatmul.f32.gmra.mxu0 %v4571
  %v5355 = vpop.f32.mrf.mxu0
  %v5356 = vadd.f32 0.0, %v5355
  %5357 = vmatmul.f32.gmra.mxu0 %v4574
  %v5358 = vpop.f32.mrf.mxu0
  %v5359 = vadd.f32 0.0, %v5358
  %5360 = vmatmul.f32.gmra.mxu0 %v4577
  %v5361 = vpop.f32.mrf.mxu0
  %v5362 = vadd.f32 0.0, %v5361
  %5363 = vmatmul.f32.gmra.mxu0 %v4580
  %v5364 = vpop.f32.mrf.mxu0
  %v5365 = vadd.f32 0.0, %v5364
  %5366 = vmatmul.f32.gmra.mxu0 %v4583
  %v5367 = vpop.f32.mrf.mxu0
  %v5368 = vadd.f32 0.0, %v5367
  %5369 = vmatmul.f32.gmra.mxu0 %v4586
  %v5370 = vpop.f32.mrf.mxu0
  %v5371 = vadd.f32 0.0, %v5370
  %5372 = vmatmul.f32.gmra.mxu0 %v4589
  %v5373 = vpop.f32.mrf.mxu0
  %v5374 = vadd.f32 0.0, %v5373
  %5375 = vmatmul.f32.gmra.mxu0 %v4592
  %v5376 = vpop.f32.mrf.mxu0
  %v5377 = vadd.f32 0.0, %v5376
  %5378 = vmatmul.f32.gmra.mxu0 %v4595
  %v5379 = vpop.f32.mrf.mxu0
  %v5380 = vadd.f32 0.0, %v5379
  %5381 = vmatmul.f32.gmra.mxu0 %v4598
  %v5382 = vpop.f32.mrf.mxu0
  %v5383 = vadd.f32 0.0, %v5382
  %5384 = vmatmul.f32.gmra.mxu0 %v4601
  %v5385 = vpop.f32.mrf.mxu0
  %v5386 = vadd.f32 0.0, %v5385
  %5387 = vmatmul.f32.gmra.mxu0 %v4604
  %v5388 = vpop.f32.mrf.mxu0
  %v5389 = vadd.f32 0.0, %v5388
  %5390 = vmatmul.f32.gmra.mxu0 %v4607
  %v5391 = vpop.f32.mrf.mxu0
  %v5392 = vadd.f32 0.0, %v5391
  %5393 = vmatmul.f32.gmra.mxu0 %v4610
  %v5394 = vpop.f32.mrf.mxu0
  %v5395 = vadd.f32 0.0, %v5394
  %5396 = vmatmul.f32.gmra.mxu0 %v4613
  %v5397 = vpop.f32.mrf.mxu0
  %v5398 = vadd.f32 0.0, %v5397
  %5399 = vmatmul.f32.gmra.mxu0 %v4616
  %v5400 = vpop.f32.mrf.mxu0
  %v5401 = vadd.f32 0.0, %v5400
  %5402 = vmatmul.f32.gmra.mxu0 %v4619
  %v5403 = vpop.f32.mrf.mxu0
  %v5404 = vadd.f32 0.0, %v5403
  %5405 = vmatmul.f32.gmra.mxu0 %v4622
  %v5406 = vpop.f32.mrf.mxu0
  %v5407 = vadd.f32 0.0, %v5406
  %5408 = vmatmul.f32.gmra.mxu0 %v4625
  %v5409 = vpop.f32.mrf.mxu0
  %v5410 = vadd.f32 0.0, %v5409
  %5411 = vmatmul.f32.gmra.mxu0 %v4628
  %v5412 = vpop.f32.mrf.mxu0
  %v5413 = vadd.f32 0.0, %v5412
  %5414 = vmatmul.f32.gmra.mxu0 %v4631
  %v5415 = vpop.f32.mrf.mxu0
  %v5416 = vadd.f32 0.0, %v5415
  %5417 = vmatmul.f32.gmra.mxu0 %v4634
  %v5418 = vpop.f32.mrf.mxu0
  %v5419 = vadd.f32 0.0, %v5418
  %5420 = vmatmul.f32.gmra.mxu0 %v4637
  %v5421 = vpop.f32.mrf.mxu0
  %v5422 = vadd.f32 0.0, %v5421
  %5423 = vmatmul.f32.gmra.mxu0 %v4640
  %v5424 = vpop.f32.mrf.mxu0
  %v5425 = vadd.f32 0.0, %v5424
  %5426 = vmatmul.f32.gmra.mxu0 %v4643
  %v5427 = vpop.f32.mrf.mxu0
  %v5428 = vadd.f32 0.0, %v5427
  %5429 = vmatmul.f32.gmra.mxu0 %v4646
  %v5430 = vpop.f32.mrf.mxu0
  %v5431 = vadd.f32 0.0, %v5430
  %5432 = vmatmul.f32.gmra.mxu0 %v4649
  %v5433 = vpop.f32.mrf.mxu0
  %v5434 = vadd.f32 0.0, %v5433
  %5435 = vmatmul.f32.gmra.mxu0 %v4652
  %v5436 = vpop.f32.mrf.mxu0
  %v5437 = vadd.f32 0.0, %v5436
  %5438 = vmatmul.f32.gmra.mxu0 %v4655
  %v5439 = vpop.f32.mrf.mxu0
  %v5440 = vadd.f32 0.0, %v5439
  %5441 = vmatmul.f32.gmra.mxu0 %v4658
  %v5442 = vpop.f32.mrf.mxu0
  %v5443 = vadd.f32 0.0, %v5442
  %5444 = vmatmul.f32.gmra.mxu0 %v4661
  %v5445 = vpop.f32.mrf.mxu0
  %v5446 = vadd.f32 0.0, %v5445
  %5447 = vmatmul.f32.gmra.mxu0 %v4664
  %v5448 = vpop.f32.mrf.mxu0
  %v5449 = vadd.f32 0.0, %v5448
  %5450 = vmatmul.f32.gmra.mxu0 %v4667
  %v5451 = vpop.f32.mrf.mxu0
  %v5452 = vadd.f32 0.0, %v5451
  %5453 = vdwg.mxu0
  %v5454 = vadd.f32 %v2874, %v4687
  %v5455 = vadd.f32 %v2877, %v4690
  %v5456 = vadd.f32 %v2880, %v4693
  %v5457 = vadd.f32 %v2883, %v4696
  %v5458 = vadd.f32 %v2886, %v4699
  %v5459 = vadd.f32 %v2889, %v4702
  %v5460 = vadd.f32 %v2892, %v4705
  %v5461 = vadd.f32 %v2895, %v4708
  %v5462 = vadd.f32 %v2898, %v4711
  %v5463 = vadd.f32 %v2901, %v4714
  %v5464 = vadd.f32 %v2904, %v4717
  %v5465 = vadd.f32 %v2907, %v4720
  %v5466 = vadd.f32 %v2910, %v4723
  %v5467 = vadd.f32 %v2913, %v4726
  %v5468 = vadd.f32 %v2916, %v4729
  %v5469 = vadd.f32 %v2919, %v4732
  %v5470 = vadd.f32 %v2922, %v4735
  %v5471 = vadd.f32 %v2925, %v4738
  %v5472 = vadd.f32 %v2928, %v4741
  %v5473 = vadd.f32 %v2931, %v4744
  %v5474 = vadd.f32 %v2934, %v4747
  %v5475 = vadd.f32 %v2937, %v4750
  %v5476 = vadd.f32 %v2940, %v4753
  %v5477 = vadd.f32 %v2943, %v4756
  %v5478 = vadd.f32 %v2946, %v4759
  %v5479 = vadd.f32 %v2949, %v4762
  %v5480 = vadd.f32 %v2952, %v4765
  %v5481 = vadd.f32 %v2955, %v4768
  %v5482 = vadd.f32 %v2958, %v4771
  %v5483 = vadd.f32 %v2961, %v4774
  %v5484 = vadd.f32 %v2964, %v4777
  %v5485 = vadd.f32 %v2967, %v4780
  %v5486 = vadd.f32 %v2970, %v4783
  %v5487 = vadd.f32 %v2973, %v4786
  %v5488 = vadd.f32 %v2976, %v4789
  %v5489 = vadd.f32 %v2979, %v4792
  %v5490 = vadd.f32 %v2982, %v4795
  %v5491 = vadd.f32 %v2985, %v4798
  %v5492 = vadd.f32 %v2988, %v4801
  %v5493 = vadd.f32 %v2991, %v4804
  %v5494 = vadd.f32 %v2994, %v4807
  %v5495 = vadd.f32 %v2997, %v4810
  %v5496 = vadd.f32 %v3000, %v4813
  %v5497 = vadd.f32 %v3003, %v4816
  %v5498 = vadd.f32 %v3006, %v4819
  %v5499 = vadd.f32 %v3009, %v4822
  %v5500 = vadd.f32 %v3012, %v4825
  %v5501 = vadd.f32 %v3015, %v4828
  %v5502 = vadd.f32 %v3018, %v4831
  %v5503 = vadd.f32 %v3021, %v4834
  %v5504 = vadd.f32 %v3024, %v4837
  %v5505 = vadd.f32 %v3027, %v4840
  %v5506 = vadd.f32 %v3030, %v4843
  %v5507 = vadd.f32 %v3033, %v4846
  %v5508 = vadd.f32 %v3036, %v4849
  %v5509 = vadd.f32 %v3039, %v4852
  %v5510 = vadd.f32 %v3042, %v4855
  %v5511 = vadd.f32 %v3045, %v4858
  %v5512 = vadd.f32 %v3048, %v4861
  %v5513 = vadd.f32 %v3051, %v4864
  %v5514 = vadd.f32 %v3054, %v4867
  %v5515 = vadd.f32 %v3057, %v4870
  %v5516 = vadd.f32 %v3060, %v4873
  %v5517 = vadd.f32 %v3063, %v4876
  %v5518 = vadd.f32 %v3066, %v4879
  %v5519 = vadd.f32 %v3069, %v4882
  %v5520 = vadd.f32 %v3072, %v4885
  %v5521 = vadd.f32 %v3075, %v4888
  %v5522 = vadd.f32 %v3078, %v4891
  %v5523 = vadd.f32 %v3081, %v4894
  %v5524 = vadd.f32 %v3084, %v4897
  %v5525 = vadd.f32 %v3087, %v4900
  %v5526 = vadd.f32 %v3090, %v4903
  %v5527 = vadd.f32 %v3093, %v4906
  %v5528 = vadd.f32 %v3096, %v4909
  %v5529 = vadd.f32 %v3099, %v4912
  %v5530 = vadd.f32 %v3102, %v4915
  %v5531 = vadd.f32 %v3105, %v4918
  %v5532 = vadd.f32 %v3108, %v4921
  %v5533 = vadd.f32 %v3111, %v4924
  %v5534 = vadd.f32 %v3114, %v4927
  %v5535 = vadd.f32 %v3117, %v4930
  %v5536 = vadd.f32 %v3120, %v4933
  %v5537 = vadd.f32 %v3123, %v4936
  %v5538 = vadd.f32 %v3126, %v4939
  %v5539 = vadd.f32 %v3129, %v4942
  %v5540 = vadd.f32 %v3132, %v4945
  %v5541 = vadd.f32 %v3135, %v4948
  %v5542 = vadd.f32 %v3138, %v4951
  %v5543 = vadd.f32 %v3141, %v4954
  %v5544 = vadd.f32 %v3144, %v4957
  %v5545 = vadd.f32 %v3147, %v4960
  %v5546 = vadd.f32 %v3150, %v4963
  %v5547 = vadd.f32 %v3153, %v4966
  %v5548 = vadd.f32 %v3156, %v4969
  %v5549 = vadd.f32 %v3159, %v4972
  %v5550 = vadd.f32 %v3162, %v4975
  %v5551 = vadd.f32 %v3165, %v4978
  %v5552 = vadd.f32 %v3168, %v4981
  %v5553 = vadd.f32 %v3171, %v4984
  %v5554 = vadd.f32 %v3174, %v4987
  %v5555 = vadd.f32 %v3177, %v4990
  %v5556 = vadd.f32 %v3180, %v4993
  %v5557 = vadd.f32 %v3183, %v4996
  %v5558 = vadd.f32 %v3186, %v4999
  %v5559 = vadd.f32 %v3189, %v5002
  %v5560 = vadd.f32 %v3192, %v5005
  %v5561 = vadd.f32 %v3195, %v5008
  %v5562 = vadd.f32 %v3198, %v5011
  %v5563 = vadd.f32 %v3201, %v5014
  %v5564 = vadd.f32 %v3204, %v5017
  %v5565 = vadd.f32 %v3207, %v5020
  %v5566 = vadd.f32 %v3210, %v5023
  %v5567 = vadd.f32 %v3213, %v5026
  %v5568 = vadd.f32 %v3216, %v5029
  %v5569 = vadd.f32 %v3219, %v5032
  %v5570 = vadd.f32 %v3222, %v5035
  %v5571 = vadd.f32 %v3225, %v5038
  %v5572 = vadd.f32 %v3228, %v5041
  %v5573 = vadd.f32 %v3231, %v5044
  %v5574 = vadd.f32 %v3234, %v5047
  %v5575 = vadd.f32 %v3237, %v5050
  %v5576 = vadd.f32 %v3240, %v5053
  %v5577 = vadd.f32 %v3243, %v5056
  %v5578 = vadd.f32 %v3246, %v5059
  %v5579 = vadd.f32 %v3249, %v5062
  %v5580 = vadd.f32 %v3252, %v5065
  %v5581 = vadd.f32 %v3255, %v5068
  %v5582 = vadd.f32 %v3258, %v5071
  %v5583 = vadd.f32 %v3261, %v5074
  %v5584 = vadd.f32 %v3264, %v5077
  %v5585 = vadd.f32 %v3267, %v5080
  %v5586 = vadd.f32 %v3270, %v5083
  %v5587 = vadd.f32 %v3273, %v5086
  %v5588 = vadd.f32 %v3276, %v5089
  %v5589 = vadd.f32 %v3279, %v5092
  %v5590 = vadd.f32 %v3282, %v5095
  %v5591 = vadd.f32 %v3285, %v5098
  %v5592 = vadd.f32 %v3288, %v5101
  %v5593 = vadd.f32 %v3291, %v5104
  %v5594 = vadd.f32 %v3294, %v5107
  %v5595 = vadd.f32 %v3297, %v5110
  %v5596 = vadd.f32 %v3300, %v5113
  %v5597 = vadd.f32 %v3303, %v5116
  %v5598 = vadd.f32 %v3306, %v5119
  %v5599 = vadd.f32 %v3309, %v5122
  %v5600 = vadd.f32 %v3312, %v5125
  %v5601 = vadd.f32 %v3315, %v5128
  %v5602 = vadd.f32 %v3318, %v5131
  %v5603 = vadd.f32 %v3321, %v5134
  %v5604 = vadd.f32 %v3324, %v5137
  %v5605 = vadd.f32 %v3327, %v5140
  %v5606 = vadd.f32 %v3330, %v5143
  %v5607 = vadd.f32 %v3333, %v5146
  %v5608 = vadd.f32 %v3336, %v5149
  %v5609 = vadd.f32 %v3339, %v5152
  %v5610 = vadd.f32 %v3342, %v5155
  %v5611 = vadd.f32 %v3345, %v5158
  %v5612 = vadd.f32 %v3348, %v5161
  %v5613 = vadd.f32 %v3351, %v5164
  %v5614 = vadd.f32 %v3354, %v5167
  %v5615 = vadd.f32 %v3357, %v5170
  %v5616 = vadd.f32 %v3360, %v5173
  %v5617 = vadd.f32 %v3363, %v5176
  %v5618 = vadd.f32 %v3366, %v5179
  %v5619 = vadd.f32 %v3369, %v5182
  %v5620 = vadd.f32 %v3372, %v5185
  %v5621 = vadd.f32 %v3375, %v5188
  %v5622 = vadd.f32 %v3378, %v5191
  %v5623 = vadd.f32 %v3381, %v5194
  %v5624 = vadd.f32 %v3384, %v5197
  %v5625 = vadd.f32 %v3387, %v5200
  %v5626 = vadd.f32 %v3390, %v5203
  %v5627 = vadd.f32 %v3393, %v5206
  %v5628 = vadd.f32 %v3396, %v5209
  %v5629 = vadd.f32 %v3399, %v5212
  %v5630 = vadd.f32 %v3402, %v5215
  %v5631 = vadd.f32 %v3405, %v5218
  %v5632 = vadd.f32 %v3408, %v5221
  %v5633 = vadd.f32 %v3411, %v5224
  %v5634 = vadd.f32 %v3414, %v5227
  %v5635 = vadd.f32 %v3417, %v5230
  %v5636 = vadd.f32 %v3420, %v5233
  %v5637 = vadd.f32 %v3423, %v5236
  %v5638 = vadd.f32 %v3426, %v5239
  %v5639 = vadd.f32 %v3429, %v5242
  %v5640 = vadd.f32 %v3432, %v5245
  %v5641 = vadd.f32 %v3435, %v5248
  %v5642 = vadd.f32 %v3438, %v5251
  %v5643 = vadd.f32 %v3441, %v5254
  %v5644 = vadd.f32 %v3444, %v5257
  %v5645 = vadd.f32 %v3447, %v5260
  %v5646 = vadd.f32 %v3450, %v5263
  %v5647 = vadd.f32 %v3453, %v5266
  %v5648 = vadd.f32 %v3456, %v5269
  %v5649 = vadd.f32 %v3459, %v5272
  %v5650 = vadd.f32 %v3462, %v5275
  %v5651 = vadd.f32 %v3465, %v5278
  %v5652 = vadd.f32 %v3468, %v5281
  %v5653 = vadd.f32 %v3471, %v5284
  %v5654 = vadd.f32 %v3474, %v5287
  %v5655 = vadd.f32 %v3477, %v5290
  %v5656 = vadd.f32 %v3480, %v5293
  %v5657 = vadd.f32 %v3483, %v5296
  %v5658 = vadd.f32 %v3486, %v5299
  %v5659 = vadd.f32 %v3489, %v5302
  %v5660 = vadd.f32 %v3492, %v5305
  %v5661 = vadd.f32 %v3495, %v5308
  %v5662 = vadd.f32 %v3498, %v5311
  %v5663 = vadd.f32 %v3501, %v5314
  %v5664 = vadd.f32 %v3504, %v5317
  %v5665 = vadd.f32 %v3507, %v5320
  %v5666 = vadd.f32 %v3510, %v5323
  %v5667 = vadd.f32 %v3513, %v5326
  %v5668 = vadd.f32 %v3516, %v5329
  %v5669 = vadd.f32 %v3519, %v5332
  %v5670 = vadd.f32 %v3522, %v5335
  %v5671 = vadd.f32 %v3525, %v5338
  %v5672 = vadd.f32 %v3528, %v5341
  %v5673 = vadd.f32 %v3531, %v5344
  %v5674 = vadd.f32 %v3534, %v5347
  %v5675 = vadd.f32 %v3537, %v5350
  %v5676 = vadd.f32 %v3540, %v5353
  %v5677 = vadd.f32 %v3543, %v5356
  %v5678 = vadd.f32 %v3546, %v5359
  %v5679 = vadd.f32 %v3549, %v5362
  %v5680 = vadd.f32 %v3552, %v5365
  %v5681 = vadd.f32 %v3555, %v5368
  %v5682 = vadd.f32 %v3558, %v5371
  %v5683 = vadd.f32 %v3561, %v5374
  %v5684 = vadd.f32 %v3564, %v5377
  %v5685 = vadd.f32 %v3567, %v5380
  %v5686 = vadd.f32 %v3570, %v5383
  %v5687 = vadd.f32 %v3573, %v5386
  %v5688 = vadd.f32 %v3576, %v5389
  %v5689 = vadd.f32 %v3579, %v5392
  %v5690 = vadd.f32 %v3582, %v5395
  %v5691 = vadd.f32 %v3585, %v5398
  %v5692 = vadd.f32 %v3588, %v5401
  %v5693 = vadd.f32 %v3591, %v5404
  %v5694 = vadd.f32 %v3594, %v5407
  %v5695 = vadd.f32 %v3597, %v5410
  %v5696 = vadd.f32 %v3600, %v5413
  %v5697 = vadd.f32 %v3603, %v5416
  %v5698 = vadd.f32 %v3606, %v5419
  %v5699 = vadd.f32 %v3609, %v5422
  %v5700 = vadd.f32 %v3612, %v5425
  %v5701 = vadd.f32 %v3615, %v5428
  %v5702 = vadd.f32 %v3618, %v5431
  %v5703 = vadd.f32 %v3621, %v5434
  %v5704 = vadd.f32 %v3624, %v5437
  %v5705 = vadd.f32 %v3627, %v5440
  %v5706 = vadd.f32 %v3630, %v5443
  %v5707 = vadd.f32 %v3633, %v5446
  %v5708 = vadd.f32 %v3636, %v5449
  %v5709 = vadd.f32 %v3639, %v5452
  %v5710 = vld [vmem:[%s3641 + $0x1] sm:$0xff]
  %v5711 = vld [vmem:[%s3641 + $0x9] sm:$0xff]
  %v5712 = vld [vmem:[%s3641 + $0x11] sm:$0xff]
  %v5713 = vld [vmem:[%s3641 + $0x19] sm:$0xff]
  %v5714 = vld [vmem:[%s3641 + $0x29] sm:$0xff]
  %v5715 = vld [vmem:[%s3641 + $0x31] sm:$0xff]
  %v5716 = vld [vmem:[%s3641 + $0x39] sm:$0xff]
  %v5717 = vld [vmem:[%s3641 + $0x41] sm:$0xff]
  %v5718 = vld [vmem:[%s3641 + $0x51] sm:$0xff]
  %v5719 = vld [vmem:[%s3641 + $0x59] sm:$0xff]
  %v5720 = vld [vmem:[%s3641 + $0x61] sm:$0xff]
  %v5721 = vld [vmem:[%s3641 + $0x69] sm:$0xff]
  %v5722 = vld [vmem:[%s3641 + $0x79] sm:$0xff]
  %v5723 = vld [vmem:[%s3641 + $0x81] sm:$0xff]
  %v5724 = vld [vmem:[%s3641 + $0x89] sm:$0xff]
  %v5725 = vld [vmem:[%s3641 + $0x91] sm:$0xff]
  %v5726 = vld [vmem:[%s3641 + $0xa1] sm:$0xff]
  %v5727 = vld [vmem:[%s3641 + $0xa9] sm:$0xff]
  %v5728 = vld [vmem:[%s3641 + $0xb1] sm:$0xff]
  %v5729 = vld [vmem:[%s3641 + $0xb9] sm:$0xff]
  %v5730 = vld [vmem:[%s3641 + $0xc9] sm:$0xff]
  %v5731 = vld [vmem:[%s3641 + $0xd1] sm:$0xff]
  %v5732 = vld [vmem:[%s3641 + $0xd9] sm:$0xff]
  %v5733 = vld [vmem:[%s3641 + $0xe1] sm:$0xff]
  %v5734 = vld [vmem:[%s3641 + $0xf1] sm:$0xff]
  %v5735 = vld [vmem:[%s3641 + $0xf9] sm:$0xff]
  %v5736 = vld [vmem:[%s3641 + $0x101] sm:$0xff]
  %v5737 = vld [vmem:[%s3641 + $0x109] sm:$0xff]
  %v5738 = vld [vmem:[%s3641 + $0x119] sm:$0xff]
  %v5739 = vld [vmem:[%s3641 + $0x121] sm:$0xff]
  %v5740 = vld [vmem:[%s3641 + $0x129] sm:$0xff]
  %v5741 = vld [vmem:[%s3641 + $0x131] sm:$0xff]
  %v5742 = vld [vmem:[%s3641 + $0x141] sm:$0xff]
  %v5743 = vld [vmem:[%s3641 + $0x149] sm:$0xff]
  %v5744 = vld [vmem:[%s3641 + $0x151] sm:$0xff]
  %v5745 = vld [vmem:[%s3641 + $0x159] sm:$0xff]
  %v5746 = vld [vmem:[%s3641 + $0x169] sm:$0xff]
  %v5747 = vld [vmem:[%s3641 + $0x171] sm:$0xff]
  %v5748 = vld [vmem:[%s3641 + $0x179] sm:$0xff]
  %v5749 = vld [vmem:[%s3641 + $0x181] sm:$0xff]
  %v5750 = vld [vmem:[%s3641 + $0x191] sm:$0xff]
  %v5751 = vld [vmem:[%s3641 + $0x199] sm:$0xff]
  %v5752 = vld [vmem:[%s3641 + $0x1a1] sm:$0xff]
  %v5753 = vld [vmem:[%s3641 + $0x1a9] sm:$0xff]
  %v5754 = vld [vmem:[%s3641 + $0x1b9] sm:$0xff]
  %v5755 = vld [vmem:[%s3641 + $0x1c1] sm:$0xff]
  %v5756 = vld [vmem:[%s3641 + $0x1c9] sm:$0xff]
  %v5757 = vld [vmem:[%s3641 + $0x1d1] sm:$0xff]
  %v5758 = vld [vmem:[%s3641 + $0x1e1] sm:$0xff]
  %v5759 = vld [vmem:[%s3641 + $0x1e9] sm:$0xff]
  %v5760 = vld [vmem:[%s3641 + $0x1f1] sm:$0xff]
  %v5761 = vld [vmem:[%s3641 + $0x1f9] sm:$0xff]
  %v5762 = vld [vmem:[%s3641 + $0x209] sm:$0xff]
  %v5763 = vld [vmem:[%s3641 + $0x211] sm:$0xff]
  %v5764 = vld [vmem:[%s3641 + $0x219] sm:$0xff]
  %v5765 = vld [vmem:[%s3641 + $0x221] sm:$0xff]
  %v5766 = vld [vmem:[%s3641 + $0x231] sm:$0xff]
  %v5767 = vld [vmem:[%s3641 + $0x239] sm:$0xff]
  %v5768 = vld [vmem:[%s3641 + $0x241] sm:$0xff]
  %v5769 = vld [vmem:[%s3641 + $0x249] sm:$0xff]
  %v5770 = vld [vmem:[%s3641 + $0x259] sm:$0xff]
  %v5771 = vld [vmem:[%s3641 + $0x261] sm:$0xff]
  %v5772 = vld [vmem:[%s3641 + $0x269] sm:$0xff]
  %v5773 = vld [vmem:[%s3641 + $0x271] sm:$0xff]
  %v5774 = vld [vmem:[%s3641 + $0x281] sm:$0xff]
  %v5775 = vld [vmem:[%s3641 + $0x289] sm:$0xff]
  %v5776 = vld [vmem:[%s3641 + $0x291] sm:$0xff]
  %v5777 = vld [vmem:[%s3641 + $0x299] sm:$0xff]
  %v5778 = vld [vmem:[%s3641 + $0x2a9] sm:$0xff]
  %v5779 = vld [vmem:[%s3641 + $0x2b1] sm:$0xff]
  %v5780 = vld [vmem:[%s3641 + $0x2b9] sm:$0xff]
  %v5781 = vld [vmem:[%s3641 + $0x2c1] sm:$0xff]
  %v5782 = vld [vmem:[%s3641 + $0x2d1] sm:$0xff]
  %v5783 = vld [vmem:[%s3641 + $0x2d9] sm:$0xff]
  %v5784 = vld [vmem:[%s3641 + $0x2e1] sm:$0xff]
  %v5785 = vld [vmem:[%s3641 + $0x2e9] sm:$0xff]
  %v5786 = vld [vmem:[%s3641 + $0x2f9] sm:$0xff]
  %v5787 = vld [vmem:[%s3641 + $0x301] sm:$0xff]
  %v5788 = vld [vmem:[%s3641 + $0x309] sm:$0xff]
  %v5789 = vld [vmem:[%s3641 + $0x311] sm:$0xff]
  %v5790 = vld [vmem:[%s3641 + $0x321] sm:$0xff]
  %v5791 = vld [vmem:[%s3641 + $0x329] sm:$0xff]
  %v5792 = vld [vmem:[%s3641 + $0x331] sm:$0xff]
  %v5793 = vld [vmem:[%s3641 + $0x339] sm:$0xff]
  %v5794 = vld [vmem:[%s3641 + $0x349] sm:$0xff]
  %v5795 = vld [vmem:[%s3641 + $0x351] sm:$0xff]
  %v5796 = vld [vmem:[%s3641 + $0x359] sm:$0xff]
  %v5797 = vld [vmem:[%s3641 + $0x361] sm:$0xff]
  %v5798 = vld [vmem:[%s3641 + $0x371] sm:$0xff]
  %v5799 = vld [vmem:[%s3641 + $0x379] sm:$0xff]
  %v5800 = vld [vmem:[%s3641 + $0x381] sm:$0xff]
  %v5801 = vld [vmem:[%s3641 + $0x389] sm:$0xff]
  %v5802 = vld [vmem:[%s3641 + $0x399] sm:$0xff]
  %v5803 = vld [vmem:[%s3641 + $0x3a1] sm:$0xff]
  %v5804 = vld [vmem:[%s3641 + $0x3a9] sm:$0xff]
  %v5805 = vld [vmem:[%s3641 + $0x3b1] sm:$0xff]
  %v5806 = vld [vmem:[%s3641 + $0x3c1] sm:$0xff]
  %v5807 = vld [vmem:[%s3641 + $0x3c9] sm:$0xff]
  %v5808 = vld [vmem:[%s3641 + $0x3d1] sm:$0xff]
  %v5809 = vld [vmem:[%s3641 + $0x3d9] sm:$0xff]
  %v5810 = vld [vmem:[%s3641 + $0x3e9] sm:$0xff]
  %v5811 = vld [vmem:[%s3641 + $0x3f1] sm:$0xff]
  %v5812 = vld [vmem:[%s3641 + $0x3f9] sm:$0xff]
  %v5813 = vld [vmem:[%s3641 + $0x401] sm:$0xff]
  %v5814 = vld [vmem:[%s3641 + $0x411] sm:$0xff]
  %v5815 = vld [vmem:[%s3641 + $0x419] sm:$0xff]
  %v5816 = vld [vmem:[%s3641 + $0x421] sm:$0xff]
  %v5817 = vld [vmem:[%s3641 + $0x429] sm:$0xff]
  %v5818 = vld [vmem:[%s3641 + $0x439] sm:$0xff]
  %v5819 = vld [vmem:[%s3641 + $0x441] sm:$0xff]
  %v5820 = vld [vmem:[%s3641 + $0x449] sm:$0xff]
  %v5821 = vld [vmem:[%s3641 + $0x451] sm:$0xff]
  %v5822 = vld [vmem:[%s3641 + $0x461] sm:$0xff]
  %v5823 = vld [vmem:[%s3641 + $0x469] sm:$0xff]
  %v5824 = vld [vmem:[%s3641 + $0x471] sm:$0xff]
  %v5825 = vld [vmem:[%s3641 + $0x479] sm:$0xff]
  %v5826 = vld [vmem:[%s3641 + $0x489] sm:$0xff]
  %v5827 = vld [vmem:[%s3641 + $0x491] sm:$0xff]
  %v5828 = vld [vmem:[%s3641 + $0x499] sm:$0xff]
  %v5829 = vld [vmem:[%s3641 + $0x4a1] sm:$0xff]
  %v5830 = vld [vmem:[%s3641 + $0x4b1] sm:$0xff]
  %v5831 = vld [vmem:[%s3641 + $0x4b9] sm:$0xff]
  %v5832 = vld [vmem:[%s3641 + $0x4c1] sm:$0xff]
  %v5833 = vld [vmem:[%s3641 + $0x4c9] sm:$0xff]
  %v5834 = vld [vmem:[%s3641 + $0x4d9] sm:$0xff]
  %v5835 = vld [vmem:[%s3641 + $0x4e1] sm:$0xff]
  %v5836 = vld [vmem:[%s3641 + $0x4e9] sm:$0xff]
  %v5837 = vld [vmem:[%s3641 + $0x4f1] sm:$0xff]
  %v5838 = vld [vmem:[%s3641 + $0x529] sm:$0xff]
  %v5839 = vld [vmem:[%s3641 + $0x531] sm:$0xff]
  %v5840 = vld [vmem:[%s3641 + $0x539] sm:$0xff]
  %v5841 = vld [vmem:[%s3641 + $0x541] sm:$0xff]
  %v5842 = vld [vmem:[%s3641 + $0x551] sm:$0xff]
  %v5843 = vld [vmem:[%s3641 + $0x559] sm:$0xff]
  %v5844 = vld [vmem:[%s3641 + $0x561] sm:$0xff]
  %v5845 = vld [vmem:[%s3641 + $0x569] sm:$0xff]
  %v5846 = vld [vmem:[%s3641 + $0x579] sm:$0xff]
  %v5847 = vld [vmem:[%s3641 + $0x581] sm:$0xff]
  %v5848 = vld [vmem:[%s3641 + $0x589] sm:$0xff]
  %v5849 = vld [vmem:[%s3641 + $0x591] sm:$0xff]
  %v5850 = vld [vmem:[%s3641 + $0x5a1] sm:$0xff]
  %v5851 = vld [vmem:[%s3641 + $0x5a9] sm:$0xff]
  %v5852 = vld [vmem:[%s3641 + $0x5b1] sm:$0xff]
  %v5853 = vld [vmem:[%s3641 + $0x5b9] sm:$0xff]
  %v5854 = vld [vmem:[%s3641 + $0x5c9] sm:$0xff]
  %v5855 = vld [vmem:[%s3641 + $0x5d1] sm:$0xff]
  %v5856 = vld [vmem:[%s3641 + $0x5d9] sm:$0xff]
  %v5857 = vld [vmem:[%s3641 + $0x5e1] sm:$0xff]
  %v5858 = vld [vmem:[%s3641 + $0x5f1] sm:$0xff]
  %v5859 = vld [vmem:[%s3641 + $0x5f9] sm:$0xff]
  %v5860 = vld [vmem:[%s3641 + $0x601] sm:$0xff]
  %v5861 = vld [vmem:[%s3641 + $0x609] sm:$0xff]
  %v5862 = vld [vmem:[%s3641 + $0x619] sm:$0xff]
  %v5863 = vld [vmem:[%s3641 + $0x621] sm:$0xff]
  %v5864 = vld [vmem:[%s3641 + $0x629] sm:$0xff]
  %v5865 = vld [vmem:[%s3641 + $0x631] sm:$0xff]
  %v5866 = vld [vmem:[%s3641 + $0x641] sm:$0xff]
  %v5867 = vld [vmem:[%s3641 + $0x649] sm:$0xff]
  %v5868 = vld [vmem:[%s3641 + $0x651] sm:$0xff]
  %v5869 = vld [vmem:[%s3641 + $0x659] sm:$0xff]
  %v5870 = vld [vmem:[%s3641 + $0x669] sm:$0xff]
  %v5871 = vld [vmem:[%s3641 + $0x671] sm:$0xff]
  %v5872 = vld [vmem:[%s3641 + $0x679] sm:$0xff]
  %v5873 = vld [vmem:[%s3641 + $0x681] sm:$0xff]
  %v5874 = vld [vmem:[%s3641 + $0x691] sm:$0xff]
  %v5875 = vld [vmem:[%s3641 + $0x699] sm:$0xff]
  %v5876 = vld [vmem:[%s3641 + $0x6a1] sm:$0xff]
  %v5877 = vld [vmem:[%s3641 + $0x6a9] sm:$0xff]
  %v5878 = vld [vmem:[%s3641 + $0x6b9] sm:$0xff]
  %v5879 = vld [vmem:[%s3641 + $0x6c1] sm:$0xff]
  %v5880 = vld [vmem:[%s3641 + $0x6c9] sm:$0xff]
  %v5881 = vld [vmem:[%s3641 + $0x6d1] sm:$0xff]
  %v5882 = vld [vmem:[%s3641 + $0x6e1] sm:$0xff]
  %v5883 = vld [vmem:[%s3641 + $0x6e9] sm:$0xff]
  %v5884 = vld [vmem:[%s3641 + $0x6f1] sm:$0xff]
  %v5885 = vld [vmem:[%s3641 + $0x6f9] sm:$0xff]
  %v5886 = vld [vmem:[%s3641 + $0x709] sm:$0xff]
  %v5887 = vld [vmem:[%s3641 + $0x711] sm:$0xff]
  %v5888 = vld [vmem:[%s3641 + $0x719] sm:$0xff]
  %v5889 = vld [vmem:[%s3641 + $0x721] sm:$0xff]
  %v5890 = vld [vmem:[%s3641 + $0x731] sm:$0xff]
  %v5891 = vld [vmem:[%s3641 + $0x739] sm:$0xff]
  %v5892 = vld [vmem:[%s3641 + $0x741] sm:$0xff]
  %v5893 = vld [vmem:[%s3641 + $0x749] sm:$0xff]
  %v5894 = vld [vmem:[%s3641 + $0x759] sm:$0xff]
  %v5895 = vld [vmem:[%s3641 + $0x761] sm:$0xff]
  %v5896 = vld [vmem:[%s3641 + $0x769] sm:$0xff]
  %v5897 = vld [vmem:[%s3641 + $0x771] sm:$0xff]
  %v5898 = vld [vmem:[%s3641 + $0x781] sm:$0xff]
  %v5899 = vld [vmem:[%s3641 + $0x789] sm:$0xff]
  %v5900 = vld [vmem:[%s3641 + $0x791] sm:$0xff]
  %v5901 = vld [vmem:[%s3641 + $0x799] sm:$0xff]
  %v5902 = vld [vmem:[%s3641 + $0x7a9] sm:$0xff]
  %v5903 = vld [vmem:[%s3641 + $0x7b1] sm:$0xff]
  %v5904 = vld [vmem:[%s3641 + $0x7b9] sm:$0xff]
  %v5905 = vld [vmem:[%s3641 + $0x7c1] sm:$0xff]
  %v5906 = vld [vmem:[%s3641 + $0x7d1] sm:$0xff]
  %v5907 = vld [vmem:[%s3641 + $0x7d9] sm:$0xff]
  %v5908 = vld [vmem:[%s3641 + $0x7e1] sm:$0xff]
  %v5909 = vld [vmem:[%s3641 + $0x7e9] sm:$0xff]
  %v5910 = vld [vmem:[%s3641 + $0x7f9] sm:$0xff]
  %v5911 = vld [vmem:[%s3641 + $0x801] sm:$0xff]
  %v5912 = vld [vmem:[%s3641 + $0x809] sm:$0xff]
  %v5913 = vld [vmem:[%s3641 + $0x811] sm:$0xff]
  %v5914 = vld [vmem:[%s3641 + $0x821] sm:$0xff]
  %v5915 = vld [vmem:[%s3641 + $0x829] sm:$0xff]
  %v5916 = vld [vmem:[%s3641 + $0x831] sm:$0xff]
  %v5917 = vld [vmem:[%s3641 + $0x839] sm:$0xff]
  %v5918 = vld [vmem:[%s3641 + $0x849] sm:$0xff]
  %v5919 = vld [vmem:[%s3641 + $0x851] sm:$0xff]
  %v5920 = vld [vmem:[%s3641 + $0x859] sm:$0xff]
  %v5921 = vld [vmem:[%s3641 + $0x861] sm:$0xff]
  %v5922 = vld [vmem:[%s3641 + $0x871] sm:$0xff]
  %v5923 = vld [vmem:[%s3641 + $0x879] sm:$0xff]
  %v5924 = vld [vmem:[%s3641 + $0x881] sm:$0xff]
  %v5925 = vld [vmem:[%s3641 + $0x889] sm:$0xff]
  %v5926 = vld [vmem:[%s3641 + $0x899] sm:$0xff]
  %v5927 = vld [vmem:[%s3641 + $0x8a1] sm:$0xff]
  %v5928 = vld [vmem:[%s3641 + $0x8a9] sm:$0xff]
  %v5929 = vld [vmem:[%s3641 + $0x8b1] sm:$0xff]
  %v5930 = vld [vmem:[%s3641 + $0x8c1] sm:$0xff]
  %v5931 = vld [vmem:[%s3641 + $0x8c9] sm:$0xff]
  %v5932 = vld [vmem:[%s3641 + $0x8d1] sm:$0xff]
  %v5933 = vld [vmem:[%s3641 + $0x8d9] sm:$0xff]
  %v5934 = vld [vmem:[%s3641 + $0x8e9] sm:$0xff]
  %v5935 = vld [vmem:[%s3641 + $0x8f1] sm:$0xff]
  %v5936 = vld [vmem:[%s3641 + $0x8f9] sm:$0xff]
  %v5937 = vld [vmem:[%s3641 + $0x901] sm:$0xff]
  %v5938 = vld [vmem:[%s3641 + $0x911] sm:$0xff]
  %v5939 = vld [vmem:[%s3641 + $0x919] sm:$0xff]
  %v5940 = vld [vmem:[%s3641 + $0x921] sm:$0xff]
  %v5941 = vld [vmem:[%s3641 + $0x929] sm:$0xff]
  %v5942 = vld [vmem:[%s3641 + $0x939] sm:$0xff]
  %v5943 = vld [vmem:[%s3641 + $0x941] sm:$0xff]
  %v5944 = vld [vmem:[%s3641 + $0x949] sm:$0xff]
  %v5945 = vld [vmem:[%s3641 + $0x951] sm:$0xff]
  %v5946 = vld [vmem:[%s3641 + $0x961] sm:$0xff]
  %v5947 = vld [vmem:[%s3641 + $0x969] sm:$0xff]
  %v5948 = vld [vmem:[%s3641 + $0x971] sm:$0xff]
  %v5949 = vld [vmem:[%s3641 + $0x979] sm:$0xff]
  %v5950 = vld [vmem:[%s3641 + $0x989] sm:$0xff]
  %v5951 = vld [vmem:[%s3641 + $0x991] sm:$0xff]
  %v5952 = vld [vmem:[%s3641 + $0x999] sm:$0xff]
  %v5953 = vld [vmem:[%s3641 + $0x9a1] sm:$0xff]
  %v5954 = vld [vmem:[%s3641 + $0x9b1] sm:$0xff]
  %v5955 = vld [vmem:[%s3641 + $0x9b9] sm:$0xff]
  %v5956 = vld [vmem:[%s3641 + $0x9c1] sm:$0xff]
  %v5957 = vld [vmem:[%s3641 + $0x9c9] sm:$0xff]
  %v5958 = vld [vmem:[%s3641 + $0x9d9] sm:$0xff]
  %v5959 = vld [vmem:[%s3641 + $0x9e1] sm:$0xff]
  %v5960 = vld [vmem:[%s3641 + $0x9e9] sm:$0xff]
  %v5961 = vld [vmem:[%s3641 + $0x9f1] sm:$0xff]
  %v5962 = vld [vmem:[%s3641 + $0xa01] sm:$0xff]
  %v5963 = vld [vmem:[%s3641 + $0xa09] sm:$0xff]
  %v5964 = vld [vmem:[%s3641 + $0xa11] sm:$0xff]
  %v5965 = vld [vmem:[%s3641 + $0xa19] sm:$0xff]
  %s5966 = scalar_lea.vmem %s1, 48
  %v5967 = vld [vmem:[%s5966] sm:$0xff]
  %v5968 = vld [vmem:[%s5966 + $0x8] sm:$0xff]
  %v5970 = vsel %vm534, %v5710, 0
  %v5973 = vsel %vm534, %v5711, 0
  %v5976 = vsel %vm534, %v5712, 0
  %v5979 = vsel %vm534, %v5713, 0
  %v5982 = vsel %vm534, %v5714, 0
  %v5985 = vsel %vm534, %v5715, 0
  %v5988 = vsel %vm534, %v5716, 0
  %v5991 = vsel %vm534, %v5717, 0
  %v5994 = vsel %vm534, %v5718, 0
  %v5997 = vsel %vm534, %v5719, 0
  %v6000 = vsel %vm534, %v5720, 0
  %v6003 = vsel %vm534, %v5721, 0
  %v6006 = vsel %vm534, %v5722, 0
  %v6009 = vsel %vm534, %v5723, 0
  %v6012 = vsel %vm534, %v5724, 0
  %v6015 = vsel %vm534, %v5725, 0
  %v6018 = vsel %vm534, %v5726, 0
  %v6021 = vsel %vm534, %v5727, 0
  %v6024 = vsel %vm534, %v5728, 0
  %v6027 = vsel %vm534, %v5729, 0
  %v6030 = vsel %vm534, %v5730, 0
  %v6033 = vsel %vm534, %v5731, 0
  %v6036 = vsel %vm534, %v5732, 0
  %v6039 = vsel %vm534, %v5733, 0
  %v6042 = vsel %vm534, %v5734, 0
  %v6045 = vsel %vm534, %v5735, 0
  %v6048 = vsel %vm534, %v5736, 0
  %v6051 = vsel %vm534, %v5737, 0
  %v6054 = vsel %vm534, %v5738, 0
  %v6057 = vsel %vm534, %v5739, 0
  %v6060 = vsel %vm534, %v5740, 0
  %v6063 = vsel %vm534, %v5741, 0
  %v6066 = vsel %vm534, %v5742, 0
  %v6069 = vsel %vm534, %v5743, 0
  %v6072 = vsel %vm534, %v5744, 0
  %v6075 = vsel %vm534, %v5745, 0
  %v6078 = vsel %vm534, %v5746, 0
  %v6081 = vsel %vm534, %v5747, 0
  %v6084 = vsel %vm534, %v5748, 0
  %v6087 = vsel %vm534, %v5749, 0
  %v6090 = vsel %vm534, %v5750, 0
  %v6093 = vsel %vm534, %v5751, 0
  %v6096 = vsel %vm534, %v5752, 0
  %v6099 = vsel %vm534, %v5753, 0
  %v6102 = vsel %vm534, %v5754, 0
  %v6105 = vsel %vm534, %v5755, 0
  %v6108 = vsel %vm534, %v5756, 0
  %v6111 = vsel %vm534, %v5757, 0
  %v6114 = vsel %vm534, %v5758, 0
  %v6117 = vsel %vm534, %v5759, 0
  %v6120 = vsel %vm534, %v5760, 0
  %v6123 = vsel %vm534, %v5761, 0
  %v6126 = vsel %vm534, %v5762, 0
  %v6129 = vsel %vm534, %v5763, 0
  %v6132 = vsel %vm534, %v5764, 0
  %v6135 = vsel %vm534, %v5765, 0
  %v6138 = vsel %vm534, %v5766, 0
  %v6141 = vsel %vm534, %v5767, 0
  %v6144 = vsel %vm534, %v5768, 0
  %v6147 = vsel %vm534, %v5769, 0
  %v6150 = vsel %vm534, %v5770, 0
  %v6153 = vsel %vm534, %v5771, 0
  %v6156 = vsel %vm534, %v5772, 0
  %v6159 = vsel %vm534, %v5773, 0
  %v6162 = vsel %vm534, %v5774, 0
  %v6165 = vsel %vm534, %v5775, 0
  %v6168 = vsel %vm534, %v5776, 0
  %v6171 = vsel %vm534, %v5777, 0
  %v6174 = vsel %vm534, %v5778, 0
  %v6177 = vsel %vm534, %v5779, 0
  %v6180 = vsel %vm534, %v5780, 0
  %v6183 = vsel %vm534, %v5781, 0
  %v6186 = vsel %vm534, %v5782, 0
  %v6189 = vsel %vm534, %v5783, 0
  %v6192 = vsel %vm534, %v5784, 0
  %v6195 = vsel %vm534, %v5785, 0
  %v6198 = vsel %vm534, %v5786, 0
  %v6201 = vsel %vm534, %v5787, 0
  %v6204 = vsel %vm534, %v5788, 0
  %v6207 = vsel %vm534, %v5789, 0
  %v6210 = vsel %vm534, %v5790, 0
  %v6213 = vsel %vm534, %v5791, 0
  %v6216 = vsel %vm534, %v5792, 0
  %v6219 = vsel %vm534, %v5793, 0
  %v6222 = vsel %vm534, %v5794, 0
  %v6225 = vsel %vm534, %v5795, 0
  %v6228 = vsel %vm534, %v5796, 0
  %v6231 = vsel %vm534, %v5797, 0
  %v6234 = vsel %vm534, %v5798, 0
  %v6237 = vsel %vm534, %v5799, 0
  %v6240 = vsel %vm534, %v5800, 0
  %v6243 = vsel %vm534, %v5801, 0
  %v6246 = vsel %vm534, %v5802, 0
  %v6249 = vsel %vm534, %v5803, 0
  %v6252 = vsel %vm534, %v5804, 0
  %v6255 = vsel %vm534, %v5805, 0
  %v6258 = vsel %vm534, %v5806, 0
  %v6261 = vsel %vm534, %v5807, 0
  %v6264 = vsel %vm534, %v5808, 0
  %v6267 = vsel %vm534, %v5809, 0
  %v6270 = vsel %vm534, %v5810, 0
  %v6273 = vsel %vm534, %v5811, 0
  %v6276 = vsel %vm534, %v5812, 0
  %v6279 = vsel %vm534, %v5813, 0
  %v6282 = vsel %vm534, %v5814, 0
  %v6285 = vsel %vm534, %v5815, 0
  %v6288 = vsel %vm534, %v5816, 0
  %v6291 = vsel %vm534, %v5817, 0
  %v6294 = vsel %vm534, %v5818, 0
  %v6297 = vsel %vm534, %v5819, 0
  %v6300 = vsel %vm534, %v5820, 0
  %v6303 = vsel %vm534, %v5821, 0
  %v6306 = vsel %vm534, %v5822, 0
  %v6309 = vsel %vm534, %v5823, 0
  %v6312 = vsel %vm534, %v5824, 0
  %v6315 = vsel %vm534, %v5825, 0
  %v6318 = vsel %vm534, %v5826, 0
  %v6321 = vsel %vm534, %v5827, 0
  %v6324 = vsel %vm534, %v5828, 0
  %v6327 = vsel %vm534, %v5829, 0
  %v6330 = vsel %vm534, %v5830, 0
  %v6333 = vsel %vm534, %v5831, 0
  %v6336 = vsel %vm534, %v5832, 0
  %v6339 = vsel %vm534, %v5833, 0
  %v6342 = vsel %vm534, %v5834, 0
  %v6345 = vsel %vm534, %v5835, 0
  %v6348 = vsel %vm534, %v5836, 0
  %v6351 = vsel %vm534, %v5837, 0
  %v6354 = vsel %vm534, %v5838, 0
  %v6357 = vsel %vm534, %v5839, 0
  %v6360 = vsel %vm534, %v5840, 0
  %v6363 = vsel %vm534, %v5841, 0
  %v6366 = vsel %vm534, %v5842, 0
  %v6369 = vsel %vm534, %v5843, 0
  %v6372 = vsel %vm534, %v5844, 0
  %v6375 = vsel %vm534, %v5845, 0
  %v6378 = vsel %vm534, %v5846, 0
  %v6381 = vsel %vm534, %v5847, 0
  %v6384 = vsel %vm534, %v5848, 0
  %v6387 = vsel %vm534, %v5849, 0
  %v6390 = vsel %vm534, %v5850, 0
  %v6393 = vsel %vm534, %v5851, 0
  %v6396 = vsel %vm534, %v5852, 0
  %v6399 = vsel %vm534, %v5853, 0
  %v6402 = vsel %vm534, %v5854, 0
  %v6405 = vsel %vm534, %v5855, 0
  %v6408 = vsel %vm534, %v5856, 0
  %v6411 = vsel %vm534, %v5857, 0
  %v6414 = vsel %vm534, %v5858, 0
  %v6417 = vsel %vm534, %v5859, 0
  %v6420 = vsel %vm534, %v5860, 0
  %v6423 = vsel %vm534, %v5861, 0
  %v6426 = vsel %vm534, %v5862, 0
  %v6429 = vsel %vm534, %v5863, 0
  %v6432 = vsel %vm534, %v5864, 0
  %v6435 = vsel %vm534, %v5865, 0
  %v6438 = vsel %vm534, %v5866, 0
  %v6441 = vsel %vm534, %v5867, 0
  %v6444 = vsel %vm534, %v5868, 0
  %v6447 = vsel %vm534, %v5869, 0
  %v6450 = vsel %vm534, %v5870, 0
  %v6453 = vsel %vm534, %v5871, 0
  %v6456 = vsel %vm534, %v5872, 0
  %v6459 = vsel %vm534, %v5873, 0
  %v6462 = vsel %vm534, %v5874, 0
  %v6465 = vsel %vm534, %v5875, 0
  %v6468 = vsel %vm534, %v5876, 0
  %v6471 = vsel %vm534, %v5877, 0
  %v6474 = vsel %vm534, %v5878, 0
  %v6477 = vsel %vm534, %v5879, 0
  %v6480 = vsel %vm534, %v5880, 0
  %v6483 = vsel %vm534, %v5881, 0
  %v6486 = vsel %vm534, %v5882, 0
  %v6489 = vsel %vm534, %v5883, 0
  %v6492 = vsel %vm534, %v5884, 0
  %v6495 = vsel %vm534, %v5885, 0
  %v6498 = vsel %vm534, %v5886, 0
  %v6501 = vsel %vm534, %v5887, 0
  %v6504 = vsel %vm534, %v5888, 0
  %v6507 = vsel %vm534, %v5889, 0
  %v6510 = vsel %vm534, %v5890, 0
  %v6513 = vsel %vm534, %v5891, 0
  %v6516 = vsel %vm534, %v5892, 0
  %v6519 = vsel %vm534, %v5893, 0
  %v6522 = vsel %vm534, %v5894, 0
  %v6525 = vsel %vm534, %v5895, 0
  %v6528 = vsel %vm534, %v5896, 0
  %v6531 = vsel %vm534, %v5897, 0
  %v6534 = vsel %vm534, %v5898, 0
  %v6537 = vsel %vm534, %v5899, 0
  %v6540 = vsel %vm534, %v5900, 0
  %v6543 = vsel %vm534, %v5901, 0
  %v6546 = vsel %vm534, %v5902, 0
  %v6549 = vsel %vm534, %v5903, 0
  %v6552 = vsel %vm534, %v5904, 0
  %v6555 = vsel %vm534, %v5905, 0
  %v6558 = vsel %vm534, %v5906, 0
  %v6561 = vsel %vm534, %v5907, 0
  %v6564 = vsel %vm534, %v5908, 0
  %v6567 = vsel %vm534, %v5909, 0
  %v6570 = vsel %vm534, %v5910, 0
  %v6573 = vsel %vm534, %v5911, 0
  %v6576 = vsel %vm534, %v5912, 0
  %v6579 = vsel %vm534, %v5913, 0
  %v6582 = vsel %vm534, %v5914, 0
  %v6585 = vsel %vm534, %v5915, 0
  %v6588 = vsel %vm534, %v5916, 0
  %v6591 = vsel %vm534, %v5917, 0
  %v6594 = vsel %vm534, %v5918, 0
  %v6597 = vsel %vm534, %v5919, 0
  %v6600 = vsel %vm534, %v5920, 0
  %v6603 = vsel %vm534, %v5921, 0
  %v6606 = vsel %vm534, %v5922, 0
  %v6609 = vsel %vm534, %v5923, 0
  %v6612 = vsel %vm534, %v5924, 0
  %v6615 = vsel %vm534, %v5925, 0
  %v6618 = vsel %vm534, %v5926, 0
  %v6621 = vsel %vm534, %v5927, 0
  %v6624 = vsel %vm534, %v5928, 0
  %v6627 = vsel %vm534, %v5929, 0
  %v6630 = vsel %vm534, %v5930, 0
  %v6633 = vsel %vm534, %v5931, 0
  %v6636 = vsel %vm534, %v5932, 0
  %v6639 = vsel %vm534, %v5933, 0
  %v6642 = vsel %vm534, %v5934, 0
  %v6645 = vsel %vm534, %v5935, 0
  %v6648 = vsel %vm534, %v5936, 0
  %v6651 = vsel %vm534, %v5937, 0
  %v6654 = vsel %vm534, %v5938, 0
  %v6657 = vsel %vm534, %v5939, 0
  %v6660 = vsel %vm534, %v5940, 0
  %v6663 = vsel %vm534, %v5941, 0
  %v6666 = vsel %vm534, %v5942, 0
  %v6669 = vsel %vm534, %v5943, 0
  %v6672 = vsel %vm534, %v5944, 0
  %v6675 = vsel %vm534, %v5945, 0
  %v6678 = vsel %vm534, %v5946, 0
  %v6681 = vsel %vm534, %v5947, 0
  %v6684 = vsel %vm534, %v5948, 0
  %v6687 = vsel %vm534, %v5949, 0
  %v6690 = vsel %vm534, %v5950, 0
  %v6693 = vsel %vm534, %v5951, 0
  %v6696 = vsel %vm534, %v5952, 0
  %v6699 = vsel %vm534, %v5953, 0
  %v6702 = vsel %vm534, %v5954, 0
  %v6705 = vsel %vm534, %v5955, 0
  %v6708 = vsel %vm534, %v5956, 0
  %v6711 = vsel %vm534, %v5957, 0
  %v6714 = vsel %vm534, %v5958, 0
  %v6717 = vsel %vm534, %v5959, 0
  %v6720 = vsel %vm534, %v5960, 0
  %v6723 = vsel %vm534, %v5961, 0
  %v6726 = vsel %vm534, %v5962, 0
  %v6729 = vsel %vm534, %v5963, 0
  %v6732 = vsel %vm534, %v5964, 0
  %v6735 = vsel %vm534, %v5965, 0
  %6737 = vmatpush.msra.mxu0 0.0
  %6738 = vmatpush.msra.mxu0 0.0
  %6739 = vmatpush.msra.mxu0 0.0
  %6740 = vmatpush.msra.mxu0 0.0
  %6741 = vmatpush.msra.mxu0 0.0
  %6742 = vmatpush.msra.mxu0 0.0
  %6743 = vmatpush.msra.mxu0 0.0
  %6744 = vmatpush.msra.mxu0 0.0
  %6745 = vmatpush.msra.mxu0 0.0
  %6746 = vmatpush.msra.mxu0 0.0
  %6747 = vmatpush.msra.mxu0 0.0
  %6748 = vmatpush.msra.mxu0 0.0
  %6749 = vmatpush.msra.mxu0 0.0
  %6750 = vmatpush.msra.mxu0 0.0
  %6751 = vmatpush.msra.mxu0 %v5968
  %6752 = vmatpush.msra.mxu0 %v5967
  %6753 = vmatmul.f32.gmra.mxu0 %v5970
  %v6754 = vpop.f32.mrf.mxu0
  %v6755 = vadd.f32 0.0, %v6754
  %6756 = vmatmul.f32.gmra.mxu0 %v5973
  %v6757 = vpop.f32.mrf.mxu0
  %v6758 = vadd.f32 0.0, %v6757
  %6759 = vmatmul.f32.gmra.mxu0 %v5976
  %v6760 = vpop.f32.mrf.mxu0
  %v6761 = vadd.f32 0.0, %v6760
  %6762 = vmatmul.f32.gmra.mxu0 %v5979
  %v6763 = vpop.f32.mrf.mxu0
  %v6764 = vadd.f32 0.0, %v6763
  %6765 = vmatmul.f32.gmra.mxu0 %v5982
  %v6766 = vpop.f32.mrf.mxu0
  %v6767 = vadd.f32 0.0, %v6766
  %6768 = vmatmul.f32.gmra.mxu0 %v5985
  %v6769 = vpop.f32.mrf.mxu0
  %v6770 = vadd.f32 0.0, %v6769
  %6771 = vmatmul.f32.gmra.mxu0 %v5988
  %v6772 = vpop.f32.mrf.mxu0
  %v6773 = vadd.f32 0.0, %v6772
  %6774 = vmatmul.f32.gmra.mxu0 %v5991
  %v6775 = vpop.f32.mrf.mxu0
  %v6776 = vadd.f32 0.0, %v6775
  %6777 = vmatmul.f32.gmra.mxu0 %v5994
  %v6778 = vpop.f32.mrf.mxu0
  %v6779 = vadd.f32 0.0, %v6778
  %6780 = vmatmul.f32.gmra.mxu0 %v5997
  %v6781 = vpop.f32.mrf.mxu0
  %v6782 = vadd.f32 0.0, %v6781
  %6783 = vmatmul.f32.gmra.mxu0 %v6000
  %v6784 = vpop.f32.mrf.mxu0
  %v6785 = vadd.f32 0.0, %v6784
  %6786 = vmatmul.f32.gmra.mxu0 %v6003
  %v6787 = vpop.f32.mrf.mxu0
  %v6788 = vadd.f32 0.0, %v6787
  %6789 = vmatmul.f32.gmra.mxu0 %v6006
  %v6790 = vpop.f32.mrf.mxu0
  %v6791 = vadd.f32 0.0, %v6790
  %6792 = vmatmul.f32.gmra.mxu0 %v6009
  %v6793 = vpop.f32.mrf.mxu0
  %v6794 = vadd.f32 0.0, %v6793
  %6795 = vmatmul.f32.gmra.mxu0 %v6012
  %v6796 = vpop.f32.mrf.mxu0
  %v6797 = vadd.f32 0.0, %v6796
  %6798 = vmatmul.f32.gmra.mxu0 %v6015
  %v6799 = vpop.f32.mrf.mxu0
  %v6800 = vadd.f32 0.0, %v6799
  %6801 = vmatmul.f32.gmra.mxu0 %v6018
  %v6802 = vpop.f32.mrf.mxu0
  %v6803 = vadd.f32 0.0, %v6802
  %6804 = vmatmul.f32.gmra.mxu0 %v6021
  %v6805 = vpop.f32.mrf.mxu0
  %v6806 = vadd.f32 0.0, %v6805
  %6807 = vmatmul.f32.gmra.mxu0 %v6024
  %v6808 = vpop.f32.mrf.mxu0
  %v6809 = vadd.f32 0.0, %v6808
  %6810 = vmatmul.f32.gmra.mxu0 %v6027
  %v6811 = vpop.f32.mrf.mxu0
  %v6812 = vadd.f32 0.0, %v6811
  %6813 = vmatmul.f32.gmra.mxu0 %v6030
  %v6814 = vpop.f32.mrf.mxu0
  %v6815 = vadd.f32 0.0, %v6814
  %6816 = vmatmul.f32.gmra.mxu0 %v6033
  %v6817 = vpop.f32.mrf.mxu0
  %v6818 = vadd.f32 0.0, %v6817
  %6819 = vmatmul.f32.gmra.mxu0 %v6036
  %v6820 = vpop.f32.mrf.mxu0
  %v6821 = vadd.f32 0.0, %v6820
  %6822 = vmatmul.f32.gmra.mxu0 %v6039
  %v6823 = vpop.f32.mrf.mxu0
  %v6824 = vadd.f32 0.0, %v6823
  %6825 = vmatmul.f32.gmra.mxu0 %v6042
  %v6826 = vpop.f32.mrf.mxu0
  %v6827 = vadd.f32 0.0, %v6826
  %6828 = vmatmul.f32.gmra.mxu0 %v6045
  %v6829 = vpop.f32.mrf.mxu0
  %v6830 = vadd.f32 0.0, %v6829
  %6831 = vmatmul.f32.gmra.mxu0 %v6048
  %v6832 = vpop.f32.mrf.mxu0
  %v6833 = vadd.f32 0.0, %v6832
  %6834 = vmatmul.f32.gmra.mxu0 %v6051
  %v6835 = vpop.f32.mrf.mxu0
  %v6836 = vadd.f32 0.0, %v6835
  %6837 = vmatmul.f32.gmra.mxu0 %v6054
  %v6838 = vpop.f32.mrf.mxu0
  %v6839 = vadd.f32 0.0, %v6838
  %6840 = vmatmul.f32.gmra.mxu0 %v6057
  %v6841 = vpop.f32.mrf.mxu0
  %v6842 = vadd.f32 0.0, %v6841
  %6843 = vmatmul.f32.gmra.mxu0 %v6060
  %v6844 = vpop.f32.mrf.mxu0
  %v6845 = vadd.f32 0.0, %v6844
  %6846 = vmatmul.f32.gmra.mxu0 %v6063
  %v6847 = vpop.f32.mrf.mxu0
  %v6848 = vadd.f32 0.0, %v6847
  %6849 = vmatmul.f32.gmra.mxu0 %v6066
  %v6850 = vpop.f32.mrf.mxu0
  %v6851 = vadd.f32 0.0, %v6850
  %6852 = vmatmul.f32.gmra.mxu0 %v6069
  %v6853 = vpop.f32.mrf.mxu0
  %v6854 = vadd.f32 0.0, %v6853
  %6855 = vmatmul.f32.gmra.mxu0 %v6072
  %v6856 = vpop.f32.mrf.mxu0
  %v6857 = vadd.f32 0.0, %v6856
  %6858 = vmatmul.f32.gmra.mxu0 %v6075
  %v6859 = vpop.f32.mrf.mxu0
  %v6860 = vadd.f32 0.0, %v6859
  %6861 = vmatmul.f32.gmra.mxu0 %v6078
  %v6862 = vpop.f32.mrf.mxu0
  %v6863 = vadd.f32 0.0, %v6862
  %6864 = vmatmul.f32.gmra.mxu0 %v6081
  %v6865 = vpop.f32.mrf.mxu0
  %v6866 = vadd.f32 0.0, %v6865
  %6867 = vmatmul.f32.gmra.mxu0 %v6084
  %v6868 = vpop.f32.mrf.mxu0
  %v6869 = vadd.f32 0.0, %v6868
  %6870 = vmatmul.f32.gmra.mxu0 %v6087
  %v6871 = vpop.f32.mrf.mxu0
  %v6872 = vadd.f32 0.0, %v6871
  %6873 = vmatmul.f32.gmra.mxu0 %v6090
  %v6874 = vpop.f32.mrf.mxu0
  %v6875 = vadd.f32 0.0, %v6874
  %6876 = vmatmul.f32.gmra.mxu0 %v6093
  %v6877 = vpop.f32.mrf.mxu0
  %v6878 = vadd.f32 0.0, %v6877
  %6879 = vmatmul.f32.gmra.mxu0 %v6096
  %v6880 = vpop.f32.mrf.mxu0
  %v6881 = vadd.f32 0.0, %v6880
  %6882 = vmatmul.f32.gmra.mxu0 %v6099
  %v6883 = vpop.f32.mrf.mxu0
  %v6884 = vadd.f32 0.0, %v6883
  %6885 = vmatmul.f32.gmra.mxu0 %v6102
  %v6886 = vpop.f32.mrf.mxu0
  %v6887 = vadd.f32 0.0, %v6886
  %6888 = vmatmul.f32.gmra.mxu0 %v6105
  %v6889 = vpop.f32.mrf.mxu0
  %v6890 = vadd.f32 0.0, %v6889
  %6891 = vmatmul.f32.gmra.mxu0 %v6108
  %v6892 = vpop.f32.mrf.mxu0
  %v6893 = vadd.f32 0.0, %v6892
  %6894 = vmatmul.f32.gmra.mxu0 %v6111
  %v6895 = vpop.f32.mrf.mxu0
  %v6896 = vadd.f32 0.0, %v6895
  %6897 = vmatmul.f32.gmra.mxu0 %v6114
  %v6898 = vpop.f32.mrf.mxu0
  %v6899 = vadd.f32 0.0, %v6898
  %6900 = vmatmul.f32.gmra.mxu0 %v6117
  %v6901 = vpop.f32.mrf.mxu0
  %v6902 = vadd.f32 0.0, %v6901
  %6903 = vmatmul.f32.gmra.mxu0 %v6120
  %v6904 = vpop.f32.mrf.mxu0
  %v6905 = vadd.f32 0.0, %v6904
  %6906 = vmatmul.f32.gmra.mxu0 %v6123
  %v6907 = vpop.f32.mrf.mxu0
  %v6908 = vadd.f32 0.0, %v6907
  %6909 = vmatmul.f32.gmra.mxu0 %v6126
  %v6910 = vpop.f32.mrf.mxu0
  %v6911 = vadd.f32 0.0, %v6910
  %6912 = vmatmul.f32.gmra.mxu0 %v6129
  %v6913 = vpop.f32.mrf.mxu0
  %v6914 = vadd.f32 0.0, %v6913
  %6915 = vmatmul.f32.gmra.mxu0 %v6132
  %v6916 = vpop.f32.mrf.mxu0
  %v6917 = vadd.f32 0.0, %v6916
  %6918 = vmatmul.f32.gmra.mxu0 %v6135
  %v6919 = vpop.f32.mrf.mxu0
  %v6920 = vadd.f32 0.0, %v6919
  %6921 = vmatmul.f32.gmra.mxu0 %v6138
  %v6922 = vpop.f32.mrf.mxu0
  %v6923 = vadd.f32 0.0, %v6922
  %6924 = vmatmul.f32.gmra.mxu0 %v6141
  %v6925 = vpop.f32.mrf.mxu0
  %v6926 = vadd.f32 0.0, %v6925
  %6927 = vmatmul.f32.gmra.mxu0 %v6144
  %v6928 = vpop.f32.mrf.mxu0
  %v6929 = vadd.f32 0.0, %v6928
  %6930 = vmatmul.f32.gmra.mxu0 %v6147
  %v6931 = vpop.f32.mrf.mxu0
  %v6932 = vadd.f32 0.0, %v6931
  %6933 = vmatmul.f32.gmra.mxu0 %v6150
  %v6934 = vpop.f32.mrf.mxu0
  %v6935 = vadd.f32 0.0, %v6934
  %6936 = vmatmul.f32.gmra.mxu0 %v6153
  %v6937 = vpop.f32.mrf.mxu0
  %v6938 = vadd.f32 0.0, %v6937
  %6939 = vmatmul.f32.gmra.mxu0 %v6156
  %v6940 = vpop.f32.mrf.mxu0
  %v6941 = vadd.f32 0.0, %v6940
  %6942 = vmatmul.f32.gmra.mxu0 %v6159
  %v6943 = vpop.f32.mrf.mxu0
  %v6944 = vadd.f32 0.0, %v6943
  %6945 = vmatmul.f32.gmra.mxu0 %v6162
  %v6946 = vpop.f32.mrf.mxu0
  %v6947 = vadd.f32 0.0, %v6946
  %6948 = vmatmul.f32.gmra.mxu0 %v6165
  %v6949 = vpop.f32.mrf.mxu0
  %v6950 = vadd.f32 0.0, %v6949
  %6951 = vmatmul.f32.gmra.mxu0 %v6168
  %v6952 = vpop.f32.mrf.mxu0
  %v6953 = vadd.f32 0.0, %v6952
  %6954 = vmatmul.f32.gmra.mxu0 %v6171
  %v6955 = vpop.f32.mrf.mxu0
  %v6956 = vadd.f32 0.0, %v6955
  %6957 = vmatmul.f32.gmra.mxu0 %v6174
  %v6958 = vpop.f32.mrf.mxu0
  %v6959 = vadd.f32 0.0, %v6958
  %6960 = vmatmul.f32.gmra.mxu0 %v6177
  %v6961 = vpop.f32.mrf.mxu0
  %v6962 = vadd.f32 0.0, %v6961
  %6963 = vmatmul.f32.gmra.mxu0 %v6180
  %v6964 = vpop.f32.mrf.mxu0
  %v6965 = vadd.f32 0.0, %v6964
  %6966 = vmatmul.f32.gmra.mxu0 %v6183
  %v6967 = vpop.f32.mrf.mxu0
  %v6968 = vadd.f32 0.0, %v6967
  %6969 = vmatmul.f32.gmra.mxu0 %v6186
  %v6970 = vpop.f32.mrf.mxu0
  %v6971 = vadd.f32 0.0, %v6970
  %6972 = vmatmul.f32.gmra.mxu0 %v6189
  %v6973 = vpop.f32.mrf.mxu0
  %v6974 = vadd.f32 0.0, %v6973
  %6975 = vmatmul.f32.gmra.mxu0 %v6192
  %v6976 = vpop.f32.mrf.mxu0
  %v6977 = vadd.f32 0.0, %v6976
  %6978 = vmatmul.f32.gmra.mxu0 %v6195
  %v6979 = vpop.f32.mrf.mxu0
  %v6980 = vadd.f32 0.0, %v6979
  %6981 = vmatmul.f32.gmra.mxu0 %v6198
  %v6982 = vpop.f32.mrf.mxu0
  %v6983 = vadd.f32 0.0, %v6982
  %6984 = vmatmul.f32.gmra.mxu0 %v6201
  %v6985 = vpop.f32.mrf.mxu0
  %v6986 = vadd.f32 0.0, %v6985
  %6987 = vmatmul.f32.gmra.mxu0 %v6204
  %v6988 = vpop.f32.mrf.mxu0
  %v6989 = vadd.f32 0.0, %v6988
  %6990 = vmatmul.f32.gmra.mxu0 %v6207
  %v6991 = vpop.f32.mrf.mxu0
  %v6992 = vadd.f32 0.0, %v6991
  %6993 = vmatmul.f32.gmra.mxu0 %v6210
  %v6994 = vpop.f32.mrf.mxu0
  %v6995 = vadd.f32 0.0, %v6994
  %6996 = vmatmul.f32.gmra.mxu0 %v6213
  %v6997 = vpop.f32.mrf.mxu0
  %v6998 = vadd.f32 0.0, %v6997
  %6999 = vmatmul.f32.gmra.mxu0 %v6216
  %v7000 = vpop.f32.mrf.mxu0
  %v7001 = vadd.f32 0.0, %v7000
  %7002 = vmatmul.f32.gmra.mxu0 %v6219
  %v7003 = vpop.f32.mrf.mxu0
  %v7004 = vadd.f32 0.0, %v7003
  %7005 = vmatmul.f32.gmra.mxu0 %v6222
  %v7006 = vpop.f32.mrf.mxu0
  %v7007 = vadd.f32 0.0, %v7006
  %7008 = vmatmul.f32.gmra.mxu0 %v6225
  %v7009 = vpop.f32.mrf.mxu0
  %v7010 = vadd.f32 0.0, %v7009
  %7011 = vmatmul.f32.gmra.mxu0 %v6228
  %v7012 = vpop.f32.mrf.mxu0
  %v7013 = vadd.f32 0.0, %v7012
  %7014 = vmatmul.f32.gmra.mxu0 %v6231
  %v7015 = vpop.f32.mrf.mxu0
  %v7016 = vadd.f32 0.0, %v7015
  %7017 = vmatmul.f32.gmra.mxu0 %v6234
  %v7018 = vpop.f32.mrf.mxu0
  %v7019 = vadd.f32 0.0, %v7018
  %7020 = vmatmul.f32.gmra.mxu0 %v6237
  %v7021 = vpop.f32.mrf.mxu0
  %v7022 = vadd.f32 0.0, %v7021
  %7023 = vmatmul.f32.gmra.mxu0 %v6240
  %v7024 = vpop.f32.mrf.mxu0
  %v7025 = vadd.f32 0.0, %v7024
  %7026 = vmatmul.f32.gmra.mxu0 %v6243
  %v7027 = vpop.f32.mrf.mxu0
  %v7028 = vadd.f32 0.0, %v7027
  %7029 = vmatmul.f32.gmra.mxu0 %v6246
  %v7030 = vpop.f32.mrf.mxu0
  %v7031 = vadd.f32 0.0, %v7030
  %7032 = vmatmul.f32.gmra.mxu0 %v6249
  %v7033 = vpop.f32.mrf.mxu0
  %v7034 = vadd.f32 0.0, %v7033
  %7035 = vmatmul.f32.gmra.mxu0 %v6252
  %v7036 = vpop.f32.mrf.mxu0
  %v7037 = vadd.f32 0.0, %v7036
  %7038 = vmatmul.f32.gmra.mxu0 %v6255
  %v7039 = vpop.f32.mrf.mxu0
  %v7040 = vadd.f32 0.0, %v7039
  %7041 = vmatmul.f32.gmra.mxu0 %v6258
  %v7042 = vpop.f32.mrf.mxu0
  %v7043 = vadd.f32 0.0, %v7042
  %7044 = vmatmul.f32.gmra.mxu0 %v6261
  %v7045 = vpop.f32.mrf.mxu0
  %v7046 = vadd.f32 0.0, %v7045
  %7047 = vmatmul.f32.gmra.mxu0 %v6264
  %v7048 = vpop.f32.mrf.mxu0
  %v7049 = vadd.f32 0.0, %v7048
  %7050 = vmatmul.f32.gmra.mxu0 %v6267
  %v7051 = vpop.f32.mrf.mxu0
  %v7052 = vadd.f32 0.0, %v7051
  %7053 = vmatmul.f32.gmra.mxu0 %v6270
  %v7054 = vpop.f32.mrf.mxu0
  %v7055 = vadd.f32 0.0, %v7054
  %7056 = vmatmul.f32.gmra.mxu0 %v6273
  %v7057 = vpop.f32.mrf.mxu0
  %v7058 = vadd.f32 0.0, %v7057
  %7059 = vmatmul.f32.gmra.mxu0 %v6276
  %v7060 = vpop.f32.mrf.mxu0
  %v7061 = vadd.f32 0.0, %v7060
  %7062 = vmatmul.f32.gmra.mxu0 %v6279
  %v7063 = vpop.f32.mrf.mxu0
  %v7064 = vadd.f32 0.0, %v7063
  %7065 = vmatmul.f32.gmra.mxu0 %v6282
  %v7066 = vpop.f32.mrf.mxu0
  %v7067 = vadd.f32 0.0, %v7066
  %7068 = vmatmul.f32.gmra.mxu0 %v6285
  %v7069 = vpop.f32.mrf.mxu0
  %v7070 = vadd.f32 0.0, %v7069
  %7071 = vmatmul.f32.gmra.mxu0 %v6288
  %v7072 = vpop.f32.mrf.mxu0
  %v7073 = vadd.f32 0.0, %v7072
  %7074 = vmatmul.f32.gmra.mxu0 %v6291
  %v7075 = vpop.f32.mrf.mxu0
  %v7076 = vadd.f32 0.0, %v7075
  %7077 = vmatmul.f32.gmra.mxu0 %v6294
  %v7078 = vpop.f32.mrf.mxu0
  %v7079 = vadd.f32 0.0, %v7078
  %7080 = vmatmul.f32.gmra.mxu0 %v6297
  %v7081 = vpop.f32.mrf.mxu0
  %v7082 = vadd.f32 0.0, %v7081
  %7083 = vmatmul.f32.gmra.mxu0 %v6300
  %v7084 = vpop.f32.mrf.mxu0
  %v7085 = vadd.f32 0.0, %v7084
  %7086 = vmatmul.f32.gmra.mxu0 %v6303
  %v7087 = vpop.f32.mrf.mxu0
  %v7088 = vadd.f32 0.0, %v7087
  %7089 = vmatmul.f32.gmra.mxu0 %v6306
  %v7090 = vpop.f32.mrf.mxu0
  %v7091 = vadd.f32 0.0, %v7090
  %7092 = vmatmul.f32.gmra.mxu0 %v6309
  %v7093 = vpop.f32.mrf.mxu0
  %v7094 = vadd.f32 0.0, %v7093
  %7095 = vmatmul.f32.gmra.mxu0 %v6312
  %v7096 = vpop.f32.mrf.mxu0
  %v7097 = vadd.f32 0.0, %v7096
  %7098 = vmatmul.f32.gmra.mxu0 %v6315
  %v7099 = vpop.f32.mrf.mxu0
  %v7100 = vadd.f32 0.0, %v7099
  %7101 = vmatmul.f32.gmra.mxu0 %v6318
  %v7102 = vpop.f32.mrf.mxu0
  %v7103 = vadd.f32 0.0, %v7102
  %7104 = vmatmul.f32.gmra.mxu0 %v6321
  %v7105 = vpop.f32.mrf.mxu0
  %v7106 = vadd.f32 0.0, %v7105
  %7107 = vmatmul.f32.gmra.mxu0 %v6324
  %v7108 = vpop.f32.mrf.mxu0
  %v7109 = vadd.f32 0.0, %v7108
  %7110 = vmatmul.f32.gmra.mxu0 %v6327
  %v7111 = vpop.f32.mrf.mxu0
  %v7112 = vadd.f32 0.0, %v7111
  %7113 = vmatmul.f32.gmra.mxu0 %v6330
  %v7114 = vpop.f32.mrf.mxu0
  %v7115 = vadd.f32 0.0, %v7114
  %7116 = vmatmul.f32.gmra.mxu0 %v6333
  %v7117 = vpop.f32.mrf.mxu0
  %v7118 = vadd.f32 0.0, %v7117
  %7119 = vmatmul.f32.gmra.mxu0 %v6336
  %v7120 = vpop.f32.mrf.mxu0
  %v7121 = vadd.f32 0.0, %v7120
  %7122 = vmatmul.f32.gmra.mxu0 %v6339
  %v7123 = vpop.f32.mrf.mxu0
  %v7124 = vadd.f32 0.0, %v7123
  %7125 = vmatmul.f32.gmra.mxu0 %v6342
  %v7126 = vpop.f32.mrf.mxu0
  %v7127 = vadd.f32 0.0, %v7126
  %7128 = vmatmul.f32.gmra.mxu0 %v6345
  %v7129 = vpop.f32.mrf.mxu0
  %v7130 = vadd.f32 0.0, %v7129
  %7131 = vmatmul.f32.gmra.mxu0 %v6348
  %v7132 = vpop.f32.mrf.mxu0
  %v7133 = vadd.f32 0.0, %v7132
  %7134 = vmatmul.f32.gmra.mxu0 %v6351
  %v7135 = vpop.f32.mrf.mxu0
  %v7136 = vadd.f32 0.0, %v7135
  %7137 = vmatmul.f32.gmra.mxu0 %v6354
  %v7138 = vpop.f32.mrf.mxu0
  %v7139 = vadd.f32 0.0, %v7138
  %7140 = vmatmul.f32.gmra.mxu0 %v6357
  %v7141 = vpop.f32.mrf.mxu0
  %v7142 = vadd.f32 0.0, %v7141
  %7143 = vmatmul.f32.gmra.mxu0 %v6360
  %v7144 = vpop.f32.mrf.mxu0
  %v7145 = vadd.f32 0.0, %v7144
  %7146 = vmatmul.f32.gmra.mxu0 %v6363
  %v7147 = vpop.f32.mrf.mxu0
  %v7148 = vadd.f32 0.0, %v7147
  %7149 = vmatmul.f32.gmra.mxu0 %v6366
  %v7150 = vpop.f32.mrf.mxu0
  %v7151 = vadd.f32 0.0, %v7150
  %7152 = vmatmul.f32.gmra.mxu0 %v6369
  %v7153 = vpop.f32.mrf.mxu0
  %v7154 = vadd.f32 0.0, %v7153
  %7155 = vmatmul.f32.gmra.mxu0 %v6372
  %v7156 = vpop.f32.mrf.mxu0
  %v7157 = vadd.f32 0.0, %v7156
  %7158 = vmatmul.f32.gmra.mxu0 %v6375
  %v7159 = vpop.f32.mrf.mxu0
  %v7160 = vadd.f32 0.0, %v7159
  %7161 = vmatmul.f32.gmra.mxu0 %v6378
  %v7162 = vpop.f32.mrf.mxu0
  %v7163 = vadd.f32 0.0, %v7162
  %7164 = vmatmul.f32.gmra.mxu0 %v6381
  %v7165 = vpop.f32.mrf.mxu0
  %v7166 = vadd.f32 0.0, %v7165
  %7167 = vmatmul.f32.gmra.mxu0 %v6384
  %v7168 = vpop.f32.mrf.mxu0
  %v7169 = vadd.f32 0.0, %v7168
  %7170 = vmatmul.f32.gmra.mxu0 %v6387
  %v7171 = vpop.f32.mrf.mxu0
  %v7172 = vadd.f32 0.0, %v7171
  %7173 = vmatmul.f32.gmra.mxu0 %v6390
  %v7174 = vpop.f32.mrf.mxu0
  %v7175 = vadd.f32 0.0, %v7174
  %7176 = vmatmul.f32.gmra.mxu0 %v6393
  %v7177 = vpop.f32.mrf.mxu0
  %v7178 = vadd.f32 0.0, %v7177
  %7179 = vmatmul.f32.gmra.mxu0 %v6396
  %v7180 = vpop.f32.mrf.mxu0
  %v7181 = vadd.f32 0.0, %v7180
  %7182 = vmatmul.f32.gmra.mxu0 %v6399
  %v7183 = vpop.f32.mrf.mxu0
  %v7184 = vadd.f32 0.0, %v7183
  %7185 = vmatmul.f32.gmra.mxu0 %v6402
  %v7186 = vpop.f32.mrf.mxu0
  %v7187 = vadd.f32 0.0, %v7186
  %7188 = vmatmul.f32.gmra.mxu0 %v6405
  %v7189 = vpop.f32.mrf.mxu0
  %v7190 = vadd.f32 0.0, %v7189
  %7191 = vmatmul.f32.gmra.mxu0 %v6408
  %v7192 = vpop.f32.mrf.mxu0
  %v7193 = vadd.f32 0.0, %v7192
  %7194 = vmatmul.f32.gmra.mxu0 %v6411
  %v7195 = vpop.f32.mrf.mxu0
  %v7196 = vadd.f32 0.0, %v7195
  %7197 = vmatmul.f32.gmra.mxu0 %v6414
  %v7198 = vpop.f32.mrf.mxu0
  %v7199 = vadd.f32 0.0, %v7198
  %7200 = vmatmul.f32.gmra.mxu0 %v6417
  %v7201 = vpop.f32.mrf.mxu0
  %v7202 = vadd.f32 0.0, %v7201
  %7203 = vmatmul.f32.gmra.mxu0 %v6420
  %v7204 = vpop.f32.mrf.mxu0
  %v7205 = vadd.f32 0.0, %v7204
  %7206 = vmatmul.f32.gmra.mxu0 %v6423
  %v7207 = vpop.f32.mrf.mxu0
  %v7208 = vadd.f32 0.0, %v7207
  %7209 = vmatmul.f32.gmra.mxu0 %v6426
  %v7210 = vpop.f32.mrf.mxu0
  %v7211 = vadd.f32 0.0, %v7210
  %7212 = vmatmul.f32.gmra.mxu0 %v6429
  %v7213 = vpop.f32.mrf.mxu0
  %v7214 = vadd.f32 0.0, %v7213
  %7215 = vmatmul.f32.gmra.mxu0 %v6432
  %v7216 = vpop.f32.mrf.mxu0
  %v7217 = vadd.f32 0.0, %v7216
  %7218 = vmatmul.f32.gmra.mxu0 %v6435
  %v7219 = vpop.f32.mrf.mxu0
  %v7220 = vadd.f32 0.0, %v7219
  %7221 = vmatmul.f32.gmra.mxu0 %v6438
  %v7222 = vpop.f32.mrf.mxu0
  %v7223 = vadd.f32 0.0, %v7222
  %7224 = vmatmul.f32.gmra.mxu0 %v6441
  %v7225 = vpop.f32.mrf.mxu0
  %v7226 = vadd.f32 0.0, %v7225
  %7227 = vmatmul.f32.gmra.mxu0 %v6444
  %v7228 = vpop.f32.mrf.mxu0
  %v7229 = vadd.f32 0.0, %v7228
  %7230 = vmatmul.f32.gmra.mxu0 %v6447
  %v7231 = vpop.f32.mrf.mxu0
  %v7232 = vadd.f32 0.0, %v7231
  %7233 = vmatmul.f32.gmra.mxu0 %v6450
  %v7234 = vpop.f32.mrf.mxu0
  %v7235 = vadd.f32 0.0, %v7234
  %7236 = vmatmul.f32.gmra.mxu0 %v6453
  %v7237 = vpop.f32.mrf.mxu0
  %v7238 = vadd.f32 0.0, %v7237
  %7239 = vmatmul.f32.gmra.mxu0 %v6456
  %v7240 = vpop.f32.mrf.mxu0
  %v7241 = vadd.f32 0.0, %v7240
  %7242 = vmatmul.f32.gmra.mxu0 %v6459
  %v7243 = vpop.f32.mrf.mxu0
  %v7244 = vadd.f32 0.0, %v7243
  %7245 = vmatmul.f32.gmra.mxu0 %v6462
  %v7246 = vpop.f32.mrf.mxu0
  %v7247 = vadd.f32 0.0, %v7246
  %7248 = vmatmul.f32.gmra.mxu0 %v6465
  %v7249 = vpop.f32.mrf.mxu0
  %v7250 = vadd.f32 0.0, %v7249
  %7251 = vmatmul.f32.gmra.mxu0 %v6468
  %v7252 = vpop.f32.mrf.mxu0
  %v7253 = vadd.f32 0.0, %v7252
  %7254 = vmatmul.f32.gmra.mxu0 %v6471
  %v7255 = vpop.f32.mrf.mxu0
  %v7256 = vadd.f32 0.0, %v7255
  %7257 = vmatmul.f32.gmra.mxu0 %v6474
  %v7258 = vpop.f32.mrf.mxu0
  %v7259 = vadd.f32 0.0, %v7258
  %7260 = vmatmul.f32.gmra.mxu0 %v6477
  %v7261 = vpop.f32.mrf.mxu0
  %v7262 = vadd.f32 0.0, %v7261
  %7263 = vmatmul.f32.gmra.mxu0 %v6480
  %v7264 = vpop.f32.mrf.mxu0
  %v7265 = vadd.f32 0.0, %v7264
  %7266 = vmatmul.f32.gmra.mxu0 %v6483
  %v7267 = vpop.f32.mrf.mxu0
  %v7268 = vadd.f32 0.0, %v7267
  %7269 = vmatmul.f32.gmra.mxu0 %v6486
  %v7270 = vpop.f32.mrf.mxu0
  %v7271 = vadd.f32 0.0, %v7270
  %7272 = vmatmul.f32.gmra.mxu0 %v6489
  %v7273 = vpop.f32.mrf.mxu0
  %v7274 = vadd.f32 0.0, %v7273
  %7275 = vmatmul.f32.gmra.mxu0 %v6492
  %v7276 = vpop.f32.mrf.mxu0
  %v7277 = vadd.f32 0.0, %v7276
  %7278 = vmatmul.f32.gmra.mxu0 %v6495
  %v7279 = vpop.f32.mrf.mxu0
  %v7280 = vadd.f32 0.0, %v7279
  %7281 = vmatmul.f32.gmra.mxu0 %v6498
  %v7282 = vpop.f32.mrf.mxu0
  %v7283 = vadd.f32 0.0, %v7282
  %7284 = vmatmul.f32.gmra.mxu0 %v6501
  %v7285 = vpop.f32.mrf.mxu0
  %v7286 = vadd.f32 0.0, %v7285
  %7287 = vmatmul.f32.gmra.mxu0 %v6504
  %v7288 = vpop.f32.mrf.mxu0
  %v7289 = vadd.f32 0.0, %v7288
  %7290 = vmatmul.f32.gmra.mxu0 %v6507
  %v7291 = vpop.f32.mrf.mxu0
  %v7292 = vadd.f32 0.0, %v7291
  %7293 = vmatmul.f32.gmra.mxu0 %v6510
  %v7294 = vpop.f32.mrf.mxu0
  %v7295 = vadd.f32 0.0, %v7294
  %7296 = vmatmul.f32.gmra.mxu0 %v6513
  %v7297 = vpop.f32.mrf.mxu0
  %v7298 = vadd.f32 0.0, %v7297
  %7299 = vmatmul.f32.gmra.mxu0 %v6516
  %v7300 = vpop.f32.mrf.mxu0
  %v7301 = vadd.f32 0.0, %v7300
  %7302 = vmatmul.f32.gmra.mxu0 %v6519
  %v7303 = vpop.f32.mrf.mxu0
  %v7304 = vadd.f32 0.0, %v7303
  %7305 = vmatmul.f32.gmra.mxu0 %v6522
  %v7306 = vpop.f32.mrf.mxu0
  %v7307 = vadd.f32 0.0, %v7306
  %7308 = vmatmul.f32.gmra.mxu0 %v6525
  %v7309 = vpop.f32.mrf.mxu0
  %v7310 = vadd.f32 0.0, %v7309
  %7311 = vmatmul.f32.gmra.mxu0 %v6528
  %v7312 = vpop.f32.mrf.mxu0
  %v7313 = vadd.f32 0.0, %v7312
  %7314 = vmatmul.f32.gmra.mxu0 %v6531
  %v7315 = vpop.f32.mrf.mxu0
  %v7316 = vadd.f32 0.0, %v7315
  %7317 = vmatmul.f32.gmra.mxu0 %v6534
  %v7318 = vpop.f32.mrf.mxu0
  %v7319 = vadd.f32 0.0, %v7318
  %7320 = vmatmul.f32.gmra.mxu0 %v6537
  %v7321 = vpop.f32.mrf.mxu0
  %v7322 = vadd.f32 0.0, %v7321
  %7323 = vmatmul.f32.gmra.mxu0 %v6540
  %v7324 = vpop.f32.mrf.mxu0
  %v7325 = vadd.f32 0.0, %v7324
  %7326 = vmatmul.f32.gmra.mxu0 %v6543
  %v7327 = vpop.f32.mrf.mxu0
  %v7328 = vadd.f32 0.0, %v7327
  %7329 = vmatmul.f32.gmra.mxu0 %v6546
  %v7330 = vpop.f32.mrf.mxu0
  %v7331 = vadd.f32 0.0, %v7330
  %7332 = vmatmul.f32.gmra.mxu0 %v6549
  %v7333 = vpop.f32.mrf.mxu0
  %v7334 = vadd.f32 0.0, %v7333
  %7335 = vmatmul.f32.gmra.mxu0 %v6552
  %v7336 = vpop.f32.mrf.mxu0
  %v7337 = vadd.f32 0.0, %v7336
  %7338 = vmatmul.f32.gmra.mxu0 %v6555
  %v7339 = vpop.f32.mrf.mxu0
  %v7340 = vadd.f32 0.0, %v7339
  %7341 = vmatmul.f32.gmra.mxu0 %v6558
  %v7342 = vpop.f32.mrf.mxu0
  %v7343 = vadd.f32 0.0, %v7342
  %7344 = vmatmul.f32.gmra.mxu0 %v6561
  %v7345 = vpop.f32.mrf.mxu0
  %v7346 = vadd.f32 0.0, %v7345
  %7347 = vmatmul.f32.gmra.mxu0 %v6564
  %v7348 = vpop.f32.mrf.mxu0
  %v7349 = vadd.f32 0.0, %v7348
  %7350 = vmatmul.f32.gmra.mxu0 %v6567
  %v7351 = vpop.f32.mrf.mxu0
  %v7352 = vadd.f32 0.0, %v7351
  %7353 = vmatmul.f32.gmra.mxu0 %v6570
  %v7354 = vpop.f32.mrf.mxu0
  %v7355 = vadd.f32 0.0, %v7354
  %7356 = vmatmul.f32.gmra.mxu0 %v6573
  %v7357 = vpop.f32.mrf.mxu0
  %v7358 = vadd.f32 0.0, %v7357
  %7359 = vmatmul.f32.gmra.mxu0 %v6576
  %v7360 = vpop.f32.mrf.mxu0
  %v7361 = vadd.f32 0.0, %v7360
  %7362 = vmatmul.f32.gmra.mxu0 %v6579
  %v7363 = vpop.f32.mrf.mxu0
  %v7364 = vadd.f32 0.0, %v7363
  %7365 = vmatmul.f32.gmra.mxu0 %v6582
  %v7366 = vpop.f32.mrf.mxu0
  %v7367 = vadd.f32 0.0, %v7366
  %7368 = vmatmul.f32.gmra.mxu0 %v6585
  %v7369 = vpop.f32.mrf.mxu0
  %v7370 = vadd.f32 0.0, %v7369
  %7371 = vmatmul.f32.gmra.mxu0 %v6588
  %v7372 = vpop.f32.mrf.mxu0
  %v7373 = vadd.f32 0.0, %v7372
  %7374 = vmatmul.f32.gmra.mxu0 %v6591
  %v7375 = vpop.f32.mrf.mxu0
  %v7376 = vadd.f32 0.0, %v7375
  %7377 = vmatmul.f32.gmra.mxu0 %v6594
  %v7378 = vpop.f32.mrf.mxu0
  %v7379 = vadd.f32 0.0, %v7378
  %7380 = vmatmul.f32.gmra.mxu0 %v6597
  %v7381 = vpop.f32.mrf.mxu0
  %v7382 = vadd.f32 0.0, %v7381
  %7383 = vmatmul.f32.gmra.mxu0 %v6600
  %v7384 = vpop.f32.mrf.mxu0
  %v7385 = vadd.f32 0.0, %v7384
  %7386 = vmatmul.f32.gmra.mxu0 %v6603
  %v7387 = vpop.f32.mrf.mxu0
  %v7388 = vadd.f32 0.0, %v7387
  %7389 = vmatmul.f32.gmra.mxu0 %v6606
  %v7390 = vpop.f32.mrf.mxu0
  %v7391 = vadd.f32 0.0, %v7390
  %7392 = vmatmul.f32.gmra.mxu0 %v6609
  %v7393 = vpop.f32.mrf.mxu0
  %v7394 = vadd.f32 0.0, %v7393
  %7395 = vmatmul.f32.gmra.mxu0 %v6612
  %v7396 = vpop.f32.mrf.mxu0
  %v7397 = vadd.f32 0.0, %v7396
  %7398 = vmatmul.f32.gmra.mxu0 %v6615
  %v7399 = vpop.f32.mrf.mxu0
  %v7400 = vadd.f32 0.0, %v7399
  %7401 = vmatmul.f32.gmra.mxu0 %v6618
  %v7402 = vpop.f32.mrf.mxu0
  %v7403 = vadd.f32 0.0, %v7402
  %7404 = vmatmul.f32.gmra.mxu0 %v6621
  %v7405 = vpop.f32.mrf.mxu0
  %v7406 = vadd.f32 0.0, %v7405
  %7407 = vmatmul.f32.gmra.mxu0 %v6624
  %v7408 = vpop.f32.mrf.mxu0
  %v7409 = vadd.f32 0.0, %v7408
  %7410 = vmatmul.f32.gmra.mxu0 %v6627
  %v7411 = vpop.f32.mrf.mxu0
  %v7412 = vadd.f32 0.0, %v7411
  %7413 = vmatmul.f32.gmra.mxu0 %v6630
  %v7414 = vpop.f32.mrf.mxu0
  %v7415 = vadd.f32 0.0, %v7414
  %7416 = vmatmul.f32.gmra.mxu0 %v6633
  %v7417 = vpop.f32.mrf.mxu0
  %v7418 = vadd.f32 0.0, %v7417
  %7419 = vmatmul.f32.gmra.mxu0 %v6636
  %v7420 = vpop.f32.mrf.mxu0
  %v7421 = vadd.f32 0.0, %v7420
  %7422 = vmatmul.f32.gmra.mxu0 %v6639
  %v7423 = vpop.f32.mrf.mxu0
  %v7424 = vadd.f32 0.0, %v7423
  %7425 = vmatmul.f32.gmra.mxu0 %v6642
  %v7426 = vpop.f32.mrf.mxu0
  %v7427 = vadd.f32 0.0, %v7426
  %7428 = vmatmul.f32.gmra.mxu0 %v6645
  %v7429 = vpop.f32.mrf.mxu0
  %v7430 = vadd.f32 0.0, %v7429
  %7431 = vmatmul.f32.gmra.mxu0 %v6648
  %v7432 = vpop.f32.mrf.mxu0
  %v7433 = vadd.f32 0.0, %v7432
  %7434 = vmatmul.f32.gmra.mxu0 %v6651
  %v7435 = vpop.f32.mrf.mxu0
  %v7436 = vadd.f32 0.0, %v7435
  %7437 = vmatmul.f32.gmra.mxu0 %v6654
  %v7438 = vpop.f32.mrf.mxu0
  %v7439 = vadd.f32 0.0, %v7438
  %7440 = vmatmul.f32.gmra.mxu0 %v6657
  %v7441 = vpop.f32.mrf.mxu0
  %v7442 = vadd.f32 0.0, %v7441
  %7443 = vmatmul.f32.gmra.mxu0 %v6660
  %v7444 = vpop.f32.mrf.mxu0
  %v7445 = vadd.f32 0.0, %v7444
  %7446 = vmatmul.f32.gmra.mxu0 %v6663
  %v7447 = vpop.f32.mrf.mxu0
  %v7448 = vadd.f32 0.0, %v7447
  %7449 = vmatmul.f32.gmra.mxu0 %v6666
  %v7450 = vpop.f32.mrf.mxu0
  %v7451 = vadd.f32 0.0, %v7450
  %7452 = vmatmul.f32.gmra.mxu0 %v6669
  %v7453 = vpop.f32.mrf.mxu0
  %v7454 = vadd.f32 0.0, %v7453
  %7455 = vmatmul.f32.gmra.mxu0 %v6672
  %v7456 = vpop.f32.mrf.mxu0
  %v7457 = vadd.f32 0.0, %v7456
  %7458 = vmatmul.f32.gmra.mxu0 %v6675
  %v7459 = vpop.f32.mrf.mxu0
  %v7460 = vadd.f32 0.0, %v7459
  %7461 = vmatmul.f32.gmra.mxu0 %v6678
  %v7462 = vpop.f32.mrf.mxu0
  %v7463 = vadd.f32 0.0, %v7462
  %7464 = vmatmul.f32.gmra.mxu0 %v6681
  %v7465 = vpop.f32.mrf.mxu0
  %v7466 = vadd.f32 0.0, %v7465
  %7467 = vmatmul.f32.gmra.mxu0 %v6684
  %v7468 = vpop.f32.mrf.mxu0
  %v7469 = vadd.f32 0.0, %v7468
  %7470 = vmatmul.f32.gmra.mxu0 %v6687
  %v7471 = vpop.f32.mrf.mxu0
  %v7472 = vadd.f32 0.0, %v7471
  %7473 = vmatmul.f32.gmra.mxu0 %v6690
  %v7474 = vpop.f32.mrf.mxu0
  %v7475 = vadd.f32 0.0, %v7474
  %7476 = vmatmul.f32.gmra.mxu0 %v6693
  %v7477 = vpop.f32.mrf.mxu0
  %v7478 = vadd.f32 0.0, %v7477
  %7479 = vmatmul.f32.gmra.mxu0 %v6696
  %v7480 = vpop.f32.mrf.mxu0
  %v7481 = vadd.f32 0.0, %v7480
  %7482 = vmatmul.f32.gmra.mxu0 %v6699
  %v7483 = vpop.f32.mrf.mxu0
  %v7484 = vadd.f32 0.0, %v7483
  %7485 = vmatmul.f32.gmra.mxu0 %v6702
  %v7486 = vpop.f32.mrf.mxu0
  %v7487 = vadd.f32 0.0, %v7486
  %7488 = vmatmul.f32.gmra.mxu0 %v6705
  %v7489 = vpop.f32.mrf.mxu0
  %v7490 = vadd.f32 0.0, %v7489
  %7491 = vmatmul.f32.gmra.mxu0 %v6708
  %v7492 = vpop.f32.mrf.mxu0
  %v7493 = vadd.f32 0.0, %v7492
  %7494 = vmatmul.f32.gmra.mxu0 %v6711
  %v7495 = vpop.f32.mrf.mxu0
  %v7496 = vadd.f32 0.0, %v7495
  %7497 = vmatmul.f32.gmra.mxu0 %v6714
  %v7498 = vpop.f32.mrf.mxu0
  %v7499 = vadd.f32 0.0, %v7498
  %7500 = vmatmul.f32.gmra.mxu0 %v6717
  %v7501 = vpop.f32.mrf.mxu0
  %v7502 = vadd.f32 0.0, %v7501
  %7503 = vmatmul.f32.gmra.mxu0 %v6720
  %v7504 = vpop.f32.mrf.mxu0
  %v7505 = vadd.f32 0.0, %v7504
  %7506 = vmatmul.f32.gmra.mxu0 %v6723
  %v7507 = vpop.f32.mrf.mxu0
  %v7508 = vadd.f32 0.0, %v7507
  %7509 = vmatmul.f32.gmra.mxu0 %v6726
  %v7510 = vpop.f32.mrf.mxu0
  %v7511 = vadd.f32 0.0, %v7510
  %7512 = vmatmul.f32.gmra.mxu0 %v6729
  %v7513 = vpop.f32.mrf.mxu0
  %v7514 = vadd.f32 0.0, %v7513
  %7515 = vmatmul.f32.gmra.mxu0 %v6732
  %v7516 = vpop.f32.mrf.mxu0
  %v7517 = vadd.f32 0.0, %v7516
  %7518 = vmatmul.f32.gmra.mxu0 %v6735
  %v7519 = vpop.f32.mrf.mxu0
  %v7520 = vadd.f32 0.0, %v7519
  %7521 = vdwg.mxu0
  %v7522 = vadd.f32 %v5454, %v6755
  %v7523 = vadd.f32 %v5455, %v6758
  %v7524 = vadd.f32 %v5456, %v6761
  %v7525 = vadd.f32 %v5457, %v6764
  %v7526 = vadd.f32 %v5458, %v6767
  %v7527 = vadd.f32 %v5459, %v6770
  %v7528 = vadd.f32 %v5460, %v6773
  %v7529 = vadd.f32 %v5461, %v6776
  %v7530 = vadd.f32 %v5462, %v6779
  %v7531 = vadd.f32 %v5463, %v6782
  %v7532 = vadd.f32 %v5464, %v6785
  %v7533 = vadd.f32 %v5465, %v6788
  %v7534 = vadd.f32 %v5466, %v6791
  %v7535 = vadd.f32 %v5467, %v6794
  %v7536 = vadd.f32 %v5468, %v6797
  %v7537 = vadd.f32 %v5469, %v6800
  %v7538 = vadd.f32 %v5470, %v6803
  %v7539 = vadd.f32 %v5471, %v6806
  %v7540 = vadd.f32 %v5472, %v6809
  %v7541 = vadd.f32 %v5473, %v6812
  %v7542 = vadd.f32 %v5474, %v6815
  %v7543 = vadd.f32 %v5475, %v6818
  %v7544 = vadd.f32 %v5476, %v6821
  %v7545 = vadd.f32 %v5477, %v6824
  %v7546 = vadd.f32 %v5478, %v6827
  %v7547 = vadd.f32 %v5479, %v6830
  %v7548 = vadd.f32 %v5480, %v6833
  %v7549 = vadd.f32 %v5481, %v6836
  %v7550 = vadd.f32 %v5482, %v6839
  %v7551 = vadd.f32 %v5483, %v6842
  %v7552 = vadd.f32 %v5484, %v6845
  %v7553 = vadd.f32 %v5485, %v6848
  %v7554 = vadd.f32 %v5486, %v6851
  %v7555 = vadd.f32 %v5487, %v6854
  %v7556 = vadd.f32 %v5488, %v6857
  %v7557 = vadd.f32 %v5489, %v6860
  %v7558 = vadd.f32 %v5490, %v6863
  %v7559 = vadd.f32 %v5491, %v6866
  %v7560 = vadd.f32 %v5492, %v6869
  %v7561 = vadd.f32 %v5493, %v6872
  %v7562 = vadd.f32 %v5494, %v6875
  %v7563 = vadd.f32 %v5495, %v6878
  %v7564 = vadd.f32 %v5496, %v6881
  %v7565 = vadd.f32 %v5497, %v6884
  %v7566 = vadd.f32 %v5498, %v6887
  %v7567 = vadd.f32 %v5499, %v6890
  %v7568 = vadd.f32 %v5500, %v6893
  %v7569 = vadd.f32 %v5501, %v6896
  %v7570 = vadd.f32 %v5502, %v6899
  %v7571 = vadd.f32 %v5503, %v6902
  %v7572 = vadd.f32 %v5504, %v6905
  %v7573 = vadd.f32 %v5505, %v6908
  %v7574 = vadd.f32 %v5506, %v6911
  %v7575 = vadd.f32 %v5507, %v6914
  %v7576 = vadd.f32 %v5508, %v6917
  %v7577 = vadd.f32 %v5509, %v6920
  %v7578 = vadd.f32 %v5510, %v6923
  %v7579 = vadd.f32 %v5511, %v6926
  %v7580 = vadd.f32 %v5512, %v6929
  %v7581 = vadd.f32 %v5513, %v6932
  %v7582 = vadd.f32 %v5514, %v6935
  %v7583 = vadd.f32 %v5515, %v6938
  %v7584 = vadd.f32 %v5516, %v6941
  %v7585 = vadd.f32 %v5517, %v6944
  %v7586 = vadd.f32 %v5518, %v6947
  %v7587 = vadd.f32 %v5519, %v6950
  %v7588 = vadd.f32 %v5520, %v6953
  %v7589 = vadd.f32 %v5521, %v6956
  %v7590 = vadd.f32 %v5522, %v6959
  %v7591 = vadd.f32 %v5523, %v6962
  %v7592 = vadd.f32 %v5524, %v6965
  %v7593 = vadd.f32 %v5525, %v6968
  %v7594 = vadd.f32 %v5526, %v6971
  %v7595 = vadd.f32 %v5527, %v6974
  %v7596 = vadd.f32 %v5528, %v6977
  %v7597 = vadd.f32 %v5529, %v6980
  %v7598 = vadd.f32 %v5530, %v6983
  %v7599 = vadd.f32 %v5531, %v6986
  %v7600 = vadd.f32 %v5532, %v6989
  %v7601 = vadd.f32 %v5533, %v6992
  %v7602 = vadd.f32 %v5534, %v6995
  %v7603 = vadd.f32 %v5535, %v6998
  %v7604 = vadd.f32 %v5536, %v7001
  %v7605 = vadd.f32 %v5537, %v7004
  %v7606 = vadd.f32 %v5538, %v7007
  %v7607 = vadd.f32 %v5539, %v7010
  %v7608 = vadd.f32 %v5540, %v7013
  %v7609 = vadd.f32 %v5541, %v7016
  %v7610 = vadd.f32 %v5542, %v7019
  %v7611 = vadd.f32 %v5543, %v7022
  %v7612 = vadd.f32 %v5544, %v7025
  %v7613 = vadd.f32 %v5545, %v7028
  %v7614 = vadd.f32 %v5546, %v7031
  %v7615 = vadd.f32 %v5547, %v7034
  %v7616 = vadd.f32 %v5548, %v7037
  %v7617 = vadd.f32 %v5549, %v7040
  %v7618 = vadd.f32 %v5550, %v7043
  %v7619 = vadd.f32 %v5551, %v7046
  %v7620 = vadd.f32 %v5552, %v7049
  %v7621 = vadd.f32 %v5553, %v7052
  %v7622 = vadd.f32 %v5554, %v7055
  %v7623 = vadd.f32 %v5555, %v7058
  %v7624 = vadd.f32 %v5556, %v7061
  %v7625 = vadd.f32 %v5557, %v7064
  %v7626 = vadd.f32 %v5558, %v7067
  %v7627 = vadd.f32 %v5559, %v7070
  %v7628 = vadd.f32 %v5560, %v7073
  %v7629 = vadd.f32 %v5561, %v7076
  %v7630 = vadd.f32 %v5562, %v7079
  %v7631 = vadd.f32 %v5563, %v7082
  %v7632 = vadd.f32 %v5564, %v7085
  %v7633 = vadd.f32 %v5565, %v7088
  %v7634 = vadd.f32 %v5566, %v7091
  %v7635 = vadd.f32 %v5567, %v7094
  %v7636 = vadd.f32 %v5568, %v7097
  %v7637 = vadd.f32 %v5569, %v7100
  %v7638 = vadd.f32 %v5570, %v7103
  %v7639 = vadd.f32 %v5571, %v7106
  %v7640 = vadd.f32 %v5572, %v7109
  %v7641 = vadd.f32 %v5573, %v7112
  %v7642 = vadd.f32 %v5574, %v7115
  %v7643 = vadd.f32 %v5575, %v7118
  %v7644 = vadd.f32 %v5576, %v7121
  %v7645 = vadd.f32 %v5577, %v7124
  %v7646 = vadd.f32 %v5578, %v7127
  %v7647 = vadd.f32 %v5579, %v7130
  %v7648 = vadd.f32 %v5580, %v7133
  %v7649 = vadd.f32 %v5581, %v7136
  %v7650 = vadd.f32 %v5582, %v7139
  %v7651 = vadd.f32 %v5583, %v7142
  %v7652 = vadd.f32 %v5584, %v7145
  %v7653 = vadd.f32 %v5585, %v7148
  %v7654 = vadd.f32 %v5586, %v7151
  %v7655 = vadd.f32 %v5587, %v7154
  %v7656 = vadd.f32 %v5588, %v7157
  %v7657 = vadd.f32 %v5589, %v7160
  %v7658 = vadd.f32 %v5590, %v7163
  %v7659 = vadd.f32 %v5591, %v7166
  %v7660 = vadd.f32 %v5592, %v7169
  %v7661 = vadd.f32 %v5593, %v7172
  %v7662 = vadd.f32 %v5594, %v7175
  %v7663 = vadd.f32 %v5595, %v7178
  %v7664 = vadd.f32 %v5596, %v7181
  %v7665 = vadd.f32 %v5597, %v7184
  %v7666 = vadd.f32 %v5598, %v7187
  %v7667 = vadd.f32 %v5599, %v7190
  %v7668 = vadd.f32 %v5600, %v7193
  %v7669 = vadd.f32 %v5601, %v7196
  %v7670 = vadd.f32 %v5602, %v7199
  %v7671 = vadd.f32 %v5603, %v7202
  %v7672 = vadd.f32 %v5604, %v7205
  %v7673 = vadd.f32 %v5605, %v7208
  %v7674 = vadd.f32 %v5606, %v7211
  %v7675 = vadd.f32 %v5607, %v7214
  %v7676 = vadd.f32 %v5608, %v7217
  %v7677 = vadd.f32 %v5609, %v7220
  %v7678 = vadd.f32 %v5610, %v7223
  %v7679 = vadd.f32 %v5611, %v7226
  %v7680 = vadd.f32 %v5612, %v7229
  %v7681 = vadd.f32 %v5613, %v7232
  %v7682 = vadd.f32 %v5614, %v7235
  %v7683 = vadd.f32 %v5615, %v7238
  %v7684 = vadd.f32 %v5616, %v7241
  %v7685 = vadd.f32 %v5617, %v7244
  %v7686 = vadd.f32 %v5618, %v7247
  %v7687 = vadd.f32 %v5619, %v7250
  %v7688 = vadd.f32 %v5620, %v7253
  %v7689 = vadd.f32 %v5621, %v7256
  %v7690 = vadd.f32 %v5622, %v7259
  %v7691 = vadd.f32 %v5623, %v7262
  %v7692 = vadd.f32 %v5624, %v7265
  %v7693 = vadd.f32 %v5625, %v7268
  %v7694 = vadd.f32 %v5626, %v7271
  %v7695 = vadd.f32 %v5627, %v7274
  %v7696 = vadd.f32 %v5628, %v7277
  %v7697 = vadd.f32 %v5629, %v7280
  %v7698 = vadd.f32 %v5630, %v7283
  %v7699 = vadd.f32 %v5631, %v7286
  %v7700 = vadd.f32 %v5632, %v7289
  %v7701 = vadd.f32 %v5633, %v7292
  %v7702 = vadd.f32 %v5634, %v7295
  %v7703 = vadd.f32 %v5635, %v7298
  %v7704 = vadd.f32 %v5636, %v7301
  %v7705 = vadd.f32 %v5637, %v7304
  %v7706 = vadd.f32 %v5638, %v7307
  %v7707 = vadd.f32 %v5639, %v7310
  %v7708 = vadd.f32 %v5640, %v7313
  %v7709 = vadd.f32 %v5641, %v7316
  %v7710 = vadd.f32 %v5642, %v7319
  %v7711 = vadd.f32 %v5643, %v7322
  %v7712 = vadd.f32 %v5644, %v7325
  %v7713 = vadd.f32 %v5645, %v7328
  %v7714 = vadd.f32 %v5646, %v7331
  %v7715 = vadd.f32 %v5647, %v7334
  %v7716 = vadd.f32 %v5648, %v7337
  %v7717 = vadd.f32 %v5649, %v7340
  %v7718 = vadd.f32 %v5650, %v7343
  %v7719 = vadd.f32 %v5651, %v7346
  %v7720 = vadd.f32 %v5652, %v7349
  %v7721 = vadd.f32 %v5653, %v7352
  %v7722 = vadd.f32 %v5654, %v7355
  %v7723 = vadd.f32 %v5655, %v7358
  %v7724 = vadd.f32 %v5656, %v7361
  %v7725 = vadd.f32 %v5657, %v7364
  %v7726 = vadd.f32 %v5658, %v7367
  %v7727 = vadd.f32 %v5659, %v7370
  %v7728 = vadd.f32 %v5660, %v7373
  %v7729 = vadd.f32 %v5661, %v7376
  %v7730 = vadd.f32 %v5662, %v7379
  %v7731 = vadd.f32 %v5663, %v7382
  %v7732 = vadd.f32 %v5664, %v7385
  %v7733 = vadd.f32 %v5665, %v7388
  %v7734 = vadd.f32 %v5666, %v7391
  %v7735 = vadd.f32 %v5667, %v7394
  %v7736 = vadd.f32 %v5668, %v7397
  %v7737 = vadd.f32 %v5669, %v7400
  %v7738 = vadd.f32 %v5670, %v7403
  %v7739 = vadd.f32 %v5671, %v7406
  %v7740 = vadd.f32 %v5672, %v7409
  %v7741 = vadd.f32 %v5673, %v7412
  %v7742 = vadd.f32 %v5674, %v7415
  %v7743 = vadd.f32 %v5675, %v7418
  %v7744 = vadd.f32 %v5676, %v7421
  %v7745 = vadd.f32 %v5677, %v7424
  %v7746 = vadd.f32 %v5678, %v7427
  %v7747 = vadd.f32 %v5679, %v7430
  %v7748 = vadd.f32 %v5680, %v7433
  %v7749 = vadd.f32 %v5681, %v7436
  %v7750 = vadd.f32 %v5682, %v7439
  %v7751 = vadd.f32 %v5683, %v7442
  %v7752 = vadd.f32 %v5684, %v7445
  %v7753 = vadd.f32 %v5685, %v7448
  %v7754 = vadd.f32 %v5686, %v7451
  %v7755 = vadd.f32 %v5687, %v7454
  %v7756 = vadd.f32 %v5688, %v7457
  %v7757 = vadd.f32 %v5689, %v7460
  %v7758 = vadd.f32 %v5690, %v7463
  %v7759 = vadd.f32 %v5691, %v7466
  %v7760 = vadd.f32 %v5692, %v7469
  %v7761 = vadd.f32 %v5693, %v7472
  %v7762 = vadd.f32 %v5694, %v7475
  %v7763 = vadd.f32 %v5695, %v7478
  %v7764 = vadd.f32 %v5696, %v7481
  %v7765 = vadd.f32 %v5697, %v7484
  %v7766 = vadd.f32 %v5698, %v7487
  %v7767 = vadd.f32 %v5699, %v7490
  %v7768 = vadd.f32 %v5700, %v7493
  %v7769 = vadd.f32 %v5701, %v7496
  %v7770 = vadd.f32 %v5702, %v7499
  %v7771 = vadd.f32 %v5703, %v7502
  %v7772 = vadd.f32 %v5704, %v7505
  %v7773 = vadd.f32 %v5705, %v7508
  %v7774 = vadd.f32 %v5706, %v7511
  %v7775 = vadd.f32 %v5707, %v7514
  %v7776 = vadd.f32 %v5708, %v7517
  %v7777 = vadd.f32 %v5709, %v7520
  %v7778 = vld [vmem:[%s2] sm:$0x1]
  %v7780 = vperm.slane %v7778, 0
  %v7782 = vmul.f32 %v7522, %v7780
  %v7783 = vmul.f32 %v7523, %v7780
  %v7784 = vmul.f32 %v7524, %v7780
  %v7785 = vmul.f32 %v7525, %v7780
  %v7786 = vmul.f32 %v7526, %v7780
  %v7787 = vmul.f32 %v7527, %v7780
  %v7788 = vmul.f32 %v7528, %v7780
  %v7789 = vmul.f32 %v7529, %v7780
  %v7790 = vmul.f32 %v7530, %v7780
  %v7791 = vmul.f32 %v7531, %v7780
  %v7792 = vmul.f32 %v7532, %v7780
  %v7793 = vmul.f32 %v7533, %v7780
  %v7794 = vmul.f32 %v7534, %v7780
  %v7795 = vmul.f32 %v7535, %v7780
  %v7796 = vmul.f32 %v7536, %v7780
  %v7797 = vmul.f32 %v7537, %v7780
  %v7798 = vmul.f32 %v7538, %v7780
  %v7799 = vmul.f32 %v7539, %v7780
  %v7800 = vmul.f32 %v7540, %v7780
  %v7801 = vmul.f32 %v7541, %v7780
  %v7802 = vmul.f32 %v7542, %v7780
  %v7803 = vmul.f32 %v7543, %v7780
  %v7804 = vmul.f32 %v7544, %v7780
  %v7805 = vmul.f32 %v7545, %v7780
  %v7806 = vmul.f32 %v7546, %v7780
  %v7807 = vmul.f32 %v7547, %v7780
  %v7808 = vmul.f32 %v7548, %v7780
  %v7809 = vmul.f32 %v7549, %v7780
  %v7810 = vmul.f32 %v7550, %v7780
  %v7811 = vmul.f32 %v7551, %v7780
  %v7812 = vmul.f32 %v7552, %v7780
  %v7813 = vmul.f32 %v7553, %v7780
  %v7814 = vmul.f32 %v7554, %v7780
  %v7815 = vmul.f32 %v7555, %v7780
  %v7816 = vmul.f32 %v7556, %v7780
  %v7817 = vmul.f32 %v7557, %v7780
  %v7818 = vmul.f32 %v7558, %v7780
  %v7819 = vmul.f32 %v7559, %v7780
  %v7820 = vmul.f32 %v7560, %v7780
  %v7821 = vmul.f32 %v7561, %v7780
  %v7822 = vmul.f32 %v7562, %v7780
  %v7823 = vmul.f32 %v7563, %v7780
  %v7824 = vmul.f32 %v7564, %v7780
  %v7825 = vmul.f32 %v7565, %v7780
  %v7826 = vmul.f32 %v7566, %v7780
  %v7827 = vmul.f32 %v7567, %v7780
  %v7828 = vmul.f32 %v7568, %v7780
  %v7829 = vmul.f32 %v7569, %v7780
  %v7830 = vmul.f32 %v7570, %v7780
  %v7831 = vmul.f32 %v7571, %v7780
  %v7832 = vmul.f32 %v7572, %v7780
  %v7833 = vmul.f32 %v7573, %v7780
  %v7834 = vmul.f32 %v7574, %v7780
  %v7835 = vmul.f32 %v7575, %v7780
  %v7836 = vmul.f32 %v7576, %v7780
  %v7837 = vmul.f32 %v7577, %v7780
  %v7838 = vmul.f32 %v7578, %v7780
  %v7839 = vmul.f32 %v7579, %v7780
  %v7840 = vmul.f32 %v7580, %v7780
  %v7841 = vmul.f32 %v7581, %v7780
  %v7842 = vmul.f32 %v7582, %v7780
  %v7843 = vmul.f32 %v7583, %v7780
  %v7844 = vmul.f32 %v7584, %v7780
  %v7845 = vmul.f32 %v7585, %v7780
  %v7846 = vmul.f32 %v7586, %v7780
  %v7847 = vmul.f32 %v7587, %v7780
  %v7848 = vmul.f32 %v7588, %v7780
  %v7849 = vmul.f32 %v7589, %v7780
  %v7850 = vmul.f32 %v7590, %v7780
  %v7851 = vmul.f32 %v7591, %v7780
  %v7852 = vmul.f32 %v7592, %v7780
  %v7853 = vmul.f32 %v7593, %v7780
  %v7854 = vmul.f32 %v7594, %v7780
  %v7855 = vmul.f32 %v7595, %v7780
  %v7856 = vmul.f32 %v7596, %v7780
  %v7857 = vmul.f32 %v7597, %v7780
  %v7858 = vmul.f32 %v7598, %v7780
  %v7859 = vmul.f32 %v7599, %v7780
  %v7860 = vmul.f32 %v7600, %v7780
  %v7861 = vmul.f32 %v7601, %v7780
  %v7862 = vmul.f32 %v7602, %v7780
  %v7863 = vmul.f32 %v7603, %v7780
  %v7864 = vmul.f32 %v7604, %v7780
  %v7865 = vmul.f32 %v7605, %v7780
  %v7866 = vmul.f32 %v7606, %v7780
  %v7867 = vmul.f32 %v7607, %v7780
  %v7868 = vmul.f32 %v7608, %v7780
  %v7869 = vmul.f32 %v7609, %v7780
  %v7870 = vmul.f32 %v7610, %v7780
  %v7871 = vmul.f32 %v7611, %v7780
  %v7872 = vmul.f32 %v7612, %v7780
  %v7873 = vmul.f32 %v7613, %v7780
  %v7874 = vmul.f32 %v7614, %v7780
  %v7875 = vmul.f32 %v7615, %v7780
  %v7876 = vmul.f32 %v7616, %v7780
  %v7877 = vmul.f32 %v7617, %v7780
  %v7878 = vmul.f32 %v7618, %v7780
  %v7879 = vmul.f32 %v7619, %v7780
  %v7880 = vmul.f32 %v7620, %v7780
  %v7881 = vmul.f32 %v7621, %v7780
  %v7882 = vmul.f32 %v7622, %v7780
  %v7883 = vmul.f32 %v7623, %v7780
  %v7884 = vmul.f32 %v7624, %v7780
  %v7885 = vmul.f32 %v7625, %v7780
  %v7886 = vmul.f32 %v7626, %v7780
  %v7887 = vmul.f32 %v7627, %v7780
  %v7888 = vmul.f32 %v7628, %v7780
  %v7889 = vmul.f32 %v7629, %v7780
  %v7890 = vmul.f32 %v7630, %v7780
  %v7891 = vmul.f32 %v7631, %v7780
  %v7892 = vmul.f32 %v7632, %v7780
  %v7893 = vmul.f32 %v7633, %v7780
  %v7894 = vmul.f32 %v7634, %v7780
  %v7895 = vmul.f32 %v7635, %v7780
  %v7896 = vmul.f32 %v7636, %v7780
  %v7897 = vmul.f32 %v7637, %v7780
  %v7898 = vmul.f32 %v7638, %v7780
  %v7899 = vmul.f32 %v7639, %v7780
  %v7900 = vmul.f32 %v7640, %v7780
  %v7901 = vmul.f32 %v7641, %v7780
  %v7902 = vmul.f32 %v7642, %v7780
  %v7903 = vmul.f32 %v7643, %v7780
  %v7904 = vmul.f32 %v7644, %v7780
  %v7905 = vmul.f32 %v7645, %v7780
  %v7906 = vmul.f32 %v7646, %v7780
  %v7907 = vmul.f32 %v7647, %v7780
  %v7908 = vmul.f32 %v7648, %v7780
  %v7909 = vmul.f32 %v7649, %v7780
  %v7910 = vmul.f32 %v7650, %v7780
  %v7911 = vmul.f32 %v7651, %v7780
  %v7912 = vmul.f32 %v7652, %v7780
  %v7913 = vmul.f32 %v7653, %v7780
  %v7914 = vmul.f32 %v7654, %v7780
  %v7915 = vmul.f32 %v7655, %v7780
  %v7916 = vmul.f32 %v7656, %v7780
  %v7917 = vmul.f32 %v7657, %v7780
  %v7918 = vmul.f32 %v7658, %v7780
  %v7919 = vmul.f32 %v7659, %v7780
  %v7920 = vmul.f32 %v7660, %v7780
  %v7921 = vmul.f32 %v7661, %v7780
  %v7922 = vmul.f32 %v7662, %v7780
  %v7923 = vmul.f32 %v7663, %v7780
  %v7924 = vmul.f32 %v7664, %v7780
  %v7925 = vmul.f32 %v7665, %v7780
  %v7926 = vmul.f32 %v7666, %v7780
  %v7927 = vmul.f32 %v7667, %v7780
  %v7928 = vmul.f32 %v7668, %v7780
  %v7929 = vmul.f32 %v7669, %v7780
  %v7930 = vmul.f32 %v7670, %v7780
  %v7931 = vmul.f32 %v7671, %v7780
  %v7932 = vmul.f32 %v7672, %v7780
  %v7933 = vmul.f32 %v7673, %v7780
  %v7934 = vmul.f32 %v7674, %v7780
  %v7935 = vmul.f32 %v7675, %v7780
  %v7936 = vmul.f32 %v7676, %v7780
  %v7937 = vmul.f32 %v7677, %v7780
  %v7938 = vmul.f32 %v7678, %v7780
  %v7939 = vmul.f32 %v7679, %v7780
  %v7940 = vmul.f32 %v7680, %v7780
  %v7941 = vmul.f32 %v7681, %v7780
  %v7942 = vmul.f32 %v7682, %v7780
  %v7943 = vmul.f32 %v7683, %v7780
  %v7944 = vmul.f32 %v7684, %v7780
  %v7945 = vmul.f32 %v7685, %v7780
  %v7946 = vmul.f32 %v7686, %v7780
  %v7947 = vmul.f32 %v7687, %v7780
  %v7948 = vmul.f32 %v7688, %v7780
  %v7949 = vmul.f32 %v7689, %v7780
  %v7950 = vmul.f32 %v7690, %v7780
  %v7951 = vmul.f32 %v7691, %v7780
  %v7952 = vmul.f32 %v7692, %v7780
  %v7953 = vmul.f32 %v7693, %v7780
  %v7954 = vmul.f32 %v7694, %v7780
  %v7955 = vmul.f32 %v7695, %v7780
  %v7956 = vmul.f32 %v7696, %v7780
  %v7957 = vmul.f32 %v7697, %v7780
  %v7958 = vmul.f32 %v7698, %v7780
  %v7959 = vmul.f32 %v7699, %v7780
  %v7960 = vmul.f32 %v7700, %v7780
  %v7961 = vmul.f32 %v7701, %v7780
  %v7962 = vmul.f32 %v7702, %v7780
  %v7963 = vmul.f32 %v7703, %v7780
  %v7964 = vmul.f32 %v7704, %v7780
  %v7965 = vmul.f32 %v7705, %v7780
  %v7966 = vmul.f32 %v7706, %v7780
  %v7967 = vmul.f32 %v7707, %v7780
  %v7968 = vmul.f32 %v7708, %v7780
  %v7969 = vmul.f32 %v7709, %v7780
  %v7970 = vmul.f32 %v7710, %v7780
  %v7971 = vmul.f32 %v7711, %v7780
  %v7972 = vmul.f32 %v7712, %v7780
  %v7973 = vmul.f32 %v7713, %v7780
  %v7974 = vmul.f32 %v7714, %v7780
  %v7975 = vmul.f32 %v7715, %v7780
  %v7976 = vmul.f32 %v7716, %v7780
  %v7977 = vmul.f32 %v7717, %v7780
  %v7978 = vmul.f32 %v7718, %v7780
  %v7979 = vmul.f32 %v7719, %v7780
  %v7980 = vmul.f32 %v7720, %v7780
  %v7981 = vmul.f32 %v7721, %v7780
  %v7982 = vmul.f32 %v7722, %v7780
  %v7983 = vmul.f32 %v7723, %v7780
  %v7984 = vmul.f32 %v7724, %v7780
  %v7985 = vmul.f32 %v7725, %v7780
  %v7986 = vmul.f32 %v7726, %v7780
  %v7987 = vmul.f32 %v7727, %v7780
  %v7988 = vmul.f32 %v7728, %v7780
  %v7989 = vmul.f32 %v7729, %v7780
  %v7990 = vmul.f32 %v7730, %v7780
  %v7991 = vmul.f32 %v7731, %v7780
  %v7992 = vmul.f32 %v7732, %v7780
  %v7993 = vmul.f32 %v7733, %v7780
  %v7994 = vmul.f32 %v7734, %v7780
  %v7995 = vmul.f32 %v7735, %v7780
  %v7996 = vmul.f32 %v7736, %v7780
  %v7997 = vmul.f32 %v7737, %v7780
  %v7998 = vmul.f32 %v7738, %v7780
  %v7999 = vmul.f32 %v7739, %v7780
  %v8000 = vmul.f32 %v7740, %v7780
  %v8001 = vmul.f32 %v7741, %v7780
  %v8002 = vmul.f32 %v7742, %v7780
  %v8003 = vmul.f32 %v7743, %v7780
  %v8004 = vmul.f32 %v7744, %v7780
  %v8005 = vmul.f32 %v7745, %v7780
  %v8006 = vmul.f32 %v7746, %v7780
  %v8007 = vmul.f32 %v7747, %v7780
  %v8008 = vmul.f32 %v7748, %v7780
  %v8009 = vmul.f32 %v7749, %v7780
  %v8010 = vmul.f32 %v7750, %v7780
  %v8011 = vmul.f32 %v7751, %v7780
  %v8012 = vmul.f32 %v7752, %v7780
  %v8013 = vmul.f32 %v7753, %v7780
  %v8014 = vmul.f32 %v7754, %v7780
  %v8015 = vmul.f32 %v7755, %v7780
  %v8016 = vmul.f32 %v7756, %v7780
  %v8017 = vmul.f32 %v7757, %v7780
  %v8018 = vmul.f32 %v7758, %v7780
  %v8019 = vmul.f32 %v7759, %v7780
  %v8020 = vmul.f32 %v7760, %v7780
  %v8021 = vmul.f32 %v7761, %v7780
  %v8022 = vmul.f32 %v7762, %v7780
  %v8023 = vmul.f32 %v7763, %v7780
  %v8024 = vmul.f32 %v7764, %v7780
  %v8025 = vmul.f32 %v7765, %v7780
  %v8026 = vmul.f32 %v7766, %v7780
  %v8027 = vmul.f32 %v7767, %v7780
  %v8028 = vmul.f32 %v7768, %v7780
  %v8029 = vmul.f32 %v7769, %v7780
  %v8030 = vmul.f32 %v7770, %v7780
  %v8031 = vmul.f32 %v7771, %v7780
  %v8032 = vmul.f32 %v7772, %v7780
  %v8033 = vmul.f32 %v7773, %v7780
  %v8034 = vmul.f32 %v7774, %v7780
  %v8035 = vmul.f32 %v7775, %v7780
  %v8036 = vmul.f32 %v7776, %v7780
  %v8037 = vmul.f32 %v7777, %v7780
  %v8038 = vld [vmem:[%s3] sm:$0x1]
  %v8040 = vperm.slane %v8038, 0
  %v8042 = vadd.f32 %v7782, %v8040
  %v8043 = vadd.f32 %v7783, %v8040
  %v8044 = vadd.f32 %v7784, %v8040
  %v8045 = vadd.f32 %v7785, %v8040
  %v8046 = vadd.f32 %v7786, %v8040
  %v8047 = vadd.f32 %v7787, %v8040
  %v8048 = vadd.f32 %v7788, %v8040
  %v8049 = vadd.f32 %v7789, %v8040
  %v8050 = vadd.f32 %v7790, %v8040
  %v8051 = vadd.f32 %v7791, %v8040
  %v8052 = vadd.f32 %v7792, %v8040
  %v8053 = vadd.f32 %v7793, %v8040
  %v8054 = vadd.f32 %v7794, %v8040
  %v8055 = vadd.f32 %v7795, %v8040
  %v8056 = vadd.f32 %v7796, %v8040
  %v8057 = vadd.f32 %v7797, %v8040
  %v8058 = vadd.f32 %v7798, %v8040
  %v8059 = vadd.f32 %v7799, %v8040
  %v8060 = vadd.f32 %v7800, %v8040
  %v8061 = vadd.f32 %v7801, %v8040
  %v8062 = vadd.f32 %v7802, %v8040
  %v8063 = vadd.f32 %v7803, %v8040
  %v8064 = vadd.f32 %v7804, %v8040
  %v8065 = vadd.f32 %v7805, %v8040
  %v8066 = vadd.f32 %v7806, %v8040
  %v8067 = vadd.f32 %v7807, %v8040
  %v8068 = vadd.f32 %v7808, %v8040
  %v8069 = vadd.f32 %v7809, %v8040
  %v8070 = vadd.f32 %v7810, %v8040
  %v8071 = vadd.f32 %v7811, %v8040
  %v8072 = vadd.f32 %v7812, %v8040
  %v8073 = vadd.f32 %v7813, %v8040
  %v8074 = vadd.f32 %v7814, %v8040
  %v8075 = vadd.f32 %v7815, %v8040
  %v8076 = vadd.f32 %v7816, %v8040
  %v8077 = vadd.f32 %v7817, %v8040
  %v8078 = vadd.f32 %v7818, %v8040
  %v8079 = vadd.f32 %v7819, %v8040
  %v8080 = vadd.f32 %v7820, %v8040
  %v8081 = vadd.f32 %v7821, %v8040
  %v8082 = vadd.f32 %v7822, %v8040
  %v8083 = vadd.f32 %v7823, %v8040
  %v8084 = vadd.f32 %v7824, %v8040
  %v8085 = vadd.f32 %v7825, %v8040
  %v8086 = vadd.f32 %v7826, %v8040
  %v8087 = vadd.f32 %v7827, %v8040
  %v8088 = vadd.f32 %v7828, %v8040
  %v8089 = vadd.f32 %v7829, %v8040
  %v8090 = vadd.f32 %v7830, %v8040
  %v8091 = vadd.f32 %v7831, %v8040
  %v8092 = vadd.f32 %v7832, %v8040
  %v8093 = vadd.f32 %v7833, %v8040
  %v8094 = vadd.f32 %v7834, %v8040
  %v8095 = vadd.f32 %v7835, %v8040
  %v8096 = vadd.f32 %v7836, %v8040
  %v8097 = vadd.f32 %v7837, %v8040
  %v8098 = vadd.f32 %v7838, %v8040
  %v8099 = vadd.f32 %v7839, %v8040
  %v8100 = vadd.f32 %v7840, %v8040
  %v8101 = vadd.f32 %v7841, %v8040
  %v8102 = vadd.f32 %v7842, %v8040
  %v8103 = vadd.f32 %v7843, %v8040
  %v8104 = vadd.f32 %v7844, %v8040
  %v8105 = vadd.f32 %v7845, %v8040
  %v8106 = vadd.f32 %v7846, %v8040
  %v8107 = vadd.f32 %v7847, %v8040
  %v8108 = vadd.f32 %v7848, %v8040
  %v8109 = vadd.f32 %v7849, %v8040
  %v8110 = vadd.f32 %v7850, %v8040
  %v8111 = vadd.f32 %v7851, %v8040
  %v8112 = vadd.f32 %v7852, %v8040
  %v8113 = vadd.f32 %v7853, %v8040
  %v8114 = vadd.f32 %v7854, %v8040
  %v8115 = vadd.f32 %v7855, %v8040
  %v8116 = vadd.f32 %v7856, %v8040
  %v8117 = vadd.f32 %v7857, %v8040
  %v8118 = vadd.f32 %v7858, %v8040
  %v8119 = vadd.f32 %v7859, %v8040
  %v8120 = vadd.f32 %v7860, %v8040
  %v8121 = vadd.f32 %v7861, %v8040
  %v8122 = vadd.f32 %v7862, %v8040
  %v8123 = vadd.f32 %v7863, %v8040
  %v8124 = vadd.f32 %v7864, %v8040
  %v8125 = vadd.f32 %v7865, %v8040
  %v8126 = vadd.f32 %v7866, %v8040
  %v8127 = vadd.f32 %v7867, %v8040
  %v8128 = vadd.f32 %v7868, %v8040
  %v8129 = vadd.f32 %v7869, %v8040
  %v8130 = vadd.f32 %v7870, %v8040
  %v8131 = vadd.f32 %v7871, %v8040
  %v8132 = vadd.f32 %v7872, %v8040
  %v8133 = vadd.f32 %v7873, %v8040
  %v8134 = vadd.f32 %v7874, %v8040
  %v8135 = vadd.f32 %v7875, %v8040
  %v8136 = vadd.f32 %v7876, %v8040
  %v8137 = vadd.f32 %v7877, %v8040
  %v8138 = vadd.f32 %v7878, %v8040
  %v8139 = vadd.f32 %v7879, %v8040
  %v8140 = vadd.f32 %v7880, %v8040
  %v8141 = vadd.f32 %v7881, %v8040
  %v8142 = vadd.f32 %v7882, %v8040
  %v8143 = vadd.f32 %v7883, %v8040
  %v8144 = vadd.f32 %v7884, %v8040
  %v8145 = vadd.f32 %v7885, %v8040
  %v8146 = vadd.f32 %v7886, %v8040
  %v8147 = vadd.f32 %v7887, %v8040
  %v8148 = vadd.f32 %v7888, %v8040
  %v8149 = vadd.f32 %v7889, %v8040
  %v8150 = vadd.f32 %v7890, %v8040
  %v8151 = vadd.f32 %v7891, %v8040
  %v8152 = vadd.f32 %v7892, %v8040
  %v8153 = vadd.f32 %v7893, %v8040
  %v8154 = vadd.f32 %v7894, %v8040
  %v8155 = vadd.f32 %v7895, %v8040
  %v8156 = vadd.f32 %v7896, %v8040
  %v8157 = vadd.f32 %v7897, %v8040
  %v8158 = vadd.f32 %v7898, %v8040
  %v8159 = vadd.f32 %v7899, %v8040
  %v8160 = vadd.f32 %v7900, %v8040
  %v8161 = vadd.f32 %v7901, %v8040
  %v8162 = vadd.f32 %v7902, %v8040
  %v8163 = vadd.f32 %v7903, %v8040
  %v8164 = vadd.f32 %v7904, %v8040
  %v8165 = vadd.f32 %v7905, %v8040
  %v8166 = vadd.f32 %v7906, %v8040
  %v8167 = vadd.f32 %v7907, %v8040
  %v8168 = vadd.f32 %v7908, %v8040
  %v8169 = vadd.f32 %v7909, %v8040
  %v8170 = vadd.f32 %v7910, %v8040
  %v8171 = vadd.f32 %v7911, %v8040
  %v8172 = vadd.f32 %v7912, %v8040
  %v8173 = vadd.f32 %v7913, %v8040
  %v8174 = vadd.f32 %v7914, %v8040
  %v8175 = vadd.f32 %v7915, %v8040
  %v8176 = vadd.f32 %v7916, %v8040
  %v8177 = vadd.f32 %v7917, %v8040
  %v8178 = vadd.f32 %v7918, %v8040
  %v8179 = vadd.f32 %v7919, %v8040
  %v8180 = vadd.f32 %v7920, %v8040
  %v8181 = vadd.f32 %v7921, %v8040
  %v8182 = vadd.f32 %v7922, %v8040
  %v8183 = vadd.f32 %v7923, %v8040
  %v8184 = vadd.f32 %v7924, %v8040
  %v8185 = vadd.f32 %v7925, %v8040
  %v8186 = vadd.f32 %v7926, %v8040
  %v8187 = vadd.f32 %v7927, %v8040
  %v8188 = vadd.f32 %v7928, %v8040
  %v8189 = vadd.f32 %v7929, %v8040
  %v8190 = vadd.f32 %v7930, %v8040
  %v8191 = vadd.f32 %v7931, %v8040
  %v8192 = vadd.f32 %v7932, %v8040
  %v8193 = vadd.f32 %v7933, %v8040
  %v8194 = vadd.f32 %v7934, %v8040
  %v8195 = vadd.f32 %v7935, %v8040
  %v8196 = vadd.f32 %v7936, %v8040
  %v8197 = vadd.f32 %v7937, %v8040
  %v8198 = vadd.f32 %v7938, %v8040
  %v8199 = vadd.f32 %v7939, %v8040
  %v8200 = vadd.f32 %v7940, %v8040
  %v8201 = vadd.f32 %v7941, %v8040
  %v8202 = vadd.f32 %v7942, %v8040
  %v8203 = vadd.f32 %v7943, %v8040
  %v8204 = vadd.f32 %v7944, %v8040
  %v8205 = vadd.f32 %v7945, %v8040
  %v8206 = vadd.f32 %v7946, %v8040
  %v8207 = vadd.f32 %v7947, %v8040
  %v8208 = vadd.f32 %v7948, %v8040
  %v8209 = vadd.f32 %v7949, %v8040
  %v8210 = vadd.f32 %v7950, %v8040
  %v8211 = vadd.f32 %v7951, %v8040
  %v8212 = vadd.f32 %v7952, %v8040
  %v8213 = vadd.f32 %v7953, %v8040
  %v8214 = vadd.f32 %v7954, %v8040
  %v8215 = vadd.f32 %v7955, %v8040
  %v8216 = vadd.f32 %v7956, %v8040
  %v8217 = vadd.f32 %v7957, %v8040
  %v8218 = vadd.f32 %v7958, %v8040
  %v8219 = vadd.f32 %v7959, %v8040
  %v8220 = vadd.f32 %v7960, %v8040
  %v8221 = vadd.f32 %v7961, %v8040
  %v8222 = vadd.f32 %v7962, %v8040
  %v8223 = vadd.f32 %v7963, %v8040
  %v8224 = vadd.f32 %v7964, %v8040
  %v8225 = vadd.f32 %v7965, %v8040
  %v8226 = vadd.f32 %v7966, %v8040
  %v8227 = vadd.f32 %v7967, %v8040
  %v8228 = vadd.f32 %v7968, %v8040
  %v8229 = vadd.f32 %v7969, %v8040
  %v8230 = vadd.f32 %v7970, %v8040
  %v8231 = vadd.f32 %v7971, %v8040
  %v8232 = vadd.f32 %v7972, %v8040
  %v8233 = vadd.f32 %v7973, %v8040
  %v8234 = vadd.f32 %v7974, %v8040
  %v8235 = vadd.f32 %v7975, %v8040
  %v8236 = vadd.f32 %v7976, %v8040
  %v8237 = vadd.f32 %v7977, %v8040
  %v8238 = vadd.f32 %v7978, %v8040
  %v8239 = vadd.f32 %v7979, %v8040
  %v8240 = vadd.f32 %v7980, %v8040
  %v8241 = vadd.f32 %v7981, %v8040
  %v8242 = vadd.f32 %v7982, %v8040
  %v8243 = vadd.f32 %v7983, %v8040
  %v8244 = vadd.f32 %v7984, %v8040
  %v8245 = vadd.f32 %v7985, %v8040
  %v8246 = vadd.f32 %v7986, %v8040
  %v8247 = vadd.f32 %v7987, %v8040
  %v8248 = vadd.f32 %v7988, %v8040
  %v8249 = vadd.f32 %v7989, %v8040
  %v8250 = vadd.f32 %v7990, %v8040
  %v8251 = vadd.f32 %v7991, %v8040
  %v8252 = vadd.f32 %v7992, %v8040
  %v8253 = vadd.f32 %v7993, %v8040
  %v8254 = vadd.f32 %v7994, %v8040
  %v8255 = vadd.f32 %v7995, %v8040
  %v8256 = vadd.f32 %v7996, %v8040
  %v8257 = vadd.f32 %v7997, %v8040
  %v8258 = vadd.f32 %v7998, %v8040
  %v8259 = vadd.f32 %v7999, %v8040
  %v8260 = vadd.f32 %v8000, %v8040
  %v8261 = vadd.f32 %v8001, %v8040
  %v8262 = vadd.f32 %v8002, %v8040
  %v8263 = vadd.f32 %v8003, %v8040
  %v8264 = vadd.f32 %v8004, %v8040
  %v8265 = vadd.f32 %v8005, %v8040
  %v8266 = vadd.f32 %v8006, %v8040
  %v8267 = vadd.f32 %v8007, %v8040
  %v8268 = vadd.f32 %v8008, %v8040
  %v8269 = vadd.f32 %v8009, %v8040
  %v8270 = vadd.f32 %v8010, %v8040
  %v8271 = vadd.f32 %v8011, %v8040
  %v8272 = vadd.f32 %v8012, %v8040
  %v8273 = vadd.f32 %v8013, %v8040
  %v8274 = vadd.f32 %v8014, %v8040
  %v8275 = vadd.f32 %v8015, %v8040
  %v8276 = vadd.f32 %v8016, %v8040
  %v8277 = vadd.f32 %v8017, %v8040
  %v8278 = vadd.f32 %v8018, %v8040
  %v8279 = vadd.f32 %v8019, %v8040
  %v8280 = vadd.f32 %v8020, %v8040
  %v8281 = vadd.f32 %v8021, %v8040
  %v8282 = vadd.f32 %v8022, %v8040
  %v8283 = vadd.f32 %v8023, %v8040
  %v8284 = vadd.f32 %v8024, %v8040
  %v8285 = vadd.f32 %v8025, %v8040
  %v8286 = vadd.f32 %v8026, %v8040
  %v8287 = vadd.f32 %v8027, %v8040
  %v8288 = vadd.f32 %v8028, %v8040
  %v8289 = vadd.f32 %v8029, %v8040
  %v8290 = vadd.f32 %v8030, %v8040
  %v8291 = vadd.f32 %v8031, %v8040
  %v8292 = vadd.f32 %v8032, %v8040
  %v8293 = vadd.f32 %v8033, %v8040
  %v8294 = vadd.f32 %v8034, %v8040
  %v8295 = vadd.f32 %v8035, %v8040
  %v8296 = vadd.f32 %v8036, %v8040
  %v8297 = vadd.f32 %v8037, %v8040
  %v8298 = vmul.f32 %v8042, 0.2
  %v8299 = vmul.f32 %v8043, 0.2
  %v8300 = vmul.f32 %v8044, 0.2
  %v8301 = vmul.f32 %v8045, 0.2
  %v8302 = vmul.f32 %v8046, 0.2
  %v8303 = vmul.f32 %v8047, 0.2
  %v8304 = vmul.f32 %v8048, 0.2
  %v8305 = vmul.f32 %v8049, 0.2
  %v8306 = vmul.f32 %v8050, 0.2
  %v8307 = vmul.f32 %v8051, 0.2
  %v8308 = vmul.f32 %v8052, 0.2
  %v8309 = vmul.f32 %v8053, 0.2
  %v8310 = vmul.f32 %v8054, 0.2
  %v8311 = vmul.f32 %v8055, 0.2
  %v8312 = vmul.f32 %v8056, 0.2
  %v8313 = vmul.f32 %v8057, 0.2
  %v8314 = vmul.f32 %v8058, 0.2
  %v8315 = vmul.f32 %v8059, 0.2
  %v8316 = vmul.f32 %v8060, 0.2
  %v8317 = vmul.f32 %v8061, 0.2
  %v8318 = vmul.f32 %v8062, 0.2
  %v8319 = vmul.f32 %v8063, 0.2
  %v8320 = vmul.f32 %v8064, 0.2
  %v8321 = vmul.f32 %v8065, 0.2
  %v8322 = vmul.f32 %v8066, 0.2
  %v8323 = vmul.f32 %v8067, 0.2
  %v8324 = vmul.f32 %v8068, 0.2
  %v8325 = vmul.f32 %v8069, 0.2
  %v8326 = vmul.f32 %v8070, 0.2
  %v8327 = vmul.f32 %v8071, 0.2
  %v8328 = vmul.f32 %v8072, 0.2
  %v8329 = vmul.f32 %v8073, 0.2
  %v8330 = vmul.f32 %v8074, 0.2
  %v8331 = vmul.f32 %v8075, 0.2
  %v8332 = vmul.f32 %v8076, 0.2
  %v8333 = vmul.f32 %v8077, 0.2
  %v8334 = vmul.f32 %v8078, 0.2
  %v8335 = vmul.f32 %v8079, 0.2
  %v8336 = vmul.f32 %v8080, 0.2
  %v8337 = vmul.f32 %v8081, 0.2
  %v8338 = vmul.f32 %v8082, 0.2
  %v8339 = vmul.f32 %v8083, 0.2
  %v8340 = vmul.f32 %v8084, 0.2
  %v8341 = vmul.f32 %v8085, 0.2
  %v8342 = vmul.f32 %v8086, 0.2
  %v8343 = vmul.f32 %v8087, 0.2
  %v8344 = vmul.f32 %v8088, 0.2
  %v8345 = vmul.f32 %v8089, 0.2
  %v8346 = vmul.f32 %v8090, 0.2
  %v8347 = vmul.f32 %v8091, 0.2
  %v8348 = vmul.f32 %v8092, 0.2
  %v8349 = vmul.f32 %v8093, 0.2
  %v8350 = vmul.f32 %v8094, 0.2
  %v8351 = vmul.f32 %v8095, 0.2
  %v8352 = vmul.f32 %v8096, 0.2
  %v8353 = vmul.f32 %v8097, 0.2
  %v8354 = vmul.f32 %v8098, 0.2
  %v8355 = vmul.f32 %v8099, 0.2
  %v8356 = vmul.f32 %v8100, 0.2
  %v8357 = vmul.f32 %v8101, 0.2
  %v8358 = vmul.f32 %v8102, 0.2
  %v8359 = vmul.f32 %v8103, 0.2
  %v8360 = vmul.f32 %v8104, 0.2
  %v8361 = vmul.f32 %v8105, 0.2
  %v8362 = vmul.f32 %v8106, 0.2
  %v8363 = vmul.f32 %v8107, 0.2
  %v8364 = vmul.f32 %v8108, 0.2
  %v8365 = vmul.f32 %v8109, 0.2
  %v8366 = vmul.f32 %v8110, 0.2
  %v8367 = vmul.f32 %v8111, 0.2
  %v8368 = vmul.f32 %v8112, 0.2
  %v8369 = vmul.f32 %v8113, 0.2
  %v8370 = vmul.f32 %v8114, 0.2
  %v8371 = vmul.f32 %v8115, 0.2
  %v8372 = vmul.f32 %v8116, 0.2
  %v8373 = vmul.f32 %v8117, 0.2
  %v8374 = vmul.f32 %v8118, 0.2
  %v8375 = vmul.f32 %v8119, 0.2
  %v8376 = vmul.f32 %v8120, 0.2
  %v8377 = vmul.f32 %v8121, 0.2
  %v8378 = vmul.f32 %v8122, 0.2
  %v8379 = vmul.f32 %v8123, 0.2
  %v8380 = vmul.f32 %v8124, 0.2
  %v8381 = vmul.f32 %v8125, 0.2
  %v8382 = vmul.f32 %v8126, 0.2
  %v8383 = vmul.f32 %v8127, 0.2
  %v8384 = vmul.f32 %v8128, 0.2
  %v8385 = vmul.f32 %v8129, 0.2
  %v8386 = vmul.f32 %v8130, 0.2
  %v8387 = vmul.f32 %v8131, 0.2
  %v8388 = vmul.f32 %v8132, 0.2
  %v8389 = vmul.f32 %v8133, 0.2
  %v8390 = vmul.f32 %v8134, 0.2
  %v8391 = vmul.f32 %v8135, 0.2
  %v8392 = vmul.f32 %v8136, 0.2
  %v8393 = vmul.f32 %v8137, 0.2
  %v8394 = vmul.f32 %v8138, 0.2
  %v8395 = vmul.f32 %v8139, 0.2
  %v8396 = vmul.f32 %v8140, 0.2
  %v8397 = vmul.f32 %v8141, 0.2
  %v8398 = vmul.f32 %v8142, 0.2
  %v8399 = vmul.f32 %v8143, 0.2
  %v8400 = vmul.f32 %v8144, 0.2
  %v8401 = vmul.f32 %v8145, 0.2
  %v8402 = vmul.f32 %v8146, 0.2
  %v8403 = vmul.f32 %v8147, 0.2
  %v8404 = vmul.f32 %v8148, 0.2
  %v8405 = vmul.f32 %v8149, 0.2
  %v8406 = vmul.f32 %v8150, 0.2
  %v8407 = vmul.f32 %v8151, 0.2
  %v8408 = vmul.f32 %v8152, 0.2
  %v8409 = vmul.f32 %v8153, 0.2
  %v8410 = vmul.f32 %v8154, 0.2
  %v8411 = vmul.f32 %v8155, 0.2
  %v8412 = vmul.f32 %v8156, 0.2
  %v8413 = vmul.f32 %v8157, 0.2
  %v8414 = vmul.f32 %v8158, 0.2
  %v8415 = vmul.f32 %v8159, 0.2
  %v8416 = vmul.f32 %v8160, 0.2
  %v8417 = vmul.f32 %v8161, 0.2
  %v8418 = vmul.f32 %v8162, 0.2
  %v8419 = vmul.f32 %v8163, 0.2
  %v8420 = vmul.f32 %v8164, 0.2
  %v8421 = vmul.f32 %v8165, 0.2
  %v8422 = vmul.f32 %v8166, 0.2
  %v8423 = vmul.f32 %v8167, 0.2
  %v8424 = vmul.f32 %v8168, 0.2
  %v8425 = vmul.f32 %v8169, 0.2
  %v8426 = vmul.f32 %v8170, 0.2
  %v8427 = vmul.f32 %v8171, 0.2
  %v8428 = vmul.f32 %v8172, 0.2
  %v8429 = vmul.f32 %v8173, 0.2
  %v8430 = vmul.f32 %v8174, 0.2
  %v8431 = vmul.f32 %v8175, 0.2
  %v8432 = vmul.f32 %v8176, 0.2
  %v8433 = vmul.f32 %v8177, 0.2
  %v8434 = vmul.f32 %v8178, 0.2
  %v8435 = vmul.f32 %v8179, 0.2
  %v8436 = vmul.f32 %v8180, 0.2
  %v8437 = vmul.f32 %v8181, 0.2
  %v8438 = vmul.f32 %v8182, 0.2
  %v8439 = vmul.f32 %v8183, 0.2
  %v8440 = vmul.f32 %v8184, 0.2
  %v8441 = vmul.f32 %v8185, 0.2
  %v8442 = vmul.f32 %v8186, 0.2
  %v8443 = vmul.f32 %v8187, 0.2
  %v8444 = vmul.f32 %v8188, 0.2
  %v8445 = vmul.f32 %v8189, 0.2
  %v8446 = vmul.f32 %v8190, 0.2
  %v8447 = vmul.f32 %v8191, 0.2
  %v8448 = vmul.f32 %v8192, 0.2
  %v8449 = vmul.f32 %v8193, 0.2
  %v8450 = vmul.f32 %v8194, 0.2
  %v8451 = vmul.f32 %v8195, 0.2
  %v8452 = vmul.f32 %v8196, 0.2
  %v8453 = vmul.f32 %v8197, 0.2
  %v8454 = vmul.f32 %v8198, 0.2
  %v8455 = vmul.f32 %v8199, 0.2
  %v8456 = vmul.f32 %v8200, 0.2
  %v8457 = vmul.f32 %v8201, 0.2
  %v8458 = vmul.f32 %v8202, 0.2
  %v8459 = vmul.f32 %v8203, 0.2
  %v8460 = vmul.f32 %v8204, 0.2
  %v8461 = vmul.f32 %v8205, 0.2
  %v8462 = vmul.f32 %v8206, 0.2
  %v8463 = vmul.f32 %v8207, 0.2
  %v8464 = vmul.f32 %v8208, 0.2
  %v8465 = vmul.f32 %v8209, 0.2
  %v8466 = vmul.f32 %v8210, 0.2
  %v8467 = vmul.f32 %v8211, 0.2
  %v8468 = vmul.f32 %v8212, 0.2
  %v8469 = vmul.f32 %v8213, 0.2
  %v8470 = vmul.f32 %v8214, 0.2
  %v8471 = vmul.f32 %v8215, 0.2
  %v8472 = vmul.f32 %v8216, 0.2
  %v8473 = vmul.f32 %v8217, 0.2
  %v8474 = vmul.f32 %v8218, 0.2
  %v8475 = vmul.f32 %v8219, 0.2
  %v8476 = vmul.f32 %v8220, 0.2
  %v8477 = vmul.f32 %v8221, 0.2
  %v8478 = vmul.f32 %v8222, 0.2
  %v8479 = vmul.f32 %v8223, 0.2
  %v8480 = vmul.f32 %v8224, 0.2
  %v8481 = vmul.f32 %v8225, 0.2
  %v8482 = vmul.f32 %v8226, 0.2
  %v8483 = vmul.f32 %v8227, 0.2
  %v8484 = vmul.f32 %v8228, 0.2
  %v8485 = vmul.f32 %v8229, 0.2
  %v8486 = vmul.f32 %v8230, 0.2
  %v8487 = vmul.f32 %v8231, 0.2
  %v8488 = vmul.f32 %v8232, 0.2
  %v8489 = vmul.f32 %v8233, 0.2
  %v8490 = vmul.f32 %v8234, 0.2
  %v8491 = vmul.f32 %v8235, 0.2
  %v8492 = vmul.f32 %v8236, 0.2
  %v8493 = vmul.f32 %v8237, 0.2
  %v8494 = vmul.f32 %v8238, 0.2
  %v8495 = vmul.f32 %v8239, 0.2
  %v8496 = vmul.f32 %v8240, 0.2
  %v8497 = vmul.f32 %v8241, 0.2
  %v8498 = vmul.f32 %v8242, 0.2
  %v8499 = vmul.f32 %v8243, 0.2
  %v8500 = vmul.f32 %v8244, 0.2
  %v8501 = vmul.f32 %v8245, 0.2
  %v8502 = vmul.f32 %v8246, 0.2
  %v8503 = vmul.f32 %v8247, 0.2
  %v8504 = vmul.f32 %v8248, 0.2
  %v8505 = vmul.f32 %v8249, 0.2
  %v8506 = vmul.f32 %v8250, 0.2
  %v8507 = vmul.f32 %v8251, 0.2
  %v8508 = vmul.f32 %v8252, 0.2
  %v8509 = vmul.f32 %v8253, 0.2
  %v8510 = vmul.f32 %v8254, 0.2
  %v8511 = vmul.f32 %v8255, 0.2
  %v8512 = vmul.f32 %v8256, 0.2
  %v8513 = vmul.f32 %v8257, 0.2
  %v8514 = vmul.f32 %v8258, 0.2
  %v8515 = vmul.f32 %v8259, 0.2
  %v8516 = vmul.f32 %v8260, 0.2
  %v8517 = vmul.f32 %v8261, 0.2
  %v8518 = vmul.f32 %v8262, 0.2
  %v8519 = vmul.f32 %v8263, 0.2
  %v8520 = vmul.f32 %v8264, 0.2
  %v8521 = vmul.f32 %v8265, 0.2
  %v8522 = vmul.f32 %v8266, 0.2
  %v8523 = vmul.f32 %v8267, 0.2
  %v8524 = vmul.f32 %v8268, 0.2
  %v8525 = vmul.f32 %v8269, 0.2
  %v8526 = vmul.f32 %v8270, 0.2
  %v8527 = vmul.f32 %v8271, 0.2
  %v8528 = vmul.f32 %v8272, 0.2
  %v8529 = vmul.f32 %v8273, 0.2
  %v8530 = vmul.f32 %v8274, 0.2
  %v8531 = vmul.f32 %v8275, 0.2
  %v8532 = vmul.f32 %v8276, 0.2
  %v8533 = vmul.f32 %v8277, 0.2
  %v8534 = vmul.f32 %v8278, 0.2
  %v8535 = vmul.f32 %v8279, 0.2
  %v8536 = vmul.f32 %v8280, 0.2
  %v8537 = vmul.f32 %v8281, 0.2
  %v8538 = vmul.f32 %v8282, 0.2
  %v8539 = vmul.f32 %v8283, 0.2
  %v8540 = vmul.f32 %v8284, 0.2
  %v8541 = vmul.f32 %v8285, 0.2
  %v8542 = vmul.f32 %v8286, 0.2
  %v8543 = vmul.f32 %v8287, 0.2
  %v8544 = vmul.f32 %v8288, 0.2
  %v8545 = vmul.f32 %v8289, 0.2
  %v8546 = vmul.f32 %v8290, 0.2
  %v8547 = vmul.f32 %v8291, 0.2
  %v8548 = vmul.f32 %v8292, 0.2
  %v8549 = vmul.f32 %v8293, 0.2
  %v8550 = vmul.f32 %v8294, 0.2
  %v8551 = vmul.f32 %v8295, 0.2
  %v8552 = vmul.f32 %v8296, 0.2
  %v8553 = vmul.f32 %v8297, 0.2
  %v8554 = vmax.f32 %v8042, %v8298
  %v8555 = vmax.f32 %v8043, %v8299
  %v8556 = vmax.f32 %v8044, %v8300
  %v8557 = vmax.f32 %v8045, %v8301
  %v8558 = vmax.f32 %v8046, %v8302
  %v8559 = vmax.f32 %v8047, %v8303
  %v8560 = vmax.f32 %v8048, %v8304
  %v8561 = vmax.f32 %v8049, %v8305
  %v8562 = vmax.f32 %v8050, %v8306
  %v8563 = vmax.f32 %v8051, %v8307
  %v8564 = vmax.f32 %v8052, %v8308
  %v8565 = vmax.f32 %v8053, %v8309
  %v8566 = vmax.f32 %v8054, %v8310
  %v8567 = vmax.f32 %v8055, %v8311
  %v8568 = vmax.f32 %v8056, %v8312
  %v8569 = vmax.f32 %v8057, %v8313
  %v8570 = vmax.f32 %v8058, %v8314
  %v8571 = vmax.f32 %v8059, %v8315
  %v8572 = vmax.f32 %v8060, %v8316
  %v8573 = vmax.f32 %v8061, %v8317
  %v8574 = vmax.f32 %v8062, %v8318
  %v8575 = vmax.f32 %v8063, %v8319
  %v8576 = vmax.f32 %v8064, %v8320
  %v8577 = vmax.f32 %v8065, %v8321
  %v8578 = vmax.f32 %v8066, %v8322
  %v8579 = vmax.f32 %v8067, %v8323
  %v8580 = vmax.f32 %v8068, %v8324
  %v8581 = vmax.f32 %v8069, %v8325
  %v8582 = vmax.f32 %v8070, %v8326
  %v8583 = vmax.f32 %v8071, %v8327
  %v8584 = vmax.f32 %v8072, %v8328
  %v8585 = vmax.f32 %v8073, %v8329
  %v8586 = vmax.f32 %v8074, %v8330
  %v8587 = vmax.f32 %v8075, %v8331
  %v8588 = vmax.f32 %v8076, %v8332
  %v8589 = vmax.f32 %v8077, %v8333
  %v8590 = vmax.f32 %v8078, %v8334
  %v8591 = vmax.f32 %v8079, %v8335
  %v8592 = vmax.f32 %v8080, %v8336
  %v8593 = vmax.f32 %v8081, %v8337
  %v8594 = vmax.f32 %v8082, %v8338
  %v8595 = vmax.f32 %v8083, %v8339
  %v8596 = vmax.f32 %v8084, %v8340
  %v8597 = vmax.f32 %v8085, %v8341
  %v8598 = vmax.f32 %v8086, %v8342
  %v8599 = vmax.f32 %v8087, %v8343
  %v8600 = vmax.f32 %v8088, %v8344
  %v8601 = vmax.f32 %v8089, %v8345
  %v8602 = vmax.f32 %v8090, %v8346
  %v8603 = vmax.f32 %v8091, %v8347
  %v8604 = vmax.f32 %v8092, %v8348
  %v8605 = vmax.f32 %v8093, %v8349
  %v8606 = vmax.f32 %v8094, %v8350
  %v8607 = vmax.f32 %v8095, %v8351
  %v8608 = vmax.f32 %v8096, %v8352
  %v8609 = vmax.f32 %v8097, %v8353
  %v8610 = vmax.f32 %v8098, %v8354
  %v8611 = vmax.f32 %v8099, %v8355
  %v8612 = vmax.f32 %v8100, %v8356
  %v8613 = vmax.f32 %v8101, %v8357
  %v8614 = vmax.f32 %v8102, %v8358
  %v8615 = vmax.f32 %v8103, %v8359
  %v8616 = vmax.f32 %v8104, %v8360
  %v8617 = vmax.f32 %v8105, %v8361
  %v8618 = vmax.f32 %v8106, %v8362
  %v8619 = vmax.f32 %v8107, %v8363
  %v8620 = vmax.f32 %v8108, %v8364
  %v8621 = vmax.f32 %v8109, %v8365
  %v8622 = vmax.f32 %v8110, %v8366
  %v8623 = vmax.f32 %v8111, %v8367
  %v8624 = vmax.f32 %v8112, %v8368
  %v8625 = vmax.f32 %v8113, %v8369
  %v8626 = vmax.f32 %v8114, %v8370
  %v8627 = vmax.f32 %v8115, %v8371
  %v8628 = vmax.f32 %v8116, %v8372
  %v8629 = vmax.f32 %v8117, %v8373
  %v8630 = vmax.f32 %v8118, %v8374
  %v8631 = vmax.f32 %v8119, %v8375
  %v8632 = vmax.f32 %v8120, %v8376
  %v8633 = vmax.f32 %v8121, %v8377
  %v8634 = vmax.f32 %v8122, %v8378
  %v8635 = vmax.f32 %v8123, %v8379
  %v8636 = vmax.f32 %v8124, %v8380
  %v8637 = vmax.f32 %v8125, %v8381
  %v8638 = vmax.f32 %v8126, %v8382
  %v8639 = vmax.f32 %v8127, %v8383
  %v8640 = vmax.f32 %v8128, %v8384
  %v8641 = vmax.f32 %v8129, %v8385
  %v8642 = vmax.f32 %v8130, %v8386
  %v8643 = vmax.f32 %v8131, %v8387
  %v8644 = vmax.f32 %v8132, %v8388
  %v8645 = vmax.f32 %v8133, %v8389
  %v8646 = vmax.f32 %v8134, %v8390
  %v8647 = vmax.f32 %v8135, %v8391
  %v8648 = vmax.f32 %v8136, %v8392
  %v8649 = vmax.f32 %v8137, %v8393
  %v8650 = vmax.f32 %v8138, %v8394
  %v8651 = vmax.f32 %v8139, %v8395
  %v8652 = vmax.f32 %v8140, %v8396
  %v8653 = vmax.f32 %v8141, %v8397
  %v8654 = vmax.f32 %v8142, %v8398
  %v8655 = vmax.f32 %v8143, %v8399
  %v8656 = vmax.f32 %v8144, %v8400
  %v8657 = vmax.f32 %v8145, %v8401
  %v8658 = vmax.f32 %v8146, %v8402
  %v8659 = vmax.f32 %v8147, %v8403
  %v8660 = vmax.f32 %v8148, %v8404
  %v8661 = vmax.f32 %v8149, %v8405
  %v8662 = vmax.f32 %v8150, %v8406
  %v8663 = vmax.f32 %v8151, %v8407
  %v8664 = vmax.f32 %v8152, %v8408
  %v8665 = vmax.f32 %v8153, %v8409
  %v8666 = vmax.f32 %v8154, %v8410
  %v8667 = vmax.f32 %v8155, %v8411
  %v8668 = vmax.f32 %v8156, %v8412
  %v8669 = vmax.f32 %v8157, %v8413
  %v8670 = vmax.f32 %v8158, %v8414
  %v8671 = vmax.f32 %v8159, %v8415
  %v8672 = vmax.f32 %v8160, %v8416
  %v8673 = vmax.f32 %v8161, %v8417
  %v8674 = vmax.f32 %v8162, %v8418
  %v8675 = vmax.f32 %v8163, %v8419
  %v8676 = vmax.f32 %v8164, %v8420
  %v8677 = vmax.f32 %v8165, %v8421
  %v8678 = vmax.f32 %v8166, %v8422
  %v8679 = vmax.f32 %v8167, %v8423
  %v8680 = vmax.f32 %v8168, %v8424
  %v8681 = vmax.f32 %v8169, %v8425
  %v8682 = vmax.f32 %v8170, %v8426
  %v8683 = vmax.f32 %v8171, %v8427
  %v8684 = vmax.f32 %v8172, %v8428
  %v8685 = vmax.f32 %v8173, %v8429
  %v8686 = vmax.f32 %v8174, %v8430
  %v8687 = vmax.f32 %v8175, %v8431
  %v8688 = vmax.f32 %v8176, %v8432
  %v8689 = vmax.f32 %v8177, %v8433
  %v8690 = vmax.f32 %v8178, %v8434
  %v8691 = vmax.f32 %v8179, %v8435
  %v8692 = vmax.f32 %v8180, %v8436
  %v8693 = vmax.f32 %v8181, %v8437
  %v8694 = vmax.f32 %v8182, %v8438
  %v8695 = vmax.f32 %v8183, %v8439
  %v8696 = vmax.f32 %v8184, %v8440
  %v8697 = vmax.f32 %v8185, %v8441
  %v8698 = vmax.f32 %v8186, %v8442
  %v8699 = vmax.f32 %v8187, %v8443
  %v8700 = vmax.f32 %v8188, %v8444
  %v8701 = vmax.f32 %v8189, %v8445
  %v8702 = vmax.f32 %v8190, %v8446
  %v8703 = vmax.f32 %v8191, %v8447
  %v8704 = vmax.f32 %v8192, %v8448
  %v8705 = vmax.f32 %v8193, %v8449
  %v8706 = vmax.f32 %v8194, %v8450
  %v8707 = vmax.f32 %v8195, %v8451
  %v8708 = vmax.f32 %v8196, %v8452
  %v8709 = vmax.f32 %v8197, %v8453
  %v8710 = vmax.f32 %v8198, %v8454
  %v8711 = vmax.f32 %v8199, %v8455
  %v8712 = vmax.f32 %v8200, %v8456
  %v8713 = vmax.f32 %v8201, %v8457
  %v8714 = vmax.f32 %v8202, %v8458
  %v8715 = vmax.f32 %v8203, %v8459
  %v8716 = vmax.f32 %v8204, %v8460
  %v8717 = vmax.f32 %v8205, %v8461
  %v8718 = vmax.f32 %v8206, %v8462
  %v8719 = vmax.f32 %v8207, %v8463
  %v8720 = vmax.f32 %v8208, %v8464
  %v8721 = vmax.f32 %v8209, %v8465
  %v8722 = vmax.f32 %v8210, %v8466
  %v8723 = vmax.f32 %v8211, %v8467
  %v8724 = vmax.f32 %v8212, %v8468
  %v8725 = vmax.f32 %v8213, %v8469
  %v8726 = vmax.f32 %v8214, %v8470
  %v8727 = vmax.f32 %v8215, %v8471
  %v8728 = vmax.f32 %v8216, %v8472
  %v8729 = vmax.f32 %v8217, %v8473
  %v8730 = vmax.f32 %v8218, %v8474
  %v8731 = vmax.f32 %v8219, %v8475
  %v8732 = vmax.f32 %v8220, %v8476
  %v8733 = vmax.f32 %v8221, %v8477
  %v8734 = vmax.f32 %v8222, %v8478
  %v8735 = vmax.f32 %v8223, %v8479
  %v8736 = vmax.f32 %v8224, %v8480
  %v8737 = vmax.f32 %v8225, %v8481
  %v8738 = vmax.f32 %v8226, %v8482
  %v8739 = vmax.f32 %v8227, %v8483
  %v8740 = vmax.f32 %v8228, %v8484
  %v8741 = vmax.f32 %v8229, %v8485
  %v8742 = vmax.f32 %v8230, %v8486
  %v8743 = vmax.f32 %v8231, %v8487
  %v8744 = vmax.f32 %v8232, %v8488
  %v8745 = vmax.f32 %v8233, %v8489
  %v8746 = vmax.f32 %v8234, %v8490
  %v8747 = vmax.f32 %v8235, %v8491
  %v8748 = vmax.f32 %v8236, %v8492
  %v8749 = vmax.f32 %v8237, %v8493
  %v8750 = vmax.f32 %v8238, %v8494
  %v8751 = vmax.f32 %v8239, %v8495
  %v8752 = vmax.f32 %v8240, %v8496
  %v8753 = vmax.f32 %v8241, %v8497
  %v8754 = vmax.f32 %v8242, %v8498
  %v8755 = vmax.f32 %v8243, %v8499
  %v8756 = vmax.f32 %v8244, %v8500
  %v8757 = vmax.f32 %v8245, %v8501
  %v8758 = vmax.f32 %v8246, %v8502
  %v8759 = vmax.f32 %v8247, %v8503
  %v8760 = vmax.f32 %v8248, %v8504
  %v8761 = vmax.f32 %v8249, %v8505
  %v8762 = vmax.f32 %v8250, %v8506
  %v8763 = vmax.f32 %v8251, %v8507
  %v8764 = vmax.f32 %v8252, %v8508
  %v8765 = vmax.f32 %v8253, %v8509
  %v8766 = vmax.f32 %v8254, %v8510
  %v8767 = vmax.f32 %v8255, %v8511
  %v8768 = vmax.f32 %v8256, %v8512
  %v8769 = vmax.f32 %v8257, %v8513
  %v8770 = vmax.f32 %v8258, %v8514
  %v8771 = vmax.f32 %v8259, %v8515
  %v8772 = vmax.f32 %v8260, %v8516
  %v8773 = vmax.f32 %v8261, %v8517
  %v8774 = vmax.f32 %v8262, %v8518
  %v8775 = vmax.f32 %v8263, %v8519
  %v8776 = vmax.f32 %v8264, %v8520
  %v8777 = vmax.f32 %v8265, %v8521
  %v8778 = vmax.f32 %v8266, %v8522
  %v8779 = vmax.f32 %v8267, %v8523
  %v8780 = vmax.f32 %v8268, %v8524
  %v8781 = vmax.f32 %v8269, %v8525
  %v8782 = vmax.f32 %v8270, %v8526
  %v8783 = vmax.f32 %v8271, %v8527
  %v8784 = vmax.f32 %v8272, %v8528
  %v8785 = vmax.f32 %v8273, %v8529
  %v8786 = vmax.f32 %v8274, %v8530
  %v8787 = vmax.f32 %v8275, %v8531
  %v8788 = vmax.f32 %v8276, %v8532
  %v8789 = vmax.f32 %v8277, %v8533
  %v8790 = vmax.f32 %v8278, %v8534
  %v8791 = vmax.f32 %v8279, %v8535
  %v8792 = vmax.f32 %v8280, %v8536
  %v8793 = vmax.f32 %v8281, %v8537
  %v8794 = vmax.f32 %v8282, %v8538
  %v8795 = vmax.f32 %v8283, %v8539
  %v8796 = vmax.f32 %v8284, %v8540
  %v8797 = vmax.f32 %v8285, %v8541
  %v8798 = vmax.f32 %v8286, %v8542
  %v8799 = vmax.f32 %v8287, %v8543
  %v8800 = vmax.f32 %v8288, %v8544
  %v8801 = vmax.f32 %v8289, %v8545
  %v8802 = vmax.f32 %v8290, %v8546
  %v8803 = vmax.f32 %v8291, %v8547
  %v8804 = vmax.f32 %v8292, %v8548
  %v8805 = vmax.f32 %v8293, %v8549
  %v8806 = vmax.f32 %v8294, %v8550
  %v8807 = vmax.f32 %v8295, %v8551
  %v8808 = vmax.f32 %v8296, %v8552
  %v8809 = vmax.f32 %v8297, %v8553
  %vm8810 = vcmask 64512
  %8811 = vst.msk [vmem:[%s4] sm:$0xff] %vm8810, %v8554
  %8812 = vst.msk [vmem:[%s4 + $0x8] sm:$0xff] %vm8810, %v8555
  %8813 = vst.msk [vmem:[%s4 + $0x10] sm:$0xff] %vm8810, %v8556
  %8814 = vst.msk [vmem:[%s4 + $0x18] sm:$0xff] %vm8810, %v8557
  %8815 = vst.msk [vmem:[%s4 + $0x20] sm:$0xff] %vm8810, %v8558
  %8816 = vst.msk [vmem:[%s4 + $0x28] sm:$0xff] %vm8810, %v8559
  %8817 = vst.msk [vmem:[%s4 + $0x30] sm:$0xff] %vm8810, %v8560
  %8818 = vst.msk [vmem:[%s4 + $0x38] sm:$0xff] %vm8810, %v8561
  %8819 = vst.msk [vmem:[%s4 + $0x40] sm:$0xff] %vm8810, %v8562
  %8820 = vst.msk [vmem:[%s4 + $0x48] sm:$0xff] %vm8810, %v8563
  %8821 = vst.msk [vmem:[%s4 + $0x50] sm:$0xff] %vm8810, %v8564
  %8822 = vst.msk [vmem:[%s4 + $0x58] sm:$0xff] %vm8810, %v8565
  %8823 = vst.msk [vmem:[%s4 + $0x60] sm:$0xff] %vm8810, %v8566
  %8824 = vst.msk [vmem:[%s4 + $0x68] sm:$0xff] %vm8810, %v8567
  %8825 = vst.msk [vmem:[%s4 + $0x70] sm:$0xff] %vm8810, %v8568
  %8826 = vst.msk [vmem:[%s4 + $0x78] sm:$0xff] %vm8810, %v8569
  %8827 = vst.msk [vmem:[%s4 + $0x80] sm:$0xff] %vm8810, %v8570
  %8828 = vst.msk [vmem:[%s4 + $0x88] sm:$0xff] %vm8810, %v8571
  %8829 = vst.msk [vmem:[%s4 + $0x90] sm:$0xff] %vm8810, %v8572
  %8830 = vst.msk [vmem:[%s4 + $0x98] sm:$0xff] %vm8810, %v8573
  %8831 = vst.msk [vmem:[%s4 + $0xa0] sm:$0xff] %vm8810, %v8574
  %8832 = vst.msk [vmem:[%s4 + $0xa8] sm:$0xff] %vm8810, %v8575
  %8833 = vst.msk [vmem:[%s4 + $0xb0] sm:$0xff] %vm8810, %v8576
  %8834 = vst.msk [vmem:[%s4 + $0xb8] sm:$0xff] %vm8810, %v8577
  %8835 = vst.msk [vmem:[%s4 + $0xc0] sm:$0xff] %vm8810, %v8578
  %8836 = vst.msk [vmem:[%s4 + $0xc8] sm:$0xff] %vm8810, %v8579
  %8837 = vst.msk [vmem:[%s4 + $0xd0] sm:$0xff] %vm8810, %v8580
  %8838 = vst.msk [vmem:[%s4 + $0xd8] sm:$0xff] %vm8810, %v8581
  %8839 = vst.msk [vmem:[%s4 + $0xe0] sm:$0xff] %vm8810, %v8582
  %8840 = vst.msk [vmem:[%s4 + $0xe8] sm:$0xff] %vm8810, %v8583
  %8841 = vst.msk [vmem:[%s4 + $0xf0] sm:$0xff] %vm8810, %v8584
  %8842 = vst.msk [vmem:[%s4 + $0xf8] sm:$0xff] %vm8810, %v8585
  %8843 = vst.msk [vmem:[%s4 + $0x100] sm:$0xff] %vm8810, %v8586
  %8844 = vst.msk [vmem:[%s4 + $0x108] sm:$0xff] %vm8810, %v8587
  %8845 = vst.msk [vmem:[%s4 + $0x110] sm:$0xff] %vm8810, %v8588
  %8846 = vst.msk [vmem:[%s4 + $0x118] sm:$0xff] %vm8810, %v8589
  %8847 = vst.msk [vmem:[%s4 + $0x120] sm:$0xff] %vm8810, %v8590
  %8848 = vst.msk [vmem:[%s4 + $0x128] sm:$0xff] %vm8810, %v8591
  %8849 = vst.msk [vmem:[%s4 + $0x130] sm:$0xff] %vm8810, %v8592
  %8850 = vst.msk [vmem:[%s4 + $0x138] sm:$0xff] %vm8810, %v8593
  %8851 = vst.msk [vmem:[%s4 + $0x140] sm:$0xff] %vm8810, %v8594
  %8852 = vst.msk [vmem:[%s4 + $0x148] sm:$0xff] %vm8810, %v8595
  %8853 = vst.msk [vmem:[%s4 + $0x150] sm:$0xff] %vm8810, %v8596
  %8854 = vst.msk [vmem:[%s4 + $0x158] sm:$0xff] %vm8810, %v8597
  %8855 = vst.msk [vmem:[%s4 + $0x160] sm:$0xff] %vm8810, %v8598
  %8856 = vst.msk [vmem:[%s4 + $0x168] sm:$0xff] %vm8810, %v8599
  %8857 = vst.msk [vmem:[%s4 + $0x170] sm:$0xff] %vm8810, %v8600
  %8858 = vst.msk [vmem:[%s4 + $0x178] sm:$0xff] %vm8810, %v8601
  %8859 = vst.msk [vmem:[%s4 + $0x180] sm:$0xff] %vm8810, %v8602
  %8860 = vst.msk [vmem:[%s4 + $0x188] sm:$0xff] %vm8810, %v8603
  %8861 = vst.msk [vmem:[%s4 + $0x190] sm:$0xff] %vm8810, %v8604
  %8862 = vst.msk [vmem:[%s4 + $0x198] sm:$0xff] %vm8810, %v8605
  %8863 = vst.msk [vmem:[%s4 + $0x1a0] sm:$0xff] %vm8810, %v8606
  %8864 = vst.msk [vmem:[%s4 + $0x1a8] sm:$0xff] %vm8810, %v8607
  %8865 = vst.msk [vmem:[%s4 + $0x1b0] sm:$0xff] %vm8810, %v8608
  %8866 = vst.msk [vmem:[%s4 + $0x1b8] sm:$0xff] %vm8810, %v8609
  %8867 = vst.msk [vmem:[%s4 + $0x1c0] sm:$0xff] %vm8810, %v8610
  %8868 = vst.msk [vmem:[%s4 + $0x1c8] sm:$0xff] %vm8810, %v8611
  %8869 = vst.msk [vmem:[%s4 + $0x1d0] sm:$0xff] %vm8810, %v8612
  %8870 = vst.msk [vmem:[%s4 + $0x1d8] sm:$0xff] %vm8810, %v8613
  %8871 = vst.msk [vmem:[%s4 + $0x1e0] sm:$0xff] %vm8810, %v8614
  %8872 = vst.msk [vmem:[%s4 + $0x1e8] sm:$0xff] %vm8810, %v8615
  %8873 = vst.msk [vmem:[%s4 + $0x1f0] sm:$0xff] %vm8810, %v8616
  %8874 = vst.msk [vmem:[%s4 + $0x1f8] sm:$0xff] %vm8810, %v8617
  %8875 = vst.msk [vmem:[%s4 + $0x200] sm:$0xff] %vm8810, %v8618
  %8876 = vst.msk [vmem:[%s4 + $0x208] sm:$0xff] %vm8810, %v8619
  %8877 = vst.msk [vmem:[%s4 + $0x210] sm:$0xff] %vm8810, %v8620
  %8878 = vst.msk [vmem:[%s4 + $0x218] sm:$0xff] %vm8810, %v8621
  %8879 = vst.msk [vmem:[%s4 + $0x220] sm:$0xff] %vm8810, %v8622
  %8880 = vst.msk [vmem:[%s4 + $0x228] sm:$0xff] %vm8810, %v8623
  %8881 = vst.msk [vmem:[%s4 + $0x230] sm:$0xff] %vm8810, %v8624
  %8882 = vst.msk [vmem:[%s4 + $0x238] sm:$0xff] %vm8810, %v8625
  %8883 = vst.msk [vmem:[%s4 + $0x240] sm:$0xff] %vm8810, %v8626
  %8884 = vst.msk [vmem:[%s4 + $0x248] sm:$0xff] %vm8810, %v8627
  %8885 = vst.msk [vmem:[%s4 + $0x250] sm:$0xff] %vm8810, %v8628
  %8886 = vst.msk [vmem:[%s4 + $0x258] sm:$0xff] %vm8810, %v8629
  %8887 = vst.msk [vmem:[%s4 + $0x260] sm:$0xff] %vm8810, %v8630
  %8888 = vst.msk [vmem:[%s4 + $0x268] sm:$0xff] %vm8810, %v8631
  %8889 = vst.msk [vmem:[%s4 + $0x270] sm:$0xff] %vm8810, %v8632
  %8890 = vst.msk [vmem:[%s4 + $0x278] sm:$0xff] %vm8810, %v8633
  %8891 = vst.msk [vmem:[%s4 + $0x280] sm:$0xff] %vm8810, %v8634
  %8892 = vst.msk [vmem:[%s4 + $0x288] sm:$0xff] %vm8810, %v8635
  %8893 = vst.msk [vmem:[%s4 + $0x290] sm:$0xff] %vm8810, %v8636
  %8894 = vst.msk [vmem:[%s4 + $0x298] sm:$0xff] %vm8810, %v8637
  %8895 = vst.msk [vmem:[%s4 + $0x2a0] sm:$0xff] %vm8810, %v8638
  %8896 = vst.msk [vmem:[%s4 + $0x2a8] sm:$0xff] %vm8810, %v8639
  %8897 = vst.msk [vmem:[%s4 + $0x2b0] sm:$0xff] %vm8810, %v8640
  %8898 = vst.msk [vmem:[%s4 + $0x2b8] sm:$0xff] %vm8810, %v8641
  %8899 = vst.msk [vmem:[%s4 + $0x2c0] sm:$0xff] %vm8810, %v8642
  %8900 = vst.msk [vmem:[%s4 + $0x2c8] sm:$0xff] %vm8810, %v8643
  %8901 = vst.msk [vmem:[%s4 + $0x2d0] sm:$0xff] %vm8810, %v8644
  %8902 = vst.msk [vmem:[%s4 + $0x2d8] sm:$0xff] %vm8810, %v8645
  %8903 = vst.msk [vmem:[%s4 + $0x2e0] sm:$0xff] %vm8810, %v8646
  %8904 = vst.msk [vmem:[%s4 + $0x2e8] sm:$0xff] %vm8810, %v8647
  %8905 = vst.msk [vmem:[%s4 + $0x2f0] sm:$0xff] %vm8810, %v8648
  %8906 = vst.msk [vmem:[%s4 + $0x2f8] sm:$0xff] %vm8810, %v8649
  %8907 = vst.msk [vmem:[%s4 + $0x300] sm:$0xff] %vm8810, %v8650
  %8908 = vst.msk [vmem:[%s4 + $0x308] sm:$0xff] %vm8810, %v8651
  %8909 = vst.msk [vmem:[%s4 + $0x310] sm:$0xff] %vm8810, %v8652
  %8910 = vst.msk [vmem:[%s4 + $0x318] sm:$0xff] %vm8810, %v8653
  %8911 = vst.msk [vmem:[%s4 + $0x320] sm:$0xff] %vm8810, %v8654
  %8912 = vst.msk [vmem:[%s4 + $0x328] sm:$0xff] %vm8810, %v8655
  %8913 = vst.msk [vmem:[%s4 + $0x330] sm:$0xff] %vm8810, %v8656
  %8914 = vst.msk [vmem:[%s4 + $0x338] sm:$0xff] %vm8810, %v8657
  %8915 = vst.msk [vmem:[%s4 + $0x340] sm:$0xff] %vm8810, %v8658
  %8916 = vst.msk [vmem:[%s4 + $0x348] sm:$0xff] %vm8810, %v8659
  %8917 = vst.msk [vmem:[%s4 + $0x350] sm:$0xff] %vm8810, %v8660
  %8918 = vst.msk [vmem:[%s4 + $0x358] sm:$0xff] %vm8810, %v8661
  %8919 = vst.msk [vmem:[%s4 + $0x360] sm:$0xff] %vm8810, %v8662
  %8920 = vst.msk [vmem:[%s4 + $0x368] sm:$0xff] %vm8810, %v8663
  %8921 = vst.msk [vmem:[%s4 + $0x370] sm:$0xff] %vm8810, %v8664
  %8922 = vst.msk [vmem:[%s4 + $0x378] sm:$0xff] %vm8810, %v8665
  %8923 = vst.msk [vmem:[%s4 + $0x380] sm:$0xff] %vm8810, %v8666
  %8924 = vst.msk [vmem:[%s4 + $0x388] sm:$0xff] %vm8810, %v8667
  %8925 = vst.msk [vmem:[%s4 + $0x390] sm:$0xff] %vm8810, %v8668
  %8926 = vst.msk [vmem:[%s4 + $0x398] sm:$0xff] %vm8810, %v8669
  %8927 = vst.msk [vmem:[%s4 + $0x3a0] sm:$0xff] %vm8810, %v8670
  %8928 = vst.msk [vmem:[%s4 + $0x3a8] sm:$0xff] %vm8810, %v8671
  %8929 = vst.msk [vmem:[%s4 + $0x3b0] sm:$0xff] %vm8810, %v8672
  %8930 = vst.msk [vmem:[%s4 + $0x3b8] sm:$0xff] %vm8810, %v8673
  %8931 = vst.msk [vmem:[%s4 + $0x3c0] sm:$0xff] %vm8810, %v8674
  %8932 = vst.msk [vmem:[%s4 + $0x3c8] sm:$0xff] %vm8810, %v8675
  %8933 = vst.msk [vmem:[%s4 + $0x3d0] sm:$0xff] %vm8810, %v8676
  %8934 = vst.msk [vmem:[%s4 + $0x3d8] sm:$0xff] %vm8810, %v8677
  %8935 = vst.msk [vmem:[%s4 + $0x3e0] sm:$0xff] %vm8810, %v8678
  %8936 = vst.msk [vmem:[%s4 + $0x3e8] sm:$0xff] %vm8810, %v8679
  %8937 = vst.msk [vmem:[%s4 + $0x3f0] sm:$0xff] %vm8810, %v8680
  %8938 = vst.msk [vmem:[%s4 + $0x3f8] sm:$0xff] %vm8810, %v8681
  %8939 = vst.msk [vmem:[%s4 + $0x400] sm:$0xff] %vm8810, %v8682
  %8940 = vst.msk [vmem:[%s4 + $0x408] sm:$0xff] %vm8810, %v8683
  %8941 = vst.msk [vmem:[%s4 + $0x410] sm:$0xff] %vm8810, %v8684
  %8942 = vst.msk [vmem:[%s4 + $0x418] sm:$0xff] %vm8810, %v8685
  %8943 = vst.msk [vmem:[%s4 + $0x420] sm:$0xff] %vm8810, %v8686
  %8944 = vst.msk [vmem:[%s4 + $0x428] sm:$0xff] %vm8810, %v8687
  %8945 = vst.msk [vmem:[%s4 + $0x430] sm:$0xff] %vm8810, %v8688
  %8946 = vst.msk [vmem:[%s4 + $0x438] sm:$0xff] %vm8810, %v8689
  %8947 = vst.msk [vmem:[%s4 + $0x440] sm:$0xff] %vm8810, %v8690
  %8948 = vst.msk [vmem:[%s4 + $0x448] sm:$0xff] %vm8810, %v8691
  %8949 = vst.msk [vmem:[%s4 + $0x450] sm:$0xff] %vm8810, %v8692
  %8950 = vst.msk [vmem:[%s4 + $0x458] sm:$0xff] %vm8810, %v8693
  %8951 = vst.msk [vmem:[%s4 + $0x460] sm:$0xff] %vm8810, %v8694
  %8952 = vst.msk [vmem:[%s4 + $0x468] sm:$0xff] %vm8810, %v8695
  %8953 = vst.msk [vmem:[%s4 + $0x470] sm:$0xff] %vm8810, %v8696
  %8954 = vst.msk [vmem:[%s4 + $0x478] sm:$0xff] %vm8810, %v8697
  %8955 = vst.msk [vmem:[%s4 + $0x480] sm:$0xff] %vm8810, %v8698
  %8956 = vst.msk [vmem:[%s4 + $0x488] sm:$0xff] %vm8810, %v8699
  %8957 = vst.msk [vmem:[%s4 + $0x490] sm:$0xff] %vm8810, %v8700
  %8958 = vst.msk [vmem:[%s4 + $0x498] sm:$0xff] %vm8810, %v8701
  %8959 = vst.msk [vmem:[%s4 + $0x4a0] sm:$0xff] %vm8810, %v8702
  %8960 = vst.msk [vmem:[%s4 + $0x4a8] sm:$0xff] %vm8810, %v8703
  %8961 = vst.msk [vmem:[%s4 + $0x4b0] sm:$0xff] %vm8810, %v8704
  %8962 = vst.msk [vmem:[%s4 + $0x4b8] sm:$0xff] %vm8810, %v8705
  %8963 = vst.msk [vmem:[%s4 + $0x4c0] sm:$0xff] %vm8810, %v8706
  %8964 = vst.msk [vmem:[%s4 + $0x4c8] sm:$0xff] %vm8810, %v8707
  %8965 = vst.msk [vmem:[%s4 + $0x4d0] sm:$0xff] %vm8810, %v8708
  %8966 = vst.msk [vmem:[%s4 + $0x4d8] sm:$0xff] %vm8810, %v8709
  %8967 = vst.msk [vmem:[%s4 + $0x4e0] sm:$0xff] %vm8810, %v8710
  %8968 = vst.msk [vmem:[%s4 + $0x4e8] sm:$0xff] %vm8810, %v8711
  %8969 = vst.msk [vmem:[%s4 + $0x4f0] sm:$0xff] %vm8810, %v8712
  %8970 = vst.msk [vmem:[%s4 + $0x4f8] sm:$0xff] %vm8810, %v8713
  %8971 = vst.msk [vmem:[%s4 + $0x500] sm:$0xff] %vm8810, %v8714
  %8972 = vst.msk [vmem:[%s4 + $0x508] sm:$0xff] %vm8810, %v8715
  %8973 = vst.msk [vmem:[%s4 + $0x510] sm:$0xff] %vm8810, %v8716
  %8974 = vst.msk [vmem:[%s4 + $0x518] sm:$0xff] %vm8810, %v8717
  %8975 = vst.msk [vmem:[%s4 + $0x520] sm:$0xff] %vm8810, %v8718
  %8976 = vst.msk [vmem:[%s4 + $0x528] sm:$0xff] %vm8810, %v8719
  %8977 = vst.msk [vmem:[%s4 + $0x530] sm:$0xff] %vm8810, %v8720
  %8978 = vst.msk [vmem:[%s4 + $0x538] sm:$0xff] %vm8810, %v8721
  %8979 = vst.msk [vmem:[%s4 + $0x540] sm:$0xff] %vm8810, %v8722
  %8980 = vst.msk [vmem:[%s4 + $0x548] sm:$0xff] %vm8810, %v8723
  %8981 = vst.msk [vmem:[%s4 + $0x550] sm:$0xff] %vm8810, %v8724
  %8982 = vst.msk [vmem:[%s4 + $0x558] sm:$0xff] %vm8810, %v8725
  %8983 = vst.msk [vmem:[%s4 + $0x560] sm:$0xff] %vm8810, %v8726
  %8984 = vst.msk [vmem:[%s4 + $0x568] sm:$0xff] %vm8810, %v8727
  %8985 = vst.msk [vmem:[%s4 + $0x570] sm:$0xff] %vm8810, %v8728
  %8986 = vst.msk [vmem:[%s4 + $0x578] sm:$0xff] %vm8810, %v8729
  %8987 = vst.msk [vmem:[%s4 + $0x580] sm:$0xff] %vm8810, %v8730
  %8988 = vst.msk [vmem:[%s4 + $0x588] sm:$0xff] %vm8810, %v8731
  %8989 = vst.msk [vmem:[%s4 + $0x590] sm:$0xff] %vm8810, %v8732
  %8990 = vst.msk [vmem:[%s4 + $0x598] sm:$0xff] %vm8810, %v8733
  %8991 = vst.msk [vmem:[%s4 + $0x5a0] sm:$0xff] %vm8810, %v8734
  %8992 = vst.msk [vmem:[%s4 + $0x5a8] sm:$0xff] %vm8810, %v8735
  %8993 = vst.msk [vmem:[%s4 + $0x5b0] sm:$0xff] %vm8810, %v8736
  %8994 = vst.msk [vmem:[%s4 + $0x5b8] sm:$0xff] %vm8810, %v8737
  %8995 = vst.msk [vmem:[%s4 + $0x5c0] sm:$0xff] %vm8810, %v8738
  %8996 = vst.msk [vmem:[%s4 + $0x5c8] sm:$0xff] %vm8810, %v8739
  %8997 = vst.msk [vmem:[%s4 + $0x5d0] sm:$0xff] %vm8810, %v8740
  %8998 = vst.msk [vmem:[%s4 + $0x5d8] sm:$0xff] %vm8810, %v8741
  %8999 = vst.msk [vmem:[%s4 + $0x5e0] sm:$0xff] %vm8810, %v8742
  %9000 = vst.msk [vmem:[%s4 + $0x5e8] sm:$0xff] %vm8810, %v8743
  %9001 = vst.msk [vmem:[%s4 + $0x5f0] sm:$0xff] %vm8810, %v8744
  %9002 = vst.msk [vmem:[%s4 + $0x5f8] sm:$0xff] %vm8810, %v8745
  %9003 = vst.msk [vmem:[%s4 + $0x600] sm:$0xff] %vm8810, %v8746
  %9004 = vst.msk [vmem:[%s4 + $0x608] sm:$0xff] %vm8810, %v8747
  %9005 = vst.msk [vmem:[%s4 + $0x610] sm:$0xff] %vm8810, %v8748
  %9006 = vst.msk [vmem:[%s4 + $0x618] sm:$0xff] %vm8810, %v8749
  %9007 = vst.msk [vmem:[%s4 + $0x620] sm:$0xff] %vm8810, %v8750
  %9008 = vst.msk [vmem:[%s4 + $0x628] sm:$0xff] %vm8810, %v8751
  %9009 = vst.msk [vmem:[%s4 + $0x630] sm:$0xff] %vm8810, %v8752
  %9010 = vst.msk [vmem:[%s4 + $0x638] sm:$0xff] %vm8810, %v8753
  %9011 = vst.msk [vmem:[%s4 + $0x640] sm:$0xff] %vm8810, %v8754
  %9012 = vst.msk [vmem:[%s4 + $0x648] sm:$0xff] %vm8810, %v8755
  %9013 = vst.msk [vmem:[%s4 + $0x650] sm:$0xff] %vm8810, %v8756
  %9014 = vst.msk [vmem:[%s4 + $0x658] sm:$0xff] %vm8810, %v8757
  %9015 = vst.msk [vmem:[%s4 + $0x660] sm:$0xff] %vm8810, %v8758
  %9016 = vst.msk [vmem:[%s4 + $0x668] sm:$0xff] %vm8810, %v8759
  %9017 = vst.msk [vmem:[%s4 + $0x670] sm:$0xff] %vm8810, %v8760
  %9018 = vst.msk [vmem:[%s4 + $0x678] sm:$0xff] %vm8810, %v8761
  %9019 = vst.msk [vmem:[%s4 + $0x680] sm:$0xff] %vm8810, %v8762
  %9020 = vst.msk [vmem:[%s4 + $0x688] sm:$0xff] %vm8810, %v8763
  %9021 = vst.msk [vmem:[%s4 + $0x690] sm:$0xff] %vm8810, %v8764
  %9022 = vst.msk [vmem:[%s4 + $0x698] sm:$0xff] %vm8810, %v8765
  %9023 = vst.msk [vmem:[%s4 + $0x6a0] sm:$0xff] %vm8810, %v8766
  %9024 = vst.msk [vmem:[%s4 + $0x6a8] sm:$0xff] %vm8810, %v8767
  %9025 = vst.msk [vmem:[%s4 + $0x6b0] sm:$0xff] %vm8810, %v8768
  %9026 = vst.msk [vmem:[%s4 + $0x6b8] sm:$0xff] %vm8810, %v8769
  %9027 = vst.msk [vmem:[%s4 + $0x6c0] sm:$0xff] %vm8810, %v8770
  %9028 = vst.msk [vmem:[%s4 + $0x6c8] sm:$0xff] %vm8810, %v8771
  %9029 = vst.msk [vmem:[%s4 + $0x6d0] sm:$0xff] %vm8810, %v8772
  %9030 = vst.msk [vmem:[%s4 + $0x6d8] sm:$0xff] %vm8810, %v8773
  %9031 = vst.msk [vmem:[%s4 + $0x6e0] sm:$0xff] %vm8810, %v8774
  %9032 = vst.msk [vmem:[%s4 + $0x6e8] sm:$0xff] %vm8810, %v8775
  %9033 = vst.msk [vmem:[%s4 + $0x6f0] sm:$0xff] %vm8810, %v8776
  %9034 = vst.msk [vmem:[%s4 + $0x6f8] sm:$0xff] %vm8810, %v8777
  %9035 = vst.msk [vmem:[%s4 + $0x700] sm:$0xff] %vm8810, %v8778
  %9036 = vst.msk [vmem:[%s4 + $0x708] sm:$0xff] %vm8810, %v8779
  %9037 = vst.msk [vmem:[%s4 + $0x710] sm:$0xff] %vm8810, %v8780
  %9038 = vst.msk [vmem:[%s4 + $0x718] sm:$0xff] %vm8810, %v8781
  %9039 = vst.msk [vmem:[%s4 + $0x720] sm:$0xff] %vm8810, %v8782
  %9040 = vst.msk [vmem:[%s4 + $0x728] sm:$0xff] %vm8810, %v8783
  %9041 = vst.msk [vmem:[%s4 + $0x730] sm:$0xff] %vm8810, %v8784
  %9042 = vst.msk [vmem:[%s4 + $0x738] sm:$0xff] %vm8810, %v8785
  %9043 = vst.msk [vmem:[%s4 + $0x740] sm:$0xff] %vm8810, %v8786
  %9044 = vst.msk [vmem:[%s4 + $0x748] sm:$0xff] %vm8810, %v8787
  %9045 = vst.msk [vmem:[%s4 + $0x750] sm:$0xff] %vm8810, %v8788
  %9046 = vst.msk [vmem:[%s4 + $0x758] sm:$0xff] %vm8810, %v8789
  %9047 = vst.msk [vmem:[%s4 + $0x760] sm:$0xff] %vm8810, %v8790
  %9048 = vst.msk [vmem:[%s4 + $0x768] sm:$0xff] %vm8810, %v8791
  %9049 = vst.msk [vmem:[%s4 + $0x770] sm:$0xff] %vm8810, %v8792
  %9050 = vst.msk [vmem:[%s4 + $0x778] sm:$0xff] %vm8810, %v8793
  %9051 = vst.msk [vmem:[%s4 + $0x780] sm:$0xff] %vm8810, %v8794
  %9052 = vst.msk [vmem:[%s4 + $0x788] sm:$0xff] %vm8810, %v8795
  %9053 = vst.msk [vmem:[%s4 + $0x790] sm:$0xff] %vm8810, %v8796
  %9054 = vst.msk [vmem:[%s4 + $0x798] sm:$0xff] %vm8810, %v8797
  %9055 = vst.msk [vmem:[%s4 + $0x7a0] sm:$0xff] %vm8810, %v8798
  %9056 = vst.msk [vmem:[%s4 + $0x7a8] sm:$0xff] %vm8810, %v8799
  %9057 = vst.msk [vmem:[%s4 + $0x7b0] sm:$0xff] %vm8810, %v8800
  %9058 = vst.msk [vmem:[%s4 + $0x7b8] sm:$0xff] %vm8810, %v8801
  %9059 = vst.msk [vmem:[%s4 + $0x7c0] sm:$0xff] %vm8810, %v8802
  %9060 = vst.msk [vmem:[%s4 + $0x7c8] sm:$0xff] %vm8810, %v8803
  %9061 = vst.msk [vmem:[%s4 + $0x7d0] sm:$0xff] %vm8810, %v8804
  %9062 = vst.msk [vmem:[%s4 + $0x7d8] sm:$0xff] %vm8810, %v8805
  %9063 = vst.msk [vmem:[%s4 + $0x7e0] sm:$0xff] %vm8810, %v8806
  %9064 = vst.msk [vmem:[%s4 + $0x7e8] sm:$0xff] %vm8810, %v8807
  %9065 = vst.msk [vmem:[%s4 + $0x7f0] sm:$0xff] %vm8810, %v8808
  %9066 = vst.msk [vmem:[%s4 + $0x7f8] sm:$0xff] %vm8810, %v8809
  // Predicated region
  $region18: #{discriminator_forward.5} parent=0 // pred_check
    _
  $region19: #{discriminator_forward.5} parent=0 // pred_check_branch
    %9068 = sbr.rel (0) target = $region21
  $region20: #{discriminator_forward.5} parent=0 // pred_region
    _
  $region21: #{discriminator_forward.5} parent=0 // pred_fallthru
    _
  // Predicated region
  $region22: #{discriminator_forward.5} parent=0 // pred_check
    _
  $region23: #{discriminator_forward.5} parent=0 // pred_check_branch
    %9070 = sbr.rel (0) target = $region25
  $region24: #{discriminator_forward.5} parent=0 // pred_region
    _
  $region25: #{discriminator_forward.5} parent=0 // pred_fallthru
    _

// kernel: discriminator_forward.7
$region0: #{discriminator_forward.7}
  #allocation0 [shape = 'u32[]', space=smem, size = 0x4, offset = 0x4, fixed_abs, tag = 'smem constant byte address 0x4 - core index']
  #allocation1 [shape = 'u32[72,128]{1,0:T(1,128)}', space=vmem, size = 0x9000, scoped, tag = 'internal scratch']
  %s0 = inlined_call_operand.vmem [shape: f32[2,9,9,64], index: 0, kind: input, shape index: {}]
  %s1 = inlined_call_operand.vmem [shape: f32[2,2,64,32], index: 1, kind: input, shape index: {}]
  %s2 = inlined_call_operand.vmem [shape: f32[1,32], index: 2, kind: input, shape index: {}]
  %s3 = inlined_call_operand.vmem [shape: f32[1,32], index: 3, kind: input, shape index: {}]
  %s4 = inlined_call_operand.vmem [shape: f32[128,32], index: 4, kind: output, shape index: {}]
  %s5 = sld [smem:[#allocation0]]
  $region26: #{discriminator_forward.7} parent=0
    _
  %s7 = ssub.s32 1, %s5
  %s8 = scalar_select 0, %s7, %s5
  // Predicated region
  $region2: #{discriminator_forward.7} parent=0 // pred_check
    _
  $region3: #{discriminator_forward.7} parent=0 // pred_check_branch
    %10 = sbr.rel (0) target = $region5
  $region4: #{discriminator_forward.7} parent=0 // pred_region
    _
  $region5: #{discriminator_forward.7} parent=0 // pred_fallthru
    _
  // Predicated region
  $region6: #{discriminator_forward.7} parent=0 // pred_check
    _
  $region7: #{discriminator_forward.7} parent=0 // pred_check_branch
    %12 = sbr.rel (0) target = $region9
  $region8: #{discriminator_forward.7} parent=0 // pred_region
    _
  $region9: #{discriminator_forward.7} parent=0 // pred_fallthru
    _
  // Predicated region
  $region10: #{discriminator_forward.7} parent=0 // pred_check
    _
  $region11: #{discriminator_forward.7} parent=0 // pred_check_branch
    %14 = sbr.rel (0) target = $region13
  $region12: #{discriminator_forward.7} parent=0 // pred_region
    _
  $region13: #{discriminator_forward.7} parent=0 // pred_fallthru
    _
  // Predicated region
  $region14: #{discriminator_forward.7} parent=0 // pred_check
    _
  $region15: #{discriminator_forward.7} parent=0 // pred_check_branch
    %16 = sbr.rel (0) target = $region17
  $region16: #{discriminator_forward.7} parent=0 // pred_region
    _
  $region17: #{discriminator_forward.7} parent=0 // pred_fallthru
    _
  %v17 = vld [vmem:[%s0] sm:$0xff]
  %v18 = vld [vmem:[%s0 + $0x10] sm:$0xff]
  %v19 = vld [vmem:[%s0 + $0x20] sm:$0xff]
  %v20 = vld [vmem:[%s0 + $0x30] sm:$0xff]
  %v21 = vld [vmem:[%s0 + $0x40] sm:$0xff]
  %v22 = vld [vmem:[%s0 + $0x50] sm:$0xff]
  %v23 = vld [vmem:[%s0 + $0x60] sm:$0xff]
  %v24 = vld [vmem:[%s0 + $0x70] sm:$0xff]
  %v25 = vld [vmem:[%s0 + $0x90] sm:$0xff]
  %v26 = vld [vmem:[%s0 + $0xa0] sm:$0xff]
  %v27 = vld [vmem:[%s0 + $0xb0] sm:$0xff]
  %v28 = vld [vmem:[%s0 + $0xc0] sm:$0xff]
  %v29 = vld [vmem:[%s0 + $0xd0] sm:$0xff]
  %v30 = vld [vmem:[%s0 + $0xe0] sm:$0xff]
  %v31 = vld [vmem:[%s0 + $0xf0] sm:$0xff]
  %v32 = vld [vmem:[%s0 + $0x100] sm:$0xff]
  %v33 = vld [vmem:[%s1] sm:$0xff]
  %v34 = vld [vmem:[%s1 + $0x8] sm:$0xff]
  %v35 = vld [vmem:[%s1 + $0x10] sm:$0xff]
  %v36 = vld [vmem:[%s1 + $0x18] sm:$0xff]
  %v37 = vld [vmem:[%s1 + $0x20] sm:$0xff]
  %v38 = vld [vmem:[%s1 + $0x28] sm:$0xff]
  %v39 = vld [vmem:[%s1 + $0x30] sm:$0xff]
  %v40 = vld [vmem:[%s1 + $0x38] sm:$0xff]
  %v41 = vld [vmem:[%s0 + $0x1] sm:$0xff]
  %v42 = vld [vmem:[%s0 + $0x11] sm:$0xff]
  %v43 = vld [vmem:[%s0 + $0x21] sm:$0xff]
  %v44 = vld [vmem:[%s0 + $0x31] sm:$0xff]
  %v45 = vld [vmem:[%s0 + $0x41] sm:$0xff]
  %v46 = vld [vmem:[%s0 + $0x51] sm:$0xff]
  %v47 = vld [vmem:[%s0 + $0x61] sm:$0xff]
  %v48 = vld [vmem:[%s0 + $0x71] sm:$0xff]
  %v49 = vld [vmem:[%s0 + $0x91] sm:$0xff]
  %v50 = vld [vmem:[%s0 + $0xa1] sm:$0xff]
  %v51 = vld [vmem:[%s0 + $0xb1] sm:$0xff]
  %v52 = vld [vmem:[%s0 + $0xc1] sm:$0xff]
  %v53 = vld [vmem:[%s0 + $0xd1] sm:$0xff]
  %v54 = vld [vmem:[%s0 + $0xe1] sm:$0xff]
  %v55 = vld [vmem:[%s0 + $0xf1] sm:$0xff]
  %v56 = vld [vmem:[%s0 + $0x101] sm:$0xff]
  %s57 = scalar_lea.vmem %s1, 64
  %v58 = vld [vmem:[%s57] sm:$0xff]
  %v59 = vld [vmem:[%s57 + $0x8] sm:$0xff]
  %v60 = vld [vmem:[%s57 + $0x10] sm:$0xff]
  %v61 = vld [vmem:[%s57 + $0x18] sm:$0xff]
  %v62 = vld [vmem:[%s57 + $0x20] sm:$0xff]
  %v63 = vld [vmem:[%s57 + $0x28] sm:$0xff]
  %v64 = vld [vmem:[%s57 + $0x30] sm:$0xff]
  %v65 = vld [vmem:[%s57 + $0x38] sm:$0xff]
  %vm66 = vcmask 523264
  %v68 = vsel %vm66, %v41, 0
  %v71 = vsel %vm66, %v42, 0
  %v74 = vsel %vm66, %v43, 0
  %v77 = vsel %vm66, %v44, 0
  %v80 = vsel %vm66, %v45, 0
  %v83 = vsel %vm66, %v46, 0
  %v86 = vsel %vm66, %v47, 0
  %v89 = vsel %vm66, %v48, 0
  %v92 = vsel %vm66, %v49, 0
  %v95 = vsel %vm66, %v50, 0
  %v98 = vsel %vm66, %v51, 0
  %v101 = vsel %vm66, %v52, 0
  %v104 = vsel %vm66, %v53, 0
  %v107 = vsel %vm66, %v54, 0
  %v110 = vsel %vm66, %v55, 0
  %v113 = vsel %vm66, %v56, 0
  %115 = vmatpush.msra.mxu0 0.0
  %116 = vmatpush.msra.mxu0 0.0
  %117 = vmatpush.msra.mxu0 0.0
  %118 = vmatpush.msra.mxu0 0.0
  %119 = vmatpush.msra.mxu0 0.0
  %120 = vmatpush.msra.mxu0 0.0
  %121 = vmatpush.msra.mxu0 0.0
  %122 = vmatpush.msra.mxu0 0.0
  %123 = vmatpush.msra.mxu0 %v65
  %124 = vmatpush.msra.mxu0 %v64
  %125 = vmatpush.msra.mxu0 %v63
  %126 = vmatpush.msra.mxu0 %v62
  %127 = vmatpush.msra.mxu0 %v61
  %128 = vmatpush.msra.mxu0 %v60
  %129 = vmatpush.msra.mxu0 %v59
  %130 = vmatpush.msra.mxu0 %v58
  %131 = vmatmul.f32.gmra.mxu0 %v68
  %v132 = vpop.f32.mrf.mxu0
  %v133 = vadd.f32 0.0, %v132
  %134 = vmatmul.f32.gmra.mxu0 %v71
  %v135 = vpop.f32.mrf.mxu0
  %v136 = vadd.f32 0.0, %v135
  %137 = vmatmul.f32.gmra.mxu0 %v74
  %v138 = vpop.f32.mrf.mxu0
  %v139 = vadd.f32 0.0, %v138
  %140 = vmatmul.f32.gmra.mxu0 %v77
  %v141 = vpop.f32.mrf.mxu0
  %v142 = vadd.f32 0.0, %v141
  %143 = vmatmul.f32.gmra.mxu0 %v80
  %v144 = vpop.f32.mrf.mxu0
  %v145 = vadd.f32 0.0, %v144
  %146 = vmatmul.f32.gmra.mxu0 %v83
  %v147 = vpop.f32.mrf.mxu0
  %v148 = vadd.f32 0.0, %v147
  %149 = vmatmul.f32.gmra.mxu0 %v86
  %v150 = vpop.f32.mrf.mxu0
  %v151 = vadd.f32 0.0, %v150
  %152 = vmatmul.f32.gmra.mxu0 %v89
  %v153 = vpop.f32.mrf.mxu0
  %v154 = vadd.f32 0.0, %v153
  %155 = vmatmul.f32.gmra.mxu0 %v92
  %v156 = vpop.f32.mrf.mxu0
  %v157 = vadd.f32 0.0, %v156
  %158 = vmatmul.f32.gmra.mxu0 %v95
  %v159 = vpop.f32.mrf.mxu0
  %v160 = vadd.f32 0.0, %v159
  %161 = vmatmul.f32.gmra.mxu0 %v98
  %v162 = vpop.f32.mrf.mxu0
  %v163 = vadd.f32 0.0, %v162
  %164 = vmatmul.f32.gmra.mxu0 %v101
  %v165 = vpop.f32.mrf.mxu0
  %v166 = vadd.f32 0.0, %v165
  %167 = vmatmul.f32.gmra.mxu0 %v104
  %v168 = vpop.f32.mrf.mxu0
  %v169 = vadd.f32 0.0, %v168
  %170 = vmatmul.f32.gmra.mxu0 %v107
  %v171 = vpop.f32.mrf.mxu0
  %v172 = vadd.f32 0.0, %v171
  %173 = vmatmul.f32.gmra.mxu0 %v110
  %v174 = vpop.f32.mrf.mxu0
  %v175 = vadd.f32 0.0, %v174
  %176 = vmatmul.f32.gmra.mxu0 %v113
  %v177 = vpop.f32.mrf.mxu0
  %v178 = vadd.f32 0.0, %v177
  %179 = vdwg.mxu0
  %v181 = vsel %vm66, %v17, 0
  %v184 = vsel %vm66, %v18, 0
  %v187 = vsel %vm66, %v19, 0
  %v190 = vsel %vm66, %v20, 0
  %v193 = vsel %vm66, %v21, 0
  %v196 = vsel %vm66, %v22, 0
  %v199 = vsel %vm66, %v23, 0
  %v202 = vsel %vm66, %v24, 0
  %v205 = vsel %vm66, %v25, 0
  %v208 = vsel %vm66, %v26, 0
  %v211 = vsel %vm66, %v27, 0
  %v214 = vsel %vm66, %v28, 0
  %v217 = vsel %vm66, %v29, 0
  %v220 = vsel %vm66, %v30, 0
  %v223 = vsel %vm66, %v31, 0
  %v226 = vsel %vm66, %v32, 0
  %228 = vmatpush.msra.mxu0 0.0
  %229 = vmatpush.msra.mxu0 0.0
  %230 = vmatpush.msra.mxu0 0.0
  %231 = vmatpush.msra.mxu0 0.0
  %232 = vmatpush.msra.mxu0 0.0
  %233 = vmatpush.msra.mxu0 0.0
  %234 = vmatpush.msra.mxu0 0.0
  %235 = vmatpush.msra.mxu0 0.0
  %236 = vmatpush.msra.mxu0 %v40
  %237 = vmatpush.msra.mxu0 %v39
  %238 = vmatpush.msra.mxu0 %v38
  %239 = vmatpush.msra.mxu0 %v37
  %240 = vmatpush.msra.mxu0 %v36
  %241 = vmatpush.msra.mxu0 %v35
  %242 = vmatpush.msra.mxu0 %v34
  %243 = vmatpush.msra.mxu0 %v33
  %244 = vmatmul.f32.gmra.mxu0 %v181
  %v245 = vpop.f32.mrf.mxu0
  %v246 = vadd.f32 %v133, %v245
  %247 = vmatmul.f32.gmra.mxu0 %v184
  %v248 = vpop.f32.mrf.mxu0
  %v249 = vadd.f32 %v136, %v248
  %250 = vmatmul.f32.gmra.mxu0 %v187
  %v251 = vpop.f32.mrf.mxu0
  %v252 = vadd.f32 %v139, %v251
  %253 = vmatmul.f32.gmra.mxu0 %v190
  %v254 = vpop.f32.mrf.mxu0
  %v255 = vadd.f32 %v142, %v254
  %256 = vmatmul.f32.gmra.mxu0 %v193
  %v257 = vpop.f32.mrf.mxu0
  %v258 = vadd.f32 %v145, %v257
  %259 = vmatmul.f32.gmra.mxu0 %v196
  %v260 = vpop.f32.mrf.mxu0
  %v261 = vadd.f32 %v148, %v260
  %262 = vmatmul.f32.gmra.mxu0 %v199
  %v263 = vpop.f32.mrf.mxu0
  %v264 = vadd.f32 %v151, %v263
  %265 = vmatmul.f32.gmra.mxu0 %v202
  %v266 = vpop.f32.mrf.mxu0
  %v267 = vadd.f32 %v154, %v266
  %268 = vmatmul.f32.gmra.mxu0 %v205
  %v269 = vpop.f32.mrf.mxu0
  %v270 = vadd.f32 %v157, %v269
  %271 = vmatmul.f32.gmra.mxu0 %v208
  %v272 = vpop.f32.mrf.mxu0
  %v273 = vadd.f32 %v160, %v272
  %274 = vmatmul.f32.gmra.mxu0 %v211
  %v275 = vpop.f32.mrf.mxu0
  %v276 = vadd.f32 %v163, %v275
  %277 = vmatmul.f32.gmra.mxu0 %v214
  %v278 = vpop.f32.mrf.mxu0
  %v279 = vadd.f32 %v166, %v278
  %280 = vmatmul.f32.gmra.mxu0 %v217
  %v281 = vpop.f32.mrf.mxu0
  %v282 = vadd.f32 %v169, %v281
  %283 = vmatmul.f32.gmra.mxu0 %v220
  %v284 = vpop.f32.mrf.mxu0
  %v285 = vadd.f32 %v172, %v284
  %286 = vmatmul.f32.gmra.mxu0 %v223
  %v287 = vpop.f32.mrf.mxu0
  %v288 = vadd.f32 %v175, %v287
  %289 = vmatmul.f32.gmra.mxu0 %v226
  %v290 = vpop.f32.mrf.mxu0
  %v291 = vadd.f32 %v178, %v290
  %292 = vdwg.mxu0
  %s293 = scalar_lea.vmem %s0, 16
  %v294 = vld [vmem:[%s293] sm:$0xff]
  %v295 = vld [vmem:[%s293 + $0x10] sm:$0xff]
  %v296 = vld [vmem:[%s293 + $0x20] sm:$0xff]
  %v297 = vld [vmem:[%s293 + $0x30] sm:$0xff]
  %v298 = vld [vmem:[%s293 + $0x40] sm:$0xff]
  %v299 = vld [vmem:[%s293 + $0x50] sm:$0xff]
  %v300 = vld [vmem:[%s293 + $0x60] sm:$0xff]
  %v301 = vld [vmem:[%s293 + $0x70] sm:$0xff]
  %v302 = vld [vmem:[%s293 + $0x90] sm:$0xff]
  %v303 = vld [vmem:[%s293 + $0xa0] sm:$0xff]
  %v304 = vld [vmem:[%s293 + $0xb0] sm:$0xff]
  %v305 = vld [vmem:[%s293 + $0xc0] sm:$0xff]
  %v306 = vld [vmem:[%s293 + $0xd0] sm:$0xff]
  %v307 = vld [vmem:[%s293 + $0xe0] sm:$0xff]
  %v308 = vld [vmem:[%s293 + $0xf0] sm:$0xff]
  %v309 = vld [vmem:[%s293 + $0x100] sm:$0xff]
  %s310 = scalar_lea.vmem %s1, 128
  %v311 = vld [vmem:[%s310] sm:$0xff]
  %v312 = vld [vmem:[%s310 + $0x8] sm:$0xff]
  %v313 = vld [vmem:[%s310 + $0x10] sm:$0xff]
  %v314 = vld [vmem:[%s310 + $0x18] sm:$0xff]
  %v315 = vld [vmem:[%s310 + $0x20] sm:$0xff]
  %v316 = vld [vmem:[%s310 + $0x28] sm:$0xff]
  %v317 = vld [vmem:[%s310 + $0x30] sm:$0xff]
  %v318 = vld [vmem:[%s310 + $0x38] sm:$0xff]
  %v320 = vsel %vm66, %v294, 0
  %v323 = vsel %vm66, %v295, 0
  %v326 = vsel %vm66, %v296, 0
  %v329 = vsel %vm66, %v297, 0
  %v332 = vsel %vm66, %v298, 0
  %v335 = vsel %vm66, %v299, 0
  %v338 = vsel %vm66, %v300, 0
  %v341 = vsel %vm66, %v301, 0
  %v344 = vsel %vm66, %v302, 0
  %v347 = vsel %vm66, %v303, 0
  %v350 = vsel %vm66, %v304, 0
  %v353 = vsel %vm66, %v305, 0
  %v356 = vsel %vm66, %v306, 0
  %v359 = vsel %vm66, %v307, 0
  %v362 = vsel %vm66, %v308, 0
  %v365 = vsel %vm66, %v309, 0
  %367 = vmatpush.msra.mxu0 0.0
  %368 = vmatpush.msra.mxu0 0.0
  %369 = vmatpush.msra.mxu0 0.0
  %370 = vmatpush.msra.mxu0 0.0
  %371 = vmatpush.msra.mxu0 0.0
  %372 = vmatpush.msra.mxu0 0.0
  %373 = vmatpush.msra.mxu0 0.0
  %374 = vmatpush.msra.mxu0 0.0
  %375 = vmatpush.msra.mxu0 %v318
  %376 = vmatpush.msra.mxu0 %v317
  %377 = vmatpush.msra.mxu0 %v316
  %378 = vmatpush.msra.mxu0 %v315
  %379 = vmatpush.msra.mxu0 %v314
  %380 = vmatpush.msra.mxu0 %v313
  %381 = vmatpush.msra.mxu0 %v312
  %382 = vmatpush.msra.mxu0 %v311
  %383 = vmatmul.f32.gmra.mxu0 %v320
  %v384 = vpop.f32.mrf.mxu0
  %v385 = vadd.f32 0.0, %v384
  %386 = vmatmul.f32.gmra.mxu0 %v323
  %v387 = vpop.f32.mrf.mxu0
  %v388 = vadd.f32 0.0, %v387
  %389 = vmatmul.f32.gmra.mxu0 %v326
  %v390 = vpop.f32.mrf.mxu0
  %v391 = vadd.f32 0.0, %v390
  %392 = vmatmul.f32.gmra.mxu0 %v329
  %v393 = vpop.f32.mrf.mxu0
  %v394 = vadd.f32 0.0, %v393
  %395 = vmatmul.f32.gmra.mxu0 %v332
  %v396 = vpop.f32.mrf.mxu0
  %v397 = vadd.f32 0.0, %v396
  %398 = vmatmul.f32.gmra.mxu0 %v335
  %v399 = vpop.f32.mrf.mxu0
  %v400 = vadd.f32 0.0, %v399
  %401 = vmatmul.f32.gmra.mxu0 %v338
  %v402 = vpop.f32.mrf.mxu0
  %v403 = vadd.f32 0.0, %v402
  %404 = vmatmul.f32.gmra.mxu0 %v341
  %v405 = vpop.f32.mrf.mxu0
  %v406 = vadd.f32 0.0, %v405
  %407 = vmatmul.f32.gmra.mxu0 %v344
  %v408 = vpop.f32.mrf.mxu0
  %v409 = vadd.f32 0.0, %v408
  %410 = vmatmul.f32.gmra.mxu0 %v347
  %v411 = vpop.f32.mrf.mxu0
  %v412 = vadd.f32 0.0, %v411
  %413 = vmatmul.f32.gmra.mxu0 %v350
  %v414 = vpop.f32.mrf.mxu0
  %v415 = vadd.f32 0.0, %v414
  %416 = vmatmul.f32.gmra.mxu0 %v353
  %v417 = vpop.f32.mrf.mxu0
  %v418 = vadd.f32 0.0, %v417
  %419 = vmatmul.f32.gmra.mxu0 %v356
  %v420 = vpop.f32.mrf.mxu0
  %v421 = vadd.f32 0.0, %v420
  %422 = vmatmul.f32.gmra.mxu0 %v359
  %v423 = vpop.f32.mrf.mxu0
  %v424 = vadd.f32 0.0, %v423
  %425 = vmatmul.f32.gmra.mxu0 %v362
  %v426 = vpop.f32.mrf.mxu0
  %v427 = vadd.f32 0.0, %v426
  %428 = vmatmul.f32.gmra.mxu0 %v365
  %v429 = vpop.f32.mrf.mxu0
  %v430 = vadd.f32 0.0, %v429
  %431 = vdwg.mxu0
  %v432 = vadd.f32 %v246, %v385
  %v433 = vadd.f32 %v249, %v388
  %v434 = vadd.f32 %v252, %v391
  %v435 = vadd.f32 %v255, %v394
  %v436 = vadd.f32 %v258, %v397
  %v437 = vadd.f32 %v261, %v400
  %v438 = vadd.f32 %v264, %v403
  %v439 = vadd.f32 %v267, %v406
  %v440 = vadd.f32 %v270, %v409
  %v441 = vadd.f32 %v273, %v412
  %v442 = vadd.f32 %v276, %v415
  %v443 = vadd.f32 %v279, %v418
  %v444 = vadd.f32 %v282, %v421
  %v445 = vadd.f32 %v285, %v424
  %v446 = vadd.f32 %v288, %v427
  %v447 = vadd.f32 %v291, %v430
  %v448 = vld [vmem:[%s293 + $0x1] sm:$0xff]
  %v449 = vld [vmem:[%s293 + $0x11] sm:$0xff]
  %v450 = vld [vmem:[%s293 + $0x21] sm:$0xff]
  %v451 = vld [vmem:[%s293 + $0x31] sm:$0xff]
  %v452 = vld [vmem:[%s293 + $0x41] sm:$0xff]
  %v453 = vld [vmem:[%s293 + $0x51] sm:$0xff]
  %v454 = vld [vmem:[%s293 + $0x61] sm:$0xff]
  %v455 = vld [vmem:[%s293 + $0x71] sm:$0xff]
  %v456 = vld [vmem:[%s293 + $0x91] sm:$0xff]
  %v457 = vld [vmem:[%s293 + $0xa1] sm:$0xff]
  %v458 = vld [vmem:[%s293 + $0xb1] sm:$0xff]
  %v459 = vld [vmem:[%s293 + $0xc1] sm:$0xff]
  %v460 = vld [vmem:[%s293 + $0xd1] sm:$0xff]
  %v461 = vld [vmem:[%s293 + $0xe1] sm:$0xff]
  %v462 = vld [vmem:[%s293 + $0xf1] sm:$0xff]
  %v463 = vld [vmem:[%s293 + $0x101] sm:$0xff]
  %s464 = scalar_lea.vmem %s1, 192
  %v465 = vld [vmem:[%s464] sm:$0xff]
  %v466 = vld [vmem:[%s464 + $0x8] sm:$0xff]
  %v467 = vld [vmem:[%s464 + $0x10] sm:$0xff]
  %v468 = vld [vmem:[%s464 + $0x18] sm:$0xff]
  %v469 = vld [vmem:[%s464 + $0x20] sm:$0xff]
  %v470 = vld [vmem:[%s464 + $0x28] sm:$0xff]
  %v471 = vld [vmem:[%s464 + $0x30] sm:$0xff]
  %v472 = vld [vmem:[%s464 + $0x38] sm:$0xff]
  %v474 = vsel %vm66, %v448, 0
  %v477 = vsel %vm66, %v449, 0
  %v480 = vsel %vm66, %v450, 0
  %v483 = vsel %vm66, %v451, 0
  %v486 = vsel %vm66, %v452, 0
  %v489 = vsel %vm66, %v453, 0
  %v492 = vsel %vm66, %v454, 0
  %v495 = vsel %vm66, %v455, 0
  %v498 = vsel %vm66, %v456, 0
  %v501 = vsel %vm66, %v457, 0
  %v504 = vsel %vm66, %v458, 0
  %v507 = vsel %vm66, %v459, 0
  %v510 = vsel %vm66, %v460, 0
  %v513 = vsel %vm66, %v461, 0
  %v516 = vsel %vm66, %v462, 0
  %v519 = vsel %vm66, %v463, 0
  %521 = vmatpush.msra.mxu0 0.0
  %522 = vmatpush.msra.mxu0 0.0
  %523 = vmatpush.msra.mxu0 0.0
  %524 = vmatpush.msra.mxu0 0.0
  %525 = vmatpush.msra.mxu0 0.0
  %526 = vmatpush.msra.mxu0 0.0
  %527 = vmatpush.msra.mxu0 0.0
  %528 = vmatpush.msra.mxu0 0.0
  %529 = vmatpush.msra.mxu0 %v472
  %530 = vmatpush.msra.mxu0 %v471
  %531 = vmatpush.msra.mxu0 %v470
  %532 = vmatpush.msra.mxu0 %v469
  %533 = vmatpush.msra.mxu0 %v468
  %534 = vmatpush.msra.mxu0 %v467
  %535 = vmatpush.msra.mxu0 %v466
  %536 = vmatpush.msra.mxu0 %v465
  %537 = vmatmul.f32.gmra.mxu0 %v474
  %v538 = vpop.f32.mrf.mxu0
  %v539 = vadd.f32 0.0, %v538
  %540 = vmatmul.f32.gmra.mxu0 %v477
  %v541 = vpop.f32.mrf.mxu0
  %v542 = vadd.f32 0.0, %v541
  %543 = vmatmul.f32.gmra.mxu0 %v480
  %v544 = vpop.f32.mrf.mxu0
  %v545 = vadd.f32 0.0, %v544
  %546 = vmatmul.f32.gmra.mxu0 %v483
  %v547 = vpop.f32.mrf.mxu0
  %v548 = vadd.f32 0.0, %v547
  %549 = vmatmul.f32.gmra.mxu0 %v486
  %v550 = vpop.f32.mrf.mxu0
  %v551 = vadd.f32 0.0, %v550
  %552 = vmatmul.f32.gmra.mxu0 %v489
  %v553 = vpop.f32.mrf.mxu0
  %v554 = vadd.f32 0.0, %v553
  %555 = vmatmul.f32.gmra.mxu0 %v492
  %v556 = vpop.f32.mrf.mxu0
  %v557 = vadd.f32 0.0, %v556
  %558 = vmatmul.f32.gmra.mxu0 %v495
  %v559 = vpop.f32.mrf.mxu0
  %v560 = vadd.f32 0.0, %v559
  %561 = vmatmul.f32.gmra.mxu0 %v498
  %v562 = vpop.f32.mrf.mxu0
  %v563 = vadd.f32 0.0, %v562
  %564 = vmatmul.f32.gmra.mxu0 %v501
  %v565 = vpop.f32.mrf.mxu0
  %v566 = vadd.f32 0.0, %v565
  %567 = vmatmul.f32.gmra.mxu0 %v504
  %v568 = vpop.f32.mrf.mxu0
  %v569 = vadd.f32 0.0, %v568
  %570 = vmatmul.f32.gmra.mxu0 %v507
  %v571 = vpop.f32.mrf.mxu0
  %v572 = vadd.f32 0.0, %v571
  %573 = vmatmul.f32.gmra.mxu0 %v510
  %v574 = vpop.f32.mrf.mxu0
  %v575 = vadd.f32 0.0, %v574
  %576 = vmatmul.f32.gmra.mxu0 %v513
  %v577 = vpop.f32.mrf.mxu0
  %v578 = vadd.f32 0.0, %v577
  %579 = vmatmul.f32.gmra.mxu0 %v516
  %v580 = vpop.f32.mrf.mxu0
  %v581 = vadd.f32 0.0, %v580
  %582 = vmatmul.f32.gmra.mxu0 %v519
  %v583 = vpop.f32.mrf.mxu0
  %v584 = vadd.f32 0.0, %v583
  %585 = vdwg.mxu0
  %v586 = vadd.f32 %v432, %v539
  %v587 = vadd.f32 %v433, %v542
  %v588 = vadd.f32 %v434, %v545
  %v589 = vadd.f32 %v435, %v548
  %v590 = vadd.f32 %v436, %v551
  %v591 = vadd.f32 %v437, %v554
  %v592 = vadd.f32 %v438, %v557
  %v593 = vadd.f32 %v439, %v560
  %v594 = vadd.f32 %v440, %v563
  %v595 = vadd.f32 %v441, %v566
  %v596 = vadd.f32 %v442, %v569
  %v597 = vadd.f32 %v443, %v572
  %v598 = vadd.f32 %v444, %v575
  %v599 = vadd.f32 %v445, %v578
  %v600 = vadd.f32 %v446, %v581
  %v601 = vadd.f32 %v447, %v584
  %v602 = vld [vmem:[%s2] sm:$0x1]
  %v604 = vperm.slane %v602, 0
  %v606 = vmul.f32 %v586, %v604
  %v607 = vmul.f32 %v587, %v604
  %v608 = vmul.f32 %v588, %v604
  %v609 = vmul.f32 %v589, %v604
  %v610 = vmul.f32 %v590, %v604
  %v611 = vmul.f32 %v591, %v604
  %v612 = vmul.f32 %v592, %v604
  %v613 = vmul.f32 %v593, %v604
  %v614 = vmul.f32 %v594, %v604
  %v615 = vmul.f32 %v595, %v604
  %v616 = vmul.f32 %v596, %v604
  %v617 = vmul.f32 %v597, %v604
  %v618 = vmul.f32 %v598, %v604
  %v619 = vmul.f32 %v599, %v604
  %v620 = vmul.f32 %v600, %v604
  %v621 = vmul.f32 %v601, %v604
  %v622 = vld [vmem:[%s3] sm:$0x1]
  %v624 = vperm.slane %v622, 0
  %v626 = vadd.f32 %v606, %v624
  %v627 = vadd.f32 %v607, %v624
  %v628 = vadd.f32 %v608, %v624
  %v629 = vadd.f32 %v609, %v624
  %v630 = vadd.f32 %v610, %v624
  %v631 = vadd.f32 %v611, %v624
  %v632 = vadd.f32 %v612, %v624
  %v633 = vadd.f32 %v613, %v624
  %v634 = vadd.f32 %v614, %v624
  %v635 = vadd.f32 %v615, %v624
  %v636 = vadd.f32 %v616, %v624
  %v637 = vadd.f32 %v617, %v624
  %v638 = vadd.f32 %v618, %v624
  %v639 = vadd.f32 %v619, %v624
  %v640 = vadd.f32 %v620, %v624
  %v641 = vadd.f32 %v621, %v624
  %v642 = vmul.f32 %v626, 0.2
  %v643 = vmul.f32 %v627, 0.2
  %v644 = vmul.f32 %v628, 0.2
  %v645 = vmul.f32 %v629, 0.2
  %v646 = vmul.f32 %v630, 0.2
  %v647 = vmul.f32 %v631, 0.2
  %v648 = vmul.f32 %v632, 0.2
  %v649 = vmul.f32 %v633, 0.2
  %v650 = vmul.f32 %v634, 0.2
  %v651 = vmul.f32 %v635, 0.2
  %v652 = vmul.f32 %v636, 0.2
  %v653 = vmul.f32 %v637, 0.2
  %v654 = vmul.f32 %v638, 0.2
  %v655 = vmul.f32 %v639, 0.2
  %v656 = vmul.f32 %v640, 0.2
  %v657 = vmul.f32 %v641, 0.2
  %v658 = vmax.f32 %v626, %v642
  %v659 = vmax.f32 %v627, %v643
  %v660 = vmax.f32 %v628, %v644
  %v661 = vmax.f32 %v629, %v645
  %v662 = vmax.f32 %v630, %v646
  %v663 = vmax.f32 %v631, %v647
  %v664 = vmax.f32 %v632, %v648
  %v665 = vmax.f32 %v633, %v649
  %v666 = vmax.f32 %v634, %v650
  %v667 = vmax.f32 %v635, %v651
  %v668 = vmax.f32 %v636, %v652
  %v669 = vmax.f32 %v637, %v653
  %v670 = vmax.f32 %v638, %v654
  %v671 = vmax.f32 %v639, %v655
  %v672 = vmax.f32 %v640, %v656
  %v673 = vmax.f32 %v641, %v657
  %vm674 = vcmask 261120
  %675 = vst.msk [vmem:[%s4] sm:$0xff] %vm674, %v658
  %676 = vst.msk [vmem:[%s4 + $0x8] sm:$0xff] %vm674, %v659
  %677 = vst.msk [vmem:[%s4 + $0x10] sm:$0xff] %vm674, %v660
  %678 = vst.msk [vmem:[%s4 + $0x18] sm:$0xff] %vm674, %v661
  %679 = vst.msk [vmem:[%s4 + $0x20] sm:$0xff] %vm674, %v662
  %680 = vst.msk [vmem:[%s4 + $0x28] sm:$0xff] %vm674, %v663
  %681 = vst.msk [vmem:[%s4 + $0x30] sm:$0xff] %vm674, %v664
  %682 = vst.msk [vmem:[%s4 + $0x38] sm:$0xff] %vm674, %v665
  %683 = vst.msk [vmem:[%s4 + $0x40] sm:$0xff] %vm674, %v666
  %684 = vst.msk [vmem:[%s4 + $0x48] sm:$0xff] %vm674, %v667
  %685 = vst.msk [vmem:[%s4 + $0x50] sm:$0xff] %vm674, %v668
  %686 = vst.msk [vmem:[%s4 + $0x58] sm:$0xff] %vm674, %v669
  %687 = vst.msk [vmem:[%s4 + $0x60] sm:$0xff] %vm674, %v670
  %688 = vst.msk [vmem:[%s4 + $0x68] sm:$0xff] %vm674, %v671
  %689 = vst.msk [vmem:[%s4 + $0x70] sm:$0xff] %vm674, %v672
  %690 = vst.msk [vmem:[%s4 + $0x78] sm:$0xff] %vm674, %v673
  // Predicated region
  $region18: #{discriminator_forward.7} parent=0 // pred_check
    _
  $region19: #{discriminator_forward.7} parent=0 // pred_check_branch
    %692 = sbr.rel (0) target = $region21
  $region20: #{discriminator_forward.7} parent=0 // pred_region
    _
  $region21: #{discriminator_forward.7} parent=0 // pred_fallthru
    _
  // Predicated region
  $region22: #{discriminator_forward.7} parent=0 // pred_check
    _
  $region23: #{discriminator_forward.7} parent=0 // pred_check_branch
    %694 = sbr.rel (0) target = $region25
  $region24: #{discriminator_forward.7} parent=0 // pred_region
    _
  $region25: #{discriminator_forward.7} parent=0 // pred_fallthru
    _

// kernel: discriminator_forward.8
$region0: #{discriminator_forward.8}
  #allocation0 [shape = 'u32[]', space=smem, size = 0x4, offset = 0x4, fixed_abs, tag = 'smem constant byte address 0x4 - core index']
  #allocation1 [shape = 'u32[72,128]{1,0:T(1,128)}', space=vmem, size = 0x9000, scoped, tag = 'internal scratch']
  %s0 = inlined_call_operand.vmem [shape: f32[2,5,5,128], index: 0, kind: input, shape index: {}]
  %s1 = inlined_call_operand.vmem [shape: f32[2,2,128,64], index: 1, kind: input, shape index: {}]
  %s2 = inlined_call_operand.vmem [shape: f32[1,64], index: 2, kind: input, shape index: {}]
  %s3 = inlined_call_operand.vmem [shape: f32[1,64], index: 3, kind: input, shape index: {}]
  %s4 = inlined_call_operand.vmem [shape: f32[32,64], index: 4, kind: output, shape index: {}]
  %s5 = sld [smem:[#allocation0]]
  $region26: #{discriminator_forward.8} parent=0
    _
  %s7 = ssub.s32 1, %s5
  %s8 = scalar_select 0, %s7, %s5
  // Predicated region
  $region2: #{discriminator_forward.8} parent=0 // pred_check
    _
  $region3: #{discriminator_forward.8} parent=0 // pred_check_branch
    %10 = sbr.rel (0) target = $region5
  $region4: #{discriminator_forward.8} parent=0 // pred_region
    _
  $region5: #{discriminator_forward.8} parent=0 // pred_fallthru
    _
  // Predicated region
  $region6: #{discriminator_forward.8} parent=0 // pred_check
    _
  $region7: #{discriminator_forward.8} parent=0 // pred_check_branch
    %12 = sbr.rel (0) target = $region9
  $region8: #{discriminator_forward.8} parent=0 // pred_region
    _
  $region9: #{discriminator_forward.8} parent=0 // pred_fallthru
    _
  // Predicated region
  $region10: #{discriminator_forward.8} parent=0 // pred_check
    _
  $region11: #{discriminator_forward.8} parent=0 // pred_check_branch
    %14 = sbr.rel (0) target = $region13
  $region12: #{discriminator_forward.8} parent=0 // pred_region
    _
  $region13: #{discriminator_forward.8} parent=0 // pred_fallthru
    _
  // Predicated region
  $region14: #{discriminator_forward.8} parent=0 // pred_check
    _
  $region15: #{discriminator_forward.8} parent=0 // pred_check_branch
    %16 = sbr.rel (0) target = $region17
  $region16: #{discriminator_forward.8} parent=0 // pred_region
    _
  $region17: #{discriminator_forward.8} parent=0 // pred_fallthru
    _
  %v17 = vld [vmem:[%s0] sm:$0xf]
  %v18 = vld [vmem:[%s0 + $0x8] sm:$0xf]
  %v19 = vld [vmem:[%s0 + $0x10] sm:$0xf]
  %v20 = vld [vmem:[%s0 + $0x18] sm:$0xf]
  %v21 = vld [vmem:[%s0 + $0x28] sm:$0xf]
  %v22 = vld [vmem:[%s0 + $0x30] sm:$0xf]
  %v23 = vld [vmem:[%s0 + $0x38] sm:$0xf]
  %v24 = vld [vmem:[%s0 + $0x40] sm:$0xf]
  %v25 = vld [vmem:[%s1] sm:$0xff]
  %v26 = vld [vmem:[%s1 + $0x8] sm:$0xff]
  %v27 = vld [vmem:[%s1 + $0x10] sm:$0xff]
  %v28 = vld [vmem:[%s1 + $0x18] sm:$0xff]
  %v29 = vld [vmem:[%s1 + $0x20] sm:$0xff]
  %v30 = vld [vmem:[%s1 + $0x28] sm:$0xff]
  %v31 = vld [vmem:[%s1 + $0x30] sm:$0xff]
  %v32 = vld [vmem:[%s1 + $0x38] sm:$0xff]
  %v33 = vld [vmem:[%s1 + $0x40] sm:$0xff]
  %v34 = vld [vmem:[%s1 + $0x48] sm:$0xff]
  %v35 = vld [vmem:[%s1 + $0x50] sm:$0xff]
  %v36 = vld [vmem:[%s1 + $0x58] sm:$0xff]
  %v37 = vld [vmem:[%s1 + $0x60] sm:$0xff]
  %v38 = vld [vmem:[%s1 + $0x68] sm:$0xff]
  %v39 = vld [vmem:[%s1 + $0x70] sm:$0xff]
  %v40 = vld [vmem:[%s1 + $0x78] sm:$0xff]
  %v41 = vld [vmem:[%s0 + $0x1] sm:$0xf]
  %v42 = vld [vmem:[%s0 + $0x9] sm:$0xf]
  %v43 = vld [vmem:[%s0 + $0x11] sm:$0xf]
  %v44 = vld [vmem:[%s0 + $0x19] sm:$0xf]
  %v45 = vld [vmem:[%s0 + $0x29] sm:$0xf]
  %v46 = vld [vmem:[%s0 + $0x31] sm:$0xf]
  %v47 = vld [vmem:[%s0 + $0x39] sm:$0xf]
  %v48 = vld [vmem:[%s0 + $0x41] sm:$0xf]
  %s49 = scalar_lea.vmem %s1, 128
  %v50 = vld [vmem:[%s49] sm:$0xff]
  %v51 = vld [vmem:[%s49 + $0x8] sm:$0xff]
  %v52 = vld [vmem:[%s49 + $0x10] sm:$0xff]
  %v53 = vld [vmem:[%s49 + $0x18] sm:$0xff]
  %v54 = vld [vmem:[%s49 + $0x20] sm:$0xff]
  %v55 = vld [vmem:[%s49 + $0x28] sm:$0xff]
  %v56 = vld [vmem:[%s49 + $0x30] sm:$0xff]
  %v57 = vld [vmem:[%s49 + $0x38] sm:$0xff]
  %v58 = vld [vmem:[%s49 + $0x40] sm:$0xff]
  %v59 = vld [vmem:[%s49 + $0x48] sm:$0xff]
  %v60 = vld [vmem:[%s49 + $0x50] sm:$0xff]
  %v61 = vld [vmem:[%s49 + $0x58] sm:$0xff]
  %v62 = vld [vmem:[%s49 + $0x60] sm:$0xff]
  %v63 = vld [vmem:[%s49 + $0x68] sm:$0xff]
  %v64 = vld [vmem:[%s49 + $0x70] sm:$0xff]
  %v65 = vld [vmem:[%s49 + $0x78] sm:$0xff]
  %74 = vst [vmem:[#allocation1] ss:$2 sm:$0xff] %v41
  %s75 = scalar_lea.vmem [#allocation1], 1
  %76 = vst [vmem:[%s75] ss:$2 sm:$0xff] %v42
  %s77 = scalar_lea.vmem [#allocation1], 16
  %78 = vst [vmem:[%s77] ss:$2 sm:$0xff] %v43
  %s79 = scalar_lea.vmem [#allocation1], 17
  %80 = vst [vmem:[%s79] ss:$2 sm:$0xff] %v44
  %s81 = scalar_lea.vmem [#allocation1], 32
  %82 = vst [vmem:[%s81] ss:$2 sm:$0xff] %v45
  %s83 = scalar_lea.vmem [#allocation1], 33
  %84 = vst [vmem:[%s83] ss:$2 sm:$0xff] %v46
  %s85 = scalar_lea.vmem [#allocation1], 48
  %86 = vst [vmem:[%s85] ss:$2 sm:$0xff] %v47
  %s87 = scalar_lea.vmem [#allocation1], 49
  %88 = vst [vmem:[%s87] ss:$2 sm:$0xff] %v48
  %v89 = vld.sshfl [vmem:[#allocation1] sm:$0xff pattern:$0x75316420]
  %v90 = vld.sshfl [vmem:[#allocation1 + $0x10] sm:$0xff pattern:$0x75316420]
  %v91 = vld.sshfl [vmem:[#allocation1 + $0x20] sm:$0xff pattern:$0x75316420]
  %v92 = vld.sshfl [vmem:[#allocation1 + $0x30] sm:$0xff pattern:$0x75316420]
  %97 = vmatpush.msra.mxu0 %v65
  %98 = vmatpush.msra.mxu0 %v64
  %99 = vmatpush.msra.mxu0 %v63
  %100 = vmatpush.msra.mxu0 %v62
  %101 = vmatpush.msra.mxu0 %v61
  %102 = vmatpush.msra.mxu0 %v60
  %103 = vmatpush.msra.mxu0 %v59
  %104 = vmatpush.msra.mxu0 %v58
  %105 = vmatpush.msra.mxu0 %v57
  %106 = vmatpush.msra.mxu0 %v56
  %107 = vmatpush.msra.mxu0 %v55
  %108 = vmatpush.msra.mxu0 %v54
  %109 = vmatpush.msra.mxu0 %v53
  %110 = vmatpush.msra.mxu0 %v52
  %111 = vmatpush.msra.mxu0 %v51
  %112 = vmatpush.msra.mxu0 %v50
  %113 = vmatmul.f32.gmra.mxu0 %v89
  %v114 = vpop.f32.mrf.mxu0
  %v115 = vadd.f32 0.0, %v114
  %116 = vmatmul.f32.gmra.mxu0 %v90
  %v117 = vpop.f32.mrf.mxu0
  %v118 = vadd.f32 0.0, %v117
  %119 = vmatmul.f32.gmra.mxu0 %v91
  %v120 = vpop.f32.mrf.mxu0
  %v121 = vadd.f32 0.0, %v120
  %122 = vmatmul.f32.gmra.mxu0 %v92
  %v123 = vpop.f32.mrf.mxu0
  %v124 = vadd.f32 0.0, %v123
  %125 = vdwg.mxu0
  %134 = vst [vmem:[#allocation1] ss:$2 sm:$0xff] %v17
  %s135 = scalar_lea.vmem [#allocation1], 1
  %136 = vst [vmem:[%s135] ss:$2 sm:$0xff] %v18
  %s137 = scalar_lea.vmem [#allocation1], 16
  %138 = vst [vmem:[%s137] ss:$2 sm:$0xff] %v19
  %s139 = scalar_lea.vmem [#allocation1], 17
  %140 = vst [vmem:[%s139] ss:$2 sm:$0xff] %v20
  %s141 = scalar_lea.vmem [#allocation1], 32
  %142 = vst [vmem:[%s141] ss:$2 sm:$0xff] %v21
  %s143 = scalar_lea.vmem [#allocation1], 33
  %144 = vst [vmem:[%s143] ss:$2 sm:$0xff] %v22
  %s145 = scalar_lea.vmem [#allocation1], 48
  %146 = vst [vmem:[%s145] ss:$2 sm:$0xff] %v23
  %s147 = scalar_lea.vmem [#allocation1], 49
  %148 = vst [vmem:[%s147] ss:$2 sm:$0xff] %v24
  %v149 = vld.sshfl [vmem:[#allocation1] sm:$0xff pattern:$0x75316420]
  %v150 = vld.sshfl [vmem:[#allocation1 + $0x10] sm:$0xff pattern:$0x75316420]
  %v151 = vld.sshfl [vmem:[#allocation1 + $0x20] sm:$0xff pattern:$0x75316420]
  %v152 = vld.sshfl [vmem:[#allocation1 + $0x30] sm:$0xff pattern:$0x75316420]
  %157 = vmatpush.msra.mxu0 %v40
  %158 = vmatpush.msra.mxu0 %v39
  %159 = vmatpush.msra.mxu0 %v38
  %160 = vmatpush.msra.mxu0 %v37
  %161 = vmatpush.msra.mxu0 %v36
  %162 = vmatpush.msra.mxu0 %v35
  %163 = vmatpush.msra.mxu0 %v34
  %164 = vmatpush.msra.mxu0 %v33
  %165 = vmatpush.msra.mxu0 %v32
  %166 = vmatpush.msra.mxu0 %v31
  %167 = vmatpush.msra.mxu0 %v30
  %168 = vmatpush.msra.mxu0 %v29
  %169 = vmatpush.msra.mxu0 %v28
  %170 = vmatpush.msra.mxu0 %v27
  %171 = vmatpush.msra.mxu0 %v26
  %172 = vmatpush.msra.mxu0 %v25
  %173 = vmatmul.f32.gmra.mxu0 %v149
  %v174 = vpop.f32.mrf.mxu0
  %v175 = vadd.f32 %v115, %v174
  %176 = vmatmul.f32.gmra.mxu0 %v150
  %v177 = vpop.f32.mrf.mxu0
  %v178 = vadd.f32 %v118, %v177
  %179 = vmatmul.f32.gmra.mxu0 %v151
  %v180 = vpop.f32.mrf.mxu0
  %v181 = vadd.f32 %v121, %v180
  %182 = vmatmul.f32.gmra.mxu0 %v152
  %v183 = vpop.f32.mrf.mxu0
  %v184 = vadd.f32 %v124, %v183
  %185 = vdwg.mxu0
  %s186 = scalar_lea.vmem %s0, 8
  %v187 = vld [vmem:[%s186] sm:$0xf]
  %v188 = vld [vmem:[%s186 + $0x8] sm:$0xf]
  %v189 = vld [vmem:[%s186 + $0x10] sm:$0xf]
  %v190 = vld [vmem:[%s186 + $0x18] sm:$0xf]
  %v191 = vld [vmem:[%s186 + $0x28] sm:$0xf]
  %v192 = vld [vmem:[%s186 + $0x30] sm:$0xf]
  %v193 = vld [vmem:[%s186 + $0x38] sm:$0xf]
  %v194 = vld [vmem:[%s186 + $0x40] sm:$0xf]
  %s195 = scalar_lea.vmem %s1, 256
  %v196 = vld [vmem:[%s195] sm:$0xff]
  %v197 = vld [vmem:[%s195 + $0x8] sm:$0xff]
  %v198 = vld [vmem:[%s195 + $0x10] sm:$0xff]
  %v199 = vld [vmem:[%s195 + $0x18] sm:$0xff]
  %v200 = vld [vmem:[%s195 + $0x20] sm:$0xff]
  %v201 = vld [vmem:[%s195 + $0x28] sm:$0xff]
  %v202 = vld [vmem:[%s195 + $0x30] sm:$0xff]
  %v203 = vld [vmem:[%s195 + $0x38] sm:$0xff]
  %v204 = vld [vmem:[%s195 + $0x40] sm:$0xff]
  %v205 = vld [vmem:[%s195 + $0x48] sm:$0xff]
  %v206 = vld [vmem:[%s195 + $0x50] sm:$0xff]
  %v207 = vld [vmem:[%s195 + $0x58] sm:$0xff]
  %v208 = vld [vmem:[%s195 + $0x60] sm:$0xff]
  %v209 = vld [vmem:[%s195 + $0x68] sm:$0xff]
  %v210 = vld [vmem:[%s195 + $0x70] sm:$0xff]
  %v211 = vld [vmem:[%s195 + $0x78] sm:$0xff]
  %220 = vst [vmem:[#allocation1] ss:$2 sm:$0xff] %v187
  %s221 = scalar_lea.vmem [#allocation1], 1
  %222 = vst [vmem:[%s221] ss:$2 sm:$0xff] %v188
  %s223 = scalar_lea.vmem [#allocation1], 16
  %224 = vst [vmem:[%s223] ss:$2 sm:$0xff] %v189
  %s225 = scalar_lea.vmem [#allocation1], 17
  %226 = vst [vmem:[%s225] ss:$2 sm:$0xff] %v190
  %s227 = scalar_lea.vmem [#allocation1], 32
  %228 = vst [vmem:[%s227] ss:$2 sm:$0xff] %v191
  %s229 = scalar_lea.vmem [#allocation1], 33
  %230 = vst [vmem:[%s229] ss:$2 sm:$0xff] %v192
  %s231 = scalar_lea.vmem [#allocation1], 48
  %232 = vst [vmem:[%s231] ss:$2 sm:$0xff] %v193
  %s233 = scalar_lea.vmem [#allocation1], 49
  %234 = vst [vmem:[%s233] ss:$2 sm:$0xff] %v194
  %v235 = vld.sshfl [vmem:[#allocation1] sm:$0xff pattern:$0x75316420]
  %v236 = vld.sshfl [vmem:[#allocation1 + $0x10] sm:$0xff pattern:$0x75316420]
  %v237 = vld.sshfl [vmem:[#allocation1 + $0x20] sm:$0xff pattern:$0x75316420]
  %v238 = vld.sshfl [vmem:[#allocation1 + $0x30] sm:$0xff pattern:$0x75316420]
  %243 = vmatpush.msra.mxu0 %v211
  %244 = vmatpush.msra.mxu0 %v210
  %245 = vmatpush.msra.mxu0 %v209
  %246 = vmatpush.msra.mxu0 %v208
  %247 = vmatpush.msra.mxu0 %v207
  %248 = vmatpush.msra.mxu0 %v206
  %249 = vmatpush.msra.mxu0 %v205
  %250 = vmatpush.msra.mxu0 %v204
  %251 = vmatpush.msra.mxu0 %v203
  %252 = vmatpush.msra.mxu0 %v202
  %253 = vmatpush.msra.mxu0 %v201
  %254 = vmatpush.msra.mxu0 %v200
  %255 = vmatpush.msra.mxu0 %v199
  %256 = vmatpush.msra.mxu0 %v198
  %257 = vmatpush.msra.mxu0 %v197
  %258 = vmatpush.msra.mxu0 %v196
  %259 = vmatmul.f32.gmra.mxu0 %v235
  %v260 = vpop.f32.mrf.mxu0
  %v261 = vadd.f32 0.0, %v260
  %262 = vmatmul.f32.gmra.mxu0 %v236
  %v263 = vpop.f32.mrf.mxu0
  %v264 = vadd.f32 0.0, %v263
  %265 = vmatmul.f32.gmra.mxu0 %v237
  %v266 = vpop.f32.mrf.mxu0
  %v267 = vadd.f32 0.0, %v266
  %268 = vmatmul.f32.gmra.mxu0 %v238
  %v269 = vpop.f32.mrf.mxu0
  %v270 = vadd.f32 0.0, %v269
  %271 = vdwg.mxu0
  %v272 = vadd.f32 %v175, %v261
  %v273 = vadd.f32 %v178, %v264
  %v274 = vadd.f32 %v181, %v267
  %v275 = vadd.f32 %v184, %v270
  %v276 = vld [vmem:[%s186 + $0x1] sm:$0xf]
  %v277 = vld [vmem:[%s186 + $0x9] sm:$0xf]
  %v278 = vld [vmem:[%s186 + $0x11] sm:$0xf]
  %v279 = vld [vmem:[%s186 + $0x19] sm:$0xf]
  %v280 = vld [vmem:[%s186 + $0x29] sm:$0xf]
  %v281 = vld [vmem:[%s186 + $0x31] sm:$0xf]
  %v282 = vld [vmem:[%s186 + $0x39] sm:$0xf]
  %v283 = vld [vmem:[%s186 + $0x41] sm:$0xf]
  %s284 = scalar_lea.vmem %s1, 384
  %v285 = vld [vmem:[%s284] sm:$0xff]
  %v286 = vld [vmem:[%s284 + $0x8] sm:$0xff]
  %v287 = vld [vmem:[%s284 + $0x10] sm:$0xff]
  %v288 = vld [vmem:[%s284 + $0x18] sm:$0xff]
  %v289 = vld [vmem:[%s284 + $0x20] sm:$0xff]
  %v290 = vld [vmem:[%s284 + $0x28] sm:$0xff]
  %v291 = vld [vmem:[%s284 + $0x30] sm:$0xff]
  %v292 = vld [vmem:[%s284 + $0x38] sm:$0xff]
  %v293 = vld [vmem:[%s284 + $0x40] sm:$0xff]
  %v294 = vld [vmem:[%s284 + $0x48] sm:$0xff]
  %v295 = vld [vmem:[%s284 + $0x50] sm:$0xff]
  %v296 = vld [vmem:[%s284 + $0x58] sm:$0xff]
  %v297 = vld [vmem:[%s284 + $0x60] sm:$0xff]
  %v298 = vld [vmem:[%s284 + $0x68] sm:$0xff]
  %v299 = vld [vmem:[%s284 + $0x70] sm:$0xff]
  %v300 = vld [vmem:[%s284 + $0x78] sm:$0xff]
  %309 = vst [vmem:[#allocation1] ss:$2 sm:$0xff] %v276
  %s310 = scalar_lea.vmem [#allocation1], 1
  %311 = vst [vmem:[%s310] ss:$2 sm:$0xff] %v277
  %s312 = scalar_lea.vmem [#allocation1], 16
  %313 = vst [vmem:[%s312] ss:$2 sm:$0xff] %v278
  %s314 = scalar_lea.vmem [#allocation1], 17
  %315 = vst [vmem:[%s314] ss:$2 sm:$0xff] %v279
  %s316 = scalar_lea.vmem [#allocation1], 32
  %317 = vst [vmem:[%s316] ss:$2 sm:$0xff] %v280
  %s318 = scalar_lea.vmem [#allocation1], 33
  %319 = vst [vmem:[%s318] ss:$2 sm:$0xff] %v281
  %s320 = scalar_lea.vmem [#allocation1], 48
  %321 = vst [vmem:[%s320] ss:$2 sm:$0xff] %v282
  %s322 = scalar_lea.vmem [#allocation1], 49
  %323 = vst [vmem:[%s322] ss:$2 sm:$0xff] %v283
  %v324 = vld.sshfl [vmem:[#allocation1] sm:$0xff pattern:$0x75316420]
  %v325 = vld.sshfl [vmem:[#allocation1 + $0x10] sm:$0xff pattern:$0x75316420]
  %v326 = vld.sshfl [vmem:[#allocation1 + $0x20] sm:$0xff pattern:$0x75316420]
  %v327 = vld.sshfl [vmem:[#allocation1 + $0x30] sm:$0xff pattern:$0x75316420]
  %332 = vmatpush.msra.mxu0 %v300
  %333 = vmatpush.msra.mxu0 %v299
  %334 = vmatpush.msra.mxu0 %v298
  %335 = vmatpush.msra.mxu0 %v297
  %336 = vmatpush.msra.mxu0 %v296
  %337 = vmatpush.msra.mxu0 %v295
  %338 = vmatpush.msra.mxu0 %v294
  %339 = vmatpush.msra.mxu0 %v293
  %340 = vmatpush.msra.mxu0 %v292
  %341 = vmatpush.msra.mxu0 %v291
  %342 = vmatpush.msra.mxu0 %v290
  %343 = vmatpush.msra.mxu0 %v289
  %344 = vmatpush.msra.mxu0 %v288
  %345 = vmatpush.msra.mxu0 %v287
  %346 = vmatpush.msra.mxu0 %v286
  %347 = vmatpush.msra.mxu0 %v285
  %348 = vmatmul.f32.gmra.mxu0 %v324
  %v349 = vpop.f32.mrf.mxu0
  %v350 = vadd.f32 0.0, %v349
  %351 = vmatmul.f32.gmra.mxu0 %v325
  %v352 = vpop.f32.mrf.mxu0
  %v353 = vadd.f32 0.0, %v352
  %354 = vmatmul.f32.gmra.mxu0 %v326
  %v355 = vpop.f32.mrf.mxu0
  %v356 = vadd.f32 0.0, %v355
  %357 = vmatmul.f32.gmra.mxu0 %v327
  %v358 = vpop.f32.mrf.mxu0
  %v359 = vadd.f32 0.0, %v358
  %360 = vdwg.mxu0
  %v361 = vadd.f32 %v272, %v350
  %v362 = vadd.f32 %v273, %v353
  %v363 = vadd.f32 %v274, %v356
  %v364 = vadd.f32 %v275, %v359
  %v365 = vld [vmem:[%s2] sm:$0x1]
  %v367 = vperm.slane %v365, 0
  %v369 = vmul.f32 %v361, %v367
  %v370 = vmul.f32 %v362, %v367
  %v371 = vmul.f32 %v363, %v367
  %v372 = vmul.f32 %v364, %v367
  %v373 = vld [vmem:[%s3] sm:$0x1]
  %v375 = vperm.slane %v373, 0
  %v377 = vadd.f32 %v369, %v375
  %v378 = vadd.f32 %v370, %v375
  %v379 = vadd.f32 %v371, %v375
  %v380 = vadd.f32 %v372, %v375
  %v381 = vmul.f32 %v377, 0.2
  %v382 = vmul.f32 %v378, 0.2
  %v383 = vmul.f32 %v379, 0.2
  %v384 = vmul.f32 %v380, 0.2
  %v385 = vmax.f32 %v377, %v381
  %v386 = vmax.f32 %v378, %v382
  %v387 = vmax.f32 %v379, %v383
  %v388 = vmax.f32 %v380, %v384
  %vm389 = vcmask 523264
  %390 = vst.msk [vmem:[%s4] sm:$0xff] %vm389, %v385
  %391 = vst.msk [vmem:[%s4 + $0x8] sm:$0xff] %vm389, %v386
  %392 = vst.msk [vmem:[%s4 + $0x10] sm:$0xff] %vm389, %v387
  %393 = vst.msk [vmem:[%s4 + $0x18] sm:$0xff] %vm389, %v388
  // Predicated region
  $region18: #{discriminator_forward.8} parent=0 // pred_check
    _
  $region19: #{discriminator_forward.8} parent=0 // pred_check_branch
    %395 = sbr.rel (0) target = $region21
  $region20: #{discriminator_forward.8} parent=0 // pred_region
    _
  $region21: #{discriminator_forward.8} parent=0 // pred_fallthru
    _
  // Predicated region
  $region22: #{discriminator_forward.8} parent=0 // pred_check
    _
  $region23: #{discriminator_forward.8} parent=0 // pred_check_branch
    %397 = sbr.rel (0) target = $region25
  $region24: #{discriminator_forward.8} parent=0 // pred_region
    _
  $region25: #{discriminator_forward.8} parent=0 // pred_fallthru
    _

// kernel: discriminator_forward.9
$region0: #{discriminator_forward.9}
  #allocation0 [shape = 'u32[]', space=smem, size = 0x4, offset = 0x4, fixed_abs, tag = 'smem constant byte address 0x4 - core index']
  #allocation1 [shape = 'u32[72,128]{1,0:T(1,128)}', space=vmem, size = 0x9000, scoped, tag = 'internal scratch']
  %s0 = inlined_call_operand.vmem [shape: f32[2,1024], index: 0, kind: input, shape index: {}]
  %s1 = inlined_call_operand.vmem [shape: f32[1024,1], index: 1, kind: input, shape index: {}]
  %s2 = inlined_call_operand.vmem [shape: f32[2,1], index: 2, kind: output, shape index: {}]
  %s3 = sld [smem:[#allocation0]]
  $region18: #{discriminator_forward.9} parent=0
    _
  %s5 = ssub.s32 1, %s3
  %s6 = scalar_select 0, %s5, %s3
  // Predicated region
  $region2: #{discriminator_forward.9} parent=0 // pred_check
    _
  $region3: #{discriminator_forward.9} parent=0 // pred_check_branch
    %8 = sbr.rel (0) target = $region5
  $region4: #{discriminator_forward.9} parent=0 // pred_region
    _
  $region5: #{discriminator_forward.9} parent=0 // pred_fallthru
    _
  // Predicated region
  $region6: #{discriminator_forward.9} parent=0 // pred_check
    _
  $region7: #{discriminator_forward.9} parent=0 // pred_check_branch
    %10 = sbr.rel (0) target = $region9
  $region8: #{discriminator_forward.9} parent=0 // pred_region
    _
  $region9: #{discriminator_forward.9} parent=0 // pred_fallthru
    _
  %v11 = vld [vmem:[%s0] sm:$0xff]
  %v12 = vld [vmem:[%s0 + $0x8] sm:$0xff]
  %v13 = vld [vmem:[%s1] sm:$0xff]
  %v14 = vld [vmem:[%s1 + $0x8] sm:$0xff]
  %v15 = vld [vmem:[%s1 + $0x10] sm:$0xff]
  %v16 = vld [vmem:[%s1 + $0x18] sm:$0xff]
  %v17 = vld [vmem:[%s1 + $0x20] sm:$0xff]
  %v18 = vld [vmem:[%s1 + $0x28] sm:$0xff]
  %v19 = vld [vmem:[%s1 + $0x30] sm:$0xff]
  %v20 = vld [vmem:[%s1 + $0x38] sm:$0xff]
  %v21 = vld [vmem:[%s1 + $0x40] sm:$0xff]
  %v22 = vld [vmem:[%s1 + $0x48] sm:$0xff]
  %v23 = vld [vmem:[%s1 + $0x50] sm:$0xff]
  %v24 = vld [vmem:[%s1 + $0x58] sm:$0xff]
  %v25 = vld [vmem:[%s1 + $0x60] sm:$0xff]
  %v26 = vld [vmem:[%s1 + $0x68] sm:$0xff]
  %v27 = vld [vmem:[%s1 + $0x70] sm:$0xff]
  %v28 = vld [vmem:[%s1 + $0x78] sm:$0xff]
  %v29 = vld [vmem:[%s1 + $0x80] sm:$0xff]
  %v30 = vld [vmem:[%s1 + $0x88] sm:$0xff]
  %v31 = vld [vmem:[%s1 + $0x90] sm:$0xff]
  %v32 = vld [vmem:[%s1 + $0x98] sm:$0xff]
  %v33 = vld [vmem:[%s1 + $0xa0] sm:$0xff]
  %v34 = vld [vmem:[%s1 + $0xa8] sm:$0xff]
  %v35 = vld [vmem:[%s1 + $0xb0] sm:$0xff]
  %v36 = vld [vmem:[%s1 + $0xb8] sm:$0xff]
  %v37 = vld [vmem:[%s1 + $0xc0] sm:$0xff]
  %v38 = vld [vmem:[%s1 + $0xc8] sm:$0xff]
  %v39 = vld [vmem:[%s1 + $0xd0] sm:$0xff]
  %v40 = vld [vmem:[%s1 + $0xd8] sm:$0xff]
  %v41 = vld [vmem:[%s1 + $0xe0] sm:$0xff]
  %v42 = vld [vmem:[%s1 + $0xe8] sm:$0xff]
  %v43 = vld [vmem:[%s1 + $0xf0] sm:$0xff]
  %v44 = vld [vmem:[%s1 + $0xf8] sm:$0xff]
  %v45 = vld [vmem:[%s1 + $0x100] sm:$0xff]
  %v46 = vld [vmem:[%s1 + $0x108] sm:$0xff]
  %v47 = vld [vmem:[%s1 + $0x110] sm:$0xff]
  %v48 = vld [vmem:[%s1 + $0x118] sm:$0xff]
  %v49 = vld [vmem:[%s1 + $0x120] sm:$0xff]
  %v50 = vld [vmem:[%s1 + $0x128] sm:$0xff]
  %v51 = vld [vmem:[%s1 + $0x130] sm:$0xff]
  %v52 = vld [vmem:[%s1 + $0x138] sm:$0xff]
  %v53 = vld [vmem:[%s1 + $0x140] sm:$0xff]
  %v54 = vld [vmem:[%s1 + $0x148] sm:$0xff]
  %v55 = vld [vmem:[%s1 + $0x150] sm:$0xff]
  %v56 = vld [vmem:[%s1 + $0x158] sm:$0xff]
  %v57 = vld [vmem:[%s1 + $0x160] sm:$0xff]
  %v58 = vld [vmem:[%s1 + $0x168] sm:$0xff]
  %v59 = vld [vmem:[%s1 + $0x170] sm:$0xff]
  %v60 = vld [vmem:[%s1 + $0x178] sm:$0xff]
  %v61 = vld [vmem:[%s1 + $0x180] sm:$0xff]
  %v62 = vld [vmem:[%s1 + $0x188] sm:$0xff]
  %v63 = vld [vmem:[%s1 + $0x190] sm:$0xff]
  %v64 = vld [vmem:[%s1 + $0x198] sm:$0xff]
  %v65 = vld [vmem:[%s1 + $0x1a0] sm:$0xff]
  %v66 = vld [vmem:[%s1 + $0x1a8] sm:$0xff]
  %v67 = vld [vmem:[%s1 + $0x1b0] sm:$0xff]
  %v68 = vld [vmem:[%s1 + $0x1b8] sm:$0xff]
  %v69 = vld [vmem:[%s1 + $0x1c0] sm:$0xff]
  %v70 = vld [vmem:[%s1 + $0x1c8] sm:$0xff]
  %v71 = vld [vmem:[%s1 + $0x1d0] sm:$0xff]
  %v72 = vld [vmem:[%s1 + $0x1d8] sm:$0xff]
  %v73 = vld [vmem:[%s1 + $0x1e0] sm:$0xff]
  %v74 = vld [vmem:[%s1 + $0x1e8] sm:$0xff]
  %v75 = vld [vmem:[%s1 + $0x1f0] sm:$0xff]
  %v76 = vld [vmem:[%s1 + $0x1f8] sm:$0xff]
  %v77 = vld [vmem:[%s1 + $0x200] sm:$0xff]
  %v78 = vld [vmem:[%s1 + $0x208] sm:$0xff]
  %v79 = vld [vmem:[%s1 + $0x210] sm:$0xff]
  %v80 = vld [vmem:[%s1 + $0x218] sm:$0xff]
  %v81 = vld [vmem:[%s1 + $0x220] sm:$0xff]
  %v82 = vld [vmem:[%s1 + $0x228] sm:$0xff]
  %v83 = vld [vmem:[%s1 + $0x230] sm:$0xff]
  %v84 = vld [vmem:[%s1 + $0x238] sm:$0xff]
  %v85 = vld [vmem:[%s1 + $0x240] sm:$0xff]
  %v86 = vld [vmem:[%s1 + $0x248] sm:$0xff]
  %v87 = vld [vmem:[%s1 + $0x250] sm:$0xff]
  %v88 = vld [vmem:[%s1 + $0x258] sm:$0xff]
  %v89 = vld [vmem:[%s1 + $0x260] sm:$0xff]
  %v90 = vld [vmem:[%s1 + $0x268] sm:$0xff]
  %v91 = vld [vmem:[%s1 + $0x270] sm:$0xff]
  %v92 = vld [vmem:[%s1 + $0x278] sm:$0xff]
  %v93 = vld [vmem:[%s1 + $0x280] sm:$0xff]
  %v94 = vld [vmem:[%s1 + $0x288] sm:$0xff]
  %v95 = vld [vmem:[%s1 + $0x290] sm:$0xff]
  %v96 = vld [vmem:[%s1 + $0x298] sm:$0xff]
  %v97 = vld [vmem:[%s1 + $0x2a0] sm:$0xff]
  %v98 = vld [vmem:[%s1 + $0x2a8] sm:$0xff]
  %v99 = vld [vmem:[%s1 + $0x2b0] sm:$0xff]
  %v100 = vld [vmem:[%s1 + $0x2b8] sm:$0xff]
  %v101 = vld [vmem:[%s1 + $0x2c0] sm:$0xff]
  %v102 = vld [vmem:[%s1 + $0x2c8] sm:$0xff]
  %v103 = vld [vmem:[%s1 + $0x2d0] sm:$0xff]
  %v104 = vld [vmem:[%s1 + $0x2d8] sm:$0xff]
  %v105 = vld [vmem:[%s1 + $0x2e0] sm:$0xff]
  %v106 = vld [vmem:[%s1 + $0x2e8] sm:$0xff]
  %v107 = vld [vmem:[%s1 + $0x2f0] sm:$0xff]
  %v108 = vld [vmem:[%s1 + $0x2f8] sm:$0xff]
  %v109 = vld [vmem:[%s1 + $0x300] sm:$0xff]
  %v110 = vld [vmem:[%s1 + $0x308] sm:$0xff]
  %v111 = vld [vmem:[%s1 + $0x310] sm:$0xff]
  %v112 = vld [vmem:[%s1 + $0x318] sm:$0xff]
  %v113 = vld [vmem:[%s1 + $0x320] sm:$0xff]
  %v114 = vld [vmem:[%s1 + $0x328] sm:$0xff]
  %v115 = vld [vmem:[%s1 + $0x330] sm:$0xff]
  %v116 = vld [vmem:[%s1 + $0x338] sm:$0xff]
  %v117 = vld [vmem:[%s1 + $0x340] sm:$0xff]
  %v118 = vld [vmem:[%s1 + $0x348] sm:$0xff]
  %v119 = vld [vmem:[%s1 + $0x350] sm:$0xff]
  %v120 = vld [vmem:[%s1 + $0x358] sm:$0xff]
  %v121 = vld [vmem:[%s1 + $0x360] sm:$0xff]
  %v122 = vld [vmem:[%s1 + $0x368] sm:$0xff]
  %v123 = vld [vmem:[%s1 + $0x370] sm:$0xff]
  %v124 = vld [vmem:[%s1 + $0x378] sm:$0xff]
  %v125 = vld [vmem:[%s1 + $0x380] sm:$0xff]
  %v126 = vld [vmem:[%s1 + $0x388] sm:$0xff]
  %v127 = vld [vmem:[%s1 + $0x390] sm:$0xff]
  %v128 = vld [vmem:[%s1 + $0x398] sm:$0xff]
  %v129 = vld [vmem:[%s1 + $0x3a0] sm:$0xff]
  %v130 = vld [vmem:[%s1 + $0x3a8] sm:$0xff]
  %v131 = vld [vmem:[%s1 + $0x3b0] sm:$0xff]
  %v132 = vld [vmem:[%s1 + $0x3b8] sm:$0xff]
  %v133 = vld [vmem:[%s1 + $0x3c0] sm:$0xff]
  %v134 = vld [vmem:[%s1 + $0x3c8] sm:$0xff]
  %v135 = vld [vmem:[%s1 + $0x3d0] sm:$0xff]
  %v136 = vld [vmem:[%s1 + $0x3d8] sm:$0xff]
  %v137 = vld [vmem:[%s1 + $0x3e0] sm:$0xff]
  %v138 = vld [vmem:[%s1 + $0x3e8] sm:$0xff]
  %v139 = vld [vmem:[%s1 + $0x3f0] sm:$0xff]
  %v140 = vld [vmem:[%s1 + $0x3f8] sm:$0xff]
  %143 = vst [vmem:[#allocation1] ss:$4 sm:$0xff] %v11
  %s144 = scalar_lea.vmem [#allocation1], 32
  %145 = vst [vmem:[%s144] ss:$4 sm:$0xff] %v12
  %v146 = vld.sshfl [vmem:[#allocation1] sm:$0xff pattern:$0x73625140]
  %v147 = vld.sshfl [vmem:[#allocation1 + $0x8] sm:$0xff pattern:$0x73625140]
  %v148 = vld.sshfl [vmem:[#allocation1 + $0x10] sm:$0xff pattern:$0x73625140]
  %v149 = vld.sshfl [vmem:[#allocation1 + $0x18] sm:$0xff pattern:$0x73625140]
  %v150 = vld.sshfl [vmem:[#allocation1 + $0x20] sm:$0xff pattern:$0x73625140]
  %v151 = vld.sshfl [vmem:[#allocation1 + $0x28] sm:$0xff pattern:$0x73625140]
  %v152 = vld.sshfl [vmem:[#allocation1 + $0x30] sm:$0xff pattern:$0x73625140]
  %v153 = vld.sshfl [vmem:[#allocation1 + $0x38] sm:$0xff pattern:$0x73625140]
  %162 = vmatpush.msra.mxu0 %v28
  %163 = vmatpush.msra.mxu0 %v27
  %164 = vmatpush.msra.mxu0 %v26
  %165 = vmatpush.msra.mxu0 %v25
  %166 = vmatpush.msra.mxu0 %v24
  %167 = vmatpush.msra.mxu0 %v23
  %168 = vmatpush.msra.mxu0 %v22
  %169 = vmatpush.msra.mxu0 %v21
  %170 = vmatpush.msra.mxu0 %v20
  %171 = vmatpush.msra.mxu0 %v19
  %172 = vmatpush.msra.mxu0 %v18
  %173 = vmatpush.msra.mxu0 %v17
  %174 = vmatpush.msra.mxu0 %v16
  %175 = vmatpush.msra.mxu0 %v15
  %176 = vmatpush.msra.mxu0 %v14
  %177 = vmatpush.msra.mxu0 %v13
  %178 = vmatmul.f32.gmra.mxu0 %v146
  %v179 = vpop.f32.mrf.mxu0
  %v180 = vadd.f32 0.0, %v179
  %181 = vdwg.mxu0
  %182 = vmatpush.msra.mxu0 %v44
  %183 = vmatpush.msra.mxu0 %v43
  %184 = vmatpush.msra.mxu0 %v42
  %185 = vmatpush.msra.mxu0 %v41
  %186 = vmatpush.msra.mxu0 %v40
  %187 = vmatpush.msra.mxu0 %v39
  %188 = vmatpush.msra.mxu0 %v38
  %189 = vmatpush.msra.mxu0 %v37
  %190 = vmatpush.msra.mxu0 %v36
  %191 = vmatpush.msra.mxu0 %v35
  %192 = vmatpush.msra.mxu0 %v34
  %193 = vmatpush.msra.mxu0 %v33
  %194 = vmatpush.msra.mxu0 %v32
  %195 = vmatpush.msra.mxu0 %v31
  %196 = vmatpush.msra.mxu0 %v30
  %197 = vmatpush.msra.mxu0 %v29
  %198 = vmatmul.f32.gmra.mxu0 %v147
  %v199 = vpop.f32.mrf.mxu0
  %v200 = vadd.f32 %v180, %v199
  %201 = vdwg.mxu0
  %202 = vmatpush.msra.mxu0 %v60
  %203 = vmatpush.msra.mxu0 %v59
  %204 = vmatpush.msra.mxu0 %v58
  %205 = vmatpush.msra.mxu0 %v57
  %206 = vmatpush.msra.mxu0 %v56
  %207 = vmatpush.msra.mxu0 %v55
  %208 = vmatpush.msra.mxu0 %v54
  %209 = vmatpush.msra.mxu0 %v53
  %210 = vmatpush.msra.mxu0 %v52
  %211 = vmatpush.msra.mxu0 %v51
  %212 = vmatpush.msra.mxu0 %v50
  %213 = vmatpush.msra.mxu0 %v49
  %214 = vmatpush.msra.mxu0 %v48
  %215 = vmatpush.msra.mxu0 %v47
  %216 = vmatpush.msra.mxu0 %v46
  %217 = vmatpush.msra.mxu0 %v45
  %218 = vmatmul.f32.gmra.mxu0 %v148
  %v219 = vpop.f32.mrf.mxu0
  %v220 = vadd.f32 %v200, %v219
  %221 = vdwg.mxu0
  %222 = vmatpush.msra.mxu0 %v76
  %223 = vmatpush.msra.mxu0 %v75
  %224 = vmatpush.msra.mxu0 %v74
  %225 = vmatpush.msra.mxu0 %v73
  %226 = vmatpush.msra.mxu0 %v72
  %227 = vmatpush.msra.mxu0 %v71
  %228 = vmatpush.msra.mxu0 %v70
  %229 = vmatpush.msra.mxu0 %v69
  %230 = vmatpush.msra.mxu0 %v68
  %231 = vmatpush.msra.mxu0 %v67
  %232 = vmatpush.msra.mxu0 %v66
  %233 = vmatpush.msra.mxu0 %v65
  %234 = vmatpush.msra.mxu0 %v64
  %235 = vmatpush.msra.mxu0 %v63
  %236 = vmatpush.msra.mxu0 %v62
  %237 = vmatpush.msra.mxu0 %v61
  %238 = vmatmul.f32.gmra.mxu0 %v149
  %v239 = vpop.f32.mrf.mxu0
  %v240 = vadd.f32 %v220, %v239
  %241 = vdwg.mxu0
  %242 = vmatpush.msra.mxu0 %v92
  %243 = vmatpush.msra.mxu0 %v91
  %244 = vmatpush.msra.mxu0 %v90
  %245 = vmatpush.msra.mxu0 %v89
  %246 = vmatpush.msra.mxu0 %v88
  %247 = vmatpush.msra.mxu0 %v87
  %248 = vmatpush.msra.mxu0 %v86
  %249 = vmatpush.msra.mxu0 %v85
  %250 = vmatpush.msra.mxu0 %v84
  %251 = vmatpush.msra.mxu0 %v83
  %252 = vmatpush.msra.mxu0 %v82
  %253 = vmatpush.msra.mxu0 %v81
  %254 = vmatpush.msra.mxu0 %v80
  %255 = vmatpush.msra.mxu0 %v79
  %256 = vmatpush.msra.mxu0 %v78
  %257 = vmatpush.msra.mxu0 %v77
  %258 = vmatmul.f32.gmra.mxu0 %v150
  %v259 = vpop.f32.mrf.mxu0
  %v260 = vadd.f32 %v240, %v259
  %261 = vdwg.mxu0
  %262 = vmatpush.msra.mxu0 %v108
  %263 = vmatpush.msra.mxu0 %v107
  %264 = vmatpush.msra.mxu0 %v106
  %265 = vmatpush.msra.mxu0 %v105
  %266 = vmatpush.msra.mxu0 %v104
  %267 = vmatpush.msra.mxu0 %v103
  %268 = vmatpush.msra.mxu0 %v102
  %269 = vmatpush.msra.mxu0 %v101
  %270 = vmatpush.msra.mxu0 %v100
  %271 = vmatpush.msra.mxu0 %v99
  %272 = vmatpush.msra.mxu0 %v98
  %273 = vmatpush.msra.mxu0 %v97
  %274 = vmatpush.msra.mxu0 %v96
  %275 = vmatpush.msra.mxu0 %v95
  %276 = vmatpush.msra.mxu0 %v94
  %277 = vmatpush.msra.mxu0 %v93
  %278 = vmatmul.f32.gmra.mxu0 %v151
  %v279 = vpop.f32.mrf.mxu0
  %v280 = vadd.f32 %v260, %v279
  %281 = vdwg.mxu0
  %282 = vmatpush.msra.mxu0 %v124
  %283 = vmatpush.msra.mxu0 %v123
  %284 = vmatpush.msra.mxu0 %v122
  %285 = vmatpush.msra.mxu0 %v121
  %286 = vmatpush.msra.mxu0 %v120
  %287 = vmatpush.msra.mxu0 %v119
  %288 = vmatpush.msra.mxu0 %v118
  %289 = vmatpush.msra.mxu0 %v117
  %290 = vmatpush.msra.mxu0 %v116
  %291 = vmatpush.msra.mxu0 %v115
  %292 = vmatpush.msra.mxu0 %v114
  %293 = vmatpush.msra.mxu0 %v113
  %294 = vmatpush.msra.mxu0 %v112
  %295 = vmatpush.msra.mxu0 %v111
  %296 = vmatpush.msra.mxu0 %v110
  %297 = vmatpush.msra.mxu0 %v109
  %298 = vmatmul.f32.gmra.mxu0 %v152
  %v299 = vpop.f32.mrf.mxu0
  %v300 = vadd.f32 %v280, %v299
  %301 = vdwg.mxu0
  %302 = vmatpush.msra.mxu0 %v140
  %303 = vmatpush.msra.mxu0 %v139
  %304 = vmatpush.msra.mxu0 %v138
  %305 = vmatpush.msra.mxu0 %v137
  %306 = vmatpush.msra.mxu0 %v136
  %307 = vmatpush.msra.mxu0 %v135
  %308 = vmatpush.msra.mxu0 %v134
  %309 = vmatpush.msra.mxu0 %v133
  %310 = vmatpush.msra.mxu0 %v132
  %311 = vmatpush.msra.mxu0 %v131
  %312 = vmatpush.msra.mxu0 %v130
  %313 = vmatpush.msra.mxu0 %v129
  %314 = vmatpush.msra.mxu0 %v128
  %315 = vmatpush.msra.mxu0 %v127
  %316 = vmatpush.msra.mxu0 %v126
  %317 = vmatpush.msra.mxu0 %v125
  %318 = vmatmul.f32.gmra.mxu0 %v153
  %v319 = vpop.f32.mrf.mxu0
  %v320 = vadd.f32 %v300, %v319
  %321 = vdwg.mxu0
  %v322 = vxor.u32 %v320, 2147483648
  %v323 = vmul.f32 %v322, 1.442695
  %v324 = vpow.pop %v323
  %v325 = vadd.f32 %v324, 1.0
  %v326 = vrcp.pop %v325
  %v327 = vmul.f32 %v325, %v326
  %v328 = vsub.f32 1.0, %v327
  %v329 = vmul.f32 %v326, %v328
  %v330 = vadd.f32 %v326, %v329
  %vm331 = vweird.f32 %v325
  %vm332 = vweird.f32 %v326
  %vm333 = vmor %vm331, %vm332
  %v334 = vsel %vm333, %v326, %v330
  %v335 = vand.u32 2147483647, %v325
  %vm336 = vcmp.eq.f32.partialorder %v335, 8.507059e+37
  %v337 = vand.u32 %v325, 2147483648
  %v338 = vor.u32 1.1754944e-38, %v337
  %v339 = vsel %vm336, %v338, %v334
  %v340 = vmul.f32 1.0, %v339
  %vm341 = vcmask 1024
  %342 = vst.msk [vmem:[%s2] sm:$0x3] %vm341, %v340
  // Predicated region
  $region10: #{discriminator_forward.9} parent=0 // pred_check
    _
  $region11: #{discriminator_forward.9} parent=0 // pred_check_branch
    %344 = sbr.rel (0) target = $region13
  $region12: #{discriminator_forward.9} parent=0 // pred_region
    _
  $region13: #{discriminator_forward.9} parent=0 // pred_fallthru
    _
  // Predicated region
  $region14: #{discriminator_forward.9} parent=0 // pred_check
    _
  $region15: #{discriminator_forward.9} parent=0 // pred_check_branch
    %346 = sbr.rel (0) target = $region17
  $region16: #{discriminator_forward.9} parent=0 // pred_region
    _
  $region17: #{discriminator_forward.9} parent=0 // pred_fallthru
    _

</llo_original>
